<compile_context>
chip_gen: v5e
topology: v5e:2x2
jax: 0.10.0
libtpu: 0.0.40
codegen_flags: <defaults>
</compile_context>

<pallas_src>
import functools

import jax
import jax.numpy as jnp
from jax import lax
from jax.experimental import pallas as pl
from jax.experimental.pallas import tpu as pltpu

LANE = 128
SUB = 8


def _v11(x):
    return jnp.full((1, 1), x, jnp.float32)


def _sdiv(a, b):
    # Exact scalar division routed through a (1,1) vector op.
    return jnp.sum(_v11(a) / b)


def _slog1p(x):
    # log(x + 1) of a scalar via a (1,1) vector op (EUP path).
    return jnp.sum(jnp.log(_v11(x) + 1.0))


def panloss_kernel(tg_ref, tp_ref, kg_ref, kp_ref, tm_ref, km_ref, sim_ref,
                   out_ref, tab_sc, acc_sc, *, max_inst: int,
                   n_real_pixels: int):
    f32 = jnp.float32
    p = pl.program_id(0)            # 0: stats pass, 1: per-pixel pass
    t = pl.program_id(1)            # pixel row-tile
    nt = pl.num_programs(1)

    # acc_sc layout: [0] sum(tg*tp)  [1] sum(tg^2)+sum(tp^2)
    #                [2] sum(kg*kp)  [3] sum(kg^2)+sum(kp^2)
    #                [4] in-instance pixel term  [5] background term
    #                [6] l_dis       [7] max instance id
    # tab_sc layout (per instance column i):
    #   rows 0-3: raw sum_{K_i} sim_c*label  ->  overwritten with G_i means
    #   row 4: |K_i|   row 5: |T_i|   row 6: valid_i / |T_i|   row 7: unused

    # ---- init persistent SMEM accumulators ---------------------------------
    @pl.when((p == 0) & (t == 0))
    def _init():
        for s in range(8):
            acc_sc[s] = f32(0.0)
        for r in range(8):
            for i in range(max_inst):
                tab_sc[r, i] = f32(0.0)

    # ---- pass 0: dice partial sums + per-instance segmented sums -----------
    @pl.when(p == 0)
    def _pass_stats():
        tg = tg_ref[...]; tp = tp_ref[...]
        kg = kg_ref[...]; kp = kp_ref[...]
        tm = tm_ref[...]; km = km_ref[...]

        acc_sc[0] += jnp.sum(tg * tp)
        acc_sc[1] += jnp.sum(tg * tg) + jnp.sum(tp * tp)
        acc_sc[2] += jnp.sum(kg * kp)
        acc_sc[3] += jnp.sum(kg * kg) + jnp.sum(kp * kp)
        acc_sc[7] = jnp.maximum(acc_sc[7], jnp.max(tm))

        # similarity_vector.mul(text_mask_map.float()) -- label-scaled, as in
        # the torch reference.
        sm0 = sim_ref[0] * tm
        sm1 = sim_ref[1] * tm
        sm2 = sim_ref[2] * tm
        sm3 = sim_ref[3] * tm

        def inst_body(i, carry):
            lab = (i + 1).astype(f32)
            kmask = (km == lab).astype(f32)
            tab_sc[0, i] += jnp.sum(sm0 * kmask)
            tab_sc[1, i] += jnp.sum(sm1 * kmask)
            tab_sc[2, i] += jnp.sum(sm2 * kmask)
            tab_sc[3, i] += jnp.sum(sm3 * kmask)
            tab_sc[4, i] += jnp.sum(kmask)
            tab_sc[5, i] += jnp.sum((tm == lab).astype(f32))
            return carry

        lax.fori_loop(0, max_inst, inst_body, 0)

    # ---- finalize per-instance stats (once, before the per-pixel pass) -----
    @pl.when((p == 1) & (t == 0))
    def _finalize():
        n_real = f32(n_real_pixels)
        max_id = acc_sc[7]

        lane_i = lax.broadcasted_iota(jnp.int32, (1, LANE), 1)
        lane_f = lane_i.astype(f32)
        row_valid = ((lane_f + 1.0 <= max_id) &
                     (lane_i < max_inst)).astype(f32)

        row_g = [jnp.zeros((1, LANE), f32) for _ in range(4)]
        g_all = []
        valid_all = []
        bg_sum = f32(0.0)

        for i in range(max_inst):
            valid = (f32(i + 1) <= max_id).astype(f32)
            cnt_k = tab_sc[4, i]
            cnt_t = tab_sc[5, i]
            cnt_k_g = cnt_k + (cnt_k < 0.5).astype(f32)     # guard: empty slot
            cnt_t_g = cnt_t + (cnt_t < 0.5).astype(f32)
            inv_k = _sdiv(1.0, cnt_k_g)                     # exact division
            inv_t = _sdiv(1.0, cnt_t_g)
            w_i = valid * inv_t

            g = [tab_sc[c, i] * inv_k for c in range(4)]    # kernel mean G_i
            for c in range(4):
                tab_sc[c, i] = g[c]
            tab_sc[6, i] = w_i

            # Closed-form contribution of every pixel OUTSIDE instance i:
            # (P - |T_i|) * log(relu(||G_i|| - 0.5)^2 + 1) / |T_i|
            gn = jnp.sqrt(g[0] * g[0] + g[1] * g[1] + g[2] * g[2] + g[3] * g[3])
            rg = jnp.maximum(gn - 0.5, 0.0)
            bg_sum = bg_sum + (n_real - cnt_t) * _slog1p(rg * rg) * w_i

            sel = lane_i == i
            for c in range(4):
                row_g[c] = jnp.where(sel, g[c], row_g[c])
            g_all.append(g)
            valid_all.append(valid)

        acc_sc[5] = bg_sum

        # Vectorized pairwise distance loss: one (1,128) row per anchor i.
        l_dis = f32(0.0)
        for i in range(max_inst):
            gi = g_all[i]
            d0 = row_g[0] - gi[0]
            d1 = row_g[1] - gi[1]
            d2 = row_g[2] - gi[2]
            d3 = row_g[3] - gi[3]
            dist = jnp.sqrt(d0 * d0 + d1 * d1 + d2 * d2 + d3 * d3)
            tdis = jnp.maximum(3.0 - dist, 0.0)
            pair_mask = (lane_i > i).astype(f32) * row_valid
            l_dis = l_dis + valid_all[i] * jnp.sum(pair_mask * tdis * tdis)
        acc_sc[6] = l_dis

    # ---- pass 1: fused per-pixel term (ONE sqrt + ONE log per pixel) -------
    @pl.when(p == 1)
    def _pass_pixel():
        tm = tm_ref[...]
        sm0 = sim_ref[0] * tm
        sm1 = sim_ref[1] * tm
        sm2 = sim_ref[2] * tm
        sm3 = sim_ref[3] * tm

        zero = jnp.zeros_like(tm)
        g0 = zero; g1 = zero; g2 = zero; g3 = zero; w = zero
        # Select-based gather of G[label(p)] / (1/|T_label(p)|): labels are
        # disjoint, so where() is exact and half the cost of mul+add.
        for i in range(max_inst):
            mask = tm == jnp.float32(i + 1)
            g0 = jnp.where(mask, tab_sc[0, i], g0)
            g1 = jnp.where(mask, tab_sc[1, i], g1)
            g2 = jnp.where(mask, tab_sc[2, i], g2)
            g3 = jnp.where(mask, tab_sc[3, i], g3)
            w = jnp.where(mask, tab_sc[6, i], w)

        d0 = sm0 - g0; d1 = sm1 - g1; d2 = sm2 - g2; d3 = sm3 - g3
        dist = jnp.sqrt(d0 * d0 + d1 * d1 + d2 * d2 + d3 * d3)
        r = jnp.maximum(dist - 0.5, 0.0)
        # padded / background / truncated pixels have w == 0 -> contribute 0
        acc_sc[4] += jnp.sum(w * jnp.log(r * r + 1.0))

    # ---- emit the five scalar losses ----------------------------------------
    @pl.when((p == 1) & (t == nt - 1))
    def _emit():
        l_text = 1.0 - 2.0 * _sdiv(acc_sc[0], acc_sc[1])
        l_ker = 1.0 - 2.0 * _sdiv(acc_sc[2], acc_sc[3])
        l_agg = _sdiv(acc_sc[4] + acc_sc[5], acc_sc[7] + 1e-8)
        l_dis = acc_sc[6]
        loss = l_text + 0.5 * l_ker + 0.25 * (l_agg + l_dis)
        out_ref[0, 0] = loss
        out_ref[0, 1] = l_text
        out_ref[0, 2] = l_ker
        out_ref[0, 3] = l_agg
        out_ref[0, 4] = l_dis
        out_ref[0, 5] = jnp.float32(0.0)
        out_ref[0, 6] = jnp.float32(0.0)
        out_ref[0, 7] = jnp.float32(0.0)


def pan_loss(text_gt, text_pred, text_mask, kernel_gt, kernel_pred, kernel_mask,
             similarity_vector, *, max_instances: int = 16,
             tile_rows: int = 256):
    """JAX wrapper. Inputs follow the PyTorch NCHW convention with B=1.

    max_instances is a static cap: results are exact whenever the true number
    of text instances (max label) is <= max_instances; extra slots contribute
    exactly zero.  No host sync / no recompile per distinct instance count.
    """
    assert text_gt.shape[0] == 1, "batch_size=1 (matches torch default)"
    assert similarity_vector.shape[-3] == 4
    assert 1 <= max_instances <= 128
    H, W = text_gt.shape[-2:]
    P = H * W
    f32 = jnp.float32

    tile_rows = max(SUB, (tile_rows // SUB) * SUB)
    r_min = -(-P // LANE)
    tr = min(tile_rows, ((r_min + SUB - 1) // SUB) * SUB)
    ntiles = -(-r_min // tr)
    rpad = ntiles * tr
    ppad = rpad * LANE

    def plane(x):                     # -> zero-padded (rpad, 128) f32 plane
        v = x.astype(f32).reshape(-1)
        return jnp.pad(v, (0, ppad - P)).reshape(rpad, LANE)

    tg, tp = plane(text_gt), plane(text_pred)
    kg, kp = plane(kernel_gt), plane(kernel_pred)
    tm, km = plane(text_mask), plane(kernel_mask)
    sim = similarity_vector.astype(f32).reshape(4, P)
    sim = jnp.pad(sim, ((0, 0), (0, ppad - P))).reshape(4, rpad, LANE)

    # TODO(synk): fold the flatten/zero-pad repack into the kernel (stream the
    # native (H, W) layout with a ragged-tail mask) to drop the extra HBM pass.
    # TODO(synk): on v7x, split the tile axis across the two TensorCores with
    # per-core partial accumulators and a final combine.

    # pass-1-only planes revisit block 0 during pass 1 -> no re-streaming
    spec_p0_only = pl.BlockSpec((tr, LANE), lambda p, t: (t * (1 - p), 0))
    spec_both = pl.BlockSpec((tr, LANE), lambda p, t: (t, 0))
    spec_sim = pl.BlockSpec((4, tr, LANE), lambda p, t: (0, t, 0))

    kernel = functools.partial(panloss_kernel, max_inst=max_instances,
                               n_real_pixels=P)

    out = pl.pallas_call(
        kernel,
        out_shape=jax.ShapeDtypeStruct((1, 8), f32),
        grid_spec=pltpu.PrefetchScalarGridSpec(
            num_scalar_prefetch=0,
            grid=(2, ntiles),
            in_specs=[spec_p0_only, spec_p0_only,       # tg, tp
                      spec_p0_only, spec_p0_only,       # kg, kp
                      spec_both,                        # tm (both passes)
                      spec_p0_only,                     # km (pass 0 only)
                      spec_sim],                        # sim (both passes)
            out_specs=pl.BlockSpec((1, 8), lambda p, t: (0, 0),
                                   memory_space=pltpu.MemorySpace.SMEM),
            scratch_shapes=[pltpu.SMEM((8, max_instances), f32),
                            pltpu.SMEM((8,), f32)]),
        compiler_params=pltpu.CompilerParams(
            dimension_semantics=("arbitrary", "arbitrary")),
    )(tg, tp, kg, kp, tm, km, sim)

    return out[0, 0], out[0, 1], out[0, 2], out[0, 3], out[0, 4]


if __name__ == "__main__":
    key = jax.random.PRNGKey(0)
    B, H, W = 1, 16, 16
    k1, k2, k3 = jax.random.split(key, 3)

    # Instance label maps: 0 = background, 1..3 = text instances.
    tm = jnp.zeros((H, W), jnp.int32)
    tm = tm.at[1:6, 1:6].set(1)
    tm = tm.at[1:6, 9:14].set(2)
    tm = tm.at[9:15, 3:12].set(3)
    km = jnp.zeros((H, W), jnp.int32)        # shrunk "kernel" instances
    km = km.at[2:5, 2:5].set(1)
    km = km.at[2:5, 10:13].set(2)
    km = km.at[10:14, 5:10].set(3)

    text_mask = tm.reshape(B, 1, H, W)
    kernel_mask = km.reshape(B, 1, H, W)
    text_gt = (text_mask > 0).astype(jnp.float32)
    kernel_gt = (kernel_mask > 0).astype(jnp.float32)
    text_pred = jax.nn.sigmoid(jax.random.normal(k1, (B, 1, H, W), jnp.float32))
    kernel_pred = jax.nn.sigmoid(jax.random.normal(k2, (B, 1, H, W), jnp.float32))
    similarity_vector = jax.random.normal(k3, (B, 4, H, W), jnp.float32)

    outs = jax.jit(pan_loss)(text_gt, text_pred, text_mask, kernel_gt,
                             kernel_pred, kernel_mask, similarity_vector)
    outs = jax.block_until_ready(outs)
    assert all(bool(jnp.isfinite(o)) for o in outs)
    print("KERNEL_OK")
</pallas_src>

<mosaic_0001>
module attributes {stable_mosaic.version = 11 : i64} {
  func.func @panloss_kernel(%arg0: i32, %arg1: i32, %arg2: memref<8x128xf32, #tpu.memory_space<vmem>>, %arg3: memref<8x128xf32, #tpu.memory_space<vmem>>, %arg4: memref<8x128xf32, #tpu.memory_space<vmem>>, %arg5: memref<8x128xf32, #tpu.memory_space<vmem>>, %arg6: memref<8x128xf32, #tpu.memory_space<vmem>>, %arg7: memref<8x128xf32, #tpu.memory_space<vmem>>, %arg8: memref<4x8x128xf32, #tpu.memory_space<vmem>>, %arg9: memref<1x8xf32, #tpu.memory_space<smem>>, %arg10: memref<8x16xf32, #tpu.memory_space<smem>>, %arg11: memref<8xf32, #tpu.memory_space<smem>>) attributes {dimension_semantics = [#tpu.dimension_semantics<arbitrary>, #tpu.dimension_semantics<arbitrary>], iteration_bounds = array<i64: 2, 1>, scalar_prefetch = 0 : i64, scratch_operands = 2 : i64, tpu.core_type = #tpu.core_type<tc>, window_params = [{transform_indices = @transform_0, window_bounds = array<i64: 8, 128>}, {transform_indices = @transform_1, window_bounds = array<i64: 8, 128>}, {transform_indices = @transform_2, window_bounds = array<i64: 8, 128>}, {transform_indices = @transform_3, window_bounds = array<i64: 8, 128>}, {transform_indices = @transform_4, window_bounds = array<i64: 8, 128>}, {transform_indices = @transform_5, window_bounds = array<i64: 8, 128>}, {transform_indices = @transform_6, window_bounds = array<i64: 4, 8, 128>}, {transform_indices = @transform_7, window_bounds = array<i64: 1, 8>}]} {
    %c0_i32 = arith.constant 0 : i32
    %0 = arith.cmpi eq, %arg0, %c0_i32 : i32
    %c0_i32_0 = arith.constant 0 : i32
    %1 = arith.cmpi eq, %arg1, %c0_i32_0 : i32
    %2 = arith.andi %0, %1 : i1
    %3 = arith.extui %2 : i1 to i32
    %c0_i32_1 = arith.constant 0 : i32
    %4 = arith.cmpi ne, %3, %c0_i32_1 : i32
    scf.if %4 {
      %cst = arith.constant 0.000000e+00 : f32
      %c0 = arith.constant 0 : index
      %21 = memref.load %arg11[%c0] : memref<8xf32, #tpu.memory_space<smem>>
      memref.store %cst, %arg11[%c0] : memref<8xf32, #tpu.memory_space<smem>>
      %cst_11 = arith.constant 0.000000e+00 : f32
      %c1 = arith.constant 1 : index
      %22 = memref.load %arg11[%c1] : memref<8xf32, #tpu.memory_space<smem>>
      memref.store %cst_11, %arg11[%c1] : memref<8xf32, #tpu.memory_space<smem>>
      %cst_12 = arith.constant 0.000000e+00 : f32
      %c2 = arith.constant 2 : index
      %23 = memref.load %arg11[%c2] : memref<8xf32, #tpu.memory_space<smem>>
      memref.store %cst_12, %arg11[%c2] : memref<8xf32, #tpu.memory_space<smem>>
      %cst_13 = arith.constant 0.000000e+00 : f32
      %c3 = arith.constant 3 : index
      %24 = memref.load %arg11[%c3] : memref<8xf32, #tpu.memory_space<smem>>
      memref.store %cst_13, %arg11[%c3] : memref<8xf32, #tpu.memory_space<smem>>
      %cst_14 = arith.constant 0.000000e+00 : f32
      %c4 = arith.constant 4 : index
      %25 = memref.load %arg11[%c4] : memref<8xf32, #tpu.memory_space<smem>>
      memref.store %cst_14, %arg11[%c4] : memref<8xf32, #tpu.memory_space<smem>>
      %cst_15 = arith.constant 0.000000e+00 : f32
      %c5 = arith.constant 5 : index
      %26 = memref.load %arg11[%c5] : memref<8xf32, #tpu.memory_space<smem>>
      memref.store %cst_15, %arg11[%c5] : memref<8xf32, #tpu.memory_space<smem>>
      %cst_16 = arith.constant 0.000000e+00 : f32
      %c6 = arith.constant 6 : index
      %27 = memref.load %arg11[%c6] : memref<8xf32, #tpu.memory_space<smem>>
      memref.store %cst_16, %arg11[%c6] : memref<8xf32, #tpu.memory_space<smem>>
      %cst_17 = arith.constant 0.000000e+00 : f32
      %c7 = arith.constant 7 : index
      %28 = memref.load %arg11[%c7] : memref<8xf32, #tpu.memory_space<smem>>
      memref.store %cst_17, %arg11[%c7] : memref<8xf32, #tpu.memory_space<smem>>
      %cst_18 = arith.constant 0.000000e+00 : f32
      %c0_19 = arith.constant 0 : index
      %c0_20 = arith.constant 0 : index
      %29 = memref.load %arg10[%c0_19, %c0_20] : memref<8x16xf32, #tpu.memory_space<smem>>
      memref.store %cst_18, %arg10[%c0_19, %c0_20] : memref<8x16xf32, #tpu.memory_space<smem>>
      %cst_21 = arith.constant 0.000000e+00 : f32
      %c0_22 = arith.constant 0 : index
      %c1_23 = arith.constant 1 : index
      %30 = memref.load %arg10[%c0_22, %c1_23] : memref<8x16xf32, #tpu.memory_space<smem>>
      memref.store %cst_21, %arg10[%c0_22, %c1_23] : memref<8x16xf32, #tpu.memory_space<smem>>
      %cst_24 = arith.constant 0.000000e+00 : f32
      %c0_25 = arith.constant 0 : index
      %c2_26 = arith.constant 2 : index
      %31 = memref.load %arg10[%c0_25, %c2_26] : memref<8x16xf32, #tpu.memory_space<smem>>
      memref.store %cst_24, %arg10[%c0_25, %c2_26] : memref<8x16xf32, #tpu.memory_space<smem>>
      %cst_27 = arith.constant 0.000000e+00 : f32
      %c0_28 = arith.constant 0 : index
      %c3_29 = arith.constant 3 : index
      %32 = memref.load %arg10[%c0_28, %c3_29] : memref<8x16xf32, #tpu.memory_space<smem>>
      memref.store %cst_27, %arg10[%c0_28, %c3_29] : memref<8x16xf32, #tpu.memory_space<smem>>
      %cst_30 = arith.constant 0.000000e+00 : f32
      %c0_31 = arith.constant 0 : index
      %c4_32 = arith.constant 4 : index
      %33 = memref.load %arg10[%c0_31, %c4_32] : memref<8x16xf32, #tpu.memory_space<smem>>
      memref.store %cst_30, %arg10[%c0_31, %c4_32] : memref<8x16xf32, #tpu.memory_space<smem>>
      %cst_33 = arith.constant 0.000000e+00 : f32
      %c0_34 = arith.constant 0 : index
      %c5_35 = arith.constant 5 : index
      %34 = memref.load %arg10[%c0_34, %c5_35] : memref<8x16xf32, #tpu.memory_space<smem>>
      memref.store %cst_33, %arg10[%c0_34, %c5_35] : memref<8x16xf32, #tpu.memory_space<smem>>
      %cst_36 = arith.constant 0.000000e+00 : f32
      %c0_37 = arith.constant 0 : index
      %c6_38 = arith.constant 6 : index
      %35 = memref.load %arg10[%c0_37, %c6_38] : memref<8x16xf32, #tpu.memory_space<smem>>
      memref.store %cst_36, %arg10[%c0_37, %c6_38] : memref<8x16xf32, #tpu.memory_space<smem>>
      %cst_39 = arith.constant 0.000000e+00 : f32
      %c0_40 = arith.constant 0 : index
      %c7_41 = arith.constant 7 : index
      %36 = memref.load %arg10[%c0_40, %c7_41] : memref<8x16xf32, #tpu.memory_space<smem>>
      memref.store %cst_39, %arg10[%c0_40, %c7_41] : memref<8x16xf32, #tpu.memory_space<smem>>
      %cst_42 = arith.constant 0.000000e+00 : f32
      %c0_43 = arith.constant 0 : index
      %c8 = arith.constant 8 : index
      %37 = memref.load %arg10[%c0_43, %c8] : memref<8x16xf32, #tpu.memory_space<smem>>
      memref.store %cst_42, %arg10[%c0_43, %c8] : memref<8x16xf32, #tpu.memory_space<smem>>
      %cst_44 = arith.constant 0.000000e+00 : f32
      %c0_45 = arith.constant 0 : index
      %c9 = arith.constant 9 : index
      %38 = memref.load %arg10[%c0_45, %c9] : memref<8x16xf32, #tpu.memory_space<smem>>
      memref.store %cst_44, %arg10[%c0_45, %c9] : memref<8x16xf32, #tpu.memory_space<smem>>
      %cst_46 = arith.constant 0.000000e+00 : f32
      %c0_47 = arith.constant 0 : index
      %c10 = arith.constant 10 : index
      %39 = memref.load %arg10[%c0_47, %c10] : memref<8x16xf32, #tpu.memory_space<smem>>
      memref.store %cst_46, %arg10[%c0_47, %c10] : memref<8x16xf32, #tpu.memory_space<smem>>
      %cst_48 = arith.constant 0.000000e+00 : f32
      %c0_49 = arith.constant 0 : index
      %c11 = arith.constant 11 : index
      %40 = memref.load %arg10[%c0_49, %c11] : memref<8x16xf32, #tpu.memory_space<smem>>
      memref.store %cst_48, %arg10[%c0_49, %c11] : memref<8x16xf32, #tpu.memory_space<smem>>
      %cst_50 = arith.constant 0.000000e+00 : f32
      %c0_51 = arith.constant 0 : index
      %c12 = arith.constant 12 : index
      %41 = memref.load %arg10[%c0_51, %c12] : memref<8x16xf32, #tpu.memory_space<smem>>
      memref.store %cst_50, %arg10[%c0_51, %c12] : memref<8x16xf32, #tpu.memory_space<smem>>
      %cst_52 = arith.constant 0.000000e+00 : f32
      %c0_53 = arith.constant 0 : index
      %c13 = arith.constant 13 : index
      %42 = memref.load %arg10[%c0_53, %c13] : memref<8x16xf32, #tpu.memory_space<smem>>
      memref.store %cst_52, %arg10[%c0_53, %c13] : memref<8x16xf32, #tpu.memory_space<smem>>
      %cst_54 = arith.constant 0.000000e+00 : f32
      %c0_55 = arith.constant 0 : index
      %c14 = arith.constant 14 : index
      %43 = memref.load %arg10[%c0_55, %c14] : memref<8x16xf32, #tpu.memory_space<smem>>
      memref.store %cst_54, %arg10[%c0_55, %c14] : memref<8x16xf32, #tpu.memory_space<smem>>
      %cst_56 = arith.constant 0.000000e+00 : f32
      %c0_57 = arith.constant 0 : index
      %c15 = arith.constant 15 : index
      %44 = memref.load %arg10[%c0_57, %c15] : memref<8x16xf32, #tpu.memory_space<smem>>
      memref.store %cst_56, %arg10[%c0_57, %c15] : memref<8x16xf32, #tpu.memory_space<smem>>
      %cst_58 = arith.constant 0.000000e+00 : f32
      %c1_59 = arith.constant 1 : index
      %c0_60 = arith.constant 0 : index
      %45 = memref.load %arg10[%c1_59, %c0_60] : memref<8x16xf32, #tpu.memory_space<smem>>
      memref.store %cst_58, %arg10[%c1_59, %c0_60] : memref<8x16xf32, #tpu.memory_space<smem>>
      %cst_61 = arith.constant 0.000000e+00 : f32
      %c1_62 = arith.constant 1 : index
      %c1_63 = arith.constant 1 : index
      %46 = memref.load %arg10[%c1_62, %c1_63] : memref<8x16xf32, #tpu.memory_space<smem>>
      memref.store %cst_61, %arg10[%c1_62, %c1_63] : memref<8x16xf32, #tpu.memory_space<smem>>
      %cst_64 = arith.constant 0.000000e+00 : f32
      %c1_65 = arith.constant 1 : index
      %c2_66 = arith.constant 2 : index
      %47 = memref.load %arg10[%c1_65, %c2_66] : memref<8x16xf32, #tpu.memory_space<smem>>
      memref.store %cst_64, %arg10[%c1_65, %c2_66] : memref<8x16xf32, #tpu.memory_space<smem>>
      %cst_67 = arith.constant 0.000000e+00 : f32
      %c1_68 = arith.constant 1 : index
      %c3_69 = arith.constant 3 : index
      %48 = memref.load %arg10[%c1_68, %c3_69] : memref<8x16xf32, #tpu.memory_space<smem>>
      memref.store %cst_67, %arg10[%c1_68, %c3_69] : memref<8x16xf32, #tpu.memory_space<smem>>
      %cst_70 = arith.constant 0.000000e+00 : f32
      %c1_71 = arith.constant 1 : index
      %c4_72 = arith.constant 4 : index
      %49 = memref.load %arg10[%c1_71, %c4_72] : memref<8x16xf32, #tpu.memory_space<smem>>
      memref.store %cst_70, %arg10[%c1_71, %c4_72] : memref<8x16xf32, #tpu.memory_space<smem>>
      %cst_73 = arith.constant 0.000000e+00 : f32
      %c1_74 = arith.constant 1 : index
      %c5_75 = arith.constant 5 : index
      %50 = memref.load %arg10[%c1_74, %c5_75] : memref<8x16xf32, #tpu.memory_space<smem>>
      memref.store %cst_73, %arg10[%c1_74, %c5_75] : memref<8x16xf32, #tpu.memory_space<smem>>
      %cst_76 = arith.constant 0.000000e+00 : f32
      %c1_77 = arith.constant 1 : index
      %c6_78 = arith.constant 6 : index
      %51 = memref.load %arg10[%c1_77, %c6_78] : memref<8x16xf32, #tpu.memory_space<smem>>
      memref.store %cst_76, %arg10[%c1_77, %c6_78] : memref<8x16xf32, #tpu.memory_space<smem>>
      %cst_79 = arith.constant 0.000000e+00 : f32
      %c1_80 = arith.constant 1 : index
      %c7_81 = arith.constant 7 : index
      %52 = memref.load %arg10[%c1_80, %c7_81] : memref<8x16xf32, #tpu.memory_space<smem>>
      memref.store %cst_79, %arg10[%c1_80, %c7_81] : memref<8x16xf32, #tpu.memory_space<smem>>
      %cst_82 = arith.constant 0.000000e+00 : f32
      %c1_83 = arith.constant 1 : index
      %c8_84 = arith.constant 8 : index
      %53 = memref.load %arg10[%c1_83, %c8_84] : memref<8x16xf32, #tpu.memory_space<smem>>
      memref.store %cst_82, %arg10[%c1_83, %c8_84] : memref<8x16xf32, #tpu.memory_space<smem>>
      %cst_85 = arith.constant 0.000000e+00 : f32
      %c1_86 = arith.constant 1 : index
      %c9_87 = arith.constant 9 : index
      %54 = memref.load %arg10[%c1_86, %c9_87] : memref<8x16xf32, #tpu.memory_space<smem>>
      memref.store %cst_85, %arg10[%c1_86, %c9_87] : memref<8x16xf32, #tpu.memory_space<smem>>
      %cst_88 = arith.constant 0.000000e+00 : f32
      %c1_89 = arith.constant 1 : index
      %c10_90 = arith.constant 10 : index
      %55 = memref.load %arg10[%c1_89, %c10_90] : memref<8x16xf32, #tpu.memory_space<smem>>
      memref.store %cst_88, %arg10[%c1_89, %c10_90] : memref<8x16xf32, #tpu.memory_space<smem>>
      %cst_91 = arith.constant 0.000000e+00 : f32
      %c1_92 = arith.constant 1 : index
      %c11_93 = arith.constant 11 : index
      %56 = memref.load %arg10[%c1_92, %c11_93] : memref<8x16xf32, #tpu.memory_space<smem>>
      memref.store %cst_91, %arg10[%c1_92, %c11_93] : memref<8x16xf32, #tpu.memory_space<smem>>
      %cst_94 = arith.constant 0.000000e+00 : f32
      %c1_95 = arith.constant 1 : index
      %c12_96 = arith.constant 12 : index
      %57 = memref.load %arg10[%c1_95, %c12_96] : memref<8x16xf32, #tpu.memory_space<smem>>
      memref.store %cst_94, %arg10[%c1_95, %c12_96] : memref<8x16xf32, #tpu.memory_space<smem>>
      %cst_97 = arith.constant 0.000000e+00 : f32
      %c1_98 = arith.constant 1 : index
      %c13_99 = arith.constant 13 : index
      %58 = memref.load %arg10[%c1_98, %c13_99] : memref<8x16xf32, #tpu.memory_space<smem>>
      memref.store %cst_97, %arg10[%c1_98, %c13_99] : memref<8x16xf32, #tpu.memory_space<smem>>
      %cst_100 = arith.constant 0.000000e+00 : f32
      %c1_101 = arith.constant 1 : index
      %c14_102 = arith.constant 14 : index
      %59 = memref.load %arg10[%c1_101, %c14_102] : memref<8x16xf32, #tpu.memory_space<smem>>
      memref.store %cst_100, %arg10[%c1_101, %c14_102] : memref<8x16xf32, #tpu.memory_space<smem>>
      %cst_103 = arith.constant 0.000000e+00 : f32
      %c1_104 = arith.constant 1 : index
      %c15_105 = arith.constant 15 : index
      %60 = memref.load %arg10[%c1_104, %c15_105] : memref<8x16xf32, #tpu.memory_space<smem>>
      memref.store %cst_103, %arg10[%c1_104, %c15_105] : memref<8x16xf32, #tpu.memory_space<smem>>
      %cst_106 = arith.constant 0.000000e+00 : f32
      %c2_107 = arith.constant 2 : index
      %c0_108 = arith.constant 0 : index
      %61 = memref.load %arg10[%c2_107, %c0_108] : memref<8x16xf32, #tpu.memory_space<smem>>
      memref.store %cst_106, %arg10[%c2_107, %c0_108] : memref<8x16xf32, #tpu.memory_space<smem>>
      %cst_109 = arith.constant 0.000000e+00 : f32
      %c2_110 = arith.constant 2 : index
      %c1_111 = arith.constant 1 : index
      %62 = memref.load %arg10[%c2_110, %c1_111] : memref<8x16xf32, #tpu.memory_space<smem>>
      memref.store %cst_109, %arg10[%c2_110, %c1_111] : memref<8x16xf32, #tpu.memory_space<smem>>
      %cst_112 = arith.constant 0.000000e+00 : f32
      %c2_113 = arith.constant 2 : index
      %c2_114 = arith.constant 2 : index
      %63 = memref.load %arg10[%c2_113, %c2_114] : memref<8x16xf32, #tpu.memory_space<smem>>
      memref.store %cst_112, %arg10[%c2_113, %c2_114] : memref<8x16xf32, #tpu.memory_space<smem>>
      %cst_115 = arith.constant 0.000000e+00 : f32
      %c2_116 = arith.constant 2 : index
      %c3_117 = arith.constant 3 : index
      %64 = memref.load %arg10[%c2_116, %c3_117] : memref<8x16xf32, #tpu.memory_space<smem>>
      memref.store %cst_115, %arg10[%c2_116, %c3_117] : memref<8x16xf32, #tpu.memory_space<smem>>
      %cst_118 = arith.constant 0.000000e+00 : f32
      %c2_119 = arith.constant 2 : index
      %c4_120 = arith.constant 4 : index
      %65 = memref.load %arg10[%c2_119, %c4_120] : memref<8x16xf32, #tpu.memory_space<smem>>
      memref.store %cst_118, %arg10[%c2_119, %c4_120] : memref<8x16xf32, #tpu.memory_space<smem>>
      %cst_121 = arith.constant 0.000000e+00 : f32
      %c2_122 = arith.constant 2 : index
      %c5_123 = arith.constant 5 : index
      %66 = memref.load %arg10[%c2_122, %c5_123] : memref<8x16xf32, #tpu.memory_space<smem>>
      memref.store %cst_121, %arg10[%c2_122, %c5_123] : memref<8x16xf32, #tpu.memory_space<smem>>
      %cst_124 = arith.constant 0.000000e+00 : f32
      %c2_125 = arith.constant 2 : index
      %c6_126 = arith.constant 6 : index
      %67 = memref.load %arg10[%c2_125, %c6_126] : memref<8x16xf32, #tpu.memory_space<smem>>
      memref.store %cst_124, %arg10[%c2_125, %c6_126] : memref<8x16xf32, #tpu.memory_space<smem>>
      %cst_127 = arith.constant 0.000000e+00 : f32
      %c2_128 = arith.constant 2 : index
      %c7_129 = arith.constant 7 : index
      %68 = memref.load %arg10[%c2_128, %c7_129] : memref<8x16xf32, #tpu.memory_space<smem>>
      memref.store %cst_127, %arg10[%c2_128, %c7_129] : memref<8x16xf32, #tpu.memory_space<smem>>
      %cst_130 = arith.constant 0.000000e+00 : f32
      %c2_131 = arith.constant 2 : index
      %c8_132 = arith.constant 8 : index
      %69 = memref.load %arg10[%c2_131, %c8_132] : memref<8x16xf32, #tpu.memory_space<smem>>
      memref.store %cst_130, %arg10[%c2_131, %c8_132] : memref<8x16xf32, #tpu.memory_space<smem>>
      %cst_133 = arith.constant 0.000000e+00 : f32
      %c2_134 = arith.constant 2 : index
      %c9_135 = arith.constant 9 : index
      %70 = memref.load %arg10[%c2_134, %c9_135] : memref<8x16xf32, #tpu.memory_space<smem>>
      memref.store %cst_133, %arg10[%c2_134, %c9_135] : memref<8x16xf32, #tpu.memory_space<smem>>
      %cst_136 = arith.constant 0.000000e+00 : f32
      %c2_137 = arith.constant 2 : index
      %c10_138 = arith.constant 10 : index
      %71 = memref.load %arg10[%c2_137, %c10_138] : memref<8x16xf32, #tpu.memory_space<smem>>
      memref.store %cst_136, %arg10[%c2_137, %c10_138] : memref<8x16xf32, #tpu.memory_space<smem>>
      %cst_139 = arith.constant 0.000000e+00 : f32
      %c2_140 = arith.constant 2 : index
      %c11_141 = arith.constant 11 : index
      %72 = memref.load %arg10[%c2_140, %c11_141] : memref<8x16xf32, #tpu.memory_space<smem>>
      memref.store %cst_139, %arg10[%c2_140, %c11_141] : memref<8x16xf32, #tpu.memory_space<smem>>
      %cst_142 = arith.constant 0.000000e+00 : f32
      %c2_143 = arith.constant 2 : index
      %c12_144 = arith.constant 12 : index
      %73 = memref.load %arg10[%c2_143, %c12_144] : memref<8x16xf32, #tpu.memory_space<smem>>
      memref.store %cst_142, %arg10[%c2_143, %c12_144] : memref<8x16xf32, #tpu.memory_space<smem>>
      %cst_145 = arith.constant 0.000000e+00 : f32
      %c2_146 = arith.constant 2 : index
      %c13_147 = arith.constant 13 : index
      %74 = memref.load %arg10[%c2_146, %c13_147] : memref<8x16xf32, #tpu.memory_space<smem>>
      memref.store %cst_145, %arg10[%c2_146, %c13_147] : memref<8x16xf32, #tpu.memory_space<smem>>
      %cst_148 = arith.constant 0.000000e+00 : f32
      %c2_149 = arith.constant 2 : index
      %c14_150 = arith.constant 14 : index
      %75 = memref.load %arg10[%c2_149, %c14_150] : memref<8x16xf32, #tpu.memory_space<smem>>
      memref.store %cst_148, %arg10[%c2_149, %c14_150] : memref<8x16xf32, #tpu.memory_space<smem>>
      %cst_151 = arith.constant 0.000000e+00 : f32
      %c2_152 = arith.constant 2 : index
      %c15_153 = arith.constant 15 : index
      %76 = memref.load %arg10[%c2_152, %c15_153] : memref<8x16xf32, #tpu.memory_space<smem>>
      memref.store %cst_151, %arg10[%c2_152, %c15_153] : memref<8x16xf32, #tpu.memory_space<smem>>
      %cst_154 = arith.constant 0.000000e+00 : f32
      %c3_155 = arith.constant 3 : index
      %c0_156 = arith.constant 0 : index
      %77 = memref.load %arg10[%c3_155, %c0_156] : memref<8x16xf32, #tpu.memory_space<smem>>
      memref.store %cst_154, %arg10[%c3_155, %c0_156] : memref<8x16xf32, #tpu.memory_space<smem>>
      %cst_157 = arith.constant 0.000000e+00 : f32
      %c3_158 = arith.constant 3 : index
      %c1_159 = arith.constant 1 : index
      %78 = memref.load %arg10[%c3_158, %c1_159] : memref<8x16xf32, #tpu.memory_space<smem>>
      memref.store %cst_157, %arg10[%c3_158, %c1_159] : memref<8x16xf32, #tpu.memory_space<smem>>
      %cst_160 = arith.constant 0.000000e+00 : f32
      %c3_161 = arith.constant 3 : index
      %c2_162 = arith.constant 2 : index
      %79 = memref.load %arg10[%c3_161, %c2_162] : memref<8x16xf32, #tpu.memory_space<smem>>
      memref.store %cst_160, %arg10[%c3_161, %c2_162] : memref<8x16xf32, #tpu.memory_space<smem>>
      %cst_163 = arith.constant 0.000000e+00 : f32
      %c3_164 = arith.constant 3 : index
      %c3_165 = arith.constant 3 : index
      %80 = memref.load %arg10[%c3_164, %c3_165] : memref<8x16xf32, #tpu.memory_space<smem>>
      memref.store %cst_163, %arg10[%c3_164, %c3_165] : memref<8x16xf32, #tpu.memory_space<smem>>
      %cst_166 = arith.constant 0.000000e+00 : f32
      %c3_167 = arith.constant 3 : index
      %c4_168 = arith.constant 4 : index
      %81 = memref.load %arg10[%c3_167, %c4_168] : memref<8x16xf32, #tpu.memory_space<smem>>
      memref.store %cst_166, %arg10[%c3_167, %c4_168] : memref<8x16xf32, #tpu.memory_space<smem>>
      %cst_169 = arith.constant 0.000000e+00 : f32
      %c3_170 = arith.constant 3 : index
      %c5_171 = arith.constant 5 : index
      %82 = memref.load %arg10[%c3_170, %c5_171] : memref<8x16xf32, #tpu.memory_space<smem>>
      memref.store %cst_169, %arg10[%c3_170, %c5_171] : memref<8x16xf32, #tpu.memory_space<smem>>
      %cst_172 = arith.constant 0.000000e+00 : f32
      %c3_173 = arith.constant 3 : index
      %c6_174 = arith.constant 6 : index
      %83 = memref.load %arg10[%c3_173, %c6_174] : memref<8x16xf32, #tpu.memory_space<smem>>
      memref.store %cst_172, %arg10[%c3_173, %c6_174] : memref<8x16xf32, #tpu.memory_space<smem>>
      %cst_175 = arith.constant 0.000000e+00 : f32
      %c3_176 = arith.constant 3 : index
      %c7_177 = arith.constant 7 : index
      %84 = memref.load %arg10[%c3_176, %c7_177] : memref<8x16xf32, #tpu.memory_space<smem>>
      memref.store %cst_175, %arg10[%c3_176, %c7_177] : memref<8x16xf32, #tpu.memory_space<smem>>
      %cst_178 = arith.constant 0.000000e+00 : f32
      %c3_179 = arith.constant 3 : index
      %c8_180 = arith.constant 8 : index
      %85 = memref.load %arg10[%c3_179, %c8_180] : memref<8x16xf32, #tpu.memory_space<smem>>
      memref.store %cst_178, %arg10[%c3_179, %c8_180] : memref<8x16xf32, #tpu.memory_space<smem>>
      %cst_181 = arith.constant 0.000000e+00 : f32
      %c3_182 = arith.constant 3 : index
      %c9_183 = arith.constant 9 : index
      %86 = memref.load %arg10[%c3_182, %c9_183] : memref<8x16xf32, #tpu.memory_space<smem>>
      memref.store %cst_181, %arg10[%c3_182, %c9_183] : memref<8x16xf32, #tpu.memory_space<smem>>
      %cst_184 = arith.constant 0.000000e+00 : f32
      %c3_185 = arith.constant 3 : index
      %c10_186 = arith.constant 10 : index
      %87 = memref.load %arg10[%c3_185, %c10_186] : memref<8x16xf32, #tpu.memory_space<smem>>
      memref.store %cst_184, %arg10[%c3_185, %c10_186] : memref<8x16xf32, #tpu.memory_space<smem>>
      %cst_187 = arith.constant 0.000000e+00 : f32
      %c3_188 = arith.constant 3 : index
      %c11_189 = arith.constant 11 : index
      %88 = memref.load %arg10[%c3_188, %c11_189] : memref<8x16xf32, #tpu.memory_space<smem>>
      memref.store %cst_187, %arg10[%c3_188, %c11_189] : memref<8x16xf32, #tpu.memory_space<smem>>
      %cst_190 = arith.constant 0.000000e+00 : f32
      %c3_191 = arith.constant 3 : index
      %c12_192 = arith.constant 12 : index
      %89 = memref.load %arg10[%c3_191, %c12_192] : memref<8x16xf32, #tpu.memory_space<smem>>
      memref.store %cst_190, %arg10[%c3_191, %c12_192] : memref<8x16xf32, #tpu.memory_space<smem>>
      %cst_193 = arith.constant 0.000000e+00 : f32
      %c3_194 = arith.constant 3 : index
      %c13_195 = arith.constant 13 : index
      %90 = memref.load %arg10[%c3_194, %c13_195] : memref<8x16xf32, #tpu.memory_space<smem>>
      memref.store %cst_193, %arg10[%c3_194, %c13_195] : memref<8x16xf32, #tpu.memory_space<smem>>
      %cst_196 = arith.constant 0.000000e+00 : f32
      %c3_197 = arith.constant 3 : index
      %c14_198 = arith.constant 14 : index
      %91 = memref.load %arg10[%c3_197, %c14_198] : memref<8x16xf32, #tpu.memory_space<smem>>
      memref.store %cst_196, %arg10[%c3_197, %c14_198] : memref<8x16xf32, #tpu.memory_space<smem>>
      %cst_199 = arith.constant 0.000000e+00 : f32
      %c3_200 = arith.constant 3 : index
      %c15_201 = arith.constant 15 : index
      %92 = memref.load %arg10[%c3_200, %c15_201] : memref<8x16xf32, #tpu.memory_space<smem>>
      memref.store %cst_199, %arg10[%c3_200, %c15_201] : memref<8x16xf32, #tpu.memory_space<smem>>
      %cst_202 = arith.constant 0.000000e+00 : f32
      %c4_203 = arith.constant 4 : index
      %c0_204 = arith.constant 0 : index
      %93 = memref.load %arg10[%c4_203, %c0_204] : memref<8x16xf32, #tpu.memory_space<smem>>
      memref.store %cst_202, %arg10[%c4_203, %c0_204] : memref<8x16xf32, #tpu.memory_space<smem>>
      %cst_205 = arith.constant 0.000000e+00 : f32
      %c4_206 = arith.constant 4 : index
      %c1_207 = arith.constant 1 : index
      %94 = memref.load %arg10[%c4_206, %c1_207] : memref<8x16xf32, #tpu.memory_space<smem>>
      memref.store %cst_205, %arg10[%c4_206, %c1_207] : memref<8x16xf32, #tpu.memory_space<smem>>
      %cst_208 = arith.constant 0.000000e+00 : f32
      %c4_209 = arith.constant 4 : index
      %c2_210 = arith.constant 2 : index
      %95 = memref.load %arg10[%c4_209, %c2_210] : memref<8x16xf32, #tpu.memory_space<smem>>
      memref.store %cst_208, %arg10[%c4_209, %c2_210] : memref<8x16xf32, #tpu.memory_space<smem>>
      %cst_211 = arith.constant 0.000000e+00 : f32
      %c4_212 = arith.constant 4 : index
      %c3_213 = arith.constant 3 : index
      %96 = memref.load %arg10[%c4_212, %c3_213] : memref<8x16xf32, #tpu.memory_space<smem>>
      memref.store %cst_211, %arg10[%c4_212, %c3_213] : memref<8x16xf32, #tpu.memory_space<smem>>
      %cst_214 = arith.constant 0.000000e+00 : f32
      %c4_215 = arith.constant 4 : index
      %c4_216 = arith.constant 4 : index
      %97 = memref.load %arg10[%c4_215, %c4_216] : memref<8x16xf32, #tpu.memory_space<smem>>
      memref.store %cst_214, %arg10[%c4_215, %c4_216] : memref<8x16xf32, #tpu.memory_space<smem>>
      %cst_217 = arith.constant 0.000000e+00 : f32
      %c4_218 = arith.constant 4 : index
      %c5_219 = arith.constant 5 : index
      %98 = memref.load %arg10[%c4_218, %c5_219] : memref<8x16xf32, #tpu.memory_space<smem>>
      memref.store %cst_217, %arg10[%c4_218, %c5_219] : memref<8x16xf32, #tpu.memory_space<smem>>
      %cst_220 = arith.constant 0.000000e+00 : f32
      %c4_221 = arith.constant 4 : index
      %c6_222 = arith.constant 6 : index
      %99 = memref.load %arg10[%c4_221, %c6_222] : memref<8x16xf32, #tpu.memory_space<smem>>
      memref.store %cst_220, %arg10[%c4_221, %c6_222] : memref<8x16xf32, #tpu.memory_space<smem>>
      %cst_223 = arith.constant 0.000000e+00 : f32
      %c4_224 = arith.constant 4 : index
      %c7_225 = arith.constant 7 : index
      %100 = memref.load %arg10[%c4_224, %c7_225] : memref<8x16xf32, #tpu.memory_space<smem>>
      memref.store %cst_223, %arg10[%c4_224, %c7_225] : memref<8x16xf32, #tpu.memory_space<smem>>
      %cst_226 = arith.constant 0.000000e+00 : f32
      %c4_227 = arith.constant 4 : index
      %c8_228 = arith.constant 8 : index
      %101 = memref.load %arg10[%c4_227, %c8_228] : memref<8x16xf32, #tpu.memory_space<smem>>
      memref.store %cst_226, %arg10[%c4_227, %c8_228] : memref<8x16xf32, #tpu.memory_space<smem>>
      %cst_229 = arith.constant 0.000000e+00 : f32
      %c4_230 = arith.constant 4 : index
      %c9_231 = arith.constant 9 : index
      %102 = memref.load %arg10[%c4_230, %c9_231] : memref<8x16xf32, #tpu.memory_space<smem>>
      memref.store %cst_229, %arg10[%c4_230, %c9_231] : memref<8x16xf32, #tpu.memory_space<smem>>
      %cst_232 = arith.constant 0.000000e+00 : f32
      %c4_233 = arith.constant 4 : index
      %c10_234 = arith.constant 10 : index
      %103 = memref.load %arg10[%c4_233, %c10_234] : memref<8x16xf32, #tpu.memory_space<smem>>
      memref.store %cst_232, %arg10[%c4_233, %c10_234] : memref<8x16xf32, #tpu.memory_space<smem>>
      %cst_235 = arith.constant 0.000000e+00 : f32
      %c4_236 = arith.constant 4 : index
      %c11_237 = arith.constant 11 : index
      %104 = memref.load %arg10[%c4_236, %c11_237] : memref<8x16xf32, #tpu.memory_space<smem>>
      memref.store %cst_235, %arg10[%c4_236, %c11_237] : memref<8x16xf32, #tpu.memory_space<smem>>
      %cst_238 = arith.constant 0.000000e+00 : f32
      %c4_239 = arith.constant 4 : index
      %c12_240 = arith.constant 12 : index
      %105 = memref.load %arg10[%c4_239, %c12_240] : memref<8x16xf32, #tpu.memory_space<smem>>
      memref.store %cst_238, %arg10[%c4_239, %c12_240] : memref<8x16xf32, #tpu.memory_space<smem>>
      %cst_241 = arith.constant 0.000000e+00 : f32
      %c4_242 = arith.constant 4 : index
      %c13_243 = arith.constant 13 : index
      %106 = memref.load %arg10[%c4_242, %c13_243] : memref<8x16xf32, #tpu.memory_space<smem>>
      memref.store %cst_241, %arg10[%c4_242, %c13_243] : memref<8x16xf32, #tpu.memory_space<smem>>
      %cst_244 = arith.constant 0.000000e+00 : f32
      %c4_245 = arith.constant 4 : index
      %c14_246 = arith.constant 14 : index
      %107 = memref.load %arg10[%c4_245, %c14_246] : memref<8x16xf32, #tpu.memory_space<smem>>
      memref.store %cst_244, %arg10[%c4_245, %c14_246] : memref<8x16xf32, #tpu.memory_space<smem>>
      %cst_247 = arith.constant 0.000000e+00 : f32
      %c4_248 = arith.constant 4 : index
      %c15_249 = arith.constant 15 : index
      %108 = memref.load %arg10[%c4_248, %c15_249] : memref<8x16xf32, #tpu.memory_space<smem>>
      memref.store %cst_247, %arg10[%c4_248, %c15_249] : memref<8x16xf32, #tpu.memory_space<smem>>
      %cst_250 = arith.constant 0.000000e+00 : f32
      %c5_251 = arith.constant 5 : index
      %c0_252 = arith.constant 0 : index
      %109 = memref.load %arg10[%c5_251, %c0_252] : memref<8x16xf32, #tpu.memory_space<smem>>
      memref.store %cst_250, %arg10[%c5_251, %c0_252] : memref<8x16xf32, #tpu.memory_space<smem>>
      %cst_253 = arith.constant 0.000000e+00 : f32
      %c5_254 = arith.constant 5 : index
      %c1_255 = arith.constant 1 : index
      %110 = memref.load %arg10[%c5_254, %c1_255] : memref<8x16xf32, #tpu.memory_space<smem>>
      memref.store %cst_253, %arg10[%c5_254, %c1_255] : memref<8x16xf32, #tpu.memory_space<smem>>
      %cst_256 = arith.constant 0.000000e+00 : f32
      %c5_257 = arith.constant 5 : index
      %c2_258 = arith.constant 2 : index
      %111 = memref.load %arg10[%c5_257, %c2_258] : memref<8x16xf32, #tpu.memory_space<smem>>
      memref.store %cst_256, %arg10[%c5_257, %c2_258] : memref<8x16xf32, #tpu.memory_space<smem>>
      %cst_259 = arith.constant 0.000000e+00 : f32
      %c5_260 = arith.constant 5 : index
      %c3_261 = arith.constant 3 : index
      %112 = memref.load %arg10[%c5_260, %c3_261] : memref<8x16xf32, #tpu.memory_space<smem>>
      memref.store %cst_259, %arg10[%c5_260, %c3_261] : memref<8x16xf32, #tpu.memory_space<smem>>
      %cst_262 = arith.constant 0.000000e+00 : f32
      %c5_263 = arith.constant 5 : index
      %c4_264 = arith.constant 4 : index
      %113 = memref.load %arg10[%c5_263, %c4_264] : memref<8x16xf32, #tpu.memory_space<smem>>
      memref.store %cst_262, %arg10[%c5_263, %c4_264] : memref<8x16xf32, #tpu.memory_space<smem>>
      %cst_265 = arith.constant 0.000000e+00 : f32
      %c5_266 = arith.constant 5 : index
      %c5_267 = arith.constant 5 : index
      %114 = memref.load %arg10[%c5_266, %c5_267] : memref<8x16xf32, #tpu.memory_space<smem>>
      memref.store %cst_265, %arg10[%c5_266, %c5_267] : memref<8x16xf32, #tpu.memory_space<smem>>
      %cst_268 = arith.constant 0.000000e+00 : f32
      %c5_269 = arith.constant 5 : index
      %c6_270 = arith.constant 6 : index
      %115 = memref.load %arg10[%c5_269, %c6_270] : memref<8x16xf32, #tpu.memory_space<smem>>
      memref.store %cst_268, %arg10[%c5_269, %c6_270] : memref<8x16xf32, #tpu.memory_space<smem>>
      %cst_271 = arith.constant 0.000000e+00 : f32
      %c5_272 = arith.constant 5 : index
      %c7_273 = arith.constant 7 : index
      %116 = memref.load %arg10[%c5_272, %c7_273] : memref<8x16xf32, #tpu.memory_space<smem>>
      memref.store %cst_271, %arg10[%c5_272, %c7_273] : memref<8x16xf32, #tpu.memory_space<smem>>
      %cst_274 = arith.constant 0.000000e+00 : f32
      %c5_275 = arith.constant 5 : index
      %c8_276 = arith.constant 8 : index
      %117 = memref.load %arg10[%c5_275, %c8_276] : memref<8x16xf32, #tpu.memory_space<smem>>
      memref.store %cst_274, %arg10[%c5_275, %c8_276] : memref<8x16xf32, #tpu.memory_space<smem>>
      %cst_277 = arith.constant 0.000000e+00 : f32
      %c5_278 = arith.constant 5 : index
      %c9_279 = arith.constant 9 : index
      %118 = memref.load %arg10[%c5_278, %c9_279] : memref<8x16xf32, #tpu.memory_space<smem>>
      memref.store %cst_277, %arg10[%c5_278, %c9_279] : memref<8x16xf32, #tpu.memory_space<smem>>
      %cst_280 = arith.constant 0.000000e+00 : f32
      %c5_281 = arith.constant 5 : index
      %c10_282 = arith.constant 10 : index
      %119 = memref.load %arg10[%c5_281, %c10_282] : memref<8x16xf32, #tpu.memory_space<smem>>
      memref.store %cst_280, %arg10[%c5_281, %c10_282] : memref<8x16xf32, #tpu.memory_space<smem>>
      %cst_283 = arith.constant 0.000000e+00 : f32
      %c5_284 = arith.constant 5 : index
      %c11_285 = arith.constant 11 : index
      %120 = memref.load %arg10[%c5_284, %c11_285] : memref<8x16xf32, #tpu.memory_space<smem>>
      memref.store %cst_283, %arg10[%c5_284, %c11_285] : memref<8x16xf32, #tpu.memory_space<smem>>
      %cst_286 = arith.constant 0.000000e+00 : f32
      %c5_287 = arith.constant 5 : index
      %c12_288 = arith.constant 12 : index
      %121 = memref.load %arg10[%c5_287, %c12_288] : memref<8x16xf32, #tpu.memory_space<smem>>
      memref.store %cst_286, %arg10[%c5_287, %c12_288] : memref<8x16xf32, #tpu.memory_space<smem>>
      %cst_289 = arith.constant 0.000000e+00 : f32
      %c5_290 = arith.constant 5 : index
      %c13_291 = arith.constant 13 : index
      %122 = memref.load %arg10[%c5_290, %c13_291] : memref<8x16xf32, #tpu.memory_space<smem>>
      memref.store %cst_289, %arg10[%c5_290, %c13_291] : memref<8x16xf32, #tpu.memory_space<smem>>
      %cst_292 = arith.constant 0.000000e+00 : f32
      %c5_293 = arith.constant 5 : index
      %c14_294 = arith.constant 14 : index
      %123 = memref.load %arg10[%c5_293, %c14_294] : memref<8x16xf32, #tpu.memory_space<smem>>
      memref.store %cst_292, %arg10[%c5_293, %c14_294] : memref<8x16xf32, #tpu.memory_space<smem>>
      %cst_295 = arith.constant 0.000000e+00 : f32
      %c5_296 = arith.constant 5 : index
      %c15_297 = arith.constant 15 : index
      %124 = memref.load %arg10[%c5_296, %c15_297] : memref<8x16xf32, #tpu.memory_space<smem>>
      memref.store %cst_295, %arg10[%c5_296, %c15_297] : memref<8x16xf32, #tpu.memory_space<smem>>
      %cst_298 = arith.constant 0.000000e+00 : f32
      %c6_299 = arith.constant 6 : index
      %c0_300 = arith.constant 0 : index
      %125 = memref.load %arg10[%c6_299, %c0_300] : memref<8x16xf32, #tpu.memory_space<smem>>
      memref.store %cst_298, %arg10[%c6_299, %c0_300] : memref<8x16xf32, #tpu.memory_space<smem>>
      %cst_301 = arith.constant 0.000000e+00 : f32
      %c6_302 = arith.constant 6 : index
      %c1_303 = arith.constant 1 : index
      %126 = memref.load %arg10[%c6_302, %c1_303] : memref<8x16xf32, #tpu.memory_space<smem>>
      memref.store %cst_301, %arg10[%c6_302, %c1_303] : memref<8x16xf32, #tpu.memory_space<smem>>
      %cst_304 = arith.constant 0.000000e+00 : f32
      %c6_305 = arith.constant 6 : index
      %c2_306 = arith.constant 2 : index
      %127 = memref.load %arg10[%c6_305, %c2_306] : memref<8x16xf32, #tpu.memory_space<smem>>
      memref.store %cst_304, %arg10[%c6_305, %c2_306] : memref<8x16xf32, #tpu.memory_space<smem>>
      %cst_307 = arith.constant 0.000000e+00 : f32
      %c6_308 = arith.constant 6 : index
      %c3_309 = arith.constant 3 : index
      %128 = memref.load %arg10[%c6_308, %c3_309] : memref<8x16xf32, #tpu.memory_space<smem>>
      memref.store %cst_307, %arg10[%c6_308, %c3_309] : memref<8x16xf32, #tpu.memory_space<smem>>
      %cst_310 = arith.constant 0.000000e+00 : f32
      %c6_311 = arith.constant 6 : index
      %c4_312 = arith.constant 4 : index
      %129 = memref.load %arg10[%c6_311, %c4_312] : memref<8x16xf32, #tpu.memory_space<smem>>
      memref.store %cst_310, %arg10[%c6_311, %c4_312] : memref<8x16xf32, #tpu.memory_space<smem>>
      %cst_313 = arith.constant 0.000000e+00 : f32
      %c6_314 = arith.constant 6 : index
      %c5_315 = arith.constant 5 : index
      %130 = memref.load %arg10[%c6_314, %c5_315] : memref<8x16xf32, #tpu.memory_space<smem>>
      memref.store %cst_313, %arg10[%c6_314, %c5_315] : memref<8x16xf32, #tpu.memory_space<smem>>
      %cst_316 = arith.constant 0.000000e+00 : f32
      %c6_317 = arith.constant 6 : index
      %c6_318 = arith.constant 6 : index
      %131 = memref.load %arg10[%c6_317, %c6_318] : memref<8x16xf32, #tpu.memory_space<smem>>
      memref.store %cst_316, %arg10[%c6_317, %c6_318] : memref<8x16xf32, #tpu.memory_space<smem>>
      %cst_319 = arith.constant 0.000000e+00 : f32
      %c6_320 = arith.constant 6 : index
      %c7_321 = arith.constant 7 : index
      %132 = memref.load %arg10[%c6_320, %c7_321] : memref<8x16xf32, #tpu.memory_space<smem>>
      memref.store %cst_319, %arg10[%c6_320, %c7_321] : memref<8x16xf32, #tpu.memory_space<smem>>
      %cst_322 = arith.constant 0.000000e+00 : f32
      %c6_323 = arith.constant 6 : index
      %c8_324 = arith.constant 8 : index
      %133 = memref.load %arg10[%c6_323, %c8_324] : memref<8x16xf32, #tpu.memory_space<smem>>
      memref.store %cst_322, %arg10[%c6_323, %c8_324] : memref<8x16xf32, #tpu.memory_space<smem>>
      %cst_325 = arith.constant 0.000000e+00 : f32
      %c6_326 = arith.constant 6 : index
      %c9_327 = arith.constant 9 : index
      %134 = memref.load %arg10[%c6_326, %c9_327] : memref<8x16xf32, #tpu.memory_space<smem>>
      memref.store %cst_325, %arg10[%c6_326, %c9_327] : memref<8x16xf32, #tpu.memory_space<smem>>
      %cst_328 = arith.constant 0.000000e+00 : f32
      %c6_329 = arith.constant 6 : index
      %c10_330 = arith.constant 10 : index
      %135 = memref.load %arg10[%c6_329, %c10_330] : memref<8x16xf32, #tpu.memory_space<smem>>
      memref.store %cst_328, %arg10[%c6_329, %c10_330] : memref<8x16xf32, #tpu.memory_space<smem>>
      %cst_331 = arith.constant 0.000000e+00 : f32
      %c6_332 = arith.constant 6 : index
      %c11_333 = arith.constant 11 : index
      %136 = memref.load %arg10[%c6_332, %c11_333] : memref<8x16xf32, #tpu.memory_space<smem>>
      memref.store %cst_331, %arg10[%c6_332, %c11_333] : memref<8x16xf32, #tpu.memory_space<smem>>
      %cst_334 = arith.constant 0.000000e+00 : f32
      %c6_335 = arith.constant 6 : index
      %c12_336 = arith.constant 12 : index
      %137 = memref.load %arg10[%c6_335, %c12_336] : memref<8x16xf32, #tpu.memory_space<smem>>
      memref.store %cst_334, %arg10[%c6_335, %c12_336] : memref<8x16xf32, #tpu.memory_space<smem>>
      %cst_337 = arith.constant 0.000000e+00 : f32
      %c6_338 = arith.constant 6 : index
      %c13_339 = arith.constant 13 : index
      %138 = memref.load %arg10[%c6_338, %c13_339] : memref<8x16xf32, #tpu.memory_space<smem>>
      memref.store %cst_337, %arg10[%c6_338, %c13_339] : memref<8x16xf32, #tpu.memory_space<smem>>
      %cst_340 = arith.constant 0.000000e+00 : f32
      %c6_341 = arith.constant 6 : index
      %c14_342 = arith.constant 14 : index
      %139 = memref.load %arg10[%c6_341, %c14_342] : memref<8x16xf32, #tpu.memory_space<smem>>
      memref.store %cst_340, %arg10[%c6_341, %c14_342] : memref<8x16xf32, #tpu.memory_space<smem>>
      %cst_343 = arith.constant 0.000000e+00 : f32
      %c6_344 = arith.constant 6 : index
      %c15_345 = arith.constant 15 : index
      %140 = memref.load %arg10[%c6_344, %c15_345] : memref<8x16xf32, #tpu.memory_space<smem>>
      memref.store %cst_343, %arg10[%c6_344, %c15_345] : memref<8x16xf32, #tpu.memory_space<smem>>
      %cst_346 = arith.constant 0.000000e+00 : f32
      %c7_347 = arith.constant 7 : index
      %c0_348 = arith.constant 0 : index
      %141 = memref.load %arg10[%c7_347, %c0_348] : memref<8x16xf32, #tpu.memory_space<smem>>
      memref.store %cst_346, %arg10[%c7_347, %c0_348] : memref<8x16xf32, #tpu.memory_space<smem>>
      %cst_349 = arith.constant 0.000000e+00 : f32
      %c7_350 = arith.constant 7 : index
      %c1_351 = arith.constant 1 : index
      %142 = memref.load %arg10[%c7_350, %c1_351] : memref<8x16xf32, #tpu.memory_space<smem>>
      memref.store %cst_349, %arg10[%c7_350, %c1_351] : memref<8x16xf32, #tpu.memory_space<smem>>
      %cst_352 = arith.constant 0.000000e+00 : f32
      %c7_353 = arith.constant 7 : index
      %c2_354 = arith.constant 2 : index
      %143 = memref.load %arg10[%c7_353, %c2_354] : memref<8x16xf32, #tpu.memory_space<smem>>
      memref.store %cst_352, %arg10[%c7_353, %c2_354] : memref<8x16xf32, #tpu.memory_space<smem>>
      %cst_355 = arith.constant 0.000000e+00 : f32
      %c7_356 = arith.constant 7 : index
      %c3_357 = arith.constant 3 : index
      %144 = memref.load %arg10[%c7_356, %c3_357] : memref<8x16xf32, #tpu.memory_space<smem>>
      memref.store %cst_355, %arg10[%c7_356, %c3_357] : memref<8x16xf32, #tpu.memory_space<smem>>
      %cst_358 = arith.constant 0.000000e+00 : f32
      %c7_359 = arith.constant 7 : index
      %c4_360 = arith.constant 4 : index
      %145 = memref.load %arg10[%c7_359, %c4_360] : memref<8x16xf32, #tpu.memory_space<smem>>
      memref.store %cst_358, %arg10[%c7_359, %c4_360] : memref<8x16xf32, #tpu.memory_space<smem>>
      %cst_361 = arith.constant 0.000000e+00 : f32
      %c7_362 = arith.constant 7 : index
      %c5_363 = arith.constant 5 : index
      %146 = memref.load %arg10[%c7_362, %c5_363] : memref<8x16xf32, #tpu.memory_space<smem>>
      memref.store %cst_361, %arg10[%c7_362, %c5_363] : memref<8x16xf32, #tpu.memory_space<smem>>
      %cst_364 = arith.constant 0.000000e+00 : f32
      %c7_365 = arith.constant 7 : index
      %c6_366 = arith.constant 6 : index
      %147 = memref.load %arg10[%c7_365, %c6_366] : memref<8x16xf32, #tpu.memory_space<smem>>
      memref.store %cst_364, %arg10[%c7_365, %c6_366] : memref<8x16xf32, #tpu.memory_space<smem>>
      %cst_367 = arith.constant 0.000000e+00 : f32
      %c7_368 = arith.constant 7 : index
      %c7_369 = arith.constant 7 : index
      %148 = memref.load %arg10[%c7_368, %c7_369] : memref<8x16xf32, #tpu.memory_space<smem>>
      memref.store %cst_367, %arg10[%c7_368, %c7_369] : memref<8x16xf32, #tpu.memory_space<smem>>
      %cst_370 = arith.constant 0.000000e+00 : f32
      %c7_371 = arith.constant 7 : index
      %c8_372 = arith.constant 8 : index
      %149 = memref.load %arg10[%c7_371, %c8_372] : memref<8x16xf32, #tpu.memory_space<smem>>
      memref.store %cst_370, %arg10[%c7_371, %c8_372] : memref<8x16xf32, #tpu.memory_space<smem>>
      %cst_373 = arith.constant 0.000000e+00 : f32
      %c7_374 = arith.constant 7 : index
      %c9_375 = arith.constant 9 : index
      %150 = memref.load %arg10[%c7_374, %c9_375] : memref<8x16xf32, #tpu.memory_space<smem>>
      memref.store %cst_373, %arg10[%c7_374, %c9_375] : memref<8x16xf32, #tpu.memory_space<smem>>
      %cst_376 = arith.constant 0.000000e+00 : f32
      %c7_377 = arith.constant 7 : index
      %c10_378 = arith.constant 10 : index
      %151 = memref.load %arg10[%c7_377, %c10_378] : memref<8x16xf32, #tpu.memory_space<smem>>
      memref.store %cst_376, %arg10[%c7_377, %c10_378] : memref<8x16xf32, #tpu.memory_space<smem>>
      %cst_379 = arith.constant 0.000000e+00 : f32
      %c7_380 = arith.constant 7 : index
      %c11_381 = arith.constant 11 : index
      %152 = memref.load %arg10[%c7_380, %c11_381] : memref<8x16xf32, #tpu.memory_space<smem>>
      memref.store %cst_379, %arg10[%c7_380, %c11_381] : memref<8x16xf32, #tpu.memory_space<smem>>
      %cst_382 = arith.constant 0.000000e+00 : f32
      %c7_383 = arith.constant 7 : index
      %c12_384 = arith.constant 12 : index
      %153 = memref.load %arg10[%c7_383, %c12_384] : memref<8x16xf32, #tpu.memory_space<smem>>
      memref.store %cst_382, %arg10[%c7_383, %c12_384] : memref<8x16xf32, #tpu.memory_space<smem>>
      %cst_385 = arith.constant 0.000000e+00 : f32
      %c7_386 = arith.constant 7 : index
      %c13_387 = arith.constant 13 : index
      %154 = memref.load %arg10[%c7_386, %c13_387] : memref<8x16xf32, #tpu.memory_space<smem>>
      memref.store %cst_385, %arg10[%c7_386, %c13_387] : memref<8x16xf32, #tpu.memory_space<smem>>
      %cst_388 = arith.constant 0.000000e+00 : f32
      %c7_389 = arith.constant 7 : index
      %c14_390 = arith.constant 14 : index
      %155 = memref.load %arg10[%c7_389, %c14_390] : memref<8x16xf32, #tpu.memory_space<smem>>
      memref.store %cst_388, %arg10[%c7_389, %c14_390] : memref<8x16xf32, #tpu.memory_space<smem>>
      %cst_391 = arith.constant 0.000000e+00 : f32
      %c7_392 = arith.constant 7 : index
      %c15_393 = arith.constant 15 : index
      %156 = memref.load %arg10[%c7_392, %c15_393] : memref<8x16xf32, #tpu.memory_space<smem>>
      memref.store %cst_391, %arg10[%c7_392, %c15_393] : memref<8x16xf32, #tpu.memory_space<smem>>
    } else {
    }
    %c0_i32_2 = arith.constant 0 : i32
    %5 = arith.cmpi eq, %arg0, %c0_i32_2 : i32
    %6 = arith.extui %5 : i1 to i32
    %c0_i32_3 = arith.constant 0 : i32
    %7 = arith.cmpi ne, %6, %c0_i32_3 : i32
    scf.if %7 {
      %c0 = arith.constant 0 : index
      %c0_11 = arith.constant 0 : index
      %21 = vector.load %arg2[%c0, %c0_11] : memref<8x128xf32, #tpu.memory_space<vmem>>, vector<8x128xf32>
      %c0_12 = arith.constant 0 : index
      %c0_13 = arith.constant 0 : index
      %22 = vector.load %arg3[%c0_12, %c0_13] : memref<8x128xf32, #tpu.memory_space<vmem>>, vector<8x128xf32>
      %c0_14 = arith.constant 0 : index
      %c0_15 = arith.constant 0 : index
      %23 = vector.load %arg4[%c0_14, %c0_15] : memref<8x128xf32, #tpu.memory_space<vmem>>, vector<8x128xf32>
      %c0_16 = arith.constant 0 : index
      %c0_17 = arith.constant 0 : index
      %24 = vector.load %arg5[%c0_16, %c0_17] : memref<8x128xf32, #tpu.memory_space<vmem>>, vector<8x128xf32>
      %c0_18 = arith.constant 0 : index
      %c0_19 = arith.constant 0 : index
      %25 = vector.load %arg6[%c0_18, %c0_19] : memref<8x128xf32, #tpu.memory_space<vmem>>, vector<8x128xf32>
      %c0_20 = arith.constant 0 : index
      %c0_21 = arith.constant 0 : index
      %26 = vector.load %arg7[%c0_20, %c0_21] : memref<8x128xf32, #tpu.memory_space<vmem>>, vector<8x128xf32>
      %c0_22 = arith.constant 0 : index
      %27 = memref.load %arg11[%c0_22] : memref<8xf32, #tpu.memory_space<smem>>
      %28 = arith.mulf %21, %22 : vector<8x128xf32>
      %29 = vector.shape_cast %28 : vector<8x128xf32> to vector<1x8x128xf32>
      %cst = arith.constant dense<0.000000e+00> : vector<1xf32>
      %30 = vector.multi_reduction <add>, %29, %cst [1, 2] : vector<1x8x128xf32> to vector<1xf32>
      %31 = vector.shape_cast %30 : vector<1xf32> to vector<1x1x1xf32>
      %32 = vector.extract %31[0, 0, 0] : f32 from vector<1x1x1xf32>
      %33 = arith.addf %27, %32 : f32
      %c0_23 = arith.constant 0 : index
      %34 = memref.load %arg11[%c0_23] : memref<8xf32, #tpu.memory_space<smem>>
      memref.store %33, %arg11[%c0_23] : memref<8xf32, #tpu.memory_space<smem>>
      %c1 = arith.constant 1 : index
      %35 = memref.load %arg11[%c1] : memref<8xf32, #tpu.memory_space<smem>>
      %36 = arith.mulf %21, %21 : vector<8x128xf32>
      %37 = vector.shape_cast %36 : vector<8x128xf32> to vector<1x8x128xf32>
      %cst_24 = arith.constant dense<0.000000e+00> : vector<1xf32>
      %38 = vector.multi_reduction <add>, %37, %cst_24 [1, 2] : vector<1x8x128xf32> to vector<1xf32>
      %39 = vector.shape_cast %38 : vector<1xf32> to vector<1x1x1xf32>
      %40 = vector.extract %39[0, 0, 0] : f32 from vector<1x1x1xf32>
      %41 = arith.mulf %22, %22 : vector<8x128xf32>
      %42 = vector.shape_cast %41 : vector<8x128xf32> to vector<1x8x128xf32>
      %cst_25 = arith.constant dense<0.000000e+00> : vector<1xf32>
      %43 = vector.multi_reduction <add>, %42, %cst_25 [1, 2] : vector<1x8x128xf32> to vector<1xf32>
      %44 = vector.shape_cast %43 : vector<1xf32> to vector<1x1x1xf32>
      %45 = vector.extract %44[0, 0, 0] : f32 from vector<1x1x1xf32>
      %46 = arith.addf %40, %45 : f32
      %47 = arith.addf %35, %46 : f32
      %c1_26 = arith.constant 1 : index
      %48 = memref.load %arg11[%c1_26] : memref<8xf32, #tpu.memory_space<smem>>
      memref.store %47, %arg11[%c1_26] : memref<8xf32, #tpu.memory_space<smem>>
      %c2 = arith.constant 2 : index
      %49 = memref.load %arg11[%c2] : memref<8xf32, #tpu.memory_space<smem>>
      %50 = arith.mulf %23, %24 : vector<8x128xf32>
      %51 = vector.shape_cast %50 : vector<8x128xf32> to vector<1x8x128xf32>
      %cst_27 = arith.constant dense<0.000000e+00> : vector<1xf32>
      %52 = vector.multi_reduction <add>, %51, %cst_27 [1, 2] : vector<1x8x128xf32> to vector<1xf32>
      %53 = vector.shape_cast %52 : vector<1xf32> to vector<1x1x1xf32>
      %54 = vector.extract %53[0, 0, 0] : f32 from vector<1x1x1xf32>
      %55 = arith.addf %49, %54 : f32
      %c2_28 = arith.constant 2 : index
      %56 = memref.load %arg11[%c2_28] : memref<8xf32, #tpu.memory_space<smem>>
      memref.store %55, %arg11[%c2_28] : memref<8xf32, #tpu.memory_space<smem>>
      %c3 = arith.constant 3 : index
      %57 = memref.load %arg11[%c3] : memref<8xf32, #tpu.memory_space<smem>>
      %58 = arith.mulf %23, %23 : vector<8x128xf32>
      %59 = vector.shape_cast %58 : vector<8x128xf32> to vector<1x8x128xf32>
      %cst_29 = arith.constant dense<0.000000e+00> : vector<1xf32>
      %60 = vector.multi_reduction <add>, %59, %cst_29 [1, 2] : vector<1x8x128xf32> to vector<1xf32>
      %61 = vector.shape_cast %60 : vector<1xf32> to vector<1x1x1xf32>
      %62 = vector.extract %61[0, 0, 0] : f32 from vector<1x1x1xf32>
      %63 = arith.mulf %24, %24 : vector<8x128xf32>
      %64 = vector.shape_cast %63 : vector<8x128xf32> to vector<1x8x128xf32>
      %cst_30 = arith.constant dense<0.000000e+00> : vector<1xf32>
      %65 = vector.multi_reduction <add>, %64, %cst_30 [1, 2] : vector<1x8x128xf32> to vector<1xf32>
      %66 = vector.shape_cast %65 : vector<1xf32> to vector<1x1x1xf32>
      %67 = vector.extract %66[0, 0, 0] : f32 from vector<1x1x1xf32>
      %68 = arith.addf %62, %67 : f32
      %69 = arith.addf %57, %68 : f32
      %c3_31 = arith.constant 3 : index
      %70 = memref.load %arg11[%c3_31] : memref<8xf32, #tpu.memory_space<smem>>
      memref.store %69, %arg11[%c3_31] : memref<8xf32, #tpu.memory_space<smem>>
      %c7 = arith.constant 7 : index
      %71 = memref.load %arg11[%c7] : memref<8xf32, #tpu.memory_space<smem>>
      %72 = vector.shape_cast %25 : vector<8x128xf32> to vector<1x8x128xf32>
      %cst_32 = arith.constant dense<0xFF800000> : vector<1xf32>
      %73 = vector.multi_reduction <maximumf>, %72, %cst_32 [1, 2] : vector<1x8x128xf32> to vector<1xf32>
      %74 = vector.shape_cast %73 : vector<1xf32> to vector<1x1x1xf32>
      %75 = vector.extract %74[0, 0, 0] : f32 from vector<1x1x1xf32>
      %76 = arith.maximumf %71, %75 : f32
      %c7_33 = arith.constant 7 : index
      %77 = memref.load %arg11[%c7_33] : memref<8xf32, #tpu.memory_space<smem>>
      memref.store %76, %arg11[%c7_33] : memref<8xf32, #tpu.memory_space<smem>>
      %c0_34 = arith.constant 0 : index
      %c0_35 = arith.constant 0 : index
      %c0_36 = arith.constant 0 : index
      %78 = vector.load %arg8[%c0_34, %c0_35, %c0_36] : memref<4x8x128xf32, #tpu.memory_space<vmem>>, vector<1x8x128xf32>
      %79 = vector.shape_cast %78 : vector<1x8x128xf32> to vector<8x128xf32>
      %80 = arith.mulf %79, %25 : vector<8x128xf32>
      %c1_37 = arith.constant 1 : index
      %c0_38 = arith.constant 0 : index
      %c0_39 = arith.constant 0 : index
      %81 = vector.load %arg8[%c1_37, %c0_38, %c0_39] : memref<4x8x128xf32, #tpu.memory_space<vmem>>, vector<1x8x128xf32>
      %82 = vector.shape_cast %81 : vector<1x8x128xf32> to vector<8x128xf32>
      %83 = arith.mulf %82, %25 : vector<8x128xf32>
      %c2_40 = arith.constant 2 : index
      %c0_41 = arith.constant 0 : index
      %c0_42 = arith.constant 0 : index
      %84 = vector.load %arg8[%c2_40, %c0_41, %c0_42] : memref<4x8x128xf32, #tpu.memory_space<vmem>>, vector<1x8x128xf32>
      %85 = vector.shape_cast %84 : vector<1x8x128xf32> to vector<8x128xf32>
      %86 = arith.mulf %85, %25 : vector<8x128xf32>
      %c3_43 = arith.constant 3 : index
      %c0_44 = arith.constant 0 : index
      %c0_45 = arith.constant 0 : index
      %87 = vector.load %arg8[%c3_43, %c0_44, %c0_45] : memref<4x8x128xf32, #tpu.memory_space<vmem>>, vector<1x8x128xf32>
      %88 = vector.shape_cast %87 : vector<1x8x128xf32> to vector<8x128xf32>
      %89 = arith.mulf %88, %25 : vector<8x128xf32>
      %c0_i32_46 = arith.constant 0 : i32
      %c16_i32 = arith.constant 16 : i32
      %90 = arith.addi %c0_i32_46, %c16_i32 : i32
      %c1_i32_47 = arith.constant 1 : i32
      scf.for %arg12 = %c0_i32_46 to %90 step %c1_i32_47  : i32 {
        %c1_i32_49 = arith.constant 1 : i32
        %91 = arith.addi %arg12, %c1_i32_49 : i32
        %92 = arith.sitofp %91 : i32 to f32
        %93 = vector.broadcast %92 : f32 to vector<8x128xf32>
        %94 = arith.cmpf oeq, %26, %93 : vector<8x128xf32>
        %95 = arith.extui %94 : vector<8x128xi1> to vector<8x128xi32>
        %96 = arith.sitofp %95 : vector<8x128xi32> to vector<8x128xf32>
        %c0_50 = arith.constant 0 : index
        %97 = arith.index_cast %arg12 : i32 to index
        %98 = memref.load %arg10[%c0_50, %97] : memref<8x16xf32, #tpu.memory_space<smem>>
        %99 = arith.mulf %80, %96 : vector<8x128xf32>
        %100 = vector.shape_cast %99 : vector<8x128xf32> to vector<1x8x128xf32>
        %cst_51 = arith.constant dense<0.000000e+00> : vector<1xf32>
        %101 = vector.multi_reduction <add>, %100, %cst_51 [1, 2] : vector<1x8x128xf32> to vector<1xf32>
        %102 = vector.shape_cast %101 : vector<1xf32> to vector<1x1x1xf32>
        %103 = vector.extract %102[0, 0, 0] : f32 from vector<1x1x1xf32>
        %104 = arith.addf %98, %103 : f32
        %c0_52 = arith.constant 0 : index
        %105 = arith.index_cast %arg12 : i32 to index
        %106 = memref.load %arg10[%c0_52, %105] : memref<8x16xf32, #tpu.memory_space<smem>>
        memref.store %104, %arg10[%c0_52, %105] : memref<8x16xf32, #tpu.memory_space<smem>>
        %c1_53 = arith.constant 1 : index
        %107 = arith.index_cast %arg12 : i32 to index
        %108 = memref.load %arg10[%c1_53, %107] : memref<8x16xf32, #tpu.memory_space<smem>>
        %109 = arith.mulf %83, %96 : vector<8x128xf32>
        %110 = vector.shape_cast %109 : vector<8x128xf32> to vector<1x8x128xf32>
        %cst_54 = arith.constant dense<0.000000e+00> : vector<1xf32>
        %111 = vector.multi_reduction <add>, %110, %cst_54 [1, 2] : vector<1x8x128xf32> to vector<1xf32>
        %112 = vector.shape_cast %111 : vector<1xf32> to vector<1x1x1xf32>
        %113 = vector.extract %112[0, 0, 0] : f32 from vector<1x1x1xf32>
        %114 = arith.addf %108, %113 : f32
        %c1_55 = arith.constant 1 : index
        %115 = arith.index_cast %arg12 : i32 to index
        %116 = memref.load %arg10[%c1_55, %115] : memref<8x16xf32, #tpu.memory_space<smem>>
        memref.store %114, %arg10[%c1_55, %115] : memref<8x16xf32, #tpu.memory_space<smem>>
        %c2_56 = arith.constant 2 : index
        %117 = arith.index_cast %arg12 : i32 to index
        %118 = memref.load %arg10[%c2_56, %117] : memref<8x16xf32, #tpu.memory_space<smem>>
        %119 = arith.mulf %86, %96 : vector<8x128xf32>
        %120 = vector.shape_cast %119 : vector<8x128xf32> to vector<1x8x128xf32>
        %cst_57 = arith.constant dense<0.000000e+00> : vector<1xf32>
        %121 = vector.multi_reduction <add>, %120, %cst_57 [1, 2] : vector<1x8x128xf32> to vector<1xf32>
        %122 = vector.shape_cast %121 : vector<1xf32> to vector<1x1x1xf32>
        %123 = vector.extract %122[0, 0, 0] : f32 from vector<1x1x1xf32>
        %124 = arith.addf %118, %123 : f32
        %c2_58 = arith.constant 2 : index
        %125 = arith.index_cast %arg12 : i32 to index
        %126 = memref.load %arg10[%c2_58, %125] : memref<8x16xf32, #tpu.memory_space<smem>>
        memref.store %124, %arg10[%c2_58, %125] : memref<8x16xf32, #tpu.memory_space<smem>>
        %c3_59 = arith.constant 3 : index
        %127 = arith.index_cast %arg12 : i32 to index
        %128 = memref.load %arg10[%c3_59, %127] : memref<8x16xf32, #tpu.memory_space<smem>>
        %129 = arith.mulf %89, %96 : vector<8x128xf32>
        %130 = vector.shape_cast %129 : vector<8x128xf32> to vector<1x8x128xf32>
        %cst_60 = arith.constant dense<0.000000e+00> : vector<1xf32>
        %131 = vector.multi_reduction <add>, %130, %cst_60 [1, 2] : vector<1x8x128xf32> to vector<1xf32>
        %132 = vector.shape_cast %131 : vector<1xf32> to vector<1x1x1xf32>
        %133 = vector.extract %132[0, 0, 0] : f32 from vector<1x1x1xf32>
        %134 = arith.addf %128, %133 : f32
        %c3_61 = arith.constant 3 : index
        %135 = arith.index_cast %arg12 : i32 to index
        %136 = memref.load %arg10[%c3_61, %135] : memref<8x16xf32, #tpu.memory_space<smem>>
        memref.store %134, %arg10[%c3_61, %135] : memref<8x16xf32, #tpu.memory_space<smem>>
        %c4 = arith.constant 4 : index
        %137 = arith.index_cast %arg12 : i32 to index
        %138 = memref.load %arg10[%c4, %137] : memref<8x16xf32, #tpu.memory_space<smem>>
        %139 = vector.shape_cast %96 : vector<8x128xf32> to vector<1x8x128xf32>
        %cst_62 = arith.constant dense<0.000000e+00> : vector<1xf32>
        %140 = vector.multi_reduction <add>, %139, %cst_62 [1, 2] : vector<1x8x128xf32> to vector<1xf32>
        %141 = vector.shape_cast %140 : vector<1xf32> to vector<1x1x1xf32>
        %142 = vector.extract %141[0, 0, 0] : f32 from vector<1x1x1xf32>
        %143 = arith.addf %138, %142 : f32
        %c4_63 = arith.constant 4 : index
        %144 = arith.index_cast %arg12 : i32 to index
        %145 = memref.load %arg10[%c4_63, %144] : memref<8x16xf32, #tpu.memory_space<smem>>
        memref.store %143, %arg10[%c4_63, %144] : memref<8x16xf32, #tpu.memory_space<smem>>
        %c5 = arith.constant 5 : index
        %146 = arith.index_cast %arg12 : i32 to index
        %147 = memref.load %arg10[%c5, %146] : memref<8x16xf32, #tpu.memory_space<smem>>
        %148 = vector.broadcast %92 : f32 to vector<8x128xf32>
        %149 = arith.cmpf oeq, %25, %148 : vector<8x128xf32>
        %150 = arith.extui %149 : vector<8x128xi1> to vector<8x128xi32>
        %151 = arith.sitofp %150 : vector<8x128xi32> to vector<8x128xf32>
        %152 = vector.shape_cast %151 : vector<8x128xf32> to vector<1x8x128xf32>
        %cst_64 = arith.constant dense<0.000000e+00> : vector<1xf32>
        %153 = vector.multi_reduction <add>, %152, %cst_64 [1, 2] : vector<1x8x128xf32> to vector<1xf32>
        %154 = vector.shape_cast %153 : vector<1xf32> to vector<1x1x1xf32>
        %155 = vector.extract %154[0, 0, 0] : f32 from vector<1x1x1xf32>
        %156 = arith.addf %147, %155 : f32
        %c5_65 = arith.constant 5 : index
        %157 = arith.index_cast %arg12 : i32 to index
        %158 = memref.load %arg10[%c5_65, %157] : memref<8x16xf32, #tpu.memory_space<smem>>
        memref.store %156, %arg10[%c5_65, %157] : memref<8x16xf32, #tpu.memory_space<smem>>
      }
      %c16_i32_48 = arith.constant 16 : i32
    } else {
    }
    %c1_i32 = arith.constant 1 : i32
    %8 = arith.cmpi eq, %arg0, %c1_i32 : i32
    %c0_i32_4 = arith.constant 0 : i32
    %9 = arith.cmpi eq, %arg1, %c0_i32_4 : i32
    %10 = arith.andi %8, %9 : i1
    %11 = arith.extui %10 : i1 to i32
    %c0_i32_5 = arith.constant 0 : i32
    %12 = arith.cmpi ne, %11, %c0_i32_5 : i32
    scf.if %12 {
      %c7 = arith.constant 7 : index
      %21 = memref.load %arg11[%c7] : memref<8xf32, #tpu.memory_space<smem>>
      %22 = tpu.iota {dimensions = array<i32: 1>} : vector<1x128xi32>
      %23 = arith.sitofp %22 : vector<1x128xi32> to vector<1x128xf32>
      %cst = arith.constant 1.000000e+00 : f32
      %24 = vector.broadcast %cst : f32 to vector<1x128xf32>
      %25 = arith.addf %23, %24 : vector<1x128xf32>
      %26 = vector.broadcast %21 : f32 to vector<1x128xf32>
      %27 = arith.cmpf ole, %25, %26 : vector<1x128xf32>
      %c16_i32 = arith.constant 16 : i32
      %28 = vector.broadcast %c16_i32 : i32 to vector<1x128xi32>
      %29 = arith.cmpi slt, %22, %28 : vector<1x128xi32>
      %30 = arith.andi %27, %29 : vector<1x128xi1>
      %31 = arith.extui %30 : vector<1x128xi1> to vector<1x128xi32>
      %32 = arith.sitofp %31 : vector<1x128xi32> to vector<1x128xf32>
      %cst_11 = arith.constant 0.000000e+00 : f32
      %33 = vector.broadcast %cst_11 : f32 to vector<1x128xf32>
      %cst_12 = arith.constant 0.000000e+00 : f32
      %34 = vector.broadcast %cst_12 : f32 to vector<1x128xf32>
      %cst_13 = arith.constant 0.000000e+00 : f32
      %35 = vector.broadcast %cst_13 : f32 to vector<1x128xf32>
      %cst_14 = arith.constant 0.000000e+00 : f32
      %36 = vector.broadcast %cst_14 : f32 to vector<1x128xf32>
      %cst_15 = arith.constant 1.000000e+00 : f32
      %37 = arith.cmpf ole, %cst_15, %21 : f32
      %38 = arith.extui %37 : i1 to i32
      %39 = arith.sitofp %38 : i32 to f32
      %c4 = arith.constant 4 : index
      %c0 = arith.constant 0 : index
      %40 = memref.load %arg10[%c4, %c0] : memref<8x16xf32, #tpu.memory_space<smem>>
      %c5 = arith.constant 5 : index
      %c0_16 = arith.constant 0 : index
      %41 = memref.load %arg10[%c5, %c0_16] : memref<8x16xf32, #tpu.memory_space<smem>>
      %cst_17 = arith.constant 5.000000e-01 : f32
      %42 = arith.cmpf olt, %40, %cst_17 : f32
      %43 = arith.extui %42 : i1 to i32
      %44 = arith.sitofp %43 : i32 to f32
      %45 = arith.addf %40, %44 : f32
      %cst_18 = arith.constant 5.000000e-01 : f32
      %46 = arith.cmpf olt, %41, %cst_18 : f32
      %47 = arith.extui %46 : i1 to i32
      %48 = arith.sitofp %47 : i32 to f32
      %49 = arith.addf %41, %48 : f32
      %cst_19 = arith.constant 1.000000e+00 : f32
      %50 = vector.broadcast %cst_19 : f32 to vector<1x1xf32>
      %51 = vector.broadcast %45 : f32 to vector<1x1xf32>
      %52 = arith.divf %50, %51 : vector<1x1xf32>
      %53 = vector.shape_cast %52 : vector<1x1xf32> to vector<1x1x1xf32>
      %cst_20 = arith.constant dense<0.000000e+00> : vector<1xf32>
      %54 = vector.multi_reduction <add>, %53, %cst_20 [1, 2] : vector<1x1x1xf32> to vector<1xf32>
      %55 = vector.shape_cast %54 : vector<1xf32> to vector<1x1x1xf32>
      %56 = vector.extract %55[0, 0, 0] : f32 from vector<1x1x1xf32>
      %cst_21 = arith.constant 1.000000e+00 : f32
      %57 = vector.broadcast %cst_21 : f32 to vector<1x1xf32>
      %58 = vector.broadcast %49 : f32 to vector<1x1xf32>
      %59 = arith.divf %57, %58 : vector<1x1xf32>
      %60 = vector.shape_cast %59 : vector<1x1xf32> to vector<1x1x1xf32>
      %cst_22 = arith.constant dense<0.000000e+00> : vector<1xf32>
      %61 = vector.multi_reduction <add>, %60, %cst_22 [1, 2] : vector<1x1x1xf32> to vector<1xf32>
      %62 = vector.shape_cast %61 : vector<1xf32> to vector<1x1x1xf32>
      %63 = vector.extract %62[0, 0, 0] : f32 from vector<1x1x1xf32>
      %64 = arith.mulf %39, %63 : f32
      %c0_23 = arith.constant 0 : index
      %c0_24 = arith.constant 0 : index
      %65 = memref.load %arg10[%c0_23, %c0_24] : memref<8x16xf32, #tpu.memory_space<smem>>
      %66 = arith.mulf %65, %56 : f32
      %c1 = arith.constant 1 : index
      %c0_25 = arith.constant 0 : index
      %67 = memref.load %arg10[%c1, %c0_25] : memref<8x16xf32, #tpu.memory_space<smem>>
      %68 = arith.mulf %67, %56 : f32
      %c2 = arith.constant 2 : index
      %c0_26 = arith.constant 0 : index
      %69 = memref.load %arg10[%c2, %c0_26] : memref<8x16xf32, #tpu.memory_space<smem>>
      %70 = arith.mulf %69, %56 : f32
      %c3 = arith.constant 3 : index
      %c0_27 = arith.constant 0 : index
      %71 = memref.load %arg10[%c3, %c0_27] : memref<8x16xf32, #tpu.memory_space<smem>>
      %72 = arith.mulf %71, %56 : f32
      %c0_28 = arith.constant 0 : index
      %c0_29 = arith.constant 0 : index
      %73 = memref.load %arg10[%c0_28, %c0_29] : memref<8x16xf32, #tpu.memory_space<smem>>
      memref.store %66, %arg10[%c0_28, %c0_29] : memref<8x16xf32, #tpu.memory_space<smem>>
      %c1_30 = arith.constant 1 : index
      %c0_31 = arith.constant 0 : index
      %74 = memref.load %arg10[%c1_30, %c0_31] : memref<8x16xf32, #tpu.memory_space<smem>>
      memref.store %68, %arg10[%c1_30, %c0_31] : memref<8x16xf32, #tpu.memory_space<smem>>
      %c2_32 = arith.constant 2 : index
      %c0_33 = arith.constant 0 : index
      %75 = memref.load %arg10[%c2_32, %c0_33] : memref<8x16xf32, #tpu.memory_space<smem>>
      memref.store %70, %arg10[%c2_32, %c0_33] : memref<8x16xf32, #tpu.memory_space<smem>>
      %c3_34 = arith.constant 3 : index
      %c0_35 = arith.constant 0 : index
      %76 = memref.load %arg10[%c3_34, %c0_35] : memref<8x16xf32, #tpu.memory_space<smem>>
      memref.store %72, %arg10[%c3_34, %c0_35] : memref<8x16xf32, #tpu.memory_space<smem>>
      %c6 = arith.constant 6 : index
      %c0_36 = arith.constant 0 : index
      %77 = memref.load %arg10[%c6, %c0_36] : memref<8x16xf32, #tpu.memory_space<smem>>
      memref.store %64, %arg10[%c6, %c0_36] : memref<8x16xf32, #tpu.memory_space<smem>>
      %78 = arith.mulf %66, %66 : f32
      %79 = arith.mulf %68, %68 : f32
      %80 = arith.addf %78, %79 : f32
      %81 = arith.mulf %70, %70 : f32
      %82 = arith.addf %80, %81 : f32
      %83 = arith.mulf %72, %72 : f32
      %84 = arith.addf %82, %83 : f32
      %85 = math.sqrt %84 : f32
      %cst_37 = arith.constant 5.000000e-01 : f32
      %86 = arith.subf %85, %cst_37 : f32
      %cst_38 = arith.constant 0.000000e+00 : f32
      %87 = arith.maximumf %86, %cst_38 : f32
      %cst_39 = arith.constant 2.560000e+02 : f32
      %88 = arith.subf %cst_39, %41 : f32
      %89 = arith.mulf %87, %87 : f32
      %90 = vector.broadcast %89 : f32 to vector<1x1xf32>
      %cst_40 = arith.constant 1.000000e+00 : f32
      %91 = vector.broadcast %cst_40 : f32 to vector<1x1xf32>
      %92 = arith.addf %90, %91 : vector<1x1xf32>
      %93 = math.log %92 : vector<1x1xf32>
      %94 = vector.shape_cast %93 : vector<1x1xf32> to vector<1x1x1xf32>
      %cst_41 = arith.constant dense<0.000000e+00> : vector<1xf32>
      %95 = vector.multi_reduction <add>, %94, %cst_41 [1, 2] : vector<1x1x1xf32> to vector<1xf32>
      %96 = vector.shape_cast %95 : vector<1xf32> to vector<1x1x1xf32>
      %97 = vector.extract %96[0, 0, 0] : f32 from vector<1x1x1xf32>
      %98 = arith.mulf %88, %97 : f32
      %99 = arith.mulf %98, %64 : f32
      %cst_42 = arith.constant 0.000000e+00 : f32
      %100 = arith.addf %cst_42, %99 : f32
      %c0_i32_43 = arith.constant 0 : i32
      %101 = vector.broadcast %c0_i32_43 : i32 to vector<1x128xi32>
      %102 = arith.cmpi eq, %22, %101 : vector<1x128xi32>
      %103 = vector.broadcast %66 : f32 to vector<1x128xf32>
      %104 = arith.select %102, %103, %33 : vector<1x128xi1>, vector<1x128xf32>
      %105 = vector.broadcast %68 : f32 to vector<1x128xf32>
      %106 = arith.select %102, %105, %34 : vector<1x128xi1>, vector<1x128xf32>
      %107 = vector.broadcast %70 : f32 to vector<1x128xf32>
      %108 = arith.select %102, %107, %35 : vector<1x128xi1>, vector<1x128xf32>
      %109 = vector.broadcast %72 : f32 to vector<1x128xf32>
      %110 = arith.select %102, %109, %36 : vector<1x128xi1>, vector<1x128xf32>
      %cst_44 = arith.constant 2.000000e+00 : f32
      %111 = arith.cmpf ole, %cst_44, %21 : f32
      %112 = arith.extui %111 : i1 to i32
      %113 = arith.sitofp %112 : i32 to f32
      %c4_45 = arith.constant 4 : index
      %c1_46 = arith.constant 1 : index
      %114 = memref.load %arg10[%c4_45, %c1_46] : memref<8x16xf32, #tpu.memory_space<smem>>
      %c5_47 = arith.constant 5 : index
      %c1_48 = arith.constant 1 : index
      %115 = memref.load %arg10[%c5_47, %c1_48] : memref<8x16xf32, #tpu.memory_space<smem>>
      %cst_49 = arith.constant 5.000000e-01 : f32
      %116 = arith.cmpf olt, %114, %cst_49 : f32
      %117 = arith.extui %116 : i1 to i32
      %118 = arith.sitofp %117 : i32 to f32
      %119 = arith.addf %114, %118 : f32
      %cst_50 = arith.constant 5.000000e-01 : f32
      %120 = arith.cmpf olt, %115, %cst_50 : f32
      %121 = arith.extui %120 : i1 to i32
      %122 = arith.sitofp %121 : i32 to f32
      %123 = arith.addf %115, %122 : f32
      %cst_51 = arith.constant 1.000000e+00 : f32
      %124 = vector.broadcast %cst_51 : f32 to vector<1x1xf32>
      %125 = vector.broadcast %119 : f32 to vector<1x1xf32>
      %126 = arith.divf %124, %125 : vector<1x1xf32>
      %127 = vector.shape_cast %126 : vector<1x1xf32> to vector<1x1x1xf32>
      %cst_52 = arith.constant dense<0.000000e+00> : vector<1xf32>
      %128 = vector.multi_reduction <add>, %127, %cst_52 [1, 2] : vector<1x1x1xf32> to vector<1xf32>
      %129 = vector.shape_cast %128 : vector<1xf32> to vector<1x1x1xf32>
      %130 = vector.extract %129[0, 0, 0] : f32 from vector<1x1x1xf32>
      %cst_53 = arith.constant 1.000000e+00 : f32
      %131 = vector.broadcast %cst_53 : f32 to vector<1x1xf32>
      %132 = vector.broadcast %123 : f32 to vector<1x1xf32>
      %133 = arith.divf %131, %132 : vector<1x1xf32>
      %134 = vector.shape_cast %133 : vector<1x1xf32> to vector<1x1x1xf32>
      %cst_54 = arith.constant dense<0.000000e+00> : vector<1xf32>
      %135 = vector.multi_reduction <add>, %134, %cst_54 [1, 2] : vector<1x1x1xf32> to vector<1xf32>
      %136 = vector.shape_cast %135 : vector<1xf32> to vector<1x1x1xf32>
      %137 = vector.extract %136[0, 0, 0] : f32 from vector<1x1x1xf32>
      %138 = arith.mulf %113, %137 : f32
      %c0_55 = arith.constant 0 : index
      %c1_56 = arith.constant 1 : index
      %139 = memref.load %arg10[%c0_55, %c1_56] : memref<8x16xf32, #tpu.memory_space<smem>>
      %140 = arith.mulf %139, %130 : f32
      %c1_57 = arith.constant 1 : index
      %c1_58 = arith.constant 1 : index
      %141 = memref.load %arg10[%c1_57, %c1_58] : memref<8x16xf32, #tpu.memory_space<smem>>
      %142 = arith.mulf %141, %130 : f32
      %c2_59 = arith.constant 2 : index
      %c1_60 = arith.constant 1 : index
      %143 = memref.load %arg10[%c2_59, %c1_60] : memref<8x16xf32, #tpu.memory_space<smem>>
      %144 = arith.mulf %143, %130 : f32
      %c3_61 = arith.constant 3 : index
      %c1_62 = arith.constant 1 : index
      %145 = memref.load %arg10[%c3_61, %c1_62] : memref<8x16xf32, #tpu.memory_space<smem>>
      %146 = arith.mulf %145, %130 : f32
      %c0_63 = arith.constant 0 : index
      %c1_64 = arith.constant 1 : index
      %147 = memref.load %arg10[%c0_63, %c1_64] : memref<8x16xf32, #tpu.memory_space<smem>>
      memref.store %140, %arg10[%c0_63, %c1_64] : memref<8x16xf32, #tpu.memory_space<smem>>
      %c1_65 = arith.constant 1 : index
      %c1_66 = arith.constant 1 : index
      %148 = memref.load %arg10[%c1_65, %c1_66] : memref<8x16xf32, #tpu.memory_space<smem>>
      memref.store %142, %arg10[%c1_65, %c1_66] : memref<8x16xf32, #tpu.memory_space<smem>>
      %c2_67 = arith.constant 2 : index
      %c1_68 = arith.constant 1 : index
      %149 = memref.load %arg10[%c2_67, %c1_68] : memref<8x16xf32, #tpu.memory_space<smem>>
      memref.store %144, %arg10[%c2_67, %c1_68] : memref<8x16xf32, #tpu.memory_space<smem>>
      %c3_69 = arith.constant 3 : index
      %c1_70 = arith.constant 1 : index
      %150 = memref.load %arg10[%c3_69, %c1_70] : memref<8x16xf32, #tpu.memory_space<smem>>
      memref.store %146, %arg10[%c3_69, %c1_70] : memref<8x16xf32, #tpu.memory_space<smem>>
      %c6_71 = arith.constant 6 : index
      %c1_72 = arith.constant 1 : index
      %151 = memref.load %arg10[%c6_71, %c1_72] : memref<8x16xf32, #tpu.memory_space<smem>>
      memref.store %138, %arg10[%c6_71, %c1_72] : memref<8x16xf32, #tpu.memory_space<smem>>
      %152 = arith.mulf %140, %140 : f32
      %153 = arith.mulf %142, %142 : f32
      %154 = arith.addf %152, %153 : f32
      %155 = arith.mulf %144, %144 : f32
      %156 = arith.addf %154, %155 : f32
      %157 = arith.mulf %146, %146 : f32
      %158 = arith.addf %156, %157 : f32
      %159 = math.sqrt %158 : f32
      %cst_73 = arith.constant 5.000000e-01 : f32
      %160 = arith.subf %159, %cst_73 : f32
      %cst_74 = arith.constant 0.000000e+00 : f32
      %161 = arith.maximumf %160, %cst_74 : f32
      %cst_75 = arith.constant 2.560000e+02 : f32
      %162 = arith.subf %cst_75, %115 : f32
      %163 = arith.mulf %161, %161 : f32
      %164 = vector.broadcast %163 : f32 to vector<1x1xf32>
      %cst_76 = arith.constant 1.000000e+00 : f32
      %165 = vector.broadcast %cst_76 : f32 to vector<1x1xf32>
      %166 = arith.addf %164, %165 : vector<1x1xf32>
      %167 = math.log %166 : vector<1x1xf32>
      %168 = vector.shape_cast %167 : vector<1x1xf32> to vector<1x1x1xf32>
      %cst_77 = arith.constant dense<0.000000e+00> : vector<1xf32>
      %169 = vector.multi_reduction <add>, %168, %cst_77 [1, 2] : vector<1x1x1xf32> to vector<1xf32>
      %170 = vector.shape_cast %169 : vector<1xf32> to vector<1x1x1xf32>
      %171 = vector.extract %170[0, 0, 0] : f32 from vector<1x1x1xf32>
      %172 = arith.mulf %162, %171 : f32
      %173 = arith.mulf %172, %138 : f32
      %174 = arith.addf %100, %173 : f32
      %c1_i32_78 = arith.constant 1 : i32
      %175 = vector.broadcast %c1_i32_78 : i32 to vector<1x128xi32>
      %176 = arith.cmpi eq, %22, %175 : vector<1x128xi32>
      %177 = vector.broadcast %140 : f32 to vector<1x128xf32>
      %178 = arith.select %176, %177, %104 : vector<1x128xi1>, vector<1x128xf32>
      %179 = vector.broadcast %142 : f32 to vector<1x128xf32>
      %180 = arith.select %176, %179, %106 : vector<1x128xi1>, vector<1x128xf32>
      %181 = vector.broadcast %144 : f32 to vector<1x128xf32>
      %182 = arith.select %176, %181, %108 : vector<1x128xi1>, vector<1x128xf32>
      %183 = vector.broadcast %146 : f32 to vector<1x128xf32>
      %184 = arith.select %176, %183, %110 : vector<1x128xi1>, vector<1x128xf32>
      %cst_79 = arith.constant 3.000000e+00 : f32
      %185 = arith.cmpf ole, %cst_79, %21 : f32
      %186 = arith.extui %185 : i1 to i32
      %187 = arith.sitofp %186 : i32 to f32
      %c4_80 = arith.constant 4 : index
      %c2_81 = arith.constant 2 : index
      %188 = memref.load %arg10[%c4_80, %c2_81] : memref<8x16xf32, #tpu.memory_space<smem>>
      %c5_82 = arith.constant 5 : index
      %c2_83 = arith.constant 2 : index
      %189 = memref.load %arg10[%c5_82, %c2_83] : memref<8x16xf32, #tpu.memory_space<smem>>
      %cst_84 = arith.constant 5.000000e-01 : f32
      %190 = arith.cmpf olt, %188, %cst_84 : f32
      %191 = arith.extui %190 : i1 to i32
      %192 = arith.sitofp %191 : i32 to f32
      %193 = arith.addf %188, %192 : f32
      %cst_85 = arith.constant 5.000000e-01 : f32
      %194 = arith.cmpf olt, %189, %cst_85 : f32
      %195 = arith.extui %194 : i1 to i32
      %196 = arith.sitofp %195 : i32 to f32
      %197 = arith.addf %189, %196 : f32
      %cst_86 = arith.constant 1.000000e+00 : f32
      %198 = vector.broadcast %cst_86 : f32 to vector<1x1xf32>
      %199 = vector.broadcast %193 : f32 to vector<1x1xf32>
      %200 = arith.divf %198, %199 : vector<1x1xf32>
      %201 = vector.shape_cast %200 : vector<1x1xf32> to vector<1x1x1xf32>
      %cst_87 = arith.constant dense<0.000000e+00> : vector<1xf32>
      %202 = vector.multi_reduction <add>, %201, %cst_87 [1, 2] : vector<1x1x1xf32> to vector<1xf32>
      %203 = vector.shape_cast %202 : vector<1xf32> to vector<1x1x1xf32>
      %204 = vector.extract %203[0, 0, 0] : f32 from vector<1x1x1xf32>
      %cst_88 = arith.constant 1.000000e+00 : f32
      %205 = vector.broadcast %cst_88 : f32 to vector<1x1xf32>
      %206 = vector.broadcast %197 : f32 to vector<1x1xf32>
      %207 = arith.divf %205, %206 : vector<1x1xf32>
      %208 = vector.shape_cast %207 : vector<1x1xf32> to vector<1x1x1xf32>
      %cst_89 = arith.constant dense<0.000000e+00> : vector<1xf32>
      %209 = vector.multi_reduction <add>, %208, %cst_89 [1, 2] : vector<1x1x1xf32> to vector<1xf32>
      %210 = vector.shape_cast %209 : vector<1xf32> to vector<1x1x1xf32>
      %211 = vector.extract %210[0, 0, 0] : f32 from vector<1x1x1xf32>
      %212 = arith.mulf %187, %211 : f32
      %c0_90 = arith.constant 0 : index
      %c2_91 = arith.constant 2 : index
      %213 = memref.load %arg10[%c0_90, %c2_91] : memref<8x16xf32, #tpu.memory_space<smem>>
      %214 = arith.mulf %213, %204 : f32
      %c1_92 = arith.constant 1 : index
      %c2_93 = arith.constant 2 : index
      %215 = memref.load %arg10[%c1_92, %c2_93] : memref<8x16xf32, #tpu.memory_space<smem>>
      %216 = arith.mulf %215, %204 : f32
      %c2_94 = arith.constant 2 : index
      %c2_95 = arith.constant 2 : index
      %217 = memref.load %arg10[%c2_94, %c2_95] : memref<8x16xf32, #tpu.memory_space<smem>>
      %218 = arith.mulf %217, %204 : f32
      %c3_96 = arith.constant 3 : index
      %c2_97 = arith.constant 2 : index
      %219 = memref.load %arg10[%c3_96, %c2_97] : memref<8x16xf32, #tpu.memory_space<smem>>
      %220 = arith.mulf %219, %204 : f32
      %c0_98 = arith.constant 0 : index
      %c2_99 = arith.constant 2 : index
      %221 = memref.load %arg10[%c0_98, %c2_99] : memref<8x16xf32, #tpu.memory_space<smem>>
      memref.store %214, %arg10[%c0_98, %c2_99] : memref<8x16xf32, #tpu.memory_space<smem>>
      %c1_100 = arith.constant 1 : index
      %c2_101 = arith.constant 2 : index
      %222 = memref.load %arg10[%c1_100, %c2_101] : memref<8x16xf32, #tpu.memory_space<smem>>
      memref.store %216, %arg10[%c1_100, %c2_101] : memref<8x16xf32, #tpu.memory_space<smem>>
      %c2_102 = arith.constant 2 : index
      %c2_103 = arith.constant 2 : index
      %223 = memref.load %arg10[%c2_102, %c2_103] : memref<8x16xf32, #tpu.memory_space<smem>>
      memref.store %218, %arg10[%c2_102, %c2_103] : memref<8x16xf32, #tpu.memory_space<smem>>
      %c3_104 = arith.constant 3 : index
      %c2_105 = arith.constant 2 : index
      %224 = memref.load %arg10[%c3_104, %c2_105] : memref<8x16xf32, #tpu.memory_space<smem>>
      memref.store %220, %arg10[%c3_104, %c2_105] : memref<8x16xf32, #tpu.memory_space<smem>>
      %c6_106 = arith.constant 6 : index
      %c2_107 = arith.constant 2 : index
      %225 = memref.load %arg10[%c6_106, %c2_107] : memref<8x16xf32, #tpu.memory_space<smem>>
      memref.store %212, %arg10[%c6_106, %c2_107] : memref<8x16xf32, #tpu.memory_space<smem>>
      %226 = arith.mulf %214, %214 : f32
      %227 = arith.mulf %216, %216 : f32
      %228 = arith.addf %226, %227 : f32
      %229 = arith.mulf %218, %218 : f32
      %230 = arith.addf %228, %229 : f32
      %231 = arith.mulf %220, %220 : f32
      %232 = arith.addf %230, %231 : f32
      %233 = math.sqrt %232 : f32
      %cst_108 = arith.constant 5.000000e-01 : f32
      %234 = arith.subf %233, %cst_108 : f32
      %cst_109 = arith.constant 0.000000e+00 : f32
      %235 = arith.maximumf %234, %cst_109 : f32
      %cst_110 = arith.constant 2.560000e+02 : f32
      %236 = arith.subf %cst_110, %189 : f32
      %237 = arith.mulf %235, %235 : f32
      %238 = vector.broadcast %237 : f32 to vector<1x1xf32>
      %cst_111 = arith.constant 1.000000e+00 : f32
      %239 = vector.broadcast %cst_111 : f32 to vector<1x1xf32>
      %240 = arith.addf %238, %239 : vector<1x1xf32>
      %241 = math.log %240 : vector<1x1xf32>
      %242 = vector.shape_cast %241 : vector<1x1xf32> to vector<1x1x1xf32>
      %cst_112 = arith.constant dense<0.000000e+00> : vector<1xf32>
      %243 = vector.multi_reduction <add>, %242, %cst_112 [1, 2] : vector<1x1x1xf32> to vector<1xf32>
      %244 = vector.shape_cast %243 : vector<1xf32> to vector<1x1x1xf32>
      %245 = vector.extract %244[0, 0, 0] : f32 from vector<1x1x1xf32>
      %246 = arith.mulf %236, %245 : f32
      %247 = arith.mulf %246, %212 : f32
      %248 = arith.addf %174, %247 : f32
      %c2_i32 = arith.constant 2 : i32
      %249 = vector.broadcast %c2_i32 : i32 to vector<1x128xi32>
      %250 = arith.cmpi eq, %22, %249 : vector<1x128xi32>
      %251 = vector.broadcast %214 : f32 to vector<1x128xf32>
      %252 = arith.select %250, %251, %178 : vector<1x128xi1>, vector<1x128xf32>
      %253 = vector.broadcast %216 : f32 to vector<1x128xf32>
      %254 = arith.select %250, %253, %180 : vector<1x128xi1>, vector<1x128xf32>
      %255 = vector.broadcast %218 : f32 to vector<1x128xf32>
      %256 = arith.select %250, %255, %182 : vector<1x128xi1>, vector<1x128xf32>
      %257 = vector.broadcast %220 : f32 to vector<1x128xf32>
      %258 = arith.select %250, %257, %184 : vector<1x128xi1>, vector<1x128xf32>
      %cst_113 = arith.constant 4.000000e+00 : f32
      %259 = arith.cmpf ole, %cst_113, %21 : f32
      %260 = arith.extui %259 : i1 to i32
      %261 = arith.sitofp %260 : i32 to f32
      %c4_114 = arith.constant 4 : index
      %c3_115 = arith.constant 3 : index
      %262 = memref.load %arg10[%c4_114, %c3_115] : memref<8x16xf32, #tpu.memory_space<smem>>
      %c5_116 = arith.constant 5 : index
      %c3_117 = arith.constant 3 : index
      %263 = memref.load %arg10[%c5_116, %c3_117] : memref<8x16xf32, #tpu.memory_space<smem>>
      %cst_118 = arith.constant 5.000000e-01 : f32
      %264 = arith.cmpf olt, %262, %cst_118 : f32
      %265 = arith.extui %264 : i1 to i32
      %266 = arith.sitofp %265 : i32 to f32
      %267 = arith.addf %262, %266 : f32
      %cst_119 = arith.constant 5.000000e-01 : f32
      %268 = arith.cmpf olt, %263, %cst_119 : f32
      %269 = arith.extui %268 : i1 to i32
      %270 = arith.sitofp %269 : i32 to f32
      %271 = arith.addf %263, %270 : f32
      %cst_120 = arith.constant 1.000000e+00 : f32
      %272 = vector.broadcast %cst_120 : f32 to vector<1x1xf32>
      %273 = vector.broadcast %267 : f32 to vector<1x1xf32>
      %274 = arith.divf %272, %273 : vector<1x1xf32>
      %275 = vector.shape_cast %274 : vector<1x1xf32> to vector<1x1x1xf32>
      %cst_121 = arith.constant dense<0.000000e+00> : vector<1xf32>
      %276 = vector.multi_reduction <add>, %275, %cst_121 [1, 2] : vector<1x1x1xf32> to vector<1xf32>
      %277 = vector.shape_cast %276 : vector<1xf32> to vector<1x1x1xf32>
      %278 = vector.extract %277[0, 0, 0] : f32 from vector<1x1x1xf32>
      %cst_122 = arith.constant 1.000000e+00 : f32
      %279 = vector.broadcast %cst_122 : f32 to vector<1x1xf32>
      %280 = vector.broadcast %271 : f32 to vector<1x1xf32>
      %281 = arith.divf %279, %280 : vector<1x1xf32>
      %282 = vector.shape_cast %281 : vector<1x1xf32> to vector<1x1x1xf32>
      %cst_123 = arith.constant dense<0.000000e+00> : vector<1xf32>
      %283 = vector.multi_reduction <add>, %282, %cst_123 [1, 2] : vector<1x1x1xf32> to vector<1xf32>
      %284 = vector.shape_cast %283 : vector<1xf32> to vector<1x1x1xf32>
      %285 = vector.extract %284[0, 0, 0] : f32 from vector<1x1x1xf32>
      %286 = arith.mulf %261, %285 : f32
      %c0_124 = arith.constant 0 : index
      %c3_125 = arith.constant 3 : index
      %287 = memref.load %arg10[%c0_124, %c3_125] : memref<8x16xf32, #tpu.memory_space<smem>>
      %288 = arith.mulf %287, %278 : f32
      %c1_126 = arith.constant 1 : index
      %c3_127 = arith.constant 3 : index
      %289 = memref.load %arg10[%c1_126, %c3_127] : memref<8x16xf32, #tpu.memory_space<smem>>
      %290 = arith.mulf %289, %278 : f32
      %c2_128 = arith.constant 2 : index
      %c3_129 = arith.constant 3 : index
      %291 = memref.load %arg10[%c2_128, %c3_129] : memref<8x16xf32, #tpu.memory_space<smem>>
      %292 = arith.mulf %291, %278 : f32
      %c3_130 = arith.constant 3 : index
      %c3_131 = arith.constant 3 : index
      %293 = memref.load %arg10[%c3_130, %c3_131] : memref<8x16xf32, #tpu.memory_space<smem>>
      %294 = arith.mulf %293, %278 : f32
      %c0_132 = arith.constant 0 : index
      %c3_133 = arith.constant 3 : index
      %295 = memref.load %arg10[%c0_132, %c3_133] : memref<8x16xf32, #tpu.memory_space<smem>>
      memref.store %288, %arg10[%c0_132, %c3_133] : memref<8x16xf32, #tpu.memory_space<smem>>
      %c1_134 = arith.constant 1 : index
      %c3_135 = arith.constant 3 : index
      %296 = memref.load %arg10[%c1_134, %c3_135] : memref<8x16xf32, #tpu.memory_space<smem>>
      memref.store %290, %arg10[%c1_134, %c3_135] : memref<8x16xf32, #tpu.memory_space<smem>>
      %c2_136 = arith.constant 2 : index
      %c3_137 = arith.constant 3 : index
      %297 = memref.load %arg10[%c2_136, %c3_137] : memref<8x16xf32, #tpu.memory_space<smem>>
      memref.store %292, %arg10[%c2_136, %c3_137] : memref<8x16xf32, #tpu.memory_space<smem>>
      %c3_138 = arith.constant 3 : index
      %c3_139 = arith.constant 3 : index
      %298 = memref.load %arg10[%c3_138, %c3_139] : memref<8x16xf32, #tpu.memory_space<smem>>
      memref.store %294, %arg10[%c3_138, %c3_139] : memref<8x16xf32, #tpu.memory_space<smem>>
      %c6_140 = arith.constant 6 : index
      %c3_141 = arith.constant 3 : index
      %299 = memref.load %arg10[%c6_140, %c3_141] : memref<8x16xf32, #tpu.memory_space<smem>>
      memref.store %286, %arg10[%c6_140, %c3_141] : memref<8x16xf32, #tpu.memory_space<smem>>
      %300 = arith.mulf %288, %288 : f32
      %301 = arith.mulf %290, %290 : f32
      %302 = arith.addf %300, %301 : f32
      %303 = arith.mulf %292, %292 : f32
      %304 = arith.addf %302, %303 : f32
      %305 = arith.mulf %294, %294 : f32
      %306 = arith.addf %304, %305 : f32
      %307 = math.sqrt %306 : f32
      %cst_142 = arith.constant 5.000000e-01 : f32
      %308 = arith.subf %307, %cst_142 : f32
      %cst_143 = arith.constant 0.000000e+00 : f32
      %309 = arith.maximumf %308, %cst_143 : f32
      %cst_144 = arith.constant 2.560000e+02 : f32
      %310 = arith.subf %cst_144, %263 : f32
      %311 = arith.mulf %309, %309 : f32
      %312 = vector.broadcast %311 : f32 to vector<1x1xf32>
      %cst_145 = arith.constant 1.000000e+00 : f32
      %313 = vector.broadcast %cst_145 : f32 to vector<1x1xf32>
      %314 = arith.addf %312, %313 : vector<1x1xf32>
      %315 = math.log %314 : vector<1x1xf32>
      %316 = vector.shape_cast %315 : vector<1x1xf32> to vector<1x1x1xf32>
      %cst_146 = arith.constant dense<0.000000e+00> : vector<1xf32>
      %317 = vector.multi_reduction <add>, %316, %cst_146 [1, 2] : vector<1x1x1xf32> to vector<1xf32>
      %318 = vector.shape_cast %317 : vector<1xf32> to vector<1x1x1xf32>
      %319 = vector.extract %318[0, 0, 0] : f32 from vector<1x1x1xf32>
      %320 = arith.mulf %310, %319 : f32
      %321 = arith.mulf %320, %286 : f32
      %322 = arith.addf %248, %321 : f32
      %c3_i32 = arith.constant 3 : i32
      %323 = vector.broadcast %c3_i32 : i32 to vector<1x128xi32>
      %324 = arith.cmpi eq, %22, %323 : vector<1x128xi32>
      %325 = vector.broadcast %288 : f32 to vector<1x128xf32>
      %326 = arith.select %324, %325, %252 : vector<1x128xi1>, vector<1x128xf32>
      %327 = vector.broadcast %290 : f32 to vector<1x128xf32>
      %328 = arith.select %324, %327, %254 : vector<1x128xi1>, vector<1x128xf32>
      %329 = vector.broadcast %292 : f32 to vector<1x128xf32>
      %330 = arith.select %324, %329, %256 : vector<1x128xi1>, vector<1x128xf32>
      %331 = vector.broadcast %294 : f32 to vector<1x128xf32>
      %332 = arith.select %324, %331, %258 : vector<1x128xi1>, vector<1x128xf32>
      %cst_147 = arith.constant 5.000000e+00 : f32
      %333 = arith.cmpf ole, %cst_147, %21 : f32
      %334 = arith.extui %333 : i1 to i32
      %335 = arith.sitofp %334 : i32 to f32
      %c4_148 = arith.constant 4 : index
      %c4_149 = arith.constant 4 : index
      %336 = memref.load %arg10[%c4_148, %c4_149] : memref<8x16xf32, #tpu.memory_space<smem>>
      %c5_150 = arith.constant 5 : index
      %c4_151 = arith.constant 4 : index
      %337 = memref.load %arg10[%c5_150, %c4_151] : memref<8x16xf32, #tpu.memory_space<smem>>
      %cst_152 = arith.constant 5.000000e-01 : f32
      %338 = arith.cmpf olt, %336, %cst_152 : f32
      %339 = arith.extui %338 : i1 to i32
      %340 = arith.sitofp %339 : i32 to f32
      %341 = arith.addf %336, %340 : f32
      %cst_153 = arith.constant 5.000000e-01 : f32
      %342 = arith.cmpf olt, %337, %cst_153 : f32
      %343 = arith.extui %342 : i1 to i32
      %344 = arith.sitofp %343 : i32 to f32
      %345 = arith.addf %337, %344 : f32
      %cst_154 = arith.constant 1.000000e+00 : f32
      %346 = vector.broadcast %cst_154 : f32 to vector<1x1xf32>
      %347 = vector.broadcast %341 : f32 to vector<1x1xf32>
      %348 = arith.divf %346, %347 : vector<1x1xf32>
      %349 = vector.shape_cast %348 : vector<1x1xf32> to vector<1x1x1xf32>
      %cst_155 = arith.constant dense<0.000000e+00> : vector<1xf32>
      %350 = vector.multi_reduction <add>, %349, %cst_155 [1, 2] : vector<1x1x1xf32> to vector<1xf32>
      %351 = vector.shape_cast %350 : vector<1xf32> to vector<1x1x1xf32>
      %352 = vector.extract %351[0, 0, 0] : f32 from vector<1x1x1xf32>
      %cst_156 = arith.constant 1.000000e+00 : f32
      %353 = vector.broadcast %cst_156 : f32 to vector<1x1xf32>
      %354 = vector.broadcast %345 : f32 to vector<1x1xf32>
      %355 = arith.divf %353, %354 : vector<1x1xf32>
      %356 = vector.shape_cast %355 : vector<1x1xf32> to vector<1x1x1xf32>
      %cst_157 = arith.constant dense<0.000000e+00> : vector<1xf32>
      %357 = vector.multi_reduction <add>, %356, %cst_157 [1, 2] : vector<1x1x1xf32> to vector<1xf32>
      %358 = vector.shape_cast %357 : vector<1xf32> to vector<1x1x1xf32>
      %359 = vector.extract %358[0, 0, 0] : f32 from vector<1x1x1xf32>
      %360 = arith.mulf %335, %359 : f32
      %c0_158 = arith.constant 0 : index
      %c4_159 = arith.constant 4 : index
      %361 = memref.load %arg10[%c0_158, %c4_159] : memref<8x16xf32, #tpu.memory_space<smem>>
      %362 = arith.mulf %361, %352 : f32
      %c1_160 = arith.constant 1 : index
      %c4_161 = arith.constant 4 : index
      %363 = memref.load %arg10[%c1_160, %c4_161] : memref<8x16xf32, #tpu.memory_space<smem>>
      %364 = arith.mulf %363, %352 : f32
      %c2_162 = arith.constant 2 : index
      %c4_163 = arith.constant 4 : index
      %365 = memref.load %arg10[%c2_162, %c4_163] : memref<8x16xf32, #tpu.memory_space<smem>>
      %366 = arith.mulf %365, %352 : f32
      %c3_164 = arith.constant 3 : index
      %c4_165 = arith.constant 4 : index
      %367 = memref.load %arg10[%c3_164, %c4_165] : memref<8x16xf32, #tpu.memory_space<smem>>
      %368 = arith.mulf %367, %352 : f32
      %c0_166 = arith.constant 0 : index
      %c4_167 = arith.constant 4 : index
      %369 = memref.load %arg10[%c0_166, %c4_167] : memref<8x16xf32, #tpu.memory_space<smem>>
      memref.store %362, %arg10[%c0_166, %c4_167] : memref<8x16xf32, #tpu.memory_space<smem>>
      %c1_168 = arith.constant 1 : index
      %c4_169 = arith.constant 4 : index
      %370 = memref.load %arg10[%c1_168, %c4_169] : memref<8x16xf32, #tpu.memory_space<smem>>
      memref.store %364, %arg10[%c1_168, %c4_169] : memref<8x16xf32, #tpu.memory_space<smem>>
      %c2_170 = arith.constant 2 : index
      %c4_171 = arith.constant 4 : index
      %371 = memref.load %arg10[%c2_170, %c4_171] : memref<8x16xf32, #tpu.memory_space<smem>>
      memref.store %366, %arg10[%c2_170, %c4_171] : memref<8x16xf32, #tpu.memory_space<smem>>
      %c3_172 = arith.constant 3 : index
      %c4_173 = arith.constant 4 : index
      %372 = memref.load %arg10[%c3_172, %c4_173] : memref<8x16xf32, #tpu.memory_space<smem>>
      memref.store %368, %arg10[%c3_172, %c4_173] : memref<8x16xf32, #tpu.memory_space<smem>>
      %c6_174 = arith.constant 6 : index
      %c4_175 = arith.constant 4 : index
      %373 = memref.load %arg10[%c6_174, %c4_175] : memref<8x16xf32, #tpu.memory_space<smem>>
      memref.store %360, %arg10[%c6_174, %c4_175] : memref<8x16xf32, #tpu.memory_space<smem>>
      %374 = arith.mulf %362, %362 : f32
      %375 = arith.mulf %364, %364 : f32
      %376 = arith.addf %374, %375 : f32
      %377 = arith.mulf %366, %366 : f32
      %378 = arith.addf %376, %377 : f32
      %379 = arith.mulf %368, %368 : f32
      %380 = arith.addf %378, %379 : f32
      %381 = math.sqrt %380 : f32
      %cst_176 = arith.constant 5.000000e-01 : f32
      %382 = arith.subf %381, %cst_176 : f32
      %cst_177 = arith.constant 0.000000e+00 : f32
      %383 = arith.maximumf %382, %cst_177 : f32
      %cst_178 = arith.constant 2.560000e+02 : f32
      %384 = arith.subf %cst_178, %337 : f32
      %385 = arith.mulf %383, %383 : f32
      %386 = vector.broadcast %385 : f32 to vector<1x1xf32>
      %cst_179 = arith.constant 1.000000e+00 : f32
      %387 = vector.broadcast %cst_179 : f32 to vector<1x1xf32>
      %388 = arith.addf %386, %387 : vector<1x1xf32>
      %389 = math.log %388 : vector<1x1xf32>
      %390 = vector.shape_cast %389 : vector<1x1xf32> to vector<1x1x1xf32>
      %cst_180 = arith.constant dense<0.000000e+00> : vector<1xf32>
      %391 = vector.multi_reduction <add>, %390, %cst_180 [1, 2] : vector<1x1x1xf32> to vector<1xf32>
      %392 = vector.shape_cast %391 : vector<1xf32> to vector<1x1x1xf32>
      %393 = vector.extract %392[0, 0, 0] : f32 from vector<1x1x1xf32>
      %394 = arith.mulf %384, %393 : f32
      %395 = arith.mulf %394, %360 : f32
      %396 = arith.addf %322, %395 : f32
      %c4_i32 = arith.constant 4 : i32
      %397 = vector.broadcast %c4_i32 : i32 to vector<1x128xi32>
      %398 = arith.cmpi eq, %22, %397 : vector<1x128xi32>
      %399 = vector.broadcast %362 : f32 to vector<1x128xf32>
      %400 = arith.select %398, %399, %326 : vector<1x128xi1>, vector<1x128xf32>
      %401 = vector.broadcast %364 : f32 to vector<1x128xf32>
      %402 = arith.select %398, %401, %328 : vector<1x128xi1>, vector<1x128xf32>
      %403 = vector.broadcast %366 : f32 to vector<1x128xf32>
      %404 = arith.select %398, %403, %330 : vector<1x128xi1>, vector<1x128xf32>
      %405 = vector.broadcast %368 : f32 to vector<1x128xf32>
      %406 = arith.select %398, %405, %332 : vector<1x128xi1>, vector<1x128xf32>
      %cst_181 = arith.constant 6.000000e+00 : f32
      %407 = arith.cmpf ole, %cst_181, %21 : f32
      %408 = arith.extui %407 : i1 to i32
      %409 = arith.sitofp %408 : i32 to f32
      %c4_182 = arith.constant 4 : index
      %c5_183 = arith.constant 5 : index
      %410 = memref.load %arg10[%c4_182, %c5_183] : memref<8x16xf32, #tpu.memory_space<smem>>
      %c5_184 = arith.constant 5 : index
      %c5_185 = arith.constant 5 : index
      %411 = memref.load %arg10[%c5_184, %c5_185] : memref<8x16xf32, #tpu.memory_space<smem>>
      %cst_186 = arith.constant 5.000000e-01 : f32
      %412 = arith.cmpf olt, %410, %cst_186 : f32
      %413 = arith.extui %412 : i1 to i32
      %414 = arith.sitofp %413 : i32 to f32
      %415 = arith.addf %410, %414 : f32
      %cst_187 = arith.constant 5.000000e-01 : f32
      %416 = arith.cmpf olt, %411, %cst_187 : f32
      %417 = arith.extui %416 : i1 to i32
      %418 = arith.sitofp %417 : i32 to f32
      %419 = arith.addf %411, %418 : f32
      %cst_188 = arith.constant 1.000000e+00 : f32
      %420 = vector.broadcast %cst_188 : f32 to vector<1x1xf32>
      %421 = vector.broadcast %415 : f32 to vector<1x1xf32>
      %422 = arith.divf %420, %421 : vector<1x1xf32>
      %423 = vector.shape_cast %422 : vector<1x1xf32> to vector<1x1x1xf32>
      %cst_189 = arith.constant dense<0.000000e+00> : vector<1xf32>
      %424 = vector.multi_reduction <add>, %423, %cst_189 [1, 2] : vector<1x1x1xf32> to vector<1xf32>
      %425 = vector.shape_cast %424 : vector<1xf32> to vector<1x1x1xf32>
      %426 = vector.extract %425[0, 0, 0] : f32 from vector<1x1x1xf32>
      %cst_190 = arith.constant 1.000000e+00 : f32
      %427 = vector.broadcast %cst_190 : f32 to vector<1x1xf32>
      %428 = vector.broadcast %419 : f32 to vector<1x1xf32>
      %429 = arith.divf %427, %428 : vector<1x1xf32>
      %430 = vector.shape_cast %429 : vector<1x1xf32> to vector<1x1x1xf32>
      %cst_191 = arith.constant dense<0.000000e+00> : vector<1xf32>
      %431 = vector.multi_reduction <add>, %430, %cst_191 [1, 2] : vector<1x1x1xf32> to vector<1xf32>
      %432 = vector.shape_cast %431 : vector<1xf32> to vector<1x1x1xf32>
      %433 = vector.extract %432[0, 0, 0] : f32 from vector<1x1x1xf32>
      %434 = arith.mulf %409, %433 : f32
      %c0_192 = arith.constant 0 : index
      %c5_193 = arith.constant 5 : index
      %435 = memref.load %arg10[%c0_192, %c5_193] : memref<8x16xf32, #tpu.memory_space<smem>>
      %436 = arith.mulf %435, %426 : f32
      %c1_194 = arith.constant 1 : index
      %c5_195 = arith.constant 5 : index
      %437 = memref.load %arg10[%c1_194, %c5_195] : memref<8x16xf32, #tpu.memory_space<smem>>
      %438 = arith.mulf %437, %426 : f32
      %c2_196 = arith.constant 2 : index
      %c5_197 = arith.constant 5 : index
      %439 = memref.load %arg10[%c2_196, %c5_197] : memref<8x16xf32, #tpu.memory_space<smem>>
      %440 = arith.mulf %439, %426 : f32
      %c3_198 = arith.constant 3 : index
      %c5_199 = arith.constant 5 : index
      %441 = memref.load %arg10[%c3_198, %c5_199] : memref<8x16xf32, #tpu.memory_space<smem>>
      %442 = arith.mulf %441, %426 : f32
      %c0_200 = arith.constant 0 : index
      %c5_201 = arith.constant 5 : index
      %443 = memref.load %arg10[%c0_200, %c5_201] : memref<8x16xf32, #tpu.memory_space<smem>>
      memref.store %436, %arg10[%c0_200, %c5_201] : memref<8x16xf32, #tpu.memory_space<smem>>
      %c1_202 = arith.constant 1 : index
      %c5_203 = arith.constant 5 : index
      %444 = memref.load %arg10[%c1_202, %c5_203] : memref<8x16xf32, #tpu.memory_space<smem>>
      memref.store %438, %arg10[%c1_202, %c5_203] : memref<8x16xf32, #tpu.memory_space<smem>>
      %c2_204 = arith.constant 2 : index
      %c5_205 = arith.constant 5 : index
      %445 = memref.load %arg10[%c2_204, %c5_205] : memref<8x16xf32, #tpu.memory_space<smem>>
      memref.store %440, %arg10[%c2_204, %c5_205] : memref<8x16xf32, #tpu.memory_space<smem>>
      %c3_206 = arith.constant 3 : index
      %c5_207 = arith.constant 5 : index
      %446 = memref.load %arg10[%c3_206, %c5_207] : memref<8x16xf32, #tpu.memory_space<smem>>
      memref.store %442, %arg10[%c3_206, %c5_207] : memref<8x16xf32, #tpu.memory_space<smem>>
      %c6_208 = arith.constant 6 : index
      %c5_209 = arith.constant 5 : index
      %447 = memref.load %arg10[%c6_208, %c5_209] : memref<8x16xf32, #tpu.memory_space<smem>>
      memref.store %434, %arg10[%c6_208, %c5_209] : memref<8x16xf32, #tpu.memory_space<smem>>
      %448 = arith.mulf %436, %436 : f32
      %449 = arith.mulf %438, %438 : f32
      %450 = arith.addf %448, %449 : f32
      %451 = arith.mulf %440, %440 : f32
      %452 = arith.addf %450, %451 : f32
      %453 = arith.mulf %442, %442 : f32
      %454 = arith.addf %452, %453 : f32
      %455 = math.sqrt %454 : f32
      %cst_210 = arith.constant 5.000000e-01 : f32
      %456 = arith.subf %455, %cst_210 : f32
      %cst_211 = arith.constant 0.000000e+00 : f32
      %457 = arith.maximumf %456, %cst_211 : f32
      %cst_212 = arith.constant 2.560000e+02 : f32
      %458 = arith.subf %cst_212, %411 : f32
      %459 = arith.mulf %457, %457 : f32
      %460 = vector.broadcast %459 : f32 to vector<1x1xf32>
      %cst_213 = arith.constant 1.000000e+00 : f32
      %461 = vector.broadcast %cst_213 : f32 to vector<1x1xf32>
      %462 = arith.addf %460, %461 : vector<1x1xf32>
      %463 = math.log %462 : vector<1x1xf32>
      %464 = vector.shape_cast %463 : vector<1x1xf32> to vector<1x1x1xf32>
      %cst_214 = arith.constant dense<0.000000e+00> : vector<1xf32>
      %465 = vector.multi_reduction <add>, %464, %cst_214 [1, 2] : vector<1x1x1xf32> to vector<1xf32>
      %466 = vector.shape_cast %465 : vector<1xf32> to vector<1x1x1xf32>
      %467 = vector.extract %466[0, 0, 0] : f32 from vector<1x1x1xf32>
      %468 = arith.mulf %458, %467 : f32
      %469 = arith.mulf %468, %434 : f32
      %470 = arith.addf %396, %469 : f32
      %c5_i32 = arith.constant 5 : i32
      %471 = vector.broadcast %c5_i32 : i32 to vector<1x128xi32>
      %472 = arith.cmpi eq, %22, %471 : vector<1x128xi32>
      %473 = vector.broadcast %436 : f32 to vector<1x128xf32>
      %474 = arith.select %472, %473, %400 : vector<1x128xi1>, vector<1x128xf32>
      %475 = vector.broadcast %438 : f32 to vector<1x128xf32>
      %476 = arith.select %472, %475, %402 : vector<1x128xi1>, vector<1x128xf32>
      %477 = vector.broadcast %440 : f32 to vector<1x128xf32>
      %478 = arith.select %472, %477, %404 : vector<1x128xi1>, vector<1x128xf32>
      %479 = vector.broadcast %442 : f32 to vector<1x128xf32>
      %480 = arith.select %472, %479, %406 : vector<1x128xi1>, vector<1x128xf32>
      %cst_215 = arith.constant 7.000000e+00 : f32
      %481 = arith.cmpf ole, %cst_215, %21 : f32
      %482 = arith.extui %481 : i1 to i32
      %483 = arith.sitofp %482 : i32 to f32
      %c4_216 = arith.constant 4 : index
      %c6_217 = arith.constant 6 : index
      %484 = memref.load %arg10[%c4_216, %c6_217] : memref<8x16xf32, #tpu.memory_space<smem>>
      %c5_218 = arith.constant 5 : index
      %c6_219 = arith.constant 6 : index
      %485 = memref.load %arg10[%c5_218, %c6_219] : memref<8x16xf32, #tpu.memory_space<smem>>
      %cst_220 = arith.constant 5.000000e-01 : f32
      %486 = arith.cmpf olt, %484, %cst_220 : f32
      %487 = arith.extui %486 : i1 to i32
      %488 = arith.sitofp %487 : i32 to f32
      %489 = arith.addf %484, %488 : f32
      %cst_221 = arith.constant 5.000000e-01 : f32
      %490 = arith.cmpf olt, %485, %cst_221 : f32
      %491 = arith.extui %490 : i1 to i32
      %492 = arith.sitofp %491 : i32 to f32
      %493 = arith.addf %485, %492 : f32
      %cst_222 = arith.constant 1.000000e+00 : f32
      %494 = vector.broadcast %cst_222 : f32 to vector<1x1xf32>
      %495 = vector.broadcast %489 : f32 to vector<1x1xf32>
      %496 = arith.divf %494, %495 : vector<1x1xf32>
      %497 = vector.shape_cast %496 : vector<1x1xf32> to vector<1x1x1xf32>
      %cst_223 = arith.constant dense<0.000000e+00> : vector<1xf32>
      %498 = vector.multi_reduction <add>, %497, %cst_223 [1, 2] : vector<1x1x1xf32> to vector<1xf32>
      %499 = vector.shape_cast %498 : vector<1xf32> to vector<1x1x1xf32>
      %500 = vector.extract %499[0, 0, 0] : f32 from vector<1x1x1xf32>
      %cst_224 = arith.constant 1.000000e+00 : f32
      %501 = vector.broadcast %cst_224 : f32 to vector<1x1xf32>
      %502 = vector.broadcast %493 : f32 to vector<1x1xf32>
      %503 = arith.divf %501, %502 : vector<1x1xf32>
      %504 = vector.shape_cast %503 : vector<1x1xf32> to vector<1x1x1xf32>
      %cst_225 = arith.constant dense<0.000000e+00> : vector<1xf32>
      %505 = vector.multi_reduction <add>, %504, %cst_225 [1, 2] : vector<1x1x1xf32> to vector<1xf32>
      %506 = vector.shape_cast %505 : vector<1xf32> to vector<1x1x1xf32>
      %507 = vector.extract %506[0, 0, 0] : f32 from vector<1x1x1xf32>
      %508 = arith.mulf %483, %507 : f32
      %c0_226 = arith.constant 0 : index
      %c6_227 = arith.constant 6 : index
      %509 = memref.load %arg10[%c0_226, %c6_227] : memref<8x16xf32, #tpu.memory_space<smem>>
      %510 = arith.mulf %509, %500 : f32
      %c1_228 = arith.constant 1 : index
      %c6_229 = arith.constant 6 : index
      %511 = memref.load %arg10[%c1_228, %c6_229] : memref<8x16xf32, #tpu.memory_space<smem>>
      %512 = arith.mulf %511, %500 : f32
      %c2_230 = arith.constant 2 : index
      %c6_231 = arith.constant 6 : index
      %513 = memref.load %arg10[%c2_230, %c6_231] : memref<8x16xf32, #tpu.memory_space<smem>>
      %514 = arith.mulf %513, %500 : f32
      %c3_232 = arith.constant 3 : index
      %c6_233 = arith.constant 6 : index
      %515 = memref.load %arg10[%c3_232, %c6_233] : memref<8x16xf32, #tpu.memory_space<smem>>
      %516 = arith.mulf %515, %500 : f32
      %c0_234 = arith.constant 0 : index
      %c6_235 = arith.constant 6 : index
      %517 = memref.load %arg10[%c0_234, %c6_235] : memref<8x16xf32, #tpu.memory_space<smem>>
      memref.store %510, %arg10[%c0_234, %c6_235] : memref<8x16xf32, #tpu.memory_space<smem>>
      %c1_236 = arith.constant 1 : index
      %c6_237 = arith.constant 6 : index
      %518 = memref.load %arg10[%c1_236, %c6_237] : memref<8x16xf32, #tpu.memory_space<smem>>
      memref.store %512, %arg10[%c1_236, %c6_237] : memref<8x16xf32, #tpu.memory_space<smem>>
      %c2_238 = arith.constant 2 : index
      %c6_239 = arith.constant 6 : index
      %519 = memref.load %arg10[%c2_238, %c6_239] : memref<8x16xf32, #tpu.memory_space<smem>>
      memref.store %514, %arg10[%c2_238, %c6_239] : memref<8x16xf32, #tpu.memory_space<smem>>
      %c3_240 = arith.constant 3 : index
      %c6_241 = arith.constant 6 : index
      %520 = memref.load %arg10[%c3_240, %c6_241] : memref<8x16xf32, #tpu.memory_space<smem>>
      memref.store %516, %arg10[%c3_240, %c6_241] : memref<8x16xf32, #tpu.memory_space<smem>>
      %c6_242 = arith.constant 6 : index
      %c6_243 = arith.constant 6 : index
      %521 = memref.load %arg10[%c6_242, %c6_243] : memref<8x16xf32, #tpu.memory_space<smem>>
      memref.store %508, %arg10[%c6_242, %c6_243] : memref<8x16xf32, #tpu.memory_space<smem>>
      %522 = arith.mulf %510, %510 : f32
      %523 = arith.mulf %512, %512 : f32
      %524 = arith.addf %522, %523 : f32
      %525 = arith.mulf %514, %514 : f32
      %526 = arith.addf %524, %525 : f32
      %527 = arith.mulf %516, %516 : f32
      %528 = arith.addf %526, %527 : f32
      %529 = math.sqrt %528 : f32
      %cst_244 = arith.constant 5.000000e-01 : f32
      %530 = arith.subf %529, %cst_244 : f32
      %cst_245 = arith.constant 0.000000e+00 : f32
      %531 = arith.maximumf %530, %cst_245 : f32
      %cst_246 = arith.constant 2.560000e+02 : f32
      %532 = arith.subf %cst_246, %485 : f32
      %533 = arith.mulf %531, %531 : f32
      %534 = vector.broadcast %533 : f32 to vector<1x1xf32>
      %cst_247 = arith.constant 1.000000e+00 : f32
      %535 = vector.broadcast %cst_247 : f32 to vector<1x1xf32>
      %536 = arith.addf %534, %535 : vector<1x1xf32>
      %537 = math.log %536 : vector<1x1xf32>
      %538 = vector.shape_cast %537 : vector<1x1xf32> to vector<1x1x1xf32>
      %cst_248 = arith.constant dense<0.000000e+00> : vector<1xf32>
      %539 = vector.multi_reduction <add>, %538, %cst_248 [1, 2] : vector<1x1x1xf32> to vector<1xf32>
      %540 = vector.shape_cast %539 : vector<1xf32> to vector<1x1x1xf32>
      %541 = vector.extract %540[0, 0, 0] : f32 from vector<1x1x1xf32>
      %542 = arith.mulf %532, %541 : f32
      %543 = arith.mulf %542, %508 : f32
      %544 = arith.addf %470, %543 : f32
      %c6_i32 = arith.constant 6 : i32
      %545 = vector.broadcast %c6_i32 : i32 to vector<1x128xi32>
      %546 = arith.cmpi eq, %22, %545 : vector<1x128xi32>
      %547 = vector.broadcast %510 : f32 to vector<1x128xf32>
      %548 = arith.select %546, %547, %474 : vector<1x128xi1>, vector<1x128xf32>
      %549 = vector.broadcast %512 : f32 to vector<1x128xf32>
      %550 = arith.select %546, %549, %476 : vector<1x128xi1>, vector<1x128xf32>
      %551 = vector.broadcast %514 : f32 to vector<1x128xf32>
      %552 = arith.select %546, %551, %478 : vector<1x128xi1>, vector<1x128xf32>
      %553 = vector.broadcast %516 : f32 to vector<1x128xf32>
      %554 = arith.select %546, %553, %480 : vector<1x128xi1>, vector<1x128xf32>
      %cst_249 = arith.constant 8.000000e+00 : f32
      %555 = arith.cmpf ole, %cst_249, %21 : f32
      %556 = arith.extui %555 : i1 to i32
      %557 = arith.sitofp %556 : i32 to f32
      %c4_250 = arith.constant 4 : index
      %c7_251 = arith.constant 7 : index
      %558 = memref.load %arg10[%c4_250, %c7_251] : memref<8x16xf32, #tpu.memory_space<smem>>
      %c5_252 = arith.constant 5 : index
      %c7_253 = arith.constant 7 : index
      %559 = memref.load %arg10[%c5_252, %c7_253] : memref<8x16xf32, #tpu.memory_space<smem>>
      %cst_254 = arith.constant 5.000000e-01 : f32
      %560 = arith.cmpf olt, %558, %cst_254 : f32
      %561 = arith.extui %560 : i1 to i32
      %562 = arith.sitofp %561 : i32 to f32
      %563 = arith.addf %558, %562 : f32
      %cst_255 = arith.constant 5.000000e-01 : f32
      %564 = arith.cmpf olt, %559, %cst_255 : f32
      %565 = arith.extui %564 : i1 to i32
      %566 = arith.sitofp %565 : i32 to f32
      %567 = arith.addf %559, %566 : f32
      %cst_256 = arith.constant 1.000000e+00 : f32
      %568 = vector.broadcast %cst_256 : f32 to vector<1x1xf32>
      %569 = vector.broadcast %563 : f32 to vector<1x1xf32>
      %570 = arith.divf %568, %569 : vector<1x1xf32>
      %571 = vector.shape_cast %570 : vector<1x1xf32> to vector<1x1x1xf32>
      %cst_257 = arith.constant dense<0.000000e+00> : vector<1xf32>
      %572 = vector.multi_reduction <add>, %571, %cst_257 [1, 2] : vector<1x1x1xf32> to vector<1xf32>
      %573 = vector.shape_cast %572 : vector<1xf32> to vector<1x1x1xf32>
      %574 = vector.extract %573[0, 0, 0] : f32 from vector<1x1x1xf32>
      %cst_258 = arith.constant 1.000000e+00 : f32
      %575 = vector.broadcast %cst_258 : f32 to vector<1x1xf32>
      %576 = vector.broadcast %567 : f32 to vector<1x1xf32>
      %577 = arith.divf %575, %576 : vector<1x1xf32>
      %578 = vector.shape_cast %577 : vector<1x1xf32> to vector<1x1x1xf32>
      %cst_259 = arith.constant dense<0.000000e+00> : vector<1xf32>
      %579 = vector.multi_reduction <add>, %578, %cst_259 [1, 2] : vector<1x1x1xf32> to vector<1xf32>
      %580 = vector.shape_cast %579 : vector<1xf32> to vector<1x1x1xf32>
      %581 = vector.extract %580[0, 0, 0] : f32 from vector<1x1x1xf32>
      %582 = arith.mulf %557, %581 : f32
      %c0_260 = arith.constant 0 : index
      %c7_261 = arith.constant 7 : index
      %583 = memref.load %arg10[%c0_260, %c7_261] : memref<8x16xf32, #tpu.memory_space<smem>>
      %584 = arith.mulf %583, %574 : f32
      %c1_262 = arith.constant 1 : index
      %c7_263 = arith.constant 7 : index
      %585 = memref.load %arg10[%c1_262, %c7_263] : memref<8x16xf32, #tpu.memory_space<smem>>
      %586 = arith.mulf %585, %574 : f32
      %c2_264 = arith.constant 2 : index
      %c7_265 = arith.constant 7 : index
      %587 = memref.load %arg10[%c2_264, %c7_265] : memref<8x16xf32, #tpu.memory_space<smem>>
      %588 = arith.mulf %587, %574 : f32
      %c3_266 = arith.constant 3 : index
      %c7_267 = arith.constant 7 : index
      %589 = memref.load %arg10[%c3_266, %c7_267] : memref<8x16xf32, #tpu.memory_space<smem>>
      %590 = arith.mulf %589, %574 : f32
      %c0_268 = arith.constant 0 : index
      %c7_269 = arith.constant 7 : index
      %591 = memref.load %arg10[%c0_268, %c7_269] : memref<8x16xf32, #tpu.memory_space<smem>>
      memref.store %584, %arg10[%c0_268, %c7_269] : memref<8x16xf32, #tpu.memory_space<smem>>
      %c1_270 = arith.constant 1 : index
      %c7_271 = arith.constant 7 : index
      %592 = memref.load %arg10[%c1_270, %c7_271] : memref<8x16xf32, #tpu.memory_space<smem>>
      memref.store %586, %arg10[%c1_270, %c7_271] : memref<8x16xf32, #tpu.memory_space<smem>>
      %c2_272 = arith.constant 2 : index
      %c7_273 = arith.constant 7 : index
      %593 = memref.load %arg10[%c2_272, %c7_273] : memref<8x16xf32, #tpu.memory_space<smem>>
      memref.store %588, %arg10[%c2_272, %c7_273] : memref<8x16xf32, #tpu.memory_space<smem>>
      %c3_274 = arith.constant 3 : index
      %c7_275 = arith.constant 7 : index
      %594 = memref.load %arg10[%c3_274, %c7_275] : memref<8x16xf32, #tpu.memory_space<smem>>
      memref.store %590, %arg10[%c3_274, %c7_275] : memref<8x16xf32, #tpu.memory_space<smem>>
      %c6_276 = arith.constant 6 : index
      %c7_277 = arith.constant 7 : index
      %595 = memref.load %arg10[%c6_276, %c7_277] : memref<8x16xf32, #tpu.memory_space<smem>>
      memref.store %582, %arg10[%c6_276, %c7_277] : memref<8x16xf32, #tpu.memory_space<smem>>
      %596 = arith.mulf %584, %584 : f32
      %597 = arith.mulf %586, %586 : f32
      %598 = arith.addf %596, %597 : f32
      %599 = arith.mulf %588, %588 : f32
      %600 = arith.addf %598, %599 : f32
      %601 = arith.mulf %590, %590 : f32
      %602 = arith.addf %600, %601 : f32
      %603 = math.sqrt %602 : f32
      %cst_278 = arith.constant 5.000000e-01 : f32
      %604 = arith.subf %603, %cst_278 : f32
      %cst_279 = arith.constant 0.000000e+00 : f32
      %605 = arith.maximumf %604, %cst_279 : f32
      %cst_280 = arith.constant 2.560000e+02 : f32
      %606 = arith.subf %cst_280, %559 : f32
      %607 = arith.mulf %605, %605 : f32
      %608 = vector.broadcast %607 : f32 to vector<1x1xf32>
      %cst_281 = arith.constant 1.000000e+00 : f32
      %609 = vector.broadcast %cst_281 : f32 to vector<1x1xf32>
      %610 = arith.addf %608, %609 : vector<1x1xf32>
      %611 = math.log %610 : vector<1x1xf32>
      %612 = vector.shape_cast %611 : vector<1x1xf32> to vector<1x1x1xf32>
      %cst_282 = arith.constant dense<0.000000e+00> : vector<1xf32>
      %613 = vector.multi_reduction <add>, %612, %cst_282 [1, 2] : vector<1x1x1xf32> to vector<1xf32>
      %614 = vector.shape_cast %613 : vector<1xf32> to vector<1x1x1xf32>
      %615 = vector.extract %614[0, 0, 0] : f32 from vector<1x1x1xf32>
      %616 = arith.mulf %606, %615 : f32
      %617 = arith.mulf %616, %582 : f32
      %618 = arith.addf %544, %617 : f32
      %c7_i32 = arith.constant 7 : i32
      %619 = vector.broadcast %c7_i32 : i32 to vector<1x128xi32>
      %620 = arith.cmpi eq, %22, %619 : vector<1x128xi32>
      %621 = vector.broadcast %584 : f32 to vector<1x128xf32>
      %622 = arith.select %620, %621, %548 : vector<1x128xi1>, vector<1x128xf32>
      %623 = vector.broadcast %586 : f32 to vector<1x128xf32>
      %624 = arith.select %620, %623, %550 : vector<1x128xi1>, vector<1x128xf32>
      %625 = vector.broadcast %588 : f32 to vector<1x128xf32>
      %626 = arith.select %620, %625, %552 : vector<1x128xi1>, vector<1x128xf32>
      %627 = vector.broadcast %590 : f32 to vector<1x128xf32>
      %628 = arith.select %620, %627, %554 : vector<1x128xi1>, vector<1x128xf32>
      %cst_283 = arith.constant 9.000000e+00 : f32
      %629 = arith.cmpf ole, %cst_283, %21 : f32
      %630 = arith.extui %629 : i1 to i32
      %631 = arith.sitofp %630 : i32 to f32
      %c4_284 = arith.constant 4 : index
      %c8 = arith.constant 8 : index
      %632 = memref.load %arg10[%c4_284, %c8] : memref<8x16xf32, #tpu.memory_space<smem>>
      %c5_285 = arith.constant 5 : index
      %c8_286 = arith.constant 8 : index
      %633 = memref.load %arg10[%c5_285, %c8_286] : memref<8x16xf32, #tpu.memory_space<smem>>
      %cst_287 = arith.constant 5.000000e-01 : f32
      %634 = arith.cmpf olt, %632, %cst_287 : f32
      %635 = arith.extui %634 : i1 to i32
      %636 = arith.sitofp %635 : i32 to f32
      %637 = arith.addf %632, %636 : f32
      %cst_288 = arith.constant 5.000000e-01 : f32
      %638 = arith.cmpf olt, %633, %cst_288 : f32
      %639 = arith.extui %638 : i1 to i32
      %640 = arith.sitofp %639 : i32 to f32
      %641 = arith.addf %633, %640 : f32
      %cst_289 = arith.constant 1.000000e+00 : f32
      %642 = vector.broadcast %cst_289 : f32 to vector<1x1xf32>
      %643 = vector.broadcast %637 : f32 to vector<1x1xf32>
      %644 = arith.divf %642, %643 : vector<1x1xf32>
      %645 = vector.shape_cast %644 : vector<1x1xf32> to vector<1x1x1xf32>
      %cst_290 = arith.constant dense<0.000000e+00> : vector<1xf32>
      %646 = vector.multi_reduction <add>, %645, %cst_290 [1, 2] : vector<1x1x1xf32> to vector<1xf32>
      %647 = vector.shape_cast %646 : vector<1xf32> to vector<1x1x1xf32>
      %648 = vector.extract %647[0, 0, 0] : f32 from vector<1x1x1xf32>
      %cst_291 = arith.constant 1.000000e+00 : f32
      %649 = vector.broadcast %cst_291 : f32 to vector<1x1xf32>
      %650 = vector.broadcast %641 : f32 to vector<1x1xf32>
      %651 = arith.divf %649, %650 : vector<1x1xf32>
      %652 = vector.shape_cast %651 : vector<1x1xf32> to vector<1x1x1xf32>
      %cst_292 = arith.constant dense<0.000000e+00> : vector<1xf32>
      %653 = vector.multi_reduction <add>, %652, %cst_292 [1, 2] : vector<1x1x1xf32> to vector<1xf32>
      %654 = vector.shape_cast %653 : vector<1xf32> to vector<1x1x1xf32>
      %655 = vector.extract %654[0, 0, 0] : f32 from vector<1x1x1xf32>
      %656 = arith.mulf %631, %655 : f32
      %c0_293 = arith.constant 0 : index
      %c8_294 = arith.constant 8 : index
      %657 = memref.load %arg10[%c0_293, %c8_294] : memref<8x16xf32, #tpu.memory_space<smem>>
      %658 = arith.mulf %657, %648 : f32
      %c1_295 = arith.constant 1 : index
      %c8_296 = arith.constant 8 : index
      %659 = memref.load %arg10[%c1_295, %c8_296] : memref<8x16xf32, #tpu.memory_space<smem>>
      %660 = arith.mulf %659, %648 : f32
      %c2_297 = arith.constant 2 : index
      %c8_298 = arith.constant 8 : index
      %661 = memref.load %arg10[%c2_297, %c8_298] : memref<8x16xf32, #tpu.memory_space<smem>>
      %662 = arith.mulf %661, %648 : f32
      %c3_299 = arith.constant 3 : index
      %c8_300 = arith.constant 8 : index
      %663 = memref.load %arg10[%c3_299, %c8_300] : memref<8x16xf32, #tpu.memory_space<smem>>
      %664 = arith.mulf %663, %648 : f32
      %c0_301 = arith.constant 0 : index
      %c8_302 = arith.constant 8 : index
      %665 = memref.load %arg10[%c0_301, %c8_302] : memref<8x16xf32, #tpu.memory_space<smem>>
      memref.store %658, %arg10[%c0_301, %c8_302] : memref<8x16xf32, #tpu.memory_space<smem>>
      %c1_303 = arith.constant 1 : index
      %c8_304 = arith.constant 8 : index
      %666 = memref.load %arg10[%c1_303, %c8_304] : memref<8x16xf32, #tpu.memory_space<smem>>
      memref.store %660, %arg10[%c1_303, %c8_304] : memref<8x16xf32, #tpu.memory_space<smem>>
      %c2_305 = arith.constant 2 : index
      %c8_306 = arith.constant 8 : index
      %667 = memref.load %arg10[%c2_305, %c8_306] : memref<8x16xf32, #tpu.memory_space<smem>>
      memref.store %662, %arg10[%c2_305, %c8_306] : memref<8x16xf32, #tpu.memory_space<smem>>
      %c3_307 = arith.constant 3 : index
      %c8_308 = arith.constant 8 : index
      %668 = memref.load %arg10[%c3_307, %c8_308] : memref<8x16xf32, #tpu.memory_space<smem>>
      memref.store %664, %arg10[%c3_307, %c8_308] : memref<8x16xf32, #tpu.memory_space<smem>>
      %c6_309 = arith.constant 6 : index
      %c8_310 = arith.constant 8 : index
      %669 = memref.load %arg10[%c6_309, %c8_310] : memref<8x16xf32, #tpu.memory_space<smem>>
      memref.store %656, %arg10[%c6_309, %c8_310] : memref<8x16xf32, #tpu.memory_space<smem>>
      %670 = arith.mulf %658, %658 : f32
      %671 = arith.mulf %660, %660 : f32
      %672 = arith.addf %670, %671 : f32
      %673 = arith.mulf %662, %662 : f32
      %674 = arith.addf %672, %673 : f32
      %675 = arith.mulf %664, %664 : f32
      %676 = arith.addf %674, %675 : f32
      %677 = math.sqrt %676 : f32
      %cst_311 = arith.constant 5.000000e-01 : f32
      %678 = arith.subf %677, %cst_311 : f32
      %cst_312 = arith.constant 0.000000e+00 : f32
      %679 = arith.maximumf %678, %cst_312 : f32
      %cst_313 = arith.constant 2.560000e+02 : f32
      %680 = arith.subf %cst_313, %633 : f32
      %681 = arith.mulf %679, %679 : f32
      %682 = vector.broadcast %681 : f32 to vector<1x1xf32>
      %cst_314 = arith.constant 1.000000e+00 : f32
      %683 = vector.broadcast %cst_314 : f32 to vector<1x1xf32>
      %684 = arith.addf %682, %683 : vector<1x1xf32>
      %685 = math.log %684 : vector<1x1xf32>
      %686 = vector.shape_cast %685 : vector<1x1xf32> to vector<1x1x1xf32>
      %cst_315 = arith.constant dense<0.000000e+00> : vector<1xf32>
      %687 = vector.multi_reduction <add>, %686, %cst_315 [1, 2] : vector<1x1x1xf32> to vector<1xf32>
      %688 = vector.shape_cast %687 : vector<1xf32> to vector<1x1x1xf32>
      %689 = vector.extract %688[0, 0, 0] : f32 from vector<1x1x1xf32>
      %690 = arith.mulf %680, %689 : f32
      %691 = arith.mulf %690, %656 : f32
      %692 = arith.addf %618, %691 : f32
      %c8_i32 = arith.constant 8 : i32
      %693 = vector.broadcast %c8_i32 : i32 to vector<1x128xi32>
      %694 = arith.cmpi eq, %22, %693 : vector<1x128xi32>
      %695 = vector.broadcast %658 : f32 to vector<1x128xf32>
      %696 = arith.select %694, %695, %622 : vector<1x128xi1>, vector<1x128xf32>
      %697 = vector.broadcast %660 : f32 to vector<1x128xf32>
      %698 = arith.select %694, %697, %624 : vector<1x128xi1>, vector<1x128xf32>
      %699 = vector.broadcast %662 : f32 to vector<1x128xf32>
      %700 = arith.select %694, %699, %626 : vector<1x128xi1>, vector<1x128xf32>
      %701 = vector.broadcast %664 : f32 to vector<1x128xf32>
      %702 = arith.select %694, %701, %628 : vector<1x128xi1>, vector<1x128xf32>
      %cst_316 = arith.constant 1.000000e+01 : f32
      %703 = arith.cmpf ole, %cst_316, %21 : f32
      %704 = arith.extui %703 : i1 to i32
      %705 = arith.sitofp %704 : i32 to f32
      %c4_317 = arith.constant 4 : index
      %c9 = arith.constant 9 : index
      %706 = memref.load %arg10[%c4_317, %c9] : memref<8x16xf32, #tpu.memory_space<smem>>
      %c5_318 = arith.constant 5 : index
      %c9_319 = arith.constant 9 : index
      %707 = memref.load %arg10[%c5_318, %c9_319] : memref<8x16xf32, #tpu.memory_space<smem>>
      %cst_320 = arith.constant 5.000000e-01 : f32
      %708 = arith.cmpf olt, %706, %cst_320 : f32
      %709 = arith.extui %708 : i1 to i32
      %710 = arith.sitofp %709 : i32 to f32
      %711 = arith.addf %706, %710 : f32
      %cst_321 = arith.constant 5.000000e-01 : f32
      %712 = arith.cmpf olt, %707, %cst_321 : f32
      %713 = arith.extui %712 : i1 to i32
      %714 = arith.sitofp %713 : i32 to f32
      %715 = arith.addf %707, %714 : f32
      %cst_322 = arith.constant 1.000000e+00 : f32
      %716 = vector.broadcast %cst_322 : f32 to vector<1x1xf32>
      %717 = vector.broadcast %711 : f32 to vector<1x1xf32>
      %718 = arith.divf %716, %717 : vector<1x1xf32>
      %719 = vector.shape_cast %718 : vector<1x1xf32> to vector<1x1x1xf32>
      %cst_323 = arith.constant dense<0.000000e+00> : vector<1xf32>
      %720 = vector.multi_reduction <add>, %719, %cst_323 [1, 2] : vector<1x1x1xf32> to vector<1xf32>
      %721 = vector.shape_cast %720 : vector<1xf32> to vector<1x1x1xf32>
      %722 = vector.extract %721[0, 0, 0] : f32 from vector<1x1x1xf32>
      %cst_324 = arith.constant 1.000000e+00 : f32
      %723 = vector.broadcast %cst_324 : f32 to vector<1x1xf32>
      %724 = vector.broadcast %715 : f32 to vector<1x1xf32>
      %725 = arith.divf %723, %724 : vector<1x1xf32>
      %726 = vector.shape_cast %725 : vector<1x1xf32> to vector<1x1x1xf32>
      %cst_325 = arith.constant dense<0.000000e+00> : vector<1xf32>
      %727 = vector.multi_reduction <add>, %726, %cst_325 [1, 2] : vector<1x1x1xf32> to vector<1xf32>
      %728 = vector.shape_cast %727 : vector<1xf32> to vector<1x1x1xf32>
      %729 = vector.extract %728[0, 0, 0] : f32 from vector<1x1x1xf32>
      %730 = arith.mulf %705, %729 : f32
      %c0_326 = arith.constant 0 : index
      %c9_327 = arith.constant 9 : index
      %731 = memref.load %arg10[%c0_326, %c9_327] : memref<8x16xf32, #tpu.memory_space<smem>>
      %732 = arith.mulf %731, %722 : f32
      %c1_328 = arith.constant 1 : index
      %c9_329 = arith.constant 9 : index
      %733 = memref.load %arg10[%c1_328, %c9_329] : memref<8x16xf32, #tpu.memory_space<smem>>
      %734 = arith.mulf %733, %722 : f32
      %c2_330 = arith.constant 2 : index
      %c9_331 = arith.constant 9 : index
      %735 = memref.load %arg10[%c2_330, %c9_331] : memref<8x16xf32, #tpu.memory_space<smem>>
      %736 = arith.mulf %735, %722 : f32
      %c3_332 = arith.constant 3 : index
      %c9_333 = arith.constant 9 : index
      %737 = memref.load %arg10[%c3_332, %c9_333] : memref<8x16xf32, #tpu.memory_space<smem>>
      %738 = arith.mulf %737, %722 : f32
      %c0_334 = arith.constant 0 : index
      %c9_335 = arith.constant 9 : index
      %739 = memref.load %arg10[%c0_334, %c9_335] : memref<8x16xf32, #tpu.memory_space<smem>>
      memref.store %732, %arg10[%c0_334, %c9_335] : memref<8x16xf32, #tpu.memory_space<smem>>
      %c1_336 = arith.constant 1 : index
      %c9_337 = arith.constant 9 : index
      %740 = memref.load %arg10[%c1_336, %c9_337] : memref<8x16xf32, #tpu.memory_space<smem>>
      memref.store %734, %arg10[%c1_336, %c9_337] : memref<8x16xf32, #tpu.memory_space<smem>>
      %c2_338 = arith.constant 2 : index
      %c9_339 = arith.constant 9 : index
      %741 = memref.load %arg10[%c2_338, %c9_339] : memref<8x16xf32, #tpu.memory_space<smem>>
      memref.store %736, %arg10[%c2_338, %c9_339] : memref<8x16xf32, #tpu.memory_space<smem>>
      %c3_340 = arith.constant 3 : index
      %c9_341 = arith.constant 9 : index
      %742 = memref.load %arg10[%c3_340, %c9_341] : memref<8x16xf32, #tpu.memory_space<smem>>
      memref.store %738, %arg10[%c3_340, %c9_341] : memref<8x16xf32, #tpu.memory_space<smem>>
      %c6_342 = arith.constant 6 : index
      %c9_343 = arith.constant 9 : index
      %743 = memref.load %arg10[%c6_342, %c9_343] : memref<8x16xf32, #tpu.memory_space<smem>>
      memref.store %730, %arg10[%c6_342, %c9_343] : memref<8x16xf32, #tpu.memory_space<smem>>
      %744 = arith.mulf %732, %732 : f32
      %745 = arith.mulf %734, %734 : f32
      %746 = arith.addf %744, %745 : f32
      %747 = arith.mulf %736, %736 : f32
      %748 = arith.addf %746, %747 : f32
      %749 = arith.mulf %738, %738 : f32
      %750 = arith.addf %748, %749 : f32
      %751 = math.sqrt %750 : f32
      %cst_344 = arith.constant 5.000000e-01 : f32
      %752 = arith.subf %751, %cst_344 : f32
      %cst_345 = arith.constant 0.000000e+00 : f32
      %753 = arith.maximumf %752, %cst_345 : f32
      %cst_346 = arith.constant 2.560000e+02 : f32
      %754 = arith.subf %cst_346, %707 : f32
      %755 = arith.mulf %753, %753 : f32
      %756 = vector.broadcast %755 : f32 to vector<1x1xf32>
      %cst_347 = arith.constant 1.000000e+00 : f32
      %757 = vector.broadcast %cst_347 : f32 to vector<1x1xf32>
      %758 = arith.addf %756, %757 : vector<1x1xf32>
      %759 = math.log %758 : vector<1x1xf32>
      %760 = vector.shape_cast %759 : vector<1x1xf32> to vector<1x1x1xf32>
      %cst_348 = arith.constant dense<0.000000e+00> : vector<1xf32>
      %761 = vector.multi_reduction <add>, %760, %cst_348 [1, 2] : vector<1x1x1xf32> to vector<1xf32>
      %762 = vector.shape_cast %761 : vector<1xf32> to vector<1x1x1xf32>
      %763 = vector.extract %762[0, 0, 0] : f32 from vector<1x1x1xf32>
      %764 = arith.mulf %754, %763 : f32
      %765 = arith.mulf %764, %730 : f32
      %766 = arith.addf %692, %765 : f32
      %c9_i32 = arith.constant 9 : i32
      %767 = vector.broadcast %c9_i32 : i32 to vector<1x128xi32>
      %768 = arith.cmpi eq, %22, %767 : vector<1x128xi32>
      %769 = vector.broadcast %732 : f32 to vector<1x128xf32>
      %770 = arith.select %768, %769, %696 : vector<1x128xi1>, vector<1x128xf32>
      %771 = vector.broadcast %734 : f32 to vector<1x128xf32>
      %772 = arith.select %768, %771, %698 : vector<1x128xi1>, vector<1x128xf32>
      %773 = vector.broadcast %736 : f32 to vector<1x128xf32>
      %774 = arith.select %768, %773, %700 : vector<1x128xi1>, vector<1x128xf32>
      %775 = vector.broadcast %738 : f32 to vector<1x128xf32>
      %776 = arith.select %768, %775, %702 : vector<1x128xi1>, vector<1x128xf32>
      %cst_349 = arith.constant 1.100000e+01 : f32
      %777 = arith.cmpf ole, %cst_349, %21 : f32
      %778 = arith.extui %777 : i1 to i32
      %779 = arith.sitofp %778 : i32 to f32
      %c4_350 = arith.constant 4 : index
      %c10 = arith.constant 10 : index
      %780 = memref.load %arg10[%c4_350, %c10] : memref<8x16xf32, #tpu.memory_space<smem>>
      %c5_351 = arith.constant 5 : index
      %c10_352 = arith.constant 10 : index
      %781 = memref.load %arg10[%c5_351, %c10_352] : memref<8x16xf32, #tpu.memory_space<smem>>
      %cst_353 = arith.constant 5.000000e-01 : f32
      %782 = arith.cmpf olt, %780, %cst_353 : f32
      %783 = arith.extui %782 : i1 to i32
      %784 = arith.sitofp %783 : i32 to f32
      %785 = arith.addf %780, %784 : f32
      %cst_354 = arith.constant 5.000000e-01 : f32
      %786 = arith.cmpf olt, %781, %cst_354 : f32
      %787 = arith.extui %786 : i1 to i32
      %788 = arith.sitofp %787 : i32 to f32
      %789 = arith.addf %781, %788 : f32
      %cst_355 = arith.constant 1.000000e+00 : f32
      %790 = vector.broadcast %cst_355 : f32 to vector<1x1xf32>
      %791 = vector.broadcast %785 : f32 to vector<1x1xf32>
      %792 = arith.divf %790, %791 : vector<1x1xf32>
      %793 = vector.shape_cast %792 : vector<1x1xf32> to vector<1x1x1xf32>
      %cst_356 = arith.constant dense<0.000000e+00> : vector<1xf32>
      %794 = vector.multi_reduction <add>, %793, %cst_356 [1, 2] : vector<1x1x1xf32> to vector<1xf32>
      %795 = vector.shape_cast %794 : vector<1xf32> to vector<1x1x1xf32>
      %796 = vector.extract %795[0, 0, 0] : f32 from vector<1x1x1xf32>
      %cst_357 = arith.constant 1.000000e+00 : f32
      %797 = vector.broadcast %cst_357 : f32 to vector<1x1xf32>
      %798 = vector.broadcast %789 : f32 to vector<1x1xf32>
      %799 = arith.divf %797, %798 : vector<1x1xf32>
      %800 = vector.shape_cast %799 : vector<1x1xf32> to vector<1x1x1xf32>
      %cst_358 = arith.constant dense<0.000000e+00> : vector<1xf32>
      %801 = vector.multi_reduction <add>, %800, %cst_358 [1, 2] : vector<1x1x1xf32> to vector<1xf32>
      %802 = vector.shape_cast %801 : vector<1xf32> to vector<1x1x1xf32>
      %803 = vector.extract %802[0, 0, 0] : f32 from vector<1x1x1xf32>
      %804 = arith.mulf %779, %803 : f32
      %c0_359 = arith.constant 0 : index
      %c10_360 = arith.constant 10 : index
      %805 = memref.load %arg10[%c0_359, %c10_360] : memref<8x16xf32, #tpu.memory_space<smem>>
      %806 = arith.mulf %805, %796 : f32
      %c1_361 = arith.constant 1 : index
      %c10_362 = arith.constant 10 : index
      %807 = memref.load %arg10[%c1_361, %c10_362] : memref<8x16xf32, #tpu.memory_space<smem>>
      %808 = arith.mulf %807, %796 : f32
      %c2_363 = arith.constant 2 : index
      %c10_364 = arith.constant 10 : index
      %809 = memref.load %arg10[%c2_363, %c10_364] : memref<8x16xf32, #tpu.memory_space<smem>>
      %810 = arith.mulf %809, %796 : f32
      %c3_365 = arith.constant 3 : index
      %c10_366 = arith.constant 10 : index
      %811 = memref.load %arg10[%c3_365, %c10_366] : memref<8x16xf32, #tpu.memory_space<smem>>
      %812 = arith.mulf %811, %796 : f32
      %c0_367 = arith.constant 0 : index
      %c10_368 = arith.constant 10 : index
      %813 = memref.load %arg10[%c0_367, %c10_368] : memref<8x16xf32, #tpu.memory_space<smem>>
      memref.store %806, %arg10[%c0_367, %c10_368] : memref<8x16xf32, #tpu.memory_space<smem>>
      %c1_369 = arith.constant 1 : index
      %c10_370 = arith.constant 10 : index
      %814 = memref.load %arg10[%c1_369, %c10_370] : memref<8x16xf32, #tpu.memory_space<smem>>
      memref.store %808, %arg10[%c1_369, %c10_370] : memref<8x16xf32, #tpu.memory_space<smem>>
      %c2_371 = arith.constant 2 : index
      %c10_372 = arith.constant 10 : index
      %815 = memref.load %arg10[%c2_371, %c10_372] : memref<8x16xf32, #tpu.memory_space<smem>>
      memref.store %810, %arg10[%c2_371, %c10_372] : memref<8x16xf32, #tpu.memory_space<smem>>
      %c3_373 = arith.constant 3 : index
      %c10_374 = arith.constant 10 : index
      %816 = memref.load %arg10[%c3_373, %c10_374] : memref<8x16xf32, #tpu.memory_space<smem>>
      memref.store %812, %arg10[%c3_373, %c10_374] : memref<8x16xf32, #tpu.memory_space<smem>>
      %c6_375 = arith.constant 6 : index
      %c10_376 = arith.constant 10 : index
      %817 = memref.load %arg10[%c6_375, %c10_376] : memref<8x16xf32, #tpu.memory_space<smem>>
      memref.store %804, %arg10[%c6_375, %c10_376] : memref<8x16xf32, #tpu.memory_space<smem>>
      %818 = arith.mulf %806, %806 : f32
      %819 = arith.mulf %808, %808 : f32
      %820 = arith.addf %818, %819 : f32
      %821 = arith.mulf %810, %810 : f32
      %822 = arith.addf %820, %821 : f32
      %823 = arith.mulf %812, %812 : f32
      %824 = arith.addf %822, %823 : f32
      %825 = math.sqrt %824 : f32
      %cst_377 = arith.constant 5.000000e-01 : f32
      %826 = arith.subf %825, %cst_377 : f32
      %cst_378 = arith.constant 0.000000e+00 : f32
      %827 = arith.maximumf %826, %cst_378 : f32
      %cst_379 = arith.constant 2.560000e+02 : f32
      %828 = arith.subf %cst_379, %781 : f32
      %829 = arith.mulf %827, %827 : f32
      %830 = vector.broadcast %829 : f32 to vector<1x1xf32>
      %cst_380 = arith.constant 1.000000e+00 : f32
      %831 = vector.broadcast %cst_380 : f32 to vector<1x1xf32>
      %832 = arith.addf %830, %831 : vector<1x1xf32>
      %833 = math.log %832 : vector<1x1xf32>
      %834 = vector.shape_cast %833 : vector<1x1xf32> to vector<1x1x1xf32>
      %cst_381 = arith.constant dense<0.000000e+00> : vector<1xf32>
      %835 = vector.multi_reduction <add>, %834, %cst_381 [1, 2] : vector<1x1x1xf32> to vector<1xf32>
      %836 = vector.shape_cast %835 : vector<1xf32> to vector<1x1x1xf32>
      %837 = vector.extract %836[0, 0, 0] : f32 from vector<1x1x1xf32>
      %838 = arith.mulf %828, %837 : f32
      %839 = arith.mulf %838, %804 : f32
      %840 = arith.addf %766, %839 : f32
      %c10_i32 = arith.constant 10 : i32
      %841 = vector.broadcast %c10_i32 : i32 to vector<1x128xi32>
      %842 = arith.cmpi eq, %22, %841 : vector<1x128xi32>
      %843 = vector.broadcast %806 : f32 to vector<1x128xf32>
      %844 = arith.select %842, %843, %770 : vector<1x128xi1>, vector<1x128xf32>
      %845 = vector.broadcast %808 : f32 to vector<1x128xf32>
      %846 = arith.select %842, %845, %772 : vector<1x128xi1>, vector<1x128xf32>
      %847 = vector.broadcast %810 : f32 to vector<1x128xf32>
      %848 = arith.select %842, %847, %774 : vector<1x128xi1>, vector<1x128xf32>
      %849 = vector.broadcast %812 : f32 to vector<1x128xf32>
      %850 = arith.select %842, %849, %776 : vector<1x128xi1>, vector<1x128xf32>
      %cst_382 = arith.constant 1.200000e+01 : f32
      %851 = arith.cmpf ole, %cst_382, %21 : f32
      %852 = arith.extui %851 : i1 to i32
      %853 = arith.sitofp %852 : i32 to f32
      %c4_383 = arith.constant 4 : index
      %c11 = arith.constant 11 : index
      %854 = memref.load %arg10[%c4_383, %c11] : memref<8x16xf32, #tpu.memory_space<smem>>
      %c5_384 = arith.constant 5 : index
      %c11_385 = arith.constant 11 : index
      %855 = memref.load %arg10[%c5_384, %c11_385] : memref<8x16xf32, #tpu.memory_space<smem>>
      %cst_386 = arith.constant 5.000000e-01 : f32
      %856 = arith.cmpf olt, %854, %cst_386 : f32
      %857 = arith.extui %856 : i1 to i32
      %858 = arith.sitofp %857 : i32 to f32
      %859 = arith.addf %854, %858 : f32
      %cst_387 = arith.constant 5.000000e-01 : f32
      %860 = arith.cmpf olt, %855, %cst_387 : f32
      %861 = arith.extui %860 : i1 to i32
      %862 = arith.sitofp %861 : i32 to f32
      %863 = arith.addf %855, %862 : f32
      %cst_388 = arith.constant 1.000000e+00 : f32
      %864 = vector.broadcast %cst_388 : f32 to vector<1x1xf32>
      %865 = vector.broadcast %859 : f32 to vector<1x1xf32>
      %866 = arith.divf %864, %865 : vector<1x1xf32>
      %867 = vector.shape_cast %866 : vector<1x1xf32> to vector<1x1x1xf32>
      %cst_389 = arith.constant dense<0.000000e+00> : vector<1xf32>
      %868 = vector.multi_reduction <add>, %867, %cst_389 [1, 2] : vector<1x1x1xf32> to vector<1xf32>
      %869 = vector.shape_cast %868 : vector<1xf32> to vector<1x1x1xf32>
      %870 = vector.extract %869[0, 0, 0] : f32 from vector<1x1x1xf32>
      %cst_390 = arith.constant 1.000000e+00 : f32
      %871 = vector.broadcast %cst_390 : f32 to vector<1x1xf32>
      %872 = vector.broadcast %863 : f32 to vector<1x1xf32>
      %873 = arith.divf %871, %872 : vector<1x1xf32>
      %874 = vector.shape_cast %873 : vector<1x1xf32> to vector<1x1x1xf32>
      %cst_391 = arith.constant dense<0.000000e+00> : vector<1xf32>
      %875 = vector.multi_reduction <add>, %874, %cst_391 [1, 2] : vector<1x1x1xf32> to vector<1xf32>
      %876 = vector.shape_cast %875 : vector<1xf32> to vector<1x1x1xf32>
      %877 = vector.extract %876[0, 0, 0] : f32 from vector<1x1x1xf32>
      %878 = arith.mulf %853, %877 : f32
      %c0_392 = arith.constant 0 : index
      %c11_393 = arith.constant 11 : index
      %879 = memref.load %arg10[%c0_392, %c11_393] : memref<8x16xf32, #tpu.memory_space<smem>>
      %880 = arith.mulf %879, %870 : f32
      %c1_394 = arith.constant 1 : index
      %c11_395 = arith.constant 11 : index
      %881 = memref.load %arg10[%c1_394, %c11_395] : memref<8x16xf32, #tpu.memory_space<smem>>
      %882 = arith.mulf %881, %870 : f32
      %c2_396 = arith.constant 2 : index
      %c11_397 = arith.constant 11 : index
      %883 = memref.load %arg10[%c2_396, %c11_397] : memref<8x16xf32, #tpu.memory_space<smem>>
      %884 = arith.mulf %883, %870 : f32
      %c3_398 = arith.constant 3 : index
      %c11_399 = arith.constant 11 : index
      %885 = memref.load %arg10[%c3_398, %c11_399] : memref<8x16xf32, #tpu.memory_space<smem>>
      %886 = arith.mulf %885, %870 : f32
      %c0_400 = arith.constant 0 : index
      %c11_401 = arith.constant 11 : index
      %887 = memref.load %arg10[%c0_400, %c11_401] : memref<8x16xf32, #tpu.memory_space<smem>>
      memref.store %880, %arg10[%c0_400, %c11_401] : memref<8x16xf32, #tpu.memory_space<smem>>
      %c1_402 = arith.constant 1 : index
      %c11_403 = arith.constant 11 : index
      %888 = memref.load %arg10[%c1_402, %c11_403] : memref<8x16xf32, #tpu.memory_space<smem>>
      memref.store %882, %arg10[%c1_402, %c11_403] : memref<8x16xf32, #tpu.memory_space<smem>>
      %c2_404 = arith.constant 2 : index
      %c11_405 = arith.constant 11 : index
      %889 = memref.load %arg10[%c2_404, %c11_405] : memref<8x16xf32, #tpu.memory_space<smem>>
      memref.store %884, %arg10[%c2_404, %c11_405] : memref<8x16xf32, #tpu.memory_space<smem>>
      %c3_406 = arith.constant 3 : index
      %c11_407 = arith.constant 11 : index
      %890 = memref.load %arg10[%c3_406, %c11_407] : memref<8x16xf32, #tpu.memory_space<smem>>
      memref.store %886, %arg10[%c3_406, %c11_407] : memref<8x16xf32, #tpu.memory_space<smem>>
      %c6_408 = arith.constant 6 : index
      %c11_409 = arith.constant 11 : index
      %891 = memref.load %arg10[%c6_408, %c11_409] : memref<8x16xf32, #tpu.memory_space<smem>>
      memref.store %878, %arg10[%c6_408, %c11_409] : memref<8x16xf32, #tpu.memory_space<smem>>
      %892 = arith.mulf %880, %880 : f32
      %893 = arith.mulf %882, %882 : f32
      %894 = arith.addf %892, %893 : f32
      %895 = arith.mulf %884, %884 : f32
      %896 = arith.addf %894, %895 : f32
      %897 = arith.mulf %886, %886 : f32
      %898 = arith.addf %896, %897 : f32
      %899 = math.sqrt %898 : f32
      %cst_410 = arith.constant 5.000000e-01 : f32
      %900 = arith.subf %899, %cst_410 : f32
      %cst_411 = arith.constant 0.000000e+00 : f32
      %901 = arith.maximumf %900, %cst_411 : f32
      %cst_412 = arith.constant 2.560000e+02 : f32
      %902 = arith.subf %cst_412, %855 : f32
      %903 = arith.mulf %901, %901 : f32
      %904 = vector.broadcast %903 : f32 to vector<1x1xf32>
      %cst_413 = arith.constant 1.000000e+00 : f32
      %905 = vector.broadcast %cst_413 : f32 to vector<1x1xf32>
      %906 = arith.addf %904, %905 : vector<1x1xf32>
      %907 = math.log %906 : vector<1x1xf32>
      %908 = vector.shape_cast %907 : vector<1x1xf32> to vector<1x1x1xf32>
      %cst_414 = arith.constant dense<0.000000e+00> : vector<1xf32>
      %909 = vector.multi_reduction <add>, %908, %cst_414 [1, 2] : vector<1x1x1xf32> to vector<1xf32>
      %910 = vector.shape_cast %909 : vector<1xf32> to vector<1x1x1xf32>
      %911 = vector.extract %910[0, 0, 0] : f32 from vector<1x1x1xf32>
      %912 = arith.mulf %902, %911 : f32
      %913 = arith.mulf %912, %878 : f32
      %914 = arith.addf %840, %913 : f32
      %c11_i32 = arith.constant 11 : i32
      %915 = vector.broadcast %c11_i32 : i32 to vector<1x128xi32>
      %916 = arith.cmpi eq, %22, %915 : vector<1x128xi32>
      %917 = vector.broadcast %880 : f32 to vector<1x128xf32>
      %918 = arith.select %916, %917, %844 : vector<1x128xi1>, vector<1x128xf32>
      %919 = vector.broadcast %882 : f32 to vector<1x128xf32>
      %920 = arith.select %916, %919, %846 : vector<1x128xi1>, vector<1x128xf32>
      %921 = vector.broadcast %884 : f32 to vector<1x128xf32>
      %922 = arith.select %916, %921, %848 : vector<1x128xi1>, vector<1x128xf32>
      %923 = vector.broadcast %886 : f32 to vector<1x128xf32>
      %924 = arith.select %916, %923, %850 : vector<1x128xi1>, vector<1x128xf32>
      %cst_415 = arith.constant 1.300000e+01 : f32
      %925 = arith.cmpf ole, %cst_415, %21 : f32
      %926 = arith.extui %925 : i1 to i32
      %927 = arith.sitofp %926 : i32 to f32
      %c4_416 = arith.constant 4 : index
      %c12 = arith.constant 12 : index
      %928 = memref.load %arg10[%c4_416, %c12] : memref<8x16xf32, #tpu.memory_space<smem>>
      %c5_417 = arith.constant 5 : index
      %c12_418 = arith.constant 12 : index
      %929 = memref.load %arg10[%c5_417, %c12_418] : memref<8x16xf32, #tpu.memory_space<smem>>
      %cst_419 = arith.constant 5.000000e-01 : f32
      %930 = arith.cmpf olt, %928, %cst_419 : f32
      %931 = arith.extui %930 : i1 to i32
      %932 = arith.sitofp %931 : i32 to f32
      %933 = arith.addf %928, %932 : f32
      %cst_420 = arith.constant 5.000000e-01 : f32
      %934 = arith.cmpf olt, %929, %cst_420 : f32
      %935 = arith.extui %934 : i1 to i32
      %936 = arith.sitofp %935 : i32 to f32
      %937 = arith.addf %929, %936 : f32
      %cst_421 = arith.constant 1.000000e+00 : f32
      %938 = vector.broadcast %cst_421 : f32 to vector<1x1xf32>
      %939 = vector.broadcast %933 : f32 to vector<1x1xf32>
      %940 = arith.divf %938, %939 : vector<1x1xf32>
      %941 = vector.shape_cast %940 : vector<1x1xf32> to vector<1x1x1xf32>
      %cst_422 = arith.constant dense<0.000000e+00> : vector<1xf32>
      %942 = vector.multi_reduction <add>, %941, %cst_422 [1, 2] : vector<1x1x1xf32> to vector<1xf32>
      %943 = vector.shape_cast %942 : vector<1xf32> to vector<1x1x1xf32>
      %944 = vector.extract %943[0, 0, 0] : f32 from vector<1x1x1xf32>
      %cst_423 = arith.constant 1.000000e+00 : f32
      %945 = vector.broadcast %cst_423 : f32 to vector<1x1xf32>
      %946 = vector.broadcast %937 : f32 to vector<1x1xf32>
      %947 = arith.divf %945, %946 : vector<1x1xf32>
      %948 = vector.shape_cast %947 : vector<1x1xf32> to vector<1x1x1xf32>
      %cst_424 = arith.constant dense<0.000000e+00> : vector<1xf32>
      %949 = vector.multi_reduction <add>, %948, %cst_424 [1, 2] : vector<1x1x1xf32> to vector<1xf32>
      %950 = vector.shape_cast %949 : vector<1xf32> to vector<1x1x1xf32>
      %951 = vector.extract %950[0, 0, 0] : f32 from vector<1x1x1xf32>
      %952 = arith.mulf %927, %951 : f32
      %c0_425 = arith.constant 0 : index
      %c12_426 = arith.constant 12 : index
      %953 = memref.load %arg10[%c0_425, %c12_426] : memref<8x16xf32, #tpu.memory_space<smem>>
      %954 = arith.mulf %953, %944 : f32
      %c1_427 = arith.constant 1 : index
      %c12_428 = arith.constant 12 : index
      %955 = memref.load %arg10[%c1_427, %c12_428] : memref<8x16xf32, #tpu.memory_space<smem>>
      %956 = arith.mulf %955, %944 : f32
      %c2_429 = arith.constant 2 : index
      %c12_430 = arith.constant 12 : index
      %957 = memref.load %arg10[%c2_429, %c12_430] : memref<8x16xf32, #tpu.memory_space<smem>>
      %958 = arith.mulf %957, %944 : f32
      %c3_431 = arith.constant 3 : index
      %c12_432 = arith.constant 12 : index
      %959 = memref.load %arg10[%c3_431, %c12_432] : memref<8x16xf32, #tpu.memory_space<smem>>
      %960 = arith.mulf %959, %944 : f32
      %c0_433 = arith.constant 0 : index
      %c12_434 = arith.constant 12 : index
      %961 = memref.load %arg10[%c0_433, %c12_434] : memref<8x16xf32, #tpu.memory_space<smem>>
      memref.store %954, %arg10[%c0_433, %c12_434] : memref<8x16xf32, #tpu.memory_space<smem>>
      %c1_435 = arith.constant 1 : index
      %c12_436 = arith.constant 12 : index
      %962 = memref.load %arg10[%c1_435, %c12_436] : memref<8x16xf32, #tpu.memory_space<smem>>
      memref.store %956, %arg10[%c1_435, %c12_436] : memref<8x16xf32, #tpu.memory_space<smem>>
      %c2_437 = arith.constant 2 : index
      %c12_438 = arith.constant 12 : index
      %963 = memref.load %arg10[%c2_437, %c12_438] : memref<8x16xf32, #tpu.memory_space<smem>>
      memref.store %958, %arg10[%c2_437, %c12_438] : memref<8x16xf32, #tpu.memory_space<smem>>
      %c3_439 = arith.constant 3 : index
      %c12_440 = arith.constant 12 : index
      %964 = memref.load %arg10[%c3_439, %c12_440] : memref<8x16xf32, #tpu.memory_space<smem>>
      memref.store %960, %arg10[%c3_439, %c12_440] : memref<8x16xf32, #tpu.memory_space<smem>>
      %c6_441 = arith.constant 6 : index
      %c12_442 = arith.constant 12 : index
      %965 = memref.load %arg10[%c6_441, %c12_442] : memref<8x16xf32, #tpu.memory_space<smem>>
      memref.store %952, %arg10[%c6_441, %c12_442] : memref<8x16xf32, #tpu.memory_space<smem>>
      %966 = arith.mulf %954, %954 : f32
      %967 = arith.mulf %956, %956 : f32
      %968 = arith.addf %966, %967 : f32
      %969 = arith.mulf %958, %958 : f32
      %970 = arith.addf %968, %969 : f32
      %971 = arith.mulf %960, %960 : f32
      %972 = arith.addf %970, %971 : f32
      %973 = math.sqrt %972 : f32
      %cst_443 = arith.constant 5.000000e-01 : f32
      %974 = arith.subf %973, %cst_443 : f32
      %cst_444 = arith.constant 0.000000e+00 : f32
      %975 = arith.maximumf %974, %cst_444 : f32
      %cst_445 = arith.constant 2.560000e+02 : f32
      %976 = arith.subf %cst_445, %929 : f32
      %977 = arith.mulf %975, %975 : f32
      %978 = vector.broadcast %977 : f32 to vector<1x1xf32>
      %cst_446 = arith.constant 1.000000e+00 : f32
      %979 = vector.broadcast %cst_446 : f32 to vector<1x1xf32>
      %980 = arith.addf %978, %979 : vector<1x1xf32>
      %981 = math.log %980 : vector<1x1xf32>
      %982 = vector.shape_cast %981 : vector<1x1xf32> to vector<1x1x1xf32>
      %cst_447 = arith.constant dense<0.000000e+00> : vector<1xf32>
      %983 = vector.multi_reduction <add>, %982, %cst_447 [1, 2] : vector<1x1x1xf32> to vector<1xf32>
      %984 = vector.shape_cast %983 : vector<1xf32> to vector<1x1x1xf32>
      %985 = vector.extract %984[0, 0, 0] : f32 from vector<1x1x1xf32>
      %986 = arith.mulf %976, %985 : f32
      %987 = arith.mulf %986, %952 : f32
      %988 = arith.addf %914, %987 : f32
      %c12_i32 = arith.constant 12 : i32
      %989 = vector.broadcast %c12_i32 : i32 to vector<1x128xi32>
      %990 = arith.cmpi eq, %22, %989 : vector<1x128xi32>
      %991 = vector.broadcast %954 : f32 to vector<1x128xf32>
      %992 = arith.select %990, %991, %918 : vector<1x128xi1>, vector<1x128xf32>
      %993 = vector.broadcast %956 : f32 to vector<1x128xf32>
      %994 = arith.select %990, %993, %920 : vector<1x128xi1>, vector<1x128xf32>
      %995 = vector.broadcast %958 : f32 to vector<1x128xf32>
      %996 = arith.select %990, %995, %922 : vector<1x128xi1>, vector<1x128xf32>
      %997 = vector.broadcast %960 : f32 to vector<1x128xf32>
      %998 = arith.select %990, %997, %924 : vector<1x128xi1>, vector<1x128xf32>
      %cst_448 = arith.constant 1.400000e+01 : f32
      %999 = arith.cmpf ole, %cst_448, %21 : f32
      %1000 = arith.extui %999 : i1 to i32
      %1001 = arith.sitofp %1000 : i32 to f32
      %c4_449 = arith.constant 4 : index
      %c13 = arith.constant 13 : index
      %1002 = memref.load %arg10[%c4_449, %c13] : memref<8x16xf32, #tpu.memory_space<smem>>
      %c5_450 = arith.constant 5 : index
      %c13_451 = arith.constant 13 : index
      %1003 = memref.load %arg10[%c5_450, %c13_451] : memref<8x16xf32, #tpu.memory_space<smem>>
      %cst_452 = arith.constant 5.000000e-01 : f32
      %1004 = arith.cmpf olt, %1002, %cst_452 : f32
      %1005 = arith.extui %1004 : i1 to i32
      %1006 = arith.sitofp %1005 : i32 to f32
      %1007 = arith.addf %1002, %1006 : f32
      %cst_453 = arith.constant 5.000000e-01 : f32
      %1008 = arith.cmpf olt, %1003, %cst_453 : f32
      %1009 = arith.extui %1008 : i1 to i32
      %1010 = arith.sitofp %1009 : i32 to f32
      %1011 = arith.addf %1003, %1010 : f32
      %cst_454 = arith.constant 1.000000e+00 : f32
      %1012 = vector.broadcast %cst_454 : f32 to vector<1x1xf32>
      %1013 = vector.broadcast %1007 : f32 to vector<1x1xf32>
      %1014 = arith.divf %1012, %1013 : vector<1x1xf32>
      %1015 = vector.shape_cast %1014 : vector<1x1xf32> to vector<1x1x1xf32>
      %cst_455 = arith.constant dense<0.000000e+00> : vector<1xf32>
      %1016 = vector.multi_reduction <add>, %1015, %cst_455 [1, 2] : vector<1x1x1xf32> to vector<1xf32>
      %1017 = vector.shape_cast %1016 : vector<1xf32> to vector<1x1x1xf32>
      %1018 = vector.extract %1017[0, 0, 0] : f32 from vector<1x1x1xf32>
      %cst_456 = arith.constant 1.000000e+00 : f32
      %1019 = vector.broadcast %cst_456 : f32 to vector<1x1xf32>
      %1020 = vector.broadcast %1011 : f32 to vector<1x1xf32>
      %1021 = arith.divf %1019, %1020 : vector<1x1xf32>
      %1022 = vector.shape_cast %1021 : vector<1x1xf32> to vector<1x1x1xf32>
      %cst_457 = arith.constant dense<0.000000e+00> : vector<1xf32>
      %1023 = vector.multi_reduction <add>, %1022, %cst_457 [1, 2] : vector<1x1x1xf32> to vector<1xf32>
      %1024 = vector.shape_cast %1023 : vector<1xf32> to vector<1x1x1xf32>
      %1025 = vector.extract %1024[0, 0, 0] : f32 from vector<1x1x1xf32>
      %1026 = arith.mulf %1001, %1025 : f32
      %c0_458 = arith.constant 0 : index
      %c13_459 = arith.constant 13 : index
      %1027 = memref.load %arg10[%c0_458, %c13_459] : memref<8x16xf32, #tpu.memory_space<smem>>
      %1028 = arith.mulf %1027, %1018 : f32
      %c1_460 = arith.constant 1 : index
      %c13_461 = arith.constant 13 : index
      %1029 = memref.load %arg10[%c1_460, %c13_461] : memref<8x16xf32, #tpu.memory_space<smem>>
      %1030 = arith.mulf %1029, %1018 : f32
      %c2_462 = arith.constant 2 : index
      %c13_463 = arith.constant 13 : index
      %1031 = memref.load %arg10[%c2_462, %c13_463] : memref<8x16xf32, #tpu.memory_space<smem>>
      %1032 = arith.mulf %1031, %1018 : f32
      %c3_464 = arith.constant 3 : index
      %c13_465 = arith.constant 13 : index
      %1033 = memref.load %arg10[%c3_464, %c13_465] : memref<8x16xf32, #tpu.memory_space<smem>>
      %1034 = arith.mulf %1033, %1018 : f32
      %c0_466 = arith.constant 0 : index
      %c13_467 = arith.constant 13 : index
      %1035 = memref.load %arg10[%c0_466, %c13_467] : memref<8x16xf32, #tpu.memory_space<smem>>
      memref.store %1028, %arg10[%c0_466, %c13_467] : memref<8x16xf32, #tpu.memory_space<smem>>
      %c1_468 = arith.constant 1 : index
      %c13_469 = arith.constant 13 : index
      %1036 = memref.load %arg10[%c1_468, %c13_469] : memref<8x16xf32, #tpu.memory_space<smem>>
      memref.store %1030, %arg10[%c1_468, %c13_469] : memref<8x16xf32, #tpu.memory_space<smem>>
      %c2_470 = arith.constant 2 : index
      %c13_471 = arith.constant 13 : index
      %1037 = memref.load %arg10[%c2_470, %c13_471] : memref<8x16xf32, #tpu.memory_space<smem>>
      memref.store %1032, %arg10[%c2_470, %c13_471] : memref<8x16xf32, #tpu.memory_space<smem>>
      %c3_472 = arith.constant 3 : index
      %c13_473 = arith.constant 13 : index
      %1038 = memref.load %arg10[%c3_472, %c13_473] : memref<8x16xf32, #tpu.memory_space<smem>>
      memref.store %1034, %arg10[%c3_472, %c13_473] : memref<8x16xf32, #tpu.memory_space<smem>>
      %c6_474 = arith.constant 6 : index
      %c13_475 = arith.constant 13 : index
      %1039 = memref.load %arg10[%c6_474, %c13_475] : memref<8x16xf32, #tpu.memory_space<smem>>
      memref.store %1026, %arg10[%c6_474, %c13_475] : memref<8x16xf32, #tpu.memory_space<smem>>
      %1040 = arith.mulf %1028, %1028 : f32
      %1041 = arith.mulf %1030, %1030 : f32
      %1042 = arith.addf %1040, %1041 : f32
      %1043 = arith.mulf %1032, %1032 : f32
      %1044 = arith.addf %1042, %1043 : f32
      %1045 = arith.mulf %1034, %1034 : f32
      %1046 = arith.addf %1044, %1045 : f32
      %1047 = math.sqrt %1046 : f32
      %cst_476 = arith.constant 5.000000e-01 : f32
      %1048 = arith.subf %1047, %cst_476 : f32
      %cst_477 = arith.constant 0.000000e+00 : f32
      %1049 = arith.maximumf %1048, %cst_477 : f32
      %cst_478 = arith.constant 2.560000e+02 : f32
      %1050 = arith.subf %cst_478, %1003 : f32
      %1051 = arith.mulf %1049, %1049 : f32
      %1052 = vector.broadcast %1051 : f32 to vector<1x1xf32>
      %cst_479 = arith.constant 1.000000e+00 : f32
      %1053 = vector.broadcast %cst_479 : f32 to vector<1x1xf32>
      %1054 = arith.addf %1052, %1053 : vector<1x1xf32>
      %1055 = math.log %1054 : vector<1x1xf32>
      %1056 = vector.shape_cast %1055 : vector<1x1xf32> to vector<1x1x1xf32>
      %cst_480 = arith.constant dense<0.000000e+00> : vector<1xf32>
      %1057 = vector.multi_reduction <add>, %1056, %cst_480 [1, 2] : vector<1x1x1xf32> to vector<1xf32>
      %1058 = vector.shape_cast %1057 : vector<1xf32> to vector<1x1x1xf32>
      %1059 = vector.extract %1058[0, 0, 0] : f32 from vector<1x1x1xf32>
      %1060 = arith.mulf %1050, %1059 : f32
      %1061 = arith.mulf %1060, %1026 : f32
      %1062 = arith.addf %988, %1061 : f32
      %c13_i32 = arith.constant 13 : i32
      %1063 = vector.broadcast %c13_i32 : i32 to vector<1x128xi32>
      %1064 = arith.cmpi eq, %22, %1063 : vector<1x128xi32>
      %1065 = vector.broadcast %1028 : f32 to vector<1x128xf32>
      %1066 = arith.select %1064, %1065, %992 : vector<1x128xi1>, vector<1x128xf32>
      %1067 = vector.broadcast %1030 : f32 to vector<1x128xf32>
      %1068 = arith.select %1064, %1067, %994 : vector<1x128xi1>, vector<1x128xf32>
      %1069 = vector.broadcast %1032 : f32 to vector<1x128xf32>
      %1070 = arith.select %1064, %1069, %996 : vector<1x128xi1>, vector<1x128xf32>
      %1071 = vector.broadcast %1034 : f32 to vector<1x128xf32>
      %1072 = arith.select %1064, %1071, %998 : vector<1x128xi1>, vector<1x128xf32>
      %cst_481 = arith.constant 1.500000e+01 : f32
      %1073 = arith.cmpf ole, %cst_481, %21 : f32
      %1074 = arith.extui %1073 : i1 to i32
      %1075 = arith.sitofp %1074 : i32 to f32
      %c4_482 = arith.constant 4 : index
      %c14 = arith.constant 14 : index
      %1076 = memref.load %arg10[%c4_482, %c14] : memref<8x16xf32, #tpu.memory_space<smem>>
      %c5_483 = arith.constant 5 : index
      %c14_484 = arith.constant 14 : index
      %1077 = memref.load %arg10[%c5_483, %c14_484] : memref<8x16xf32, #tpu.memory_space<smem>>
      %cst_485 = arith.constant 5.000000e-01 : f32
      %1078 = arith.cmpf olt, %1076, %cst_485 : f32
      %1079 = arith.extui %1078 : i1 to i32
      %1080 = arith.sitofp %1079 : i32 to f32
      %1081 = arith.addf %1076, %1080 : f32
      %cst_486 = arith.constant 5.000000e-01 : f32
      %1082 = arith.cmpf olt, %1077, %cst_486 : f32
      %1083 = arith.extui %1082 : i1 to i32
      %1084 = arith.sitofp %1083 : i32 to f32
      %1085 = arith.addf %1077, %1084 : f32
      %cst_487 = arith.constant 1.000000e+00 : f32
      %1086 = vector.broadcast %cst_487 : f32 to vector<1x1xf32>
      %1087 = vector.broadcast %1081 : f32 to vector<1x1xf32>
      %1088 = arith.divf %1086, %1087 : vector<1x1xf32>
      %1089 = vector.shape_cast %1088 : vector<1x1xf32> to vector<1x1x1xf32>
      %cst_488 = arith.constant dense<0.000000e+00> : vector<1xf32>
      %1090 = vector.multi_reduction <add>, %1089, %cst_488 [1, 2] : vector<1x1x1xf32> to vector<1xf32>
      %1091 = vector.shape_cast %1090 : vector<1xf32> to vector<1x1x1xf32>
      %1092 = vector.extract %1091[0, 0, 0] : f32 from vector<1x1x1xf32>
      %cst_489 = arith.constant 1.000000e+00 : f32
      %1093 = vector.broadcast %cst_489 : f32 to vector<1x1xf32>
      %1094 = vector.broadcast %1085 : f32 to vector<1x1xf32>
      %1095 = arith.divf %1093, %1094 : vector<1x1xf32>
      %1096 = vector.shape_cast %1095 : vector<1x1xf32> to vector<1x1x1xf32>
      %cst_490 = arith.constant dense<0.000000e+00> : vector<1xf32>
      %1097 = vector.multi_reduction <add>, %1096, %cst_490 [1, 2] : vector<1x1x1xf32> to vector<1xf32>
      %1098 = vector.shape_cast %1097 : vector<1xf32> to vector<1x1x1xf32>
      %1099 = vector.extract %1098[0, 0, 0] : f32 from vector<1x1x1xf32>
      %1100 = arith.mulf %1075, %1099 : f32
      %c0_491 = arith.constant 0 : index
      %c14_492 = arith.constant 14 : index
      %1101 = memref.load %arg10[%c0_491, %c14_492] : memref<8x16xf32, #tpu.memory_space<smem>>
      %1102 = arith.mulf %1101, %1092 : f32
      %c1_493 = arith.constant 1 : index
      %c14_494 = arith.constant 14 : index
      %1103 = memref.load %arg10[%c1_493, %c14_494] : memref<8x16xf32, #tpu.memory_space<smem>>
      %1104 = arith.mulf %1103, %1092 : f32
      %c2_495 = arith.constant 2 : index
      %c14_496 = arith.constant 14 : index
      %1105 = memref.load %arg10[%c2_495, %c14_496] : memref<8x16xf32, #tpu.memory_space<smem>>
      %1106 = arith.mulf %1105, %1092 : f32
      %c3_497 = arith.constant 3 : index
      %c14_498 = arith.constant 14 : index
      %1107 = memref.load %arg10[%c3_497, %c14_498] : memref<8x16xf32, #tpu.memory_space<smem>>
      %1108 = arith.mulf %1107, %1092 : f32
      %c0_499 = arith.constant 0 : index
      %c14_500 = arith.constant 14 : index
      %1109 = memref.load %arg10[%c0_499, %c14_500] : memref<8x16xf32, #tpu.memory_space<smem>>
      memref.store %1102, %arg10[%c0_499, %c14_500] : memref<8x16xf32, #tpu.memory_space<smem>>
      %c1_501 = arith.constant 1 : index
      %c14_502 = arith.constant 14 : index
      %1110 = memref.load %arg10[%c1_501, %c14_502] : memref<8x16xf32, #tpu.memory_space<smem>>
      memref.store %1104, %arg10[%c1_501, %c14_502] : memref<8x16xf32, #tpu.memory_space<smem>>
      %c2_503 = arith.constant 2 : index
      %c14_504 = arith.constant 14 : index
      %1111 = memref.load %arg10[%c2_503, %c14_504] : memref<8x16xf32, #tpu.memory_space<smem>>
      memref.store %1106, %arg10[%c2_503, %c14_504] : memref<8x16xf32, #tpu.memory_space<smem>>
      %c3_505 = arith.constant 3 : index
      %c14_506 = arith.constant 14 : index
      %1112 = memref.load %arg10[%c3_505, %c14_506] : memref<8x16xf32, #tpu.memory_space<smem>>
      memref.store %1108, %arg10[%c3_505, %c14_506] : memref<8x16xf32, #tpu.memory_space<smem>>
      %c6_507 = arith.constant 6 : index
      %c14_508 = arith.constant 14 : index
      %1113 = memref.load %arg10[%c6_507, %c14_508] : memref<8x16xf32, #tpu.memory_space<smem>>
      memref.store %1100, %arg10[%c6_507, %c14_508] : memref<8x16xf32, #tpu.memory_space<smem>>
      %1114 = arith.mulf %1102, %1102 : f32
      %1115 = arith.mulf %1104, %1104 : f32
      %1116 = arith.addf %1114, %1115 : f32
      %1117 = arith.mulf %1106, %1106 : f32
      %1118 = arith.addf %1116, %1117 : f32
      %1119 = arith.mulf %1108, %1108 : f32
      %1120 = arith.addf %1118, %1119 : f32
      %1121 = math.sqrt %1120 : f32
      %cst_509 = arith.constant 5.000000e-01 : f32
      %1122 = arith.subf %1121, %cst_509 : f32
      %cst_510 = arith.constant 0.000000e+00 : f32
      %1123 = arith.maximumf %1122, %cst_510 : f32
      %cst_511 = arith.constant 2.560000e+02 : f32
      %1124 = arith.subf %cst_511, %1077 : f32
      %1125 = arith.mulf %1123, %1123 : f32
      %1126 = vector.broadcast %1125 : f32 to vector<1x1xf32>
      %cst_512 = arith.constant 1.000000e+00 : f32
      %1127 = vector.broadcast %cst_512 : f32 to vector<1x1xf32>
      %1128 = arith.addf %1126, %1127 : vector<1x1xf32>
      %1129 = math.log %1128 : vector<1x1xf32>
      %1130 = vector.shape_cast %1129 : vector<1x1xf32> to vector<1x1x1xf32>
      %cst_513 = arith.constant dense<0.000000e+00> : vector<1xf32>
      %1131 = vector.multi_reduction <add>, %1130, %cst_513 [1, 2] : vector<1x1x1xf32> to vector<1xf32>
      %1132 = vector.shape_cast %1131 : vector<1xf32> to vector<1x1x1xf32>
      %1133 = vector.extract %1132[0, 0, 0] : f32 from vector<1x1x1xf32>
      %1134 = arith.mulf %1124, %1133 : f32
      %1135 = arith.mulf %1134, %1100 : f32
      %1136 = arith.addf %1062, %1135 : f32
      %c14_i32 = arith.constant 14 : i32
      %1137 = vector.broadcast %c14_i32 : i32 to vector<1x128xi32>
      %1138 = arith.cmpi eq, %22, %1137 : vector<1x128xi32>
      %1139 = vector.broadcast %1102 : f32 to vector<1x128xf32>
      %1140 = arith.select %1138, %1139, %1066 : vector<1x128xi1>, vector<1x128xf32>
      %1141 = vector.broadcast %1104 : f32 to vector<1x128xf32>
      %1142 = arith.select %1138, %1141, %1068 : vector<1x128xi1>, vector<1x128xf32>
      %1143 = vector.broadcast %1106 : f32 to vector<1x128xf32>
      %1144 = arith.select %1138, %1143, %1070 : vector<1x128xi1>, vector<1x128xf32>
      %1145 = vector.broadcast %1108 : f32 to vector<1x128xf32>
      %1146 = arith.select %1138, %1145, %1072 : vector<1x128xi1>, vector<1x128xf32>
      %cst_514 = arith.constant 1.600000e+01 : f32
      %1147 = arith.cmpf ole, %cst_514, %21 : f32
      %1148 = arith.extui %1147 : i1 to i32
      %1149 = arith.sitofp %1148 : i32 to f32
      %c4_515 = arith.constant 4 : index
      %c15 = arith.constant 15 : index
      %1150 = memref.load %arg10[%c4_515, %c15] : memref<8x16xf32, #tpu.memory_space<smem>>
      %c5_516 = arith.constant 5 : index
      %c15_517 = arith.constant 15 : index
      %1151 = memref.load %arg10[%c5_516, %c15_517] : memref<8x16xf32, #tpu.memory_space<smem>>
      %cst_518 = arith.constant 5.000000e-01 : f32
      %1152 = arith.cmpf olt, %1150, %cst_518 : f32
      %1153 = arith.extui %1152 : i1 to i32
      %1154 = arith.sitofp %1153 : i32 to f32
      %1155 = arith.addf %1150, %1154 : f32
      %cst_519 = arith.constant 5.000000e-01 : f32
      %1156 = arith.cmpf olt, %1151, %cst_519 : f32
      %1157 = arith.extui %1156 : i1 to i32
      %1158 = arith.sitofp %1157 : i32 to f32
      %1159 = arith.addf %1151, %1158 : f32
      %cst_520 = arith.constant 1.000000e+00 : f32
      %1160 = vector.broadcast %cst_520 : f32 to vector<1x1xf32>
      %1161 = vector.broadcast %1155 : f32 to vector<1x1xf32>
      %1162 = arith.divf %1160, %1161 : vector<1x1xf32>
      %1163 = vector.shape_cast %1162 : vector<1x1xf32> to vector<1x1x1xf32>
      %cst_521 = arith.constant dense<0.000000e+00> : vector<1xf32>
      %1164 = vector.multi_reduction <add>, %1163, %cst_521 [1, 2] : vector<1x1x1xf32> to vector<1xf32>
      %1165 = vector.shape_cast %1164 : vector<1xf32> to vector<1x1x1xf32>
      %1166 = vector.extract %1165[0, 0, 0] : f32 from vector<1x1x1xf32>
      %cst_522 = arith.constant 1.000000e+00 : f32
      %1167 = vector.broadcast %cst_522 : f32 to vector<1x1xf32>
      %1168 = vector.broadcast %1159 : f32 to vector<1x1xf32>
      %1169 = arith.divf %1167, %1168 : vector<1x1xf32>
      %1170 = vector.shape_cast %1169 : vector<1x1xf32> to vector<1x1x1xf32>
      %cst_523 = arith.constant dense<0.000000e+00> : vector<1xf32>
      %1171 = vector.multi_reduction <add>, %1170, %cst_523 [1, 2] : vector<1x1x1xf32> to vector<1xf32>
      %1172 = vector.shape_cast %1171 : vector<1xf32> to vector<1x1x1xf32>
      %1173 = vector.extract %1172[0, 0, 0] : f32 from vector<1x1x1xf32>
      %1174 = arith.mulf %1149, %1173 : f32
      %c0_524 = arith.constant 0 : index
      %c15_525 = arith.constant 15 : index
      %1175 = memref.load %arg10[%c0_524, %c15_525] : memref<8x16xf32, #tpu.memory_space<smem>>
      %1176 = arith.mulf %1175, %1166 : f32
      %c1_526 = arith.constant 1 : index
      %c15_527 = arith.constant 15 : index
      %1177 = memref.load %arg10[%c1_526, %c15_527] : memref<8x16xf32, #tpu.memory_space<smem>>
      %1178 = arith.mulf %1177, %1166 : f32
      %c2_528 = arith.constant 2 : index
      %c15_529 = arith.constant 15 : index
      %1179 = memref.load %arg10[%c2_528, %c15_529] : memref<8x16xf32, #tpu.memory_space<smem>>
      %1180 = arith.mulf %1179, %1166 : f32
      %c3_530 = arith.constant 3 : index
      %c15_531 = arith.constant 15 : index
      %1181 = memref.load %arg10[%c3_530, %c15_531] : memref<8x16xf32, #tpu.memory_space<smem>>
      %1182 = arith.mulf %1181, %1166 : f32
      %c0_532 = arith.constant 0 : index
      %c15_533 = arith.constant 15 : index
      %1183 = memref.load %arg10[%c0_532, %c15_533] : memref<8x16xf32, #tpu.memory_space<smem>>
      memref.store %1176, %arg10[%c0_532, %c15_533] : memref<8x16xf32, #tpu.memory_space<smem>>
      %c1_534 = arith.constant 1 : index
      %c15_535 = arith.constant 15 : index
      %1184 = memref.load %arg10[%c1_534, %c15_535] : memref<8x16xf32, #tpu.memory_space<smem>>
      memref.store %1178, %arg10[%c1_534, %c15_535] : memref<8x16xf32, #tpu.memory_space<smem>>
      %c2_536 = arith.constant 2 : index
      %c15_537 = arith.constant 15 : index
      %1185 = memref.load %arg10[%c2_536, %c15_537] : memref<8x16xf32, #tpu.memory_space<smem>>
      memref.store %1180, %arg10[%c2_536, %c15_537] : memref<8x16xf32, #tpu.memory_space<smem>>
      %c3_538 = arith.constant 3 : index
      %c15_539 = arith.constant 15 : index
      %1186 = memref.load %arg10[%c3_538, %c15_539] : memref<8x16xf32, #tpu.memory_space<smem>>
      memref.store %1182, %arg10[%c3_538, %c15_539] : memref<8x16xf32, #tpu.memory_space<smem>>
      %c6_540 = arith.constant 6 : index
      %c15_541 = arith.constant 15 : index
      %1187 = memref.load %arg10[%c6_540, %c15_541] : memref<8x16xf32, #tpu.memory_space<smem>>
      memref.store %1174, %arg10[%c6_540, %c15_541] : memref<8x16xf32, #tpu.memory_space<smem>>
      %1188 = arith.mulf %1176, %1176 : f32
      %1189 = arith.mulf %1178, %1178 : f32
      %1190 = arith.addf %1188, %1189 : f32
      %1191 = arith.mulf %1180, %1180 : f32
      %1192 = arith.addf %1190, %1191 : f32
      %1193 = arith.mulf %1182, %1182 : f32
      %1194 = arith.addf %1192, %1193 : f32
      %1195 = math.sqrt %1194 : f32
      %cst_542 = arith.constant 5.000000e-01 : f32
      %1196 = arith.subf %1195, %cst_542 : f32
      %cst_543 = arith.constant 0.000000e+00 : f32
      %1197 = arith.maximumf %1196, %cst_543 : f32
      %cst_544 = arith.constant 2.560000e+02 : f32
      %1198 = arith.subf %cst_544, %1151 : f32
      %1199 = arith.mulf %1197, %1197 : f32
      %1200 = vector.broadcast %1199 : f32 to vector<1x1xf32>
      %cst_545 = arith.constant 1.000000e+00 : f32
      %1201 = vector.broadcast %cst_545 : f32 to vector<1x1xf32>
      %1202 = arith.addf %1200, %1201 : vector<1x1xf32>
      %1203 = math.log %1202 : vector<1x1xf32>
      %1204 = vector.shape_cast %1203 : vector<1x1xf32> to vector<1x1x1xf32>
      %cst_546 = arith.constant dense<0.000000e+00> : vector<1xf32>
      %1205 = vector.multi_reduction <add>, %1204, %cst_546 [1, 2] : vector<1x1x1xf32> to vector<1xf32>
      %1206 = vector.shape_cast %1205 : vector<1xf32> to vector<1x1x1xf32>
      %1207 = vector.extract %1206[0, 0, 0] : f32 from vector<1x1x1xf32>
      %1208 = arith.mulf %1198, %1207 : f32
      %1209 = arith.mulf %1208, %1174 : f32
      %1210 = arith.addf %1136, %1209 : f32
      %c15_i32 = arith.constant 15 : i32
      %1211 = vector.broadcast %c15_i32 : i32 to vector<1x128xi32>
      %1212 = arith.cmpi eq, %22, %1211 : vector<1x128xi32>
      %1213 = vector.broadcast %1176 : f32 to vector<1x128xf32>
      %1214 = arith.select %1212, %1213, %1140 : vector<1x128xi1>, vector<1x128xf32>
      %1215 = vector.broadcast %1178 : f32 to vector<1x128xf32>
      %1216 = arith.select %1212, %1215, %1142 : vector<1x128xi1>, vector<1x128xf32>
      %1217 = vector.broadcast %1180 : f32 to vector<1x128xf32>
      %1218 = arith.select %1212, %1217, %1144 : vector<1x128xi1>, vector<1x128xf32>
      %1219 = vector.broadcast %1182 : f32 to vector<1x128xf32>
      %1220 = arith.select %1212, %1219, %1146 : vector<1x128xi1>, vector<1x128xf32>
      %c5_547 = arith.constant 5 : index
      %1221 = memref.load %arg11[%c5_547] : memref<8xf32, #tpu.memory_space<smem>>
      memref.store %1210, %arg11[%c5_547] : memref<8xf32, #tpu.memory_space<smem>>
      %1222 = vector.broadcast %66 : f32 to vector<1x128xf32>
      %1223 = arith.subf %1214, %1222 : vector<1x128xf32>
      %1224 = vector.broadcast %68 : f32 to vector<1x128xf32>
      %1225 = arith.subf %1216, %1224 : vector<1x128xf32>
      %1226 = vector.broadcast %70 : f32 to vector<1x128xf32>
      %1227 = arith.subf %1218, %1226 : vector<1x128xf32>
      %1228 = vector.broadcast %72 : f32 to vector<1x128xf32>
      %1229 = arith.subf %1220, %1228 : vector<1x128xf32>
      %1230 = arith.mulf %1223, %1223 : vector<1x128xf32>
      %1231 = arith.mulf %1225, %1225 : vector<1x128xf32>
      %1232 = arith.addf %1230, %1231 : vector<1x128xf32>
      %1233 = arith.mulf %1227, %1227 : vector<1x128xf32>
      %1234 = arith.addf %1232, %1233 : vector<1x128xf32>
      %1235 = arith.mulf %1229, %1229 : vector<1x128xf32>
      %1236 = arith.addf %1234, %1235 : vector<1x128xf32>
      %1237 = math.sqrt %1236 : vector<1x128xf32>
      %cst_548 = arith.constant 3.000000e+00 : f32
      %1238 = vector.broadcast %cst_548 : f32 to vector<1x128xf32>
      %1239 = arith.subf %1238, %1237 : vector<1x128xf32>
      %cst_549 = arith.constant 0.000000e+00 : f32
      %1240 = vector.broadcast %cst_549 : f32 to vector<1x128xf32>
      %1241 = arith.maximumf %1239, %1240 : vector<1x128xf32>
      %c0_i32_550 = arith.constant 0 : i32
      %1242 = vector.broadcast %c0_i32_550 : i32 to vector<1x128xi32>
      %1243 = arith.cmpi sgt, %22, %1242 : vector<1x128xi32>
      %1244 = arith.extui %1243 : vector<1x128xi1> to vector<1x128xi32>
      %1245 = arith.sitofp %1244 : vector<1x128xi32> to vector<1x128xf32>
      %1246 = arith.mulf %1245, %32 : vector<1x128xf32>
      %1247 = arith.mulf %1246, %1241 : vector<1x128xf32>
      %1248 = arith.mulf %1247, %1241 : vector<1x128xf32>
      %1249 = vector.shape_cast %1248 : vector<1x128xf32> to vector<1x1x128xf32>
      %cst_551 = arith.constant dense<0.000000e+00> : vector<1xf32>
      %1250 = vector.multi_reduction <add>, %1249, %cst_551 [1, 2] : vector<1x1x128xf32> to vector<1xf32>
      %1251 = vector.shape_cast %1250 : vector<1xf32> to vector<1x1x1xf32>
      %1252 = vector.extract %1251[0, 0, 0] : f32 from vector<1x1x1xf32>
      %1253 = arith.mulf %39, %1252 : f32
      %cst_552 = arith.constant 0.000000e+00 : f32
      %1254 = arith.addf %cst_552, %1253 : f32
      %1255 = vector.broadcast %140 : f32 to vector<1x128xf32>
      %1256 = arith.subf %1214, %1255 : vector<1x128xf32>
      %1257 = vector.broadcast %142 : f32 to vector<1x128xf32>
      %1258 = arith.subf %1216, %1257 : vector<1x128xf32>
      %1259 = vector.broadcast %144 : f32 to vector<1x128xf32>
      %1260 = arith.subf %1218, %1259 : vector<1x128xf32>
      %1261 = vector.broadcast %146 : f32 to vector<1x128xf32>
      %1262 = arith.subf %1220, %1261 : vector<1x128xf32>
      %1263 = arith.mulf %1256, %1256 : vector<1x128xf32>
      %1264 = arith.mulf %1258, %1258 : vector<1x128xf32>
      %1265 = arith.addf %1263, %1264 : vector<1x128xf32>
      %1266 = arith.mulf %1260, %1260 : vector<1x128xf32>
      %1267 = arith.addf %1265, %1266 : vector<1x128xf32>
      %1268 = arith.mulf %1262, %1262 : vector<1x128xf32>
      %1269 = arith.addf %1267, %1268 : vector<1x128xf32>
      %1270 = math.sqrt %1269 : vector<1x128xf32>
      %cst_553 = arith.constant 3.000000e+00 : f32
      %1271 = vector.broadcast %cst_553 : f32 to vector<1x128xf32>
      %1272 = arith.subf %1271, %1270 : vector<1x128xf32>
      %cst_554 = arith.constant 0.000000e+00 : f32
      %1273 = vector.broadcast %cst_554 : f32 to vector<1x128xf32>
      %1274 = arith.maximumf %1272, %1273 : vector<1x128xf32>
      %c1_i32_555 = arith.constant 1 : i32
      %1275 = vector.broadcast %c1_i32_555 : i32 to vector<1x128xi32>
      %1276 = arith.cmpi sgt, %22, %1275 : vector<1x128xi32>
      %1277 = arith.extui %1276 : vector<1x128xi1> to vector<1x128xi32>
      %1278 = arith.sitofp %1277 : vector<1x128xi32> to vector<1x128xf32>
      %1279 = arith.mulf %1278, %32 : vector<1x128xf32>
      %1280 = arith.mulf %1279, %1274 : vector<1x128xf32>
      %1281 = arith.mulf %1280, %1274 : vector<1x128xf32>
      %1282 = vector.shape_cast %1281 : vector<1x128xf32> to vector<1x1x128xf32>
      %cst_556 = arith.constant dense<0.000000e+00> : vector<1xf32>
      %1283 = vector.multi_reduction <add>, %1282, %cst_556 [1, 2] : vector<1x1x128xf32> to vector<1xf32>
      %1284 = vector.shape_cast %1283 : vector<1xf32> to vector<1x1x1xf32>
      %1285 = vector.extract %1284[0, 0, 0] : f32 from vector<1x1x1xf32>
      %1286 = arith.mulf %113, %1285 : f32
      %1287 = arith.addf %1254, %1286 : f32
      %1288 = vector.broadcast %214 : f32 to vector<1x128xf32>
      %1289 = arith.subf %1214, %1288 : vector<1x128xf32>
      %1290 = vector.broadcast %216 : f32 to vector<1x128xf32>
      %1291 = arith.subf %1216, %1290 : vector<1x128xf32>
      %1292 = vector.broadcast %218 : f32 to vector<1x128xf32>
      %1293 = arith.subf %1218, %1292 : vector<1x128xf32>
      %1294 = vector.broadcast %220 : f32 to vector<1x128xf32>
      %1295 = arith.subf %1220, %1294 : vector<1x128xf32>
      %1296 = arith.mulf %1289, %1289 : vector<1x128xf32>
      %1297 = arith.mulf %1291, %1291 : vector<1x128xf32>
      %1298 = arith.addf %1296, %1297 : vector<1x128xf32>
      %1299 = arith.mulf %1293, %1293 : vector<1x128xf32>
      %1300 = arith.addf %1298, %1299 : vector<1x128xf32>
      %1301 = arith.mulf %1295, %1295 : vector<1x128xf32>
      %1302 = arith.addf %1300, %1301 : vector<1x128xf32>
      %1303 = math.sqrt %1302 : vector<1x128xf32>
      %cst_557 = arith.constant 3.000000e+00 : f32
      %1304 = vector.broadcast %cst_557 : f32 to vector<1x128xf32>
      %1305 = arith.subf %1304, %1303 : vector<1x128xf32>
      %cst_558 = arith.constant 0.000000e+00 : f32
      %1306 = vector.broadcast %cst_558 : f32 to vector<1x128xf32>
      %1307 = arith.maximumf %1305, %1306 : vector<1x128xf32>
      %c2_i32_559 = arith.constant 2 : i32
      %1308 = vector.broadcast %c2_i32_559 : i32 to vector<1x128xi32>
      %1309 = arith.cmpi sgt, %22, %1308 : vector<1x128xi32>
      %1310 = arith.extui %1309 : vector<1x128xi1> to vector<1x128xi32>
      %1311 = arith.sitofp %1310 : vector<1x128xi32> to vector<1x128xf32>
      %1312 = arith.mulf %1311, %32 : vector<1x128xf32>
      %1313 = arith.mulf %1312, %1307 : vector<1x128xf32>
      %1314 = arith.mulf %1313, %1307 : vector<1x128xf32>
      %1315 = vector.shape_cast %1314 : vector<1x128xf32> to vector<1x1x128xf32>
      %cst_560 = arith.constant dense<0.000000e+00> : vector<1xf32>
      %1316 = vector.multi_reduction <add>, %1315, %cst_560 [1, 2] : vector<1x1x128xf32> to vector<1xf32>
      %1317 = vector.shape_cast %1316 : vector<1xf32> to vector<1x1x1xf32>
      %1318 = vector.extract %1317[0, 0, 0] : f32 from vector<1x1x1xf32>
      %1319 = arith.mulf %187, %1318 : f32
      %1320 = arith.addf %1287, %1319 : f32
      %1321 = vector.broadcast %288 : f32 to vector<1x128xf32>
      %1322 = arith.subf %1214, %1321 : vector<1x128xf32>
      %1323 = vector.broadcast %290 : f32 to vector<1x128xf32>
      %1324 = arith.subf %1216, %1323 : vector<1x128xf32>
      %1325 = vector.broadcast %292 : f32 to vector<1x128xf32>
      %1326 = arith.subf %1218, %1325 : vector<1x128xf32>
      %1327 = vector.broadcast %294 : f32 to vector<1x128xf32>
      %1328 = arith.subf %1220, %1327 : vector<1x128xf32>
      %1329 = arith.mulf %1322, %1322 : vector<1x128xf32>
      %1330 = arith.mulf %1324, %1324 : vector<1x128xf32>
      %1331 = arith.addf %1329, %1330 : vector<1x128xf32>
      %1332 = arith.mulf %1326, %1326 : vector<1x128xf32>
      %1333 = arith.addf %1331, %1332 : vector<1x128xf32>
      %1334 = arith.mulf %1328, %1328 : vector<1x128xf32>
      %1335 = arith.addf %1333, %1334 : vector<1x128xf32>
      %1336 = math.sqrt %1335 : vector<1x128xf32>
      %cst_561 = arith.constant 3.000000e+00 : f32
      %1337 = vector.broadcast %cst_561 : f32 to vector<1x128xf32>
      %1338 = arith.subf %1337, %1336 : vector<1x128xf32>
      %cst_562 = arith.constant 0.000000e+00 : f32
      %1339 = vector.broadcast %cst_562 : f32 to vector<1x128xf32>
      %1340 = arith.maximumf %1338, %1339 : vector<1x128xf32>
      %c3_i32_563 = arith.constant 3 : i32
      %1341 = vector.broadcast %c3_i32_563 : i32 to vector<1x128xi32>
      %1342 = arith.cmpi sgt, %22, %1341 : vector<1x128xi32>
      %1343 = arith.extui %1342 : vector<1x128xi1> to vector<1x128xi32>
      %1344 = arith.sitofp %1343 : vector<1x128xi32> to vector<1x128xf32>
      %1345 = arith.mulf %1344, %32 : vector<1x128xf32>
      %1346 = arith.mulf %1345, %1340 : vector<1x128xf32>
      %1347 = arith.mulf %1346, %1340 : vector<1x128xf32>
      %1348 = vector.shape_cast %1347 : vector<1x128xf32> to vector<1x1x128xf32>
      %cst_564 = arith.constant dense<0.000000e+00> : vector<1xf32>
      %1349 = vector.multi_reduction <add>, %1348, %cst_564 [1, 2] : vector<1x1x128xf32> to vector<1xf32>
      %1350 = vector.shape_cast %1349 : vector<1xf32> to vector<1x1x1xf32>
      %1351 = vector.extract %1350[0, 0, 0] : f32 from vector<1x1x1xf32>
      %1352 = arith.mulf %261, %1351 : f32
      %1353 = arith.addf %1320, %1352 : f32
      %1354 = vector.broadcast %362 : f32 to vector<1x128xf32>
      %1355 = arith.subf %1214, %1354 : vector<1x128xf32>
      %1356 = vector.broadcast %364 : f32 to vector<1x128xf32>
      %1357 = arith.subf %1216, %1356 : vector<1x128xf32>
      %1358 = vector.broadcast %366 : f32 to vector<1x128xf32>
      %1359 = arith.subf %1218, %1358 : vector<1x128xf32>
      %1360 = vector.broadcast %368 : f32 to vector<1x128xf32>
      %1361 = arith.subf %1220, %1360 : vector<1x128xf32>
      %1362 = arith.mulf %1355, %1355 : vector<1x128xf32>
      %1363 = arith.mulf %1357, %1357 : vector<1x128xf32>
      %1364 = arith.addf %1362, %1363 : vector<1x128xf32>
      %1365 = arith.mulf %1359, %1359 : vector<1x128xf32>
      %1366 = arith.addf %1364, %1365 : vector<1x128xf32>
      %1367 = arith.mulf %1361, %1361 : vector<1x128xf32>
      %1368 = arith.addf %1366, %1367 : vector<1x128xf32>
      %1369 = math.sqrt %1368 : vector<1x128xf32>
      %cst_565 = arith.constant 3.000000e+00 : f32
      %1370 = vector.broadcast %cst_565 : f32 to vector<1x128xf32>
      %1371 = arith.subf %1370, %1369 : vector<1x128xf32>
      %cst_566 = arith.constant 0.000000e+00 : f32
      %1372 = vector.broadcast %cst_566 : f32 to vector<1x128xf32>
      %1373 = arith.maximumf %1371, %1372 : vector<1x128xf32>
      %c4_i32_567 = arith.constant 4 : i32
      %1374 = vector.broadcast %c4_i32_567 : i32 to vector<1x128xi32>
      %1375 = arith.cmpi sgt, %22, %1374 : vector<1x128xi32>
      %1376 = arith.extui %1375 : vector<1x128xi1> to vector<1x128xi32>
      %1377 = arith.sitofp %1376 : vector<1x128xi32> to vector<1x128xf32>
      %1378 = arith.mulf %1377, %32 : vector<1x128xf32>
      %1379 = arith.mulf %1378, %1373 : vector<1x128xf32>
      %1380 = arith.mulf %1379, %1373 : vector<1x128xf32>
      %1381 = vector.shape_cast %1380 : vector<1x128xf32> to vector<1x1x128xf32>
      %cst_568 = arith.constant dense<0.000000e+00> : vector<1xf32>
      %1382 = vector.multi_reduction <add>, %1381, %cst_568 [1, 2] : vector<1x1x128xf32> to vector<1xf32>
      %1383 = vector.shape_cast %1382 : vector<1xf32> to vector<1x1x1xf32>
      %1384 = vector.extract %1383[0, 0, 0] : f32 from vector<1x1x1xf32>
      %1385 = arith.mulf %335, %1384 : f32
      %1386 = arith.addf %1353, %1385 : f32
      %1387 = vector.broadcast %436 : f32 to vector<1x128xf32>
      %1388 = arith.subf %1214, %1387 : vector<1x128xf32>
      %1389 = vector.broadcast %438 : f32 to vector<1x128xf32>
      %1390 = arith.subf %1216, %1389 : vector<1x128xf32>
      %1391 = vector.broadcast %440 : f32 to vector<1x128xf32>
      %1392 = arith.subf %1218, %1391 : vector<1x128xf32>
      %1393 = vector.broadcast %442 : f32 to vector<1x128xf32>
      %1394 = arith.subf %1220, %1393 : vector<1x128xf32>
      %1395 = arith.mulf %1388, %1388 : vector<1x128xf32>
      %1396 = arith.mulf %1390, %1390 : vector<1x128xf32>
      %1397 = arith.addf %1395, %1396 : vector<1x128xf32>
      %1398 = arith.mulf %1392, %1392 : vector<1x128xf32>
      %1399 = arith.addf %1397, %1398 : vector<1x128xf32>
      %1400 = arith.mulf %1394, %1394 : vector<1x128xf32>
      %1401 = arith.addf %1399, %1400 : vector<1x128xf32>
      %1402 = math.sqrt %1401 : vector<1x128xf32>
      %cst_569 = arith.constant 3.000000e+00 : f32
      %1403 = vector.broadcast %cst_569 : f32 to vector<1x128xf32>
      %1404 = arith.subf %1403, %1402 : vector<1x128xf32>
      %cst_570 = arith.constant 0.000000e+00 : f32
      %1405 = vector.broadcast %cst_570 : f32 to vector<1x128xf32>
      %1406 = arith.maximumf %1404, %1405 : vector<1x128xf32>
      %c5_i32_571 = arith.constant 5 : i32
      %1407 = vector.broadcast %c5_i32_571 : i32 to vector<1x128xi32>
      %1408 = arith.cmpi sgt, %22, %1407 : vector<1x128xi32>
      %1409 = arith.extui %1408 : vector<1x128xi1> to vector<1x128xi32>
      %1410 = arith.sitofp %1409 : vector<1x128xi32> to vector<1x128xf32>
      %1411 = arith.mulf %1410, %32 : vector<1x128xf32>
      %1412 = arith.mulf %1411, %1406 : vector<1x128xf32>
      %1413 = arith.mulf %1412, %1406 : vector<1x128xf32>
      %1414 = vector.shape_cast %1413 : vector<1x128xf32> to vector<1x1x128xf32>
      %cst_572 = arith.constant dense<0.000000e+00> : vector<1xf32>
      %1415 = vector.multi_reduction <add>, %1414, %cst_572 [1, 2] : vector<1x1x128xf32> to vector<1xf32>
      %1416 = vector.shape_cast %1415 : vector<1xf32> to vector<1x1x1xf32>
      %1417 = vector.extract %1416[0, 0, 0] : f32 from vector<1x1x1xf32>
      %1418 = arith.mulf %409, %1417 : f32
      %1419 = arith.addf %1386, %1418 : f32
      %1420 = vector.broadcast %510 : f32 to vector<1x128xf32>
      %1421 = arith.subf %1214, %1420 : vector<1x128xf32>
      %1422 = vector.broadcast %512 : f32 to vector<1x128xf32>
      %1423 = arith.subf %1216, %1422 : vector<1x128xf32>
      %1424 = vector.broadcast %514 : f32 to vector<1x128xf32>
      %1425 = arith.subf %1218, %1424 : vector<1x128xf32>
      %1426 = vector.broadcast %516 : f32 to vector<1x128xf32>
      %1427 = arith.subf %1220, %1426 : vector<1x128xf32>
      %1428 = arith.mulf %1421, %1421 : vector<1x128xf32>
      %1429 = arith.mulf %1423, %1423 : vector<1x128xf32>
      %1430 = arith.addf %1428, %1429 : vector<1x128xf32>
      %1431 = arith.mulf %1425, %1425 : vector<1x128xf32>
      %1432 = arith.addf %1430, %1431 : vector<1x128xf32>
      %1433 = arith.mulf %1427, %1427 : vector<1x128xf32>
      %1434 = arith.addf %1432, %1433 : vector<1x128xf32>
      %1435 = math.sqrt %1434 : vector<1x128xf32>
      %cst_573 = arith.constant 3.000000e+00 : f32
      %1436 = vector.broadcast %cst_573 : f32 to vector<1x128xf32>
      %1437 = arith.subf %1436, %1435 : vector<1x128xf32>
      %cst_574 = arith.constant 0.000000e+00 : f32
      %1438 = vector.broadcast %cst_574 : f32 to vector<1x128xf32>
      %1439 = arith.maximumf %1437, %1438 : vector<1x128xf32>
      %c6_i32_575 = arith.constant 6 : i32
      %1440 = vector.broadcast %c6_i32_575 : i32 to vector<1x128xi32>
      %1441 = arith.cmpi sgt, %22, %1440 : vector<1x128xi32>
      %1442 = arith.extui %1441 : vector<1x128xi1> to vector<1x128xi32>
      %1443 = arith.sitofp %1442 : vector<1x128xi32> to vector<1x128xf32>
      %1444 = arith.mulf %1443, %32 : vector<1x128xf32>
      %1445 = arith.mulf %1444, %1439 : vector<1x128xf32>
      %1446 = arith.mulf %1445, %1439 : vector<1x128xf32>
      %1447 = vector.shape_cast %1446 : vector<1x128xf32> to vector<1x1x128xf32>
      %cst_576 = arith.constant dense<0.000000e+00> : vector<1xf32>
      %1448 = vector.multi_reduction <add>, %1447, %cst_576 [1, 2] : vector<1x1x128xf32> to vector<1xf32>
      %1449 = vector.shape_cast %1448 : vector<1xf32> to vector<1x1x1xf32>
      %1450 = vector.extract %1449[0, 0, 0] : f32 from vector<1x1x1xf32>
      %1451 = arith.mulf %483, %1450 : f32
      %1452 = arith.addf %1419, %1451 : f32
      %1453 = vector.broadcast %584 : f32 to vector<1x128xf32>
      %1454 = arith.subf %1214, %1453 : vector<1x128xf32>
      %1455 = vector.broadcast %586 : f32 to vector<1x128xf32>
      %1456 = arith.subf %1216, %1455 : vector<1x128xf32>
      %1457 = vector.broadcast %588 : f32 to vector<1x128xf32>
      %1458 = arith.subf %1218, %1457 : vector<1x128xf32>
      %1459 = vector.broadcast %590 : f32 to vector<1x128xf32>
      %1460 = arith.subf %1220, %1459 : vector<1x128xf32>
      %1461 = arith.mulf %1454, %1454 : vector<1x128xf32>
      %1462 = arith.mulf %1456, %1456 : vector<1x128xf32>
      %1463 = arith.addf %1461, %1462 : vector<1x128xf32>
      %1464 = arith.mulf %1458, %1458 : vector<1x128xf32>
      %1465 = arith.addf %1463, %1464 : vector<1x128xf32>
      %1466 = arith.mulf %1460, %1460 : vector<1x128xf32>
      %1467 = arith.addf %1465, %1466 : vector<1x128xf32>
      %1468 = math.sqrt %1467 : vector<1x128xf32>
      %cst_577 = arith.constant 3.000000e+00 : f32
      %1469 = vector.broadcast %cst_577 : f32 to vector<1x128xf32>
      %1470 = arith.subf %1469, %1468 : vector<1x128xf32>
      %cst_578 = arith.constant 0.000000e+00 : f32
      %1471 = vector.broadcast %cst_578 : f32 to vector<1x128xf32>
      %1472 = arith.maximumf %1470, %1471 : vector<1x128xf32>
      %c7_i32_579 = arith.constant 7 : i32
      %1473 = vector.broadcast %c7_i32_579 : i32 to vector<1x128xi32>
      %1474 = arith.cmpi sgt, %22, %1473 : vector<1x128xi32>
      %1475 = arith.extui %1474 : vector<1x128xi1> to vector<1x128xi32>
      %1476 = arith.sitofp %1475 : vector<1x128xi32> to vector<1x128xf32>
      %1477 = arith.mulf %1476, %32 : vector<1x128xf32>
      %1478 = arith.mulf %1477, %1472 : vector<1x128xf32>
      %1479 = arith.mulf %1478, %1472 : vector<1x128xf32>
      %1480 = vector.shape_cast %1479 : vector<1x128xf32> to vector<1x1x128xf32>
      %cst_580 = arith.constant dense<0.000000e+00> : vector<1xf32>
      %1481 = vector.multi_reduction <add>, %1480, %cst_580 [1, 2] : vector<1x1x128xf32> to vector<1xf32>
      %1482 = vector.shape_cast %1481 : vector<1xf32> to vector<1x1x1xf32>
      %1483 = vector.extract %1482[0, 0, 0] : f32 from vector<1x1x1xf32>
      %1484 = arith.mulf %557, %1483 : f32
      %1485 = arith.addf %1452, %1484 : f32
      %1486 = vector.broadcast %658 : f32 to vector<1x128xf32>
      %1487 = arith.subf %1214, %1486 : vector<1x128xf32>
      %1488 = vector.broadcast %660 : f32 to vector<1x128xf32>
      %1489 = arith.subf %1216, %1488 : vector<1x128xf32>
      %1490 = vector.broadcast %662 : f32 to vector<1x128xf32>
      %1491 = arith.subf %1218, %1490 : vector<1x128xf32>
      %1492 = vector.broadcast %664 : f32 to vector<1x128xf32>
      %1493 = arith.subf %1220, %1492 : vector<1x128xf32>
      %1494 = arith.mulf %1487, %1487 : vector<1x128xf32>
      %1495 = arith.mulf %1489, %1489 : vector<1x128xf32>
      %1496 = arith.addf %1494, %1495 : vector<1x128xf32>
      %1497 = arith.mulf %1491, %1491 : vector<1x128xf32>
      %1498 = arith.addf %1496, %1497 : vector<1x128xf32>
      %1499 = arith.mulf %1493, %1493 : vector<1x128xf32>
      %1500 = arith.addf %1498, %1499 : vector<1x128xf32>
      %1501 = math.sqrt %1500 : vector<1x128xf32>
      %cst_581 = arith.constant 3.000000e+00 : f32
      %1502 = vector.broadcast %cst_581 : f32 to vector<1x128xf32>
      %1503 = arith.subf %1502, %1501 : vector<1x128xf32>
      %cst_582 = arith.constant 0.000000e+00 : f32
      %1504 = vector.broadcast %cst_582 : f32 to vector<1x128xf32>
      %1505 = arith.maximumf %1503, %1504 : vector<1x128xf32>
      %c8_i32_583 = arith.constant 8 : i32
      %1506 = vector.broadcast %c8_i32_583 : i32 to vector<1x128xi32>
      %1507 = arith.cmpi sgt, %22, %1506 : vector<1x128xi32>
      %1508 = arith.extui %1507 : vector<1x128xi1> to vector<1x128xi32>
      %1509 = arith.sitofp %1508 : vector<1x128xi32> to vector<1x128xf32>
      %1510 = arith.mulf %1509, %32 : vector<1x128xf32>
      %1511 = arith.mulf %1510, %1505 : vector<1x128xf32>
      %1512 = arith.mulf %1511, %1505 : vector<1x128xf32>
      %1513 = vector.shape_cast %1512 : vector<1x128xf32> to vector<1x1x128xf32>
      %cst_584 = arith.constant dense<0.000000e+00> : vector<1xf32>
      %1514 = vector.multi_reduction <add>, %1513, %cst_584 [1, 2] : vector<1x1x128xf32> to vector<1xf32>
      %1515 = vector.shape_cast %1514 : vector<1xf32> to vector<1x1x1xf32>
      %1516 = vector.extract %1515[0, 0, 0] : f32 from vector<1x1x1xf32>
      %1517 = arith.mulf %631, %1516 : f32
      %1518 = arith.addf %1485, %1517 : f32
      %1519 = vector.broadcast %732 : f32 to vector<1x128xf32>
      %1520 = arith.subf %1214, %1519 : vector<1x128xf32>
      %1521 = vector.broadcast %734 : f32 to vector<1x128xf32>
      %1522 = arith.subf %1216, %1521 : vector<1x128xf32>
      %1523 = vector.broadcast %736 : f32 to vector<1x128xf32>
      %1524 = arith.subf %1218, %1523 : vector<1x128xf32>
      %1525 = vector.broadcast %738 : f32 to vector<1x128xf32>
      %1526 = arith.subf %1220, %1525 : vector<1x128xf32>
      %1527 = arith.mulf %1520, %1520 : vector<1x128xf32>
      %1528 = arith.mulf %1522, %1522 : vector<1x128xf32>
      %1529 = arith.addf %1527, %1528 : vector<1x128xf32>
      %1530 = arith.mulf %1524, %1524 : vector<1x128xf32>
      %1531 = arith.addf %1529, %1530 : vector<1x128xf32>
      %1532 = arith.mulf %1526, %1526 : vector<1x128xf32>
      %1533 = arith.addf %1531, %1532 : vector<1x128xf32>
      %1534 = math.sqrt %1533 : vector<1x128xf32>
      %cst_585 = arith.constant 3.000000e+00 : f32
      %1535 = vector.broadcast %cst_585 : f32 to vector<1x128xf32>
      %1536 = arith.subf %1535, %1534 : vector<1x128xf32>
      %cst_586 = arith.constant 0.000000e+00 : f32
      %1537 = vector.broadcast %cst_586 : f32 to vector<1x128xf32>
      %1538 = arith.maximumf %1536, %1537 : vector<1x128xf32>
      %c9_i32_587 = arith.constant 9 : i32
      %1539 = vector.broadcast %c9_i32_587 : i32 to vector<1x128xi32>
      %1540 = arith.cmpi sgt, %22, %1539 : vector<1x128xi32>
      %1541 = arith.extui %1540 : vector<1x128xi1> to vector<1x128xi32>
      %1542 = arith.sitofp %1541 : vector<1x128xi32> to vector<1x128xf32>
      %1543 = arith.mulf %1542, %32 : vector<1x128xf32>
      %1544 = arith.mulf %1543, %1538 : vector<1x128xf32>
      %1545 = arith.mulf %1544, %1538 : vector<1x128xf32>
      %1546 = vector.shape_cast %1545 : vector<1x128xf32> to vector<1x1x128xf32>
      %cst_588 = arith.constant dense<0.000000e+00> : vector<1xf32>
      %1547 = vector.multi_reduction <add>, %1546, %cst_588 [1, 2] : vector<1x1x128xf32> to vector<1xf32>
      %1548 = vector.shape_cast %1547 : vector<1xf32> to vector<1x1x1xf32>
      %1549 = vector.extract %1548[0, 0, 0] : f32 from vector<1x1x1xf32>
      %1550 = arith.mulf %705, %1549 : f32
      %1551 = arith.addf %1518, %1550 : f32
      %1552 = vector.broadcast %806 : f32 to vector<1x128xf32>
      %1553 = arith.subf %1214, %1552 : vector<1x128xf32>
      %1554 = vector.broadcast %808 : f32 to vector<1x128xf32>
      %1555 = arith.subf %1216, %1554 : vector<1x128xf32>
      %1556 = vector.broadcast %810 : f32 to vector<1x128xf32>
      %1557 = arith.subf %1218, %1556 : vector<1x128xf32>
      %1558 = vector.broadcast %812 : f32 to vector<1x128xf32>
      %1559 = arith.subf %1220, %1558 : vector<1x128xf32>
      %1560 = arith.mulf %1553, %1553 : vector<1x128xf32>
      %1561 = arith.mulf %1555, %1555 : vector<1x128xf32>
      %1562 = arith.addf %1560, %1561 : vector<1x128xf32>
      %1563 = arith.mulf %1557, %1557 : vector<1x128xf32>
      %1564 = arith.addf %1562, %1563 : vector<1x128xf32>
      %1565 = arith.mulf %1559, %1559 : vector<1x128xf32>
      %1566 = arith.addf %1564, %1565 : vector<1x128xf32>
      %1567 = math.sqrt %1566 : vector<1x128xf32>
      %cst_589 = arith.constant 3.000000e+00 : f32
      %1568 = vector.broadcast %cst_589 : f32 to vector<1x128xf32>
      %1569 = arith.subf %1568, %1567 : vector<1x128xf32>
      %cst_590 = arith.constant 0.000000e+00 : f32
      %1570 = vector.broadcast %cst_590 : f32 to vector<1x128xf32>
      %1571 = arith.maximumf %1569, %1570 : vector<1x128xf32>
      %c10_i32_591 = arith.constant 10 : i32
      %1572 = vector.broadcast %c10_i32_591 : i32 to vector<1x128xi32>
      %1573 = arith.cmpi sgt, %22, %1572 : vector<1x128xi32>
      %1574 = arith.extui %1573 : vector<1x128xi1> to vector<1x128xi32>
      %1575 = arith.sitofp %1574 : vector<1x128xi32> to vector<1x128xf32>
      %1576 = arith.mulf %1575, %32 : vector<1x128xf32>
      %1577 = arith.mulf %1576, %1571 : vector<1x128xf32>
      %1578 = arith.mulf %1577, %1571 : vector<1x128xf32>
      %1579 = vector.shape_cast %1578 : vector<1x128xf32> to vector<1x1x128xf32>
      %cst_592 = arith.constant dense<0.000000e+00> : vector<1xf32>
      %1580 = vector.multi_reduction <add>, %1579, %cst_592 [1, 2] : vector<1x1x128xf32> to vector<1xf32>
      %1581 = vector.shape_cast %1580 : vector<1xf32> to vector<1x1x1xf32>
      %1582 = vector.extract %1581[0, 0, 0] : f32 from vector<1x1x1xf32>
      %1583 = arith.mulf %779, %1582 : f32
      %1584 = arith.addf %1551, %1583 : f32
      %1585 = vector.broadcast %880 : f32 to vector<1x128xf32>
      %1586 = arith.subf %1214, %1585 : vector<1x128xf32>
      %1587 = vector.broadcast %882 : f32 to vector<1x128xf32>
      %1588 = arith.subf %1216, %1587 : vector<1x128xf32>
      %1589 = vector.broadcast %884 : f32 to vector<1x128xf32>
      %1590 = arith.subf %1218, %1589 : vector<1x128xf32>
      %1591 = vector.broadcast %886 : f32 to vector<1x128xf32>
      %1592 = arith.subf %1220, %1591 : vector<1x128xf32>
      %1593 = arith.mulf %1586, %1586 : vector<1x128xf32>
      %1594 = arith.mulf %1588, %1588 : vector<1x128xf32>
      %1595 = arith.addf %1593, %1594 : vector<1x128xf32>
      %1596 = arith.mulf %1590, %1590 : vector<1x128xf32>
      %1597 = arith.addf %1595, %1596 : vector<1x128xf32>
      %1598 = arith.mulf %1592, %1592 : vector<1x128xf32>
      %1599 = arith.addf %1597, %1598 : vector<1x128xf32>
      %1600 = math.sqrt %1599 : vector<1x128xf32>
      %cst_593 = arith.constant 3.000000e+00 : f32
      %1601 = vector.broadcast %cst_593 : f32 to vector<1x128xf32>
      %1602 = arith.subf %1601, %1600 : vector<1x128xf32>
      %cst_594 = arith.constant 0.000000e+00 : f32
      %1603 = vector.broadcast %cst_594 : f32 to vector<1x128xf32>
      %1604 = arith.maximumf %1602, %1603 : vector<1x128xf32>
      %c11_i32_595 = arith.constant 11 : i32
      %1605 = vector.broadcast %c11_i32_595 : i32 to vector<1x128xi32>
      %1606 = arith.cmpi sgt, %22, %1605 : vector<1x128xi32>
      %1607 = arith.extui %1606 : vector<1x128xi1> to vector<1x128xi32>
      %1608 = arith.sitofp %1607 : vector<1x128xi32> to vector<1x128xf32>
      %1609 = arith.mulf %1608, %32 : vector<1x128xf32>
      %1610 = arith.mulf %1609, %1604 : vector<1x128xf32>
      %1611 = arith.mulf %1610, %1604 : vector<1x128xf32>
      %1612 = vector.shape_cast %1611 : vector<1x128xf32> to vector<1x1x128xf32>
      %cst_596 = arith.constant dense<0.000000e+00> : vector<1xf32>
      %1613 = vector.multi_reduction <add>, %1612, %cst_596 [1, 2] : vector<1x1x128xf32> to vector<1xf32>
      %1614 = vector.shape_cast %1613 : vector<1xf32> to vector<1x1x1xf32>
      %1615 = vector.extract %1614[0, 0, 0] : f32 from vector<1x1x1xf32>
      %1616 = arith.mulf %853, %1615 : f32
      %1617 = arith.addf %1584, %1616 : f32
      %1618 = vector.broadcast %954 : f32 to vector<1x128xf32>
      %1619 = arith.subf %1214, %1618 : vector<1x128xf32>
      %1620 = vector.broadcast %956 : f32 to vector<1x128xf32>
      %1621 = arith.subf %1216, %1620 : vector<1x128xf32>
      %1622 = vector.broadcast %958 : f32 to vector<1x128xf32>
      %1623 = arith.subf %1218, %1622 : vector<1x128xf32>
      %1624 = vector.broadcast %960 : f32 to vector<1x128xf32>
      %1625 = arith.subf %1220, %1624 : vector<1x128xf32>
      %1626 = arith.mulf %1619, %1619 : vector<1x128xf32>
      %1627 = arith.mulf %1621, %1621 : vector<1x128xf32>
      %1628 = arith.addf %1626, %1627 : vector<1x128xf32>
      %1629 = arith.mulf %1623, %1623 : vector<1x128xf32>
      %1630 = arith.addf %1628, %1629 : vector<1x128xf32>
      %1631 = arith.mulf %1625, %1625 : vector<1x128xf32>
      %1632 = arith.addf %1630, %1631 : vector<1x128xf32>
      %1633 = math.sqrt %1632 : vector<1x128xf32>
      %cst_597 = arith.constant 3.000000e+00 : f32
      %1634 = vector.broadcast %cst_597 : f32 to vector<1x128xf32>
      %1635 = arith.subf %1634, %1633 : vector<1x128xf32>
      %cst_598 = arith.constant 0.000000e+00 : f32
      %1636 = vector.broadcast %cst_598 : f32 to vector<1x128xf32>
      %1637 = arith.maximumf %1635, %1636 : vector<1x128xf32>
      %c12_i32_599 = arith.constant 12 : i32
      %1638 = vector.broadcast %c12_i32_599 : i32 to vector<1x128xi32>
      %1639 = arith.cmpi sgt, %22, %1638 : vector<1x128xi32>
      %1640 = arith.extui %1639 : vector<1x128xi1> to vector<1x128xi32>
      %1641 = arith.sitofp %1640 : vector<1x128xi32> to vector<1x128xf32>
      %1642 = arith.mulf %1641, %32 : vector<1x128xf32>
      %1643 = arith.mulf %1642, %1637 : vector<1x128xf32>
      %1644 = arith.mulf %1643, %1637 : vector<1x128xf32>
      %1645 = vector.shape_cast %1644 : vector<1x128xf32> to vector<1x1x128xf32>
      %cst_600 = arith.constant dense<0.000000e+00> : vector<1xf32>
      %1646 = vector.multi_reduction <add>, %1645, %cst_600 [1, 2] : vector<1x1x128xf32> to vector<1xf32>
      %1647 = vector.shape_cast %1646 : vector<1xf32> to vector<1x1x1xf32>
      %1648 = vector.extract %1647[0, 0, 0] : f32 from vector<1x1x1xf32>
      %1649 = arith.mulf %927, %1648 : f32
      %1650 = arith.addf %1617, %1649 : f32
      %1651 = vector.broadcast %1028 : f32 to vector<1x128xf32>
      %1652 = arith.subf %1214, %1651 : vector<1x128xf32>
      %1653 = vector.broadcast %1030 : f32 to vector<1x128xf32>
      %1654 = arith.subf %1216, %1653 : vector<1x128xf32>
      %1655 = vector.broadcast %1032 : f32 to vector<1x128xf32>
      %1656 = arith.subf %1218, %1655 : vector<1x128xf32>
      %1657 = vector.broadcast %1034 : f32 to vector<1x128xf32>
      %1658 = arith.subf %1220, %1657 : vector<1x128xf32>
      %1659 = arith.mulf %1652, %1652 : vector<1x128xf32>
      %1660 = arith.mulf %1654, %1654 : vector<1x128xf32>
      %1661 = arith.addf %1659, %1660 : vector<1x128xf32>
      %1662 = arith.mulf %1656, %1656 : vector<1x128xf32>
      %1663 = arith.addf %1661, %1662 : vector<1x128xf32>
      %1664 = arith.mulf %1658, %1658 : vector<1x128xf32>
      %1665 = arith.addf %1663, %1664 : vector<1x128xf32>
      %1666 = math.sqrt %1665 : vector<1x128xf32>
      %cst_601 = arith.constant 3.000000e+00 : f32
      %1667 = vector.broadcast %cst_601 : f32 to vector<1x128xf32>
      %1668 = arith.subf %1667, %1666 : vector<1x128xf32>
      %cst_602 = arith.constant 0.000000e+00 : f32
      %1669 = vector.broadcast %cst_602 : f32 to vector<1x128xf32>
      %1670 = arith.maximumf %1668, %1669 : vector<1x128xf32>
      %c13_i32_603 = arith.constant 13 : i32
      %1671 = vector.broadcast %c13_i32_603 : i32 to vector<1x128xi32>
      %1672 = arith.cmpi sgt, %22, %1671 : vector<1x128xi32>
      %1673 = arith.extui %1672 : vector<1x128xi1> to vector<1x128xi32>
      %1674 = arith.sitofp %1673 : vector<1x128xi32> to vector<1x128xf32>
      %1675 = arith.mulf %1674, %32 : vector<1x128xf32>
      %1676 = arith.mulf %1675, %1670 : vector<1x128xf32>
      %1677 = arith.mulf %1676, %1670 : vector<1x128xf32>
      %1678 = vector.shape_cast %1677 : vector<1x128xf32> to vector<1x1x128xf32>
      %cst_604 = arith.constant dense<0.000000e+00> : vector<1xf32>
      %1679 = vector.multi_reduction <add>, %1678, %cst_604 [1, 2] : vector<1x1x128xf32> to vector<1xf32>
      %1680 = vector.shape_cast %1679 : vector<1xf32> to vector<1x1x1xf32>
      %1681 = vector.extract %1680[0, 0, 0] : f32 from vector<1x1x1xf32>
      %1682 = arith.mulf %1001, %1681 : f32
      %1683 = arith.addf %1650, %1682 : f32
      %1684 = vector.broadcast %1102 : f32 to vector<1x128xf32>
      %1685 = arith.subf %1214, %1684 : vector<1x128xf32>
      %1686 = vector.broadcast %1104 : f32 to vector<1x128xf32>
      %1687 = arith.subf %1216, %1686 : vector<1x128xf32>
      %1688 = vector.broadcast %1106 : f32 to vector<1x128xf32>
      %1689 = arith.subf %1218, %1688 : vector<1x128xf32>
      %1690 = vector.broadcast %1108 : f32 to vector<1x128xf32>
      %1691 = arith.subf %1220, %1690 : vector<1x128xf32>
      %1692 = arith.mulf %1685, %1685 : vector<1x128xf32>
      %1693 = arith.mulf %1687, %1687 : vector<1x128xf32>
      %1694 = arith.addf %1692, %1693 : vector<1x128xf32>
      %1695 = arith.mulf %1689, %1689 : vector<1x128xf32>
      %1696 = arith.addf %1694, %1695 : vector<1x128xf32>
      %1697 = arith.mulf %1691, %1691 : vector<1x128xf32>
      %1698 = arith.addf %1696, %1697 : vector<1x128xf32>
      %1699 = math.sqrt %1698 : vector<1x128xf32>
      %cst_605 = arith.constant 3.000000e+00 : f32
      %1700 = vector.broadcast %cst_605 : f32 to vector<1x128xf32>
      %1701 = arith.subf %1700, %1699 : vector<1x128xf32>
      %cst_606 = arith.constant 0.000000e+00 : f32
      %1702 = vector.broadcast %cst_606 : f32 to vector<1x128xf32>
      %1703 = arith.maximumf %1701, %1702 : vector<1x128xf32>
      %c14_i32_607 = arith.constant 14 : i32
      %1704 = vector.broadcast %c14_i32_607 : i32 to vector<1x128xi32>
      %1705 = arith.cmpi sgt, %22, %1704 : vector<1x128xi32>
      %1706 = arith.extui %1705 : vector<1x128xi1> to vector<1x128xi32>
      %1707 = arith.sitofp %1706 : vector<1x128xi32> to vector<1x128xf32>
      %1708 = arith.mulf %1707, %32 : vector<1x128xf32>
      %1709 = arith.mulf %1708, %1703 : vector<1x128xf32>
      %1710 = arith.mulf %1709, %1703 : vector<1x128xf32>
      %1711 = vector.shape_cast %1710 : vector<1x128xf32> to vector<1x1x128xf32>
      %cst_608 = arith.constant dense<0.000000e+00> : vector<1xf32>
      %1712 = vector.multi_reduction <add>, %1711, %cst_608 [1, 2] : vector<1x1x128xf32> to vector<1xf32>
      %1713 = vector.shape_cast %1712 : vector<1xf32> to vector<1x1x1xf32>
      %1714 = vector.extract %1713[0, 0, 0] : f32 from vector<1x1x1xf32>
      %1715 = arith.mulf %1075, %1714 : f32
      %1716 = arith.addf %1683, %1715 : f32
      %1717 = vector.broadcast %1176 : f32 to vector<1x128xf32>
      %1718 = arith.subf %1214, %1717 : vector<1x128xf32>
      %1719 = vector.broadcast %1178 : f32 to vector<1x128xf32>
      %1720 = arith.subf %1216, %1719 : vector<1x128xf32>
      %1721 = vector.broadcast %1180 : f32 to vector<1x128xf32>
      %1722 = arith.subf %1218, %1721 : vector<1x128xf32>
      %1723 = vector.broadcast %1182 : f32 to vector<1x128xf32>
      %1724 = arith.subf %1220, %1723 : vector<1x128xf32>
      %1725 = arith.mulf %1718, %1718 : vector<1x128xf32>
      %1726 = arith.mulf %1720, %1720 : vector<1x128xf32>
      %1727 = arith.addf %1725, %1726 : vector<1x128xf32>
      %1728 = arith.mulf %1722, %1722 : vector<1x128xf32>
      %1729 = arith.addf %1727, %1728 : vector<1x128xf32>
      %1730 = arith.mulf %1724, %1724 : vector<1x128xf32>
      %1731 = arith.addf %1729, %1730 : vector<1x128xf32>
      %1732 = math.sqrt %1731 : vector<1x128xf32>
      %cst_609 = arith.constant 3.000000e+00 : f32
      %1733 = vector.broadcast %cst_609 : f32 to vector<1x128xf32>
      %1734 = arith.subf %1733, %1732 : vector<1x128xf32>
      %cst_610 = arith.constant 0.000000e+00 : f32
      %1735 = vector.broadcast %cst_610 : f32 to vector<1x128xf32>
      %1736 = arith.maximumf %1734, %1735 : vector<1x128xf32>
      %c15_i32_611 = arith.constant 15 : i32
      %1737 = vector.broadcast %c15_i32_611 : i32 to vector<1x128xi32>
      %1738 = arith.cmpi sgt, %22, %1737 : vector<1x128xi32>
      %1739 = arith.extui %1738 : vector<1x128xi1> to vector<1x128xi32>
      %1740 = arith.sitofp %1739 : vector<1x128xi32> to vector<1x128xf32>
      %1741 = arith.mulf %1740, %32 : vector<1x128xf32>
      %1742 = arith.mulf %1741, %1736 : vector<1x128xf32>
      %1743 = arith.mulf %1742, %1736 : vector<1x128xf32>
      %1744 = vector.shape_cast %1743 : vector<1x128xf32> to vector<1x1x128xf32>
      %cst_612 = arith.constant dense<0.000000e+00> : vector<1xf32>
      %1745 = vector.multi_reduction <add>, %1744, %cst_612 [1, 2] : vector<1x1x128xf32> to vector<1xf32>
      %1746 = vector.shape_cast %1745 : vector<1xf32> to vector<1x1x1xf32>
      %1747 = vector.extract %1746[0, 0, 0] : f32 from vector<1x1x1xf32>
      %1748 = arith.mulf %1149, %1747 : f32
      %1749 = arith.addf %1716, %1748 : f32
      %c6_613 = arith.constant 6 : index
      %1750 = memref.load %arg11[%c6_613] : memref<8xf32, #tpu.memory_space<smem>>
      memref.store %1749, %arg11[%c6_613] : memref<8xf32, #tpu.memory_space<smem>>
    } else {
    }
    %c1_i32_6 = arith.constant 1 : i32
    %13 = arith.cmpi eq, %arg0, %c1_i32_6 : i32
    %14 = arith.extui %13 : i1 to i32
    %c0_i32_7 = arith.constant 0 : i32
    %15 = arith.cmpi ne, %14, %c0_i32_7 : i32
    scf.if %15 {
      %c0 = arith.constant 0 : index
      %c0_11 = arith.constant 0 : index
      %21 = vector.load %arg6[%c0, %c0_11] : memref<8x128xf32, #tpu.memory_space<vmem>>, vector<8x128xf32>
      %c0_12 = arith.constant 0 : index
      %c0_13 = arith.constant 0 : index
      %c0_14 = arith.constant 0 : index
      %22 = vector.load %arg8[%c0_12, %c0_13, %c0_14] : memref<4x8x128xf32, #tpu.memory_space<vmem>>, vector<1x8x128xf32>
      %23 = vector.shape_cast %22 : vector<1x8x128xf32> to vector<8x128xf32>
      %24 = arith.mulf %23, %21 : vector<8x128xf32>
      %c1 = arith.constant 1 : index
      %c0_15 = arith.constant 0 : index
      %c0_16 = arith.constant 0 : index
      %25 = vector.load %arg8[%c1, %c0_15, %c0_16] : memref<4x8x128xf32, #tpu.memory_space<vmem>>, vector<1x8x128xf32>
      %26 = vector.shape_cast %25 : vector<1x8x128xf32> to vector<8x128xf32>
      %27 = arith.mulf %26, %21 : vector<8x128xf32>
      %c2 = arith.constant 2 : index
      %c0_17 = arith.constant 0 : index
      %c0_18 = arith.constant 0 : index
      %28 = vector.load %arg8[%c2, %c0_17, %c0_18] : memref<4x8x128xf32, #tpu.memory_space<vmem>>, vector<1x8x128xf32>
      %29 = vector.shape_cast %28 : vector<1x8x128xf32> to vector<8x128xf32>
      %30 = arith.mulf %29, %21 : vector<8x128xf32>
      %c3 = arith.constant 3 : index
      %c0_19 = arith.constant 0 : index
      %c0_20 = arith.constant 0 : index
      %31 = vector.load %arg8[%c3, %c0_19, %c0_20] : memref<4x8x128xf32, #tpu.memory_space<vmem>>, vector<1x8x128xf32>
      %32 = vector.shape_cast %31 : vector<1x8x128xf32> to vector<8x128xf32>
      %33 = arith.mulf %32, %21 : vector<8x128xf32>
      %cst = arith.constant 0.000000e+00 : f32
      %34 = vector.broadcast %cst : f32 to vector<8x128xf32>
      %cst_21 = arith.constant 1.000000e+00 : f32
      %35 = vector.broadcast %cst_21 : f32 to vector<8x128xf32>
      %36 = arith.cmpf oeq, %21, %35 : vector<8x128xf32>
      %c0_22 = arith.constant 0 : index
      %c0_23 = arith.constant 0 : index
      %37 = memref.load %arg10[%c0_22, %c0_23] : memref<8x16xf32, #tpu.memory_space<smem>>
      %38 = vector.broadcast %37 : f32 to vector<8x128xf32>
      %39 = arith.select %36, %38, %34 : vector<8x128xi1>, vector<8x128xf32>
      %c1_24 = arith.constant 1 : index
      %c0_25 = arith.constant 0 : index
      %40 = memref.load %arg10[%c1_24, %c0_25] : memref<8x16xf32, #tpu.memory_space<smem>>
      %41 = vector.broadcast %40 : f32 to vector<8x128xf32>
      %42 = arith.select %36, %41, %34 : vector<8x128xi1>, vector<8x128xf32>
      %c2_26 = arith.constant 2 : index
      %c0_27 = arith.constant 0 : index
      %43 = memref.load %arg10[%c2_26, %c0_27] : memref<8x16xf32, #tpu.memory_space<smem>>
      %44 = vector.broadcast %43 : f32 to vector<8x128xf32>
      %45 = arith.select %36, %44, %34 : vector<8x128xi1>, vector<8x128xf32>
      %c3_28 = arith.constant 3 : index
      %c0_29 = arith.constant 0 : index
      %46 = memref.load %arg10[%c3_28, %c0_29] : memref<8x16xf32, #tpu.memory_space<smem>>
      %47 = vector.broadcast %46 : f32 to vector<8x128xf32>
      %48 = arith.select %36, %47, %34 : vector<8x128xi1>, vector<8x128xf32>
      %c6 = arith.constant 6 : index
      %c0_30 = arith.constant 0 : index
      %49 = memref.load %arg10[%c6, %c0_30] : memref<8x16xf32, #tpu.memory_space<smem>>
      %50 = vector.broadcast %49 : f32 to vector<8x128xf32>
      %51 = arith.select %36, %50, %34 : vector<8x128xi1>, vector<8x128xf32>
      %cst_31 = arith.constant 2.000000e+00 : f32
      %52 = vector.broadcast %cst_31 : f32 to vector<8x128xf32>
      %53 = arith.cmpf oeq, %21, %52 : vector<8x128xf32>
      %c0_32 = arith.constant 0 : index
      %c1_33 = arith.constant 1 : index
      %54 = memref.load %arg10[%c0_32, %c1_33] : memref<8x16xf32, #tpu.memory_space<smem>>
      %55 = vector.broadcast %54 : f32 to vector<8x128xf32>
      %56 = arith.select %53, %55, %39 : vector<8x128xi1>, vector<8x128xf32>
      %c1_34 = arith.constant 1 : index
      %c1_35 = arith.constant 1 : index
      %57 = memref.load %arg10[%c1_34, %c1_35] : memref<8x16xf32, #tpu.memory_space<smem>>
      %58 = vector.broadcast %57 : f32 to vector<8x128xf32>
      %59 = arith.select %53, %58, %42 : vector<8x128xi1>, vector<8x128xf32>
      %c2_36 = arith.constant 2 : index
      %c1_37 = arith.constant 1 : index
      %60 = memref.load %arg10[%c2_36, %c1_37] : memref<8x16xf32, #tpu.memory_space<smem>>
      %61 = vector.broadcast %60 : f32 to vector<8x128xf32>
      %62 = arith.select %53, %61, %45 : vector<8x128xi1>, vector<8x128xf32>
      %c3_38 = arith.constant 3 : index
      %c1_39 = arith.constant 1 : index
      %63 = memref.load %arg10[%c3_38, %c1_39] : memref<8x16xf32, #tpu.memory_space<smem>>
      %64 = vector.broadcast %63 : f32 to vector<8x128xf32>
      %65 = arith.select %53, %64, %48 : vector<8x128xi1>, vector<8x128xf32>
      %c6_40 = arith.constant 6 : index
      %c1_41 = arith.constant 1 : index
      %66 = memref.load %arg10[%c6_40, %c1_41] : memref<8x16xf32, #tpu.memory_space<smem>>
      %67 = vector.broadcast %66 : f32 to vector<8x128xf32>
      %68 = arith.select %53, %67, %51 : vector<8x128xi1>, vector<8x128xf32>
      %cst_42 = arith.constant 3.000000e+00 : f32
      %69 = vector.broadcast %cst_42 : f32 to vector<8x128xf32>
      %70 = arith.cmpf oeq, %21, %69 : vector<8x128xf32>
      %c0_43 = arith.constant 0 : index
      %c2_44 = arith.constant 2 : index
      %71 = memref.load %arg10[%c0_43, %c2_44] : memref<8x16xf32, #tpu.memory_space<smem>>
      %72 = vector.broadcast %71 : f32 to vector<8x128xf32>
      %73 = arith.select %70, %72, %56 : vector<8x128xi1>, vector<8x128xf32>
      %c1_45 = arith.constant 1 : index
      %c2_46 = arith.constant 2 : index
      %74 = memref.load %arg10[%c1_45, %c2_46] : memref<8x16xf32, #tpu.memory_space<smem>>
      %75 = vector.broadcast %74 : f32 to vector<8x128xf32>
      %76 = arith.select %70, %75, %59 : vector<8x128xi1>, vector<8x128xf32>
      %c2_47 = arith.constant 2 : index
      %c2_48 = arith.constant 2 : index
      %77 = memref.load %arg10[%c2_47, %c2_48] : memref<8x16xf32, #tpu.memory_space<smem>>
      %78 = vector.broadcast %77 : f32 to vector<8x128xf32>
      %79 = arith.select %70, %78, %62 : vector<8x128xi1>, vector<8x128xf32>
      %c3_49 = arith.constant 3 : index
      %c2_50 = arith.constant 2 : index
      %80 = memref.load %arg10[%c3_49, %c2_50] : memref<8x16xf32, #tpu.memory_space<smem>>
      %81 = vector.broadcast %80 : f32 to vector<8x128xf32>
      %82 = arith.select %70, %81, %65 : vector<8x128xi1>, vector<8x128xf32>
      %c6_51 = arith.constant 6 : index
      %c2_52 = arith.constant 2 : index
      %83 = memref.load %arg10[%c6_51, %c2_52] : memref<8x16xf32, #tpu.memory_space<smem>>
      %84 = vector.broadcast %83 : f32 to vector<8x128xf32>
      %85 = arith.select %70, %84, %68 : vector<8x128xi1>, vector<8x128xf32>
      %cst_53 = arith.constant 4.000000e+00 : f32
      %86 = vector.broadcast %cst_53 : f32 to vector<8x128xf32>
      %87 = arith.cmpf oeq, %21, %86 : vector<8x128xf32>
      %c0_54 = arith.constant 0 : index
      %c3_55 = arith.constant 3 : index
      %88 = memref.load %arg10[%c0_54, %c3_55] : memref<8x16xf32, #tpu.memory_space<smem>>
      %89 = vector.broadcast %88 : f32 to vector<8x128xf32>
      %90 = arith.select %87, %89, %73 : vector<8x128xi1>, vector<8x128xf32>
      %c1_56 = arith.constant 1 : index
      %c3_57 = arith.constant 3 : index
      %91 = memref.load %arg10[%c1_56, %c3_57] : memref<8x16xf32, #tpu.memory_space<smem>>
      %92 = vector.broadcast %91 : f32 to vector<8x128xf32>
      %93 = arith.select %87, %92, %76 : vector<8x128xi1>, vector<8x128xf32>
      %c2_58 = arith.constant 2 : index
      %c3_59 = arith.constant 3 : index
      %94 = memref.load %arg10[%c2_58, %c3_59] : memref<8x16xf32, #tpu.memory_space<smem>>
      %95 = vector.broadcast %94 : f32 to vector<8x128xf32>
      %96 = arith.select %87, %95, %79 : vector<8x128xi1>, vector<8x128xf32>
      %c3_60 = arith.constant 3 : index
      %c3_61 = arith.constant 3 : index
      %97 = memref.load %arg10[%c3_60, %c3_61] : memref<8x16xf32, #tpu.memory_space<smem>>
      %98 = vector.broadcast %97 : f32 to vector<8x128xf32>
      %99 = arith.select %87, %98, %82 : vector<8x128xi1>, vector<8x128xf32>
      %c6_62 = arith.constant 6 : index
      %c3_63 = arith.constant 3 : index
      %100 = memref.load %arg10[%c6_62, %c3_63] : memref<8x16xf32, #tpu.memory_space<smem>>
      %101 = vector.broadcast %100 : f32 to vector<8x128xf32>
      %102 = arith.select %87, %101, %85 : vector<8x128xi1>, vector<8x128xf32>
      %cst_64 = arith.constant 5.000000e+00 : f32
      %103 = vector.broadcast %cst_64 : f32 to vector<8x128xf32>
      %104 = arith.cmpf oeq, %21, %103 : vector<8x128xf32>
      %c0_65 = arith.constant 0 : index
      %c4 = arith.constant 4 : index
      %105 = memref.load %arg10[%c0_65, %c4] : memref<8x16xf32, #tpu.memory_space<smem>>
      %106 = vector.broadcast %105 : f32 to vector<8x128xf32>
      %107 = arith.select %104, %106, %90 : vector<8x128xi1>, vector<8x128xf32>
      %c1_66 = arith.constant 1 : index
      %c4_67 = arith.constant 4 : index
      %108 = memref.load %arg10[%c1_66, %c4_67] : memref<8x16xf32, #tpu.memory_space<smem>>
      %109 = vector.broadcast %108 : f32 to vector<8x128xf32>
      %110 = arith.select %104, %109, %93 : vector<8x128xi1>, vector<8x128xf32>
      %c2_68 = arith.constant 2 : index
      %c4_69 = arith.constant 4 : index
      %111 = memref.load %arg10[%c2_68, %c4_69] : memref<8x16xf32, #tpu.memory_space<smem>>
      %112 = vector.broadcast %111 : f32 to vector<8x128xf32>
      %113 = arith.select %104, %112, %96 : vector<8x128xi1>, vector<8x128xf32>
      %c3_70 = arith.constant 3 : index
      %c4_71 = arith.constant 4 : index
      %114 = memref.load %arg10[%c3_70, %c4_71] : memref<8x16xf32, #tpu.memory_space<smem>>
      %115 = vector.broadcast %114 : f32 to vector<8x128xf32>
      %116 = arith.select %104, %115, %99 : vector<8x128xi1>, vector<8x128xf32>
      %c6_72 = arith.constant 6 : index
      %c4_73 = arith.constant 4 : index
      %117 = memref.load %arg10[%c6_72, %c4_73] : memref<8x16xf32, #tpu.memory_space<smem>>
      %118 = vector.broadcast %117 : f32 to vector<8x128xf32>
      %119 = arith.select %104, %118, %102 : vector<8x128xi1>, vector<8x128xf32>
      %cst_74 = arith.constant 6.000000e+00 : f32
      %120 = vector.broadcast %cst_74 : f32 to vector<8x128xf32>
      %121 = arith.cmpf oeq, %21, %120 : vector<8x128xf32>
      %c0_75 = arith.constant 0 : index
      %c5 = arith.constant 5 : index
      %122 = memref.load %arg10[%c0_75, %c5] : memref<8x16xf32, #tpu.memory_space<smem>>
      %123 = vector.broadcast %122 : f32 to vector<8x128xf32>
      %124 = arith.select %121, %123, %107 : vector<8x128xi1>, vector<8x128xf32>
      %c1_76 = arith.constant 1 : index
      %c5_77 = arith.constant 5 : index
      %125 = memref.load %arg10[%c1_76, %c5_77] : memref<8x16xf32, #tpu.memory_space<smem>>
      %126 = vector.broadcast %125 : f32 to vector<8x128xf32>
      %127 = arith.select %121, %126, %110 : vector<8x128xi1>, vector<8x128xf32>
      %c2_78 = arith.constant 2 : index
      %c5_79 = arith.constant 5 : index
      %128 = memref.load %arg10[%c2_78, %c5_79] : memref<8x16xf32, #tpu.memory_space<smem>>
      %129 = vector.broadcast %128 : f32 to vector<8x128xf32>
      %130 = arith.select %121, %129, %113 : vector<8x128xi1>, vector<8x128xf32>
      %c3_80 = arith.constant 3 : index
      %c5_81 = arith.constant 5 : index
      %131 = memref.load %arg10[%c3_80, %c5_81] : memref<8x16xf32, #tpu.memory_space<smem>>
      %132 = vector.broadcast %131 : f32 to vector<8x128xf32>
      %133 = arith.select %121, %132, %116 : vector<8x128xi1>, vector<8x128xf32>
      %c6_82 = arith.constant 6 : index
      %c5_83 = arith.constant 5 : index
      %134 = memref.load %arg10[%c6_82, %c5_83] : memref<8x16xf32, #tpu.memory_space<smem>>
      %135 = vector.broadcast %134 : f32 to vector<8x128xf32>
      %136 = arith.select %121, %135, %119 : vector<8x128xi1>, vector<8x128xf32>
      %cst_84 = arith.constant 7.000000e+00 : f32
      %137 = vector.broadcast %cst_84 : f32 to vector<8x128xf32>
      %138 = arith.cmpf oeq, %21, %137 : vector<8x128xf32>
      %c0_85 = arith.constant 0 : index
      %c6_86 = arith.constant 6 : index
      %139 = memref.load %arg10[%c0_85, %c6_86] : memref<8x16xf32, #tpu.memory_space<smem>>
      %140 = vector.broadcast %139 : f32 to vector<8x128xf32>
      %141 = arith.select %138, %140, %124 : vector<8x128xi1>, vector<8x128xf32>
      %c1_87 = arith.constant 1 : index
      %c6_88 = arith.constant 6 : index
      %142 = memref.load %arg10[%c1_87, %c6_88] : memref<8x16xf32, #tpu.memory_space<smem>>
      %143 = vector.broadcast %142 : f32 to vector<8x128xf32>
      %144 = arith.select %138, %143, %127 : vector<8x128xi1>, vector<8x128xf32>
      %c2_89 = arith.constant 2 : index
      %c6_90 = arith.constant 6 : index
      %145 = memref.load %arg10[%c2_89, %c6_90] : memref<8x16xf32, #tpu.memory_space<smem>>
      %146 = vector.broadcast %145 : f32 to vector<8x128xf32>
      %147 = arith.select %138, %146, %130 : vector<8x128xi1>, vector<8x128xf32>
      %c3_91 = arith.constant 3 : index
      %c6_92 = arith.constant 6 : index
      %148 = memref.load %arg10[%c3_91, %c6_92] : memref<8x16xf32, #tpu.memory_space<smem>>
      %149 = vector.broadcast %148 : f32 to vector<8x128xf32>
      %150 = arith.select %138, %149, %133 : vector<8x128xi1>, vector<8x128xf32>
      %c6_93 = arith.constant 6 : index
      %c6_94 = arith.constant 6 : index
      %151 = memref.load %arg10[%c6_93, %c6_94] : memref<8x16xf32, #tpu.memory_space<smem>>
      %152 = vector.broadcast %151 : f32 to vector<8x128xf32>
      %153 = arith.select %138, %152, %136 : vector<8x128xi1>, vector<8x128xf32>
      %cst_95 = arith.constant 8.000000e+00 : f32
      %154 = vector.broadcast %cst_95 : f32 to vector<8x128xf32>
      %155 = arith.cmpf oeq, %21, %154 : vector<8x128xf32>
      %c0_96 = arith.constant 0 : index
      %c7 = arith.constant 7 : index
      %156 = memref.load %arg10[%c0_96, %c7] : memref<8x16xf32, #tpu.memory_space<smem>>
      %157 = vector.broadcast %156 : f32 to vector<8x128xf32>
      %158 = arith.select %155, %157, %141 : vector<8x128xi1>, vector<8x128xf32>
      %c1_97 = arith.constant 1 : index
      %c7_98 = arith.constant 7 : index
      %159 = memref.load %arg10[%c1_97, %c7_98] : memref<8x16xf32, #tpu.memory_space<smem>>
      %160 = vector.broadcast %159 : f32 to vector<8x128xf32>
      %161 = arith.select %155, %160, %144 : vector<8x128xi1>, vector<8x128xf32>
      %c2_99 = arith.constant 2 : index
      %c7_100 = arith.constant 7 : index
      %162 = memref.load %arg10[%c2_99, %c7_100] : memref<8x16xf32, #tpu.memory_space<smem>>
      %163 = vector.broadcast %162 : f32 to vector<8x128xf32>
      %164 = arith.select %155, %163, %147 : vector<8x128xi1>, vector<8x128xf32>
      %c3_101 = arith.constant 3 : index
      %c7_102 = arith.constant 7 : index
      %165 = memref.load %arg10[%c3_101, %c7_102] : memref<8x16xf32, #tpu.memory_space<smem>>
      %166 = vector.broadcast %165 : f32 to vector<8x128xf32>
      %167 = arith.select %155, %166, %150 : vector<8x128xi1>, vector<8x128xf32>
      %c6_103 = arith.constant 6 : index
      %c7_104 = arith.constant 7 : index
      %168 = memref.load %arg10[%c6_103, %c7_104] : memref<8x16xf32, #tpu.memory_space<smem>>
      %169 = vector.broadcast %168 : f32 to vector<8x128xf32>
      %170 = arith.select %155, %169, %153 : vector<8x128xi1>, vector<8x128xf32>
      %cst_105 = arith.constant 9.000000e+00 : f32
      %171 = vector.broadcast %cst_105 : f32 to vector<8x128xf32>
      %172 = arith.cmpf oeq, %21, %171 : vector<8x128xf32>
      %c0_106 = arith.constant 0 : index
      %c8 = arith.constant 8 : index
      %173 = memref.load %arg10[%c0_106, %c8] : memref<8x16xf32, #tpu.memory_space<smem>>
      %174 = vector.broadcast %173 : f32 to vector<8x128xf32>
      %175 = arith.select %172, %174, %158 : vector<8x128xi1>, vector<8x128xf32>
      %c1_107 = arith.constant 1 : index
      %c8_108 = arith.constant 8 : index
      %176 = memref.load %arg10[%c1_107, %c8_108] : memref<8x16xf32, #tpu.memory_space<smem>>
      %177 = vector.broadcast %176 : f32 to vector<8x128xf32>
      %178 = arith.select %172, %177, %161 : vector<8x128xi1>, vector<8x128xf32>
      %c2_109 = arith.constant 2 : index
      %c8_110 = arith.constant 8 : index
      %179 = memref.load %arg10[%c2_109, %c8_110] : memref<8x16xf32, #tpu.memory_space<smem>>
      %180 = vector.broadcast %179 : f32 to vector<8x128xf32>
      %181 = arith.select %172, %180, %164 : vector<8x128xi1>, vector<8x128xf32>
      %c3_111 = arith.constant 3 : index
      %c8_112 = arith.constant 8 : index
      %182 = memref.load %arg10[%c3_111, %c8_112] : memref<8x16xf32, #tpu.memory_space<smem>>
      %183 = vector.broadcast %182 : f32 to vector<8x128xf32>
      %184 = arith.select %172, %183, %167 : vector<8x128xi1>, vector<8x128xf32>
      %c6_113 = arith.constant 6 : index
      %c8_114 = arith.constant 8 : index
      %185 = memref.load %arg10[%c6_113, %c8_114] : memref<8x16xf32, #tpu.memory_space<smem>>
      %186 = vector.broadcast %185 : f32 to vector<8x128xf32>
      %187 = arith.select %172, %186, %170 : vector<8x128xi1>, vector<8x128xf32>
      %cst_115 = arith.constant 1.000000e+01 : f32
      %188 = vector.broadcast %cst_115 : f32 to vector<8x128xf32>
      %189 = arith.cmpf oeq, %21, %188 : vector<8x128xf32>
      %c0_116 = arith.constant 0 : index
      %c9 = arith.constant 9 : index
      %190 = memref.load %arg10[%c0_116, %c9] : memref<8x16xf32, #tpu.memory_space<smem>>
      %191 = vector.broadcast %190 : f32 to vector<8x128xf32>
      %192 = arith.select %189, %191, %175 : vector<8x128xi1>, vector<8x128xf32>
      %c1_117 = arith.constant 1 : index
      %c9_118 = arith.constant 9 : index
      %193 = memref.load %arg10[%c1_117, %c9_118] : memref<8x16xf32, #tpu.memory_space<smem>>
      %194 = vector.broadcast %193 : f32 to vector<8x128xf32>
      %195 = arith.select %189, %194, %178 : vector<8x128xi1>, vector<8x128xf32>
      %c2_119 = arith.constant 2 : index
      %c9_120 = arith.constant 9 : index
      %196 = memref.load %arg10[%c2_119, %c9_120] : memref<8x16xf32, #tpu.memory_space<smem>>
      %197 = vector.broadcast %196 : f32 to vector<8x128xf32>
      %198 = arith.select %189, %197, %181 : vector<8x128xi1>, vector<8x128xf32>
      %c3_121 = arith.constant 3 : index
      %c9_122 = arith.constant 9 : index
      %199 = memref.load %arg10[%c3_121, %c9_122] : memref<8x16xf32, #tpu.memory_space<smem>>
      %200 = vector.broadcast %199 : f32 to vector<8x128xf32>
      %201 = arith.select %189, %200, %184 : vector<8x128xi1>, vector<8x128xf32>
      %c6_123 = arith.constant 6 : index
      %c9_124 = arith.constant 9 : index
      %202 = memref.load %arg10[%c6_123, %c9_124] : memref<8x16xf32, #tpu.memory_space<smem>>
      %203 = vector.broadcast %202 : f32 to vector<8x128xf32>
      %204 = arith.select %189, %203, %187 : vector<8x128xi1>, vector<8x128xf32>
      %cst_125 = arith.constant 1.100000e+01 : f32
      %205 = vector.broadcast %cst_125 : f32 to vector<8x128xf32>
      %206 = arith.cmpf oeq, %21, %205 : vector<8x128xf32>
      %c0_126 = arith.constant 0 : index
      %c10 = arith.constant 10 : index
      %207 = memref.load %arg10[%c0_126, %c10] : memref<8x16xf32, #tpu.memory_space<smem>>
      %208 = vector.broadcast %207 : f32 to vector<8x128xf32>
      %209 = arith.select %206, %208, %192 : vector<8x128xi1>, vector<8x128xf32>
      %c1_127 = arith.constant 1 : index
      %c10_128 = arith.constant 10 : index
      %210 = memref.load %arg10[%c1_127, %c10_128] : memref<8x16xf32, #tpu.memory_space<smem>>
      %211 = vector.broadcast %210 : f32 to vector<8x128xf32>
      %212 = arith.select %206, %211, %195 : vector<8x128xi1>, vector<8x128xf32>
      %c2_129 = arith.constant 2 : index
      %c10_130 = arith.constant 10 : index
      %213 = memref.load %arg10[%c2_129, %c10_130] : memref<8x16xf32, #tpu.memory_space<smem>>
      %214 = vector.broadcast %213 : f32 to vector<8x128xf32>
      %215 = arith.select %206, %214, %198 : vector<8x128xi1>, vector<8x128xf32>
      %c3_131 = arith.constant 3 : index
      %c10_132 = arith.constant 10 : index
      %216 = memref.load %arg10[%c3_131, %c10_132] : memref<8x16xf32, #tpu.memory_space<smem>>
      %217 = vector.broadcast %216 : f32 to vector<8x128xf32>
      %218 = arith.select %206, %217, %201 : vector<8x128xi1>, vector<8x128xf32>
      %c6_133 = arith.constant 6 : index
      %c10_134 = arith.constant 10 : index
      %219 = memref.load %arg10[%c6_133, %c10_134] : memref<8x16xf32, #tpu.memory_space<smem>>
      %220 = vector.broadcast %219 : f32 to vector<8x128xf32>
      %221 = arith.select %206, %220, %204 : vector<8x128xi1>, vector<8x128xf32>
      %cst_135 = arith.constant 1.200000e+01 : f32
      %222 = vector.broadcast %cst_135 : f32 to vector<8x128xf32>
      %223 = arith.cmpf oeq, %21, %222 : vector<8x128xf32>
      %c0_136 = arith.constant 0 : index
      %c11 = arith.constant 11 : index
      %224 = memref.load %arg10[%c0_136, %c11] : memref<8x16xf32, #tpu.memory_space<smem>>
      %225 = vector.broadcast %224 : f32 to vector<8x128xf32>
      %226 = arith.select %223, %225, %209 : vector<8x128xi1>, vector<8x128xf32>
      %c1_137 = arith.constant 1 : index
      %c11_138 = arith.constant 11 : index
      %227 = memref.load %arg10[%c1_137, %c11_138] : memref<8x16xf32, #tpu.memory_space<smem>>
      %228 = vector.broadcast %227 : f32 to vector<8x128xf32>
      %229 = arith.select %223, %228, %212 : vector<8x128xi1>, vector<8x128xf32>
      %c2_139 = arith.constant 2 : index
      %c11_140 = arith.constant 11 : index
      %230 = memref.load %arg10[%c2_139, %c11_140] : memref<8x16xf32, #tpu.memory_space<smem>>
      %231 = vector.broadcast %230 : f32 to vector<8x128xf32>
      %232 = arith.select %223, %231, %215 : vector<8x128xi1>, vector<8x128xf32>
      %c3_141 = arith.constant 3 : index
      %c11_142 = arith.constant 11 : index
      %233 = memref.load %arg10[%c3_141, %c11_142] : memref<8x16xf32, #tpu.memory_space<smem>>
      %234 = vector.broadcast %233 : f32 to vector<8x128xf32>
      %235 = arith.select %223, %234, %218 : vector<8x128xi1>, vector<8x128xf32>
      %c6_143 = arith.constant 6 : index
      %c11_144 = arith.constant 11 : index
      %236 = memref.load %arg10[%c6_143, %c11_144] : memref<8x16xf32, #tpu.memory_space<smem>>
      %237 = vector.broadcast %236 : f32 to vector<8x128xf32>
      %238 = arith.select %223, %237, %221 : vector<8x128xi1>, vector<8x128xf32>
      %cst_145 = arith.constant 1.300000e+01 : f32
      %239 = vector.broadcast %cst_145 : f32 to vector<8x128xf32>
      %240 = arith.cmpf oeq, %21, %239 : vector<8x128xf32>
      %c0_146 = arith.constant 0 : index
      %c12 = arith.constant 12 : index
      %241 = memref.load %arg10[%c0_146, %c12] : memref<8x16xf32, #tpu.memory_space<smem>>
      %242 = vector.broadcast %241 : f32 to vector<8x128xf32>
      %243 = arith.select %240, %242, %226 : vector<8x128xi1>, vector<8x128xf32>
      %c1_147 = arith.constant 1 : index
      %c12_148 = arith.constant 12 : index
      %244 = memref.load %arg10[%c1_147, %c12_148] : memref<8x16xf32, #tpu.memory_space<smem>>
      %245 = vector.broadcast %244 : f32 to vector<8x128xf32>
      %246 = arith.select %240, %245, %229 : vector<8x128xi1>, vector<8x128xf32>
      %c2_149 = arith.constant 2 : index
      %c12_150 = arith.constant 12 : index
      %247 = memref.load %arg10[%c2_149, %c12_150] : memref<8x16xf32, #tpu.memory_space<smem>>
      %248 = vector.broadcast %247 : f32 to vector<8x128xf32>
      %249 = arith.select %240, %248, %232 : vector<8x128xi1>, vector<8x128xf32>
      %c3_151 = arith.constant 3 : index
      %c12_152 = arith.constant 12 : index
      %250 = memref.load %arg10[%c3_151, %c12_152] : memref<8x16xf32, #tpu.memory_space<smem>>
      %251 = vector.broadcast %250 : f32 to vector<8x128xf32>
      %252 = arith.select %240, %251, %235 : vector<8x128xi1>, vector<8x128xf32>
      %c6_153 = arith.constant 6 : index
      %c12_154 = arith.constant 12 : index
      %253 = memref.load %arg10[%c6_153, %c12_154] : memref<8x16xf32, #tpu.memory_space<smem>>
      %254 = vector.broadcast %253 : f32 to vector<8x128xf32>
      %255 = arith.select %240, %254, %238 : vector<8x128xi1>, vector<8x128xf32>
      %cst_155 = arith.constant 1.400000e+01 : f32
      %256 = vector.broadcast %cst_155 : f32 to vector<8x128xf32>
      %257 = arith.cmpf oeq, %21, %256 : vector<8x128xf32>
      %c0_156 = arith.constant 0 : index
      %c13 = arith.constant 13 : index
      %258 = memref.load %arg10[%c0_156, %c13] : memref<8x16xf32, #tpu.memory_space<smem>>
      %259 = vector.broadcast %258 : f32 to vector<8x128xf32>
      %260 = arith.select %257, %259, %243 : vector<8x128xi1>, vector<8x128xf32>
      %c1_157 = arith.constant 1 : index
      %c13_158 = arith.constant 13 : index
      %261 = memref.load %arg10[%c1_157, %c13_158] : memref<8x16xf32, #tpu.memory_space<smem>>
      %262 = vector.broadcast %261 : f32 to vector<8x128xf32>
      %263 = arith.select %257, %262, %246 : vector<8x128xi1>, vector<8x128xf32>
      %c2_159 = arith.constant 2 : index
      %c13_160 = arith.constant 13 : index
      %264 = memref.load %arg10[%c2_159, %c13_160] : memref<8x16xf32, #tpu.memory_space<smem>>
      %265 = vector.broadcast %264 : f32 to vector<8x128xf32>
      %266 = arith.select %257, %265, %249 : vector<8x128xi1>, vector<8x128xf32>
      %c3_161 = arith.constant 3 : index
      %c13_162 = arith.constant 13 : index
      %267 = memref.load %arg10[%c3_161, %c13_162] : memref<8x16xf32, #tpu.memory_space<smem>>
      %268 = vector.broadcast %267 : f32 to vector<8x128xf32>
      %269 = arith.select %257, %268, %252 : vector<8x128xi1>, vector<8x128xf32>
      %c6_163 = arith.constant 6 : index
      %c13_164 = arith.constant 13 : index
      %270 = memref.load %arg10[%c6_163, %c13_164] : memref<8x16xf32, #tpu.memory_space<smem>>
      %271 = vector.broadcast %270 : f32 to vector<8x128xf32>
      %272 = arith.select %257, %271, %255 : vector<8x128xi1>, vector<8x128xf32>
      %cst_165 = arith.constant 1.500000e+01 : f32
      %273 = vector.broadcast %cst_165 : f32 to vector<8x128xf32>
      %274 = arith.cmpf oeq, %21, %273 : vector<8x128xf32>
      %c0_166 = arith.constant 0 : index
      %c14 = arith.constant 14 : index
      %275 = memref.load %arg10[%c0_166, %c14] : memref<8x16xf32, #tpu.memory_space<smem>>
      %276 = vector.broadcast %275 : f32 to vector<8x128xf32>
      %277 = arith.select %274, %276, %260 : vector<8x128xi1>, vector<8x128xf32>
      %c1_167 = arith.constant 1 : index
      %c14_168 = arith.constant 14 : index
      %278 = memref.load %arg10[%c1_167, %c14_168] : memref<8x16xf32, #tpu.memory_space<smem>>
      %279 = vector.broadcast %278 : f32 to vector<8x128xf32>
      %280 = arith.select %274, %279, %263 : vector<8x128xi1>, vector<8x128xf32>
      %c2_169 = arith.constant 2 : index
      %c14_170 = arith.constant 14 : index
      %281 = memref.load %arg10[%c2_169, %c14_170] : memref<8x16xf32, #tpu.memory_space<smem>>
      %282 = vector.broadcast %281 : f32 to vector<8x128xf32>
      %283 = arith.select %274, %282, %266 : vector<8x128xi1>, vector<8x128xf32>
      %c3_171 = arith.constant 3 : index
      %c14_172 = arith.constant 14 : index
      %284 = memref.load %arg10[%c3_171, %c14_172] : memref<8x16xf32, #tpu.memory_space<smem>>
      %285 = vector.broadcast %284 : f32 to vector<8x128xf32>
      %286 = arith.select %274, %285, %269 : vector<8x128xi1>, vector<8x128xf32>
      %c6_173 = arith.constant 6 : index
      %c14_174 = arith.constant 14 : index
      %287 = memref.load %arg10[%c6_173, %c14_174] : memref<8x16xf32, #tpu.memory_space<smem>>
      %288 = vector.broadcast %287 : f32 to vector<8x128xf32>
      %289 = arith.select %274, %288, %272 : vector<8x128xi1>, vector<8x128xf32>
      %cst_175 = arith.constant 1.600000e+01 : f32
      %290 = vector.broadcast %cst_175 : f32 to vector<8x128xf32>
      %291 = arith.cmpf oeq, %21, %290 : vector<8x128xf32>
      %c0_176 = arith.constant 0 : index
      %c15 = arith.constant 15 : index
      %292 = memref.load %arg10[%c0_176, %c15] : memref<8x16xf32, #tpu.memory_space<smem>>
      %293 = vector.broadcast %292 : f32 to vector<8x128xf32>
      %294 = arith.select %291, %293, %277 : vector<8x128xi1>, vector<8x128xf32>
      %c1_177 = arith.constant 1 : index
      %c15_178 = arith.constant 15 : index
      %295 = memref.load %arg10[%c1_177, %c15_178] : memref<8x16xf32, #tpu.memory_space<smem>>
      %296 = vector.broadcast %295 : f32 to vector<8x128xf32>
      %297 = arith.select %291, %296, %280 : vector<8x128xi1>, vector<8x128xf32>
      %c2_179 = arith.constant 2 : index
      %c15_180 = arith.constant 15 : index
      %298 = memref.load %arg10[%c2_179, %c15_180] : memref<8x16xf32, #tpu.memory_space<smem>>
      %299 = vector.broadcast %298 : f32 to vector<8x128xf32>
      %300 = arith.select %291, %299, %283 : vector<8x128xi1>, vector<8x128xf32>
      %c3_181 = arith.constant 3 : index
      %c15_182 = arith.constant 15 : index
      %301 = memref.load %arg10[%c3_181, %c15_182] : memref<8x16xf32, #tpu.memory_space<smem>>
      %302 = vector.broadcast %301 : f32 to vector<8x128xf32>
      %303 = arith.select %291, %302, %286 : vector<8x128xi1>, vector<8x128xf32>
      %c6_183 = arith.constant 6 : index
      %c15_184 = arith.constant 15 : index
      %304 = memref.load %arg10[%c6_183, %c15_184] : memref<8x16xf32, #tpu.memory_space<smem>>
      %305 = vector.broadcast %304 : f32 to vector<8x128xf32>
      %306 = arith.select %291, %305, %289 : vector<8x128xi1>, vector<8x128xf32>
      %307 = arith.subf %24, %294 : vector<8x128xf32>
      %308 = arith.subf %27, %297 : vector<8x128xf32>
      %309 = arith.subf %30, %300 : vector<8x128xf32>
      %310 = arith.subf %33, %303 : vector<8x128xf32>
      %311 = arith.mulf %307, %307 : vector<8x128xf32>
      %312 = arith.mulf %308, %308 : vector<8x128xf32>
      %313 = arith.addf %311, %312 : vector<8x128xf32>
      %314 = arith.mulf %309, %309 : vector<8x128xf32>
      %315 = arith.addf %313, %314 : vector<8x128xf32>
      %316 = arith.mulf %310, %310 : vector<8x128xf32>
      %317 = arith.addf %315, %316 : vector<8x128xf32>
      %318 = math.sqrt %317 : vector<8x128xf32>
      %cst_185 = arith.constant 5.000000e-01 : f32
      %319 = vector.broadcast %cst_185 : f32 to vector<8x128xf32>
      %320 = arith.subf %318, %319 : vector<8x128xf32>
      %cst_186 = arith.constant 0.000000e+00 : f32
      %321 = vector.broadcast %cst_186 : f32 to vector<8x128xf32>
      %322 = arith.maximumf %320, %321 : vector<8x128xf32>
      %c4_187 = arith.constant 4 : index
      %323 = memref.load %arg11[%c4_187] : memref<8xf32, #tpu.memory_space<smem>>
      %324 = arith.mulf %322, %322 : vector<8x128xf32>
      %cst_188 = arith.constant 1.000000e+00 : f32
      %325 = vector.broadcast %cst_188 : f32 to vector<8x128xf32>
      %326 = arith.addf %324, %325 : vector<8x128xf32>
      %327 = math.log %326 : vector<8x128xf32>
      %328 = arith.mulf %306, %327 : vector<8x128xf32>
      %329 = vector.shape_cast %328 : vector<8x128xf32> to vector<1x8x128xf32>
      %cst_189 = arith.constant dense<0.000000e+00> : vector<1xf32>
      %330 = vector.multi_reduction <add>, %329, %cst_189 [1, 2] : vector<1x8x128xf32> to vector<1xf32>
      %331 = vector.shape_cast %330 : vector<1xf32> to vector<1x1x1xf32>
      %332 = vector.extract %331[0, 0, 0] : f32 from vector<1x1x1xf32>
      %333 = arith.addf %323, %332 : f32
      %c4_190 = arith.constant 4 : index
      %334 = memref.load %arg11[%c4_190] : memref<8xf32, #tpu.memory_space<smem>>
      memref.store %333, %arg11[%c4_190] : memref<8xf32, #tpu.memory_space<smem>>
    } else {
    }
    %c1_i32_8 = arith.constant 1 : i32
    %16 = arith.cmpi eq, %arg0, %c1_i32_8 : i32
    %c0_i32_9 = arith.constant 0 : i32
    %17 = arith.cmpi eq, %arg1, %c0_i32_9 : i32
    %18 = arith.andi %16, %17 : i1
    %19 = arith.extui %18 : i1 to i32
    %c0_i32_10 = arith.constant 0 : i32
    %20 = arith.cmpi ne, %19, %c0_i32_10 : i32
    scf.if %20 {
      %c0 = arith.constant 0 : index
      %21 = memref.load %arg11[%c0] : memref<8xf32, #tpu.memory_space<smem>>
      %c1 = arith.constant 1 : index
      %22 = memref.load %arg11[%c1] : memref<8xf32, #tpu.memory_space<smem>>
      %23 = vector.broadcast %21 : f32 to vector<1x1xf32>
      %24 = vector.broadcast %22 : f32 to vector<1x1xf32>
      %25 = arith.divf %23, %24 : vector<1x1xf32>
      %26 = vector.shape_cast %25 : vector<1x1xf32> to vector<1x1x1xf32>
      %cst = arith.constant dense<0.000000e+00> : vector<1xf32>
      %27 = vector.multi_reduction <add>, %26, %cst [1, 2] : vector<1x1x1xf32> to vector<1xf32>
      %28 = vector.shape_cast %27 : vector<1xf32> to vector<1x1x1xf32>
      %29 = vector.extract %28[0, 0, 0] : f32 from vector<1x1x1xf32>
      %cst_11 = arith.constant 2.000000e+00 : f32
      %30 = arith.mulf %cst_11, %29 : f32
      %cst_12 = arith.constant 1.000000e+00 : f32
      %31 = arith.subf %cst_12, %30 : f32
      %c2 = arith.constant 2 : index
      %32 = memref.load %arg11[%c2] : memref<8xf32, #tpu.memory_space<smem>>
      %c3 = arith.constant 3 : index
      %33 = memref.load %arg11[%c3] : memref<8xf32, #tpu.memory_space<smem>>
      %34 = vector.broadcast %32 : f32 to vector<1x1xf32>
      %35 = vector.broadcast %33 : f32 to vector<1x1xf32>
      %36 = arith.divf %34, %35 : vector<1x1xf32>
      %37 = vector.shape_cast %36 : vector<1x1xf32> to vector<1x1x1xf32>
      %cst_13 = arith.constant dense<0.000000e+00> : vector<1xf32>
      %38 = vector.multi_reduction <add>, %37, %cst_13 [1, 2] : vector<1x1x1xf32> to vector<1xf32>
      %39 = vector.shape_cast %38 : vector<1xf32> to vector<1x1x1xf32>
      %40 = vector.extract %39[0, 0, 0] : f32 from vector<1x1x1xf32>
      %cst_14 = arith.constant 2.000000e+00 : f32
      %41 = arith.mulf %cst_14, %40 : f32
      %cst_15 = arith.constant 1.000000e+00 : f32
      %42 = arith.subf %cst_15, %41 : f32
      %c4 = arith.constant 4 : index
      %43 = memref.load %arg11[%c4] : memref<8xf32, #tpu.memory_space<smem>>
      %c5 = arith.constant 5 : index
      %44 = memref.load %arg11[%c5] : memref<8xf32, #tpu.memory_space<smem>>
      %45 = arith.addf %43, %44 : f32
      %c7 = arith.constant 7 : index
      %46 = memref.load %arg11[%c7] : memref<8xf32, #tpu.memory_space<smem>>
      %cst_16 = arith.constant 9.99999993E-9 : f32
      %47 = arith.addf %46, %cst_16 : f32
      %48 = vector.broadcast %45 : f32 to vector<1x1xf32>
      %49 = vector.broadcast %47 : f32 to vector<1x1xf32>
      %50 = arith.divf %48, %49 : vector<1x1xf32>
      %51 = vector.shape_cast %50 : vector<1x1xf32> to vector<1x1x1xf32>
      %cst_17 = arith.constant dense<0.000000e+00> : vector<1xf32>
      %52 = vector.multi_reduction <add>, %51, %cst_17 [1, 2] : vector<1x1x1xf32> to vector<1xf32>
      %53 = vector.shape_cast %52 : vector<1xf32> to vector<1x1x1xf32>
      %54 = vector.extract %53[0, 0, 0] : f32 from vector<1x1x1xf32>
      %c6 = arith.constant 6 : index
      %55 = memref.load %arg11[%c6] : memref<8xf32, #tpu.memory_space<smem>>
      %cst_18 = arith.constant 5.000000e-01 : f32
      %56 = arith.mulf %cst_18, %42 : f32
      %57 = arith.addf %31, %56 : f32
      %58 = arith.addf %54, %55 : f32
      %cst_19 = arith.constant 2.500000e-01 : f32
      %59 = arith.mulf %cst_19, %58 : f32
      %60 = arith.addf %57, %59 : f32
      %c0_20 = arith.constant 0 : index
      %c0_21 = arith.constant 0 : index
      %61 = memref.load %arg9[%c0_20, %c0_21] : memref<1x8xf32, #tpu.memory_space<smem>>
      memref.store %60, %arg9[%c0_20, %c0_21] : memref<1x8xf32, #tpu.memory_space<smem>>
      %c0_22 = arith.constant 0 : index
      %c1_23 = arith.constant 1 : index
      %62 = memref.load %arg9[%c0_22, %c1_23] : memref<1x8xf32, #tpu.memory_space<smem>>
      memref.store %31, %arg9[%c0_22, %c1_23] : memref<1x8xf32, #tpu.memory_space<smem>>
      %c0_24 = arith.constant 0 : index
      %c2_25 = arith.constant 2 : index
      %63 = memref.load %arg9[%c0_24, %c2_25] : memref<1x8xf32, #tpu.memory_space<smem>>
      memref.store %42, %arg9[%c0_24, %c2_25] : memref<1x8xf32, #tpu.memory_space<smem>>
      %c0_26 = arith.constant 0 : index
      %c3_27 = arith.constant 3 : index
      %64 = memref.load %arg9[%c0_26, %c3_27] : memref<1x8xf32, #tpu.memory_space<smem>>
      memref.store %54, %arg9[%c0_26, %c3_27] : memref<1x8xf32, #tpu.memory_space<smem>>
      %c0_28 = arith.constant 0 : index
      %c4_29 = arith.constant 4 : index
      %65 = memref.load %arg9[%c0_28, %c4_29] : memref<1x8xf32, #tpu.memory_space<smem>>
      memref.store %55, %arg9[%c0_28, %c4_29] : memref<1x8xf32, #tpu.memory_space<smem>>
      %cst_30 = arith.constant 0.000000e+00 : f32
      %c0_31 = arith.constant 0 : index
      %c5_32 = arith.constant 5 : index
      %66 = memref.load %arg9[%c0_31, %c5_32] : memref<1x8xf32, #tpu.memory_space<smem>>
      memref.store %cst_30, %arg9[%c0_31, %c5_32] : memref<1x8xf32, #tpu.memory_space<smem>>
      %cst_33 = arith.constant 0.000000e+00 : f32
      %c0_34 = arith.constant 0 : index
      %c6_35 = arith.constant 6 : index
      %67 = memref.load %arg9[%c0_34, %c6_35] : memref<1x8xf32, #tpu.memory_space<smem>>
      memref.store %cst_33, %arg9[%c0_34, %c6_35] : memref<1x8xf32, #tpu.memory_space<smem>>
      %cst_36 = arith.constant 0.000000e+00 : f32
      %c0_37 = arith.constant 0 : index
      %c7_38 = arith.constant 7 : index
      %68 = memref.load %arg9[%c0_37, %c7_38] : memref<1x8xf32, #tpu.memory_space<smem>>
      memref.store %cst_36, %arg9[%c0_37, %c7_38] : memref<1x8xf32, #tpu.memory_space<smem>>
    } else {
    }
    return
  }
  func.func @transform_0(%arg0: i32, %arg1: i32) -> (i32, i32) {
    %c1_i32 = arith.constant 1 : i32
    %0 = arith.subi %c1_i32, %arg0 : i32
    %1 = arith.muli %arg1, %0 : i32
    %c0_i32 = arith.constant 0 : i32
    %c0_i32_0 = arith.constant 0 : i32
    return %1, %c0_i32 : i32, i32
  }
  func.func @transform_1(%arg0: i32, %arg1: i32) -> (i32, i32) {
    %c1_i32 = arith.constant 1 : i32
    %0 = arith.subi %c1_i32, %arg0 : i32
    %1 = arith.muli %arg1, %0 : i32
    %c0_i32 = arith.constant 0 : i32
    %c0_i32_0 = arith.constant 0 : i32
    return %1, %c0_i32 : i32, i32
  }
  func.func @transform_2(%arg0: i32, %arg1: i32) -> (i32, i32) {
    %c1_i32 = arith.constant 1 : i32
    %0 = arith.subi %c1_i32, %arg0 : i32
    %1 = arith.muli %arg1, %0 : i32
    %c0_i32 = arith.constant 0 : i32
    %c0_i32_0 = arith.constant 0 : i32
    return %1, %c0_i32 : i32, i32
  }
  func.func @transform_3(%arg0: i32, %arg1: i32) -> (i32, i32) {
    %c1_i32 = arith.constant 1 : i32
    %0 = arith.subi %c1_i32, %arg0 : i32
    %1 = arith.muli %arg1, %0 : i32
    %c0_i32 = arith.constant 0 : i32
    %c0_i32_0 = arith.constant 0 : i32
    return %1, %c0_i32 : i32, i32
  }
  func.func @transform_4(%arg0: i32, %arg1: i32) -> (i32, i32) {
    %c0_i32 = arith.constant 0 : i32
    %c0_i32_0 = arith.constant 0 : i32
    return %arg1, %c0_i32 : i32, i32
  }
  func.func @transform_5(%arg0: i32, %arg1: i32) -> (i32, i32) {
    %c1_i32 = arith.constant 1 : i32
    %0 = arith.subi %c1_i32, %arg0 : i32
    %1 = arith.muli %arg1, %0 : i32
    %c0_i32 = arith.constant 0 : i32
    %c0_i32_0 = arith.constant 0 : i32
    return %1, %c0_i32 : i32, i32
  }
  func.func @transform_6(%arg0: i32, %arg1: i32) -> (i32, i32, i32) {
    %c0_i32 = arith.constant 0 : i32
    %c0_i32_0 = arith.constant 0 : i32
    %c0_i32_1 = arith.constant 0 : i32
    return %c0_i32, %arg1, %c0_i32_0 : i32, i32, i32
  }
  func.func @transform_7(%arg0: i32, %arg1: i32) -> (i32, i32) {
    %c0_i32 = arith.constant 0 : i32
    %c0_i32_0 = arith.constant 0 : i32
    %c0_i32_1 = arith.constant 0 : i32
    return %c0_i32, %c0_i32_0 : i32, i32
  }
}

</mosaic_0001>

<llo_original>
// kernel: pan_loss.1
$region0: #{pan_loss.1}
  #allocation0 [shape = 'u32[]', space=smem, size = 0x4, offset = 0x4, fixed_abs, tag = 'smem constant byte address 0x4 - core index']
  #allocation1 [shape = 'u32[72,128]{1,0:T(1,128)}', space=vmem, size = 0x9000, scoped, tag = 'internal scratch']
  #allocation2 [shape = 'f32[8,16]{1,0:T(8,128)}', space=smem, size = 0x1000, scoped, tag = 'scratch operand']
  #allocation3 [shape = 'f32[8]{0:T(128)}', space=smem, size = 0x200, scoped, tag = 'scratch operand']
  %s0 = inlined_call_operand.vmem [shape: f32[8,128], index: 0, kind: input, shape index: {}]
  %s1 = inlined_call_operand.vmem [shape: f32[8,128], index: 1, kind: input, shape index: {}]
  %s2 = inlined_call_operand.vmem [shape: f32[8,128], index: 2, kind: input, shape index: {}]
  %s3 = inlined_call_operand.vmem [shape: f32[8,128], index: 3, kind: input, shape index: {}]
  %s4 = inlined_call_operand.vmem [shape: f32[8,128], index: 4, kind: input, shape index: {}]
  %s5 = inlined_call_operand.vmem [shape: f32[8,128], index: 5, kind: input, shape index: {}]
  %s6 = inlined_call_operand.vmem [shape: f32[4,8,128], index: 6, kind: input, shape index: {}]
  %s7 = inlined_call_operand.vmem [shape: f32[1,8], index: 7, kind: output, shape index: {}]
  %s8 = sld [smem:[#allocation0]]
  $region88: #{pan_loss.1} parent=0
    _
  %s10 = ssub.s32 1, %s8
  %s11 = scalar_select 0, %s10, %s8
  $region1: #{pan_loss.1} parent=0
    #allocation4 [shape = 'u8[512]{0}', space=smem, size = 0x200, scoped, tag = 'output window, operand 0, single buffered']
    #allocation5 [shape = 's32[2]{0}', space=sflag, size = 0x8, scoped, tag = 'scoped memory for pan_loss.1']
    %12 = vsyncpa [#allocation5], 0
    loop: start=0, step=1, limit=4
    $region2: #{pan_loss.1} parent=1 // loop_pre_header
      _
    $region3: #{pan_loss.1} parent=1 // loop_header
      %s14 = sphi 0, %s18
      %p15 = scmp.ge.s32.totalorder %s14, 4
      %s21 = sphi 0, %s33
      %s22 = sphi 0, %s29
      %s23 = sphi 0, %s21
      %s24 = sphi 0, %s22
      %s25 = sphi 0, %s23
      %s26 = sphi 0, %s24
      %s40 = sphi 0, %s42
      %s43 = sphi 0, %s40
      %s44 = sphi 0, %s43
      %s60 = sphi 0, %s44
      %s70 = sphi 0, %s72
      %s73 = sphi 0, %s70
      %s74 = sphi 0, %s73
      %s90 = sphi 0, %s74
      %s100 = sphi 0, %s102
      %s103 = sphi 0, %s100
      %s104 = sphi 0, %s103
      %s120 = sphi 0, %s104
      %s130 = sphi 0, %s132
      %s133 = sphi 0, %s130
      %s134 = sphi 0, %s133
      %s150 = sphi 0, %s134
      %s156 = sphi 0, %s158
      %s159 = sphi 0, %s156
      %s160 = sphi 0, %s159
      %s176 = sphi 0, %s160
      %s186 = sphi 0, %s188
      %s189 = sphi 0, %s186
      %s190 = sphi 0, %s189
      %s206 = sphi 0, %s190
      %s212 = sphi 0, %s214
      %s215 = sphi 0, %s212
      %s216 = sphi 0, %s215
      %s232 = sphi 0, %s216
      %s236 = sphi 0, %s236
      %s238 = sphi 0, %s236
      %s239 = sphi 0, %s238
      %s253 = sphi 0, %s239
    $region4: #{pan_loss.1} parent=1 // loop_header_branch
      %17 = sbr.rel (%p15) target = $region8
    $region5: #{pan_loss.1} parent=1 // loop_body
      %s19 = ssub.s32 %s14, 1
      %s20 = ssub.s32 %s14, 2
      %s27 = sadd.s32 1, %s22
      %p28 = scmp.ge.s32.totalorder %s27, 1
      %s29 = scalar_select %p28, 0, %s27
      %s30 = sadd.s32 1, %s21
      %s31 = scalar_select %p28, %s30, %s21
      %p32 = scmp.ge.s32.totalorder %s31, 2
      %s33 = scalar_select %p32, 0, %s31
      %s34 = ssub.s32 1, %s21
      %s35 = smul.u32 %s22, %s34
      %s36 = ssub.s32 1, %s33
      %s37 = smul.u32 %s29, %s36
      %s38 = ssub.s32 %s35, %s37
      %p39 = scmp.eq.s32.totalorder %s38, 0
      %s41 = sadd.s32 %s40, 1
      %s42 = scalar_select %p39, %s40, %s41
      %p45 = pneg %p39
      %p46 = scmp.eq.s32.totalorder %s14, 1
      %p47 = por %p45, %p46
      %p48 = scmp.ne.s32.totalorder %s40, %s43
      %p49 = scmp.eq.s32.totalorder %s14, 0
      %p50 = por %p48, %p49
      %p51 = scmp.ne.s32.totalorder %s40, %s43
      %p52 = scmp.eq.s32.totalorder %s19, 1
      %p53 = por %p51, %p52
      %p54 = scmp.ne.s32.totalorder %s43, %s44
      %p55 = scmp.eq.s32.totalorder %s19, 0
      %p56 = por %p54, %p55
      %p57 = scmp.ne.s32.totalorder %s43, %s44
      %p58 = scmp.eq.s32.totalorder %s20, 1
      %p59 = por %p57, %p58
      %p61 = scmp.ne.s32.totalorder %s44, %s60
      %p62 = scmp.eq.s32.totalorder %s20, 0
      %p63 = por %p61, %p62
      %s64 = ssub.s32 1, %s21
      %s65 = smul.u32 %s22, %s64
      %s66 = ssub.s32 1, %s33
      %s67 = smul.u32 %s29, %s66
      %s68 = ssub.s32 %s65, %s67
      %p69 = scmp.eq.s32.totalorder %s68, 0
      %s71 = sadd.s32 %s70, 1
      %s72 = scalar_select %p69, %s70, %s71
      %p75 = pneg %p69
      %p76 = scmp.eq.s32.totalorder %s14, 1
      %p77 = por %p75, %p76
      %p78 = scmp.ne.s32.totalorder %s70, %s73
      %p79 = scmp.eq.s32.totalorder %s14, 0
      %p80 = por %p78, %p79
      %p81 = scmp.ne.s32.totalorder %s70, %s73
      %p82 = scmp.eq.s32.totalorder %s19, 1
      %p83 = por %p81, %p82
      %p84 = scmp.ne.s32.totalorder %s73, %s74
      %p85 = scmp.eq.s32.totalorder %s19, 0
      %p86 = por %p84, %p85
      %p87 = scmp.ne.s32.totalorder %s73, %s74
      %p88 = scmp.eq.s32.totalorder %s20, 1
      %p89 = por %p87, %p88
      %p91 = scmp.ne.s32.totalorder %s74, %s90
      %p92 = scmp.eq.s32.totalorder %s20, 0
      %p93 = por %p91, %p92
      %s94 = ssub.s32 1, %s21
      %s95 = smul.u32 %s22, %s94
      %s96 = ssub.s32 1, %s33
      %s97 = smul.u32 %s29, %s96
      %s98 = ssub.s32 %s95, %s97
      %p99 = scmp.eq.s32.totalorder %s98, 0
      %s101 = sadd.s32 %s100, 1
      %s102 = scalar_select %p99, %s100, %s101
      %p105 = pneg %p99
      %p106 = scmp.eq.s32.totalorder %s14, 1
      %p107 = por %p105, %p106
      %p108 = scmp.ne.s32.totalorder %s100, %s103
      %p109 = scmp.eq.s32.totalorder %s14, 0
      %p110 = por %p108, %p109
      %p111 = scmp.ne.s32.totalorder %s100, %s103
      %p112 = scmp.eq.s32.totalorder %s19, 1
      %p113 = por %p111, %p112
      %p114 = scmp.ne.s32.totalorder %s103, %s104
      %p115 = scmp.eq.s32.totalorder %s19, 0
      %p116 = por %p114, %p115
      %p117 = scmp.ne.s32.totalorder %s103, %s104
      %p118 = scmp.eq.s32.totalorder %s20, 1
      %p119 = por %p117, %p118
      %p121 = scmp.ne.s32.totalorder %s104, %s120
      %p122 = scmp.eq.s32.totalorder %s20, 0
      %p123 = por %p121, %p122
      %s124 = ssub.s32 1, %s21
      %s125 = smul.u32 %s22, %s124
      %s126 = ssub.s32 1, %s33
      %s127 = smul.u32 %s29, %s126
      %s128 = ssub.s32 %s125, %s127
      %p129 = scmp.eq.s32.totalorder %s128, 0
      %s131 = sadd.s32 %s130, 1
      %s132 = scalar_select %p129, %s130, %s131
      %p135 = pneg %p129
      %p136 = scmp.eq.s32.totalorder %s14, 1
      %p137 = por %p135, %p136
      %p138 = scmp.ne.s32.totalorder %s130, %s133
      %p139 = scmp.eq.s32.totalorder %s14, 0
      %p140 = por %p138, %p139
      %p141 = scmp.ne.s32.totalorder %s130, %s133
      %p142 = scmp.eq.s32.totalorder %s19, 1
      %p143 = por %p141, %p142
      %p144 = scmp.ne.s32.totalorder %s133, %s134
      %p145 = scmp.eq.s32.totalorder %s19, 0
      %p146 = por %p144, %p145
      %p147 = scmp.ne.s32.totalorder %s133, %s134
      %p148 = scmp.eq.s32.totalorder %s20, 1
      %p149 = por %p147, %p148
      %p151 = scmp.ne.s32.totalorder %s134, %s150
      %p152 = scmp.eq.s32.totalorder %s20, 0
      %p153 = por %p151, %p152
      %s154 = ssub.s32 %s22, %s29
      %p155 = scmp.eq.s32.totalorder %s154, 0
      %s157 = sadd.s32 %s156, 1
      %s158 = scalar_select %p155, %s156, %s157
      %p161 = pneg %p155
      %p162 = scmp.eq.s32.totalorder %s14, 1
      %p163 = por %p161, %p162
      %p164 = scmp.ne.s32.totalorder %s156, %s159
      %p165 = scmp.eq.s32.totalorder %s14, 0
      %p166 = por %p164, %p165
      %p167 = scmp.ne.s32.totalorder %s156, %s159
      %p168 = scmp.eq.s32.totalorder %s19, 1
      %p169 = por %p167, %p168
      %p170 = scmp.ne.s32.totalorder %s159, %s160
      %p171 = scmp.eq.s32.totalorder %s19, 0
      %p172 = por %p170, %p171
      %p173 = scmp.ne.s32.totalorder %s159, %s160
      %p174 = scmp.eq.s32.totalorder %s20, 1
      %p175 = por %p173, %p174
      %p177 = scmp.ne.s32.totalorder %s160, %s176
      %p178 = scmp.eq.s32.totalorder %s20, 0
      %p179 = por %p177, %p178
      %s180 = ssub.s32 1, %s21
      %s181 = smul.u32 %s22, %s180
      %s182 = ssub.s32 1, %s33
      %s183 = smul.u32 %s29, %s182
      %s184 = ssub.s32 %s181, %s183
      %p185 = scmp.eq.s32.totalorder %s184, 0
      %s187 = sadd.s32 %s186, 1
      %s188 = scalar_select %p185, %s186, %s187
      %p191 = pneg %p185
      %p192 = scmp.eq.s32.totalorder %s14, 1
      %p193 = por %p191, %p192
      %p194 = scmp.ne.s32.totalorder %s186, %s189
      %p195 = scmp.eq.s32.totalorder %s14, 0
      %p196 = por %p194, %p195
      %p197 = scmp.ne.s32.totalorder %s186, %s189
      %p198 = scmp.eq.s32.totalorder %s19, 1
      %p199 = por %p197, %p198
      %p200 = scmp.ne.s32.totalorder %s189, %s190
      %p201 = scmp.eq.s32.totalorder %s19, 0
      %p202 = por %p200, %p201
      %p203 = scmp.ne.s32.totalorder %s189, %s190
      %p204 = scmp.eq.s32.totalorder %s20, 1
      %p205 = por %p203, %p204
      %p207 = scmp.ne.s32.totalorder %s190, %s206
      %p208 = scmp.eq.s32.totalorder %s20, 0
      %p209 = por %p207, %p208
      %s210 = ssub.s32 %s22, %s29
      %p211 = scmp.eq.s32.totalorder %s210, 0
      %s213 = sadd.s32 %s212, 1
      %s214 = scalar_select %p211, %s212, %s213
      %p217 = pneg %p211
      %p218 = scmp.eq.s32.totalorder %s14, 1
      %p219 = por %p217, %p218
      %p220 = scmp.ne.s32.totalorder %s212, %s215
      %p221 = scmp.eq.s32.totalorder %s14, 0
      %p222 = por %p220, %p221
      %p223 = scmp.ne.s32.totalorder %s212, %s215
      %p224 = scmp.eq.s32.totalorder %s19, 1
      %p225 = por %p223, %p224
      %p226 = scmp.ne.s32.totalorder %s215, %s216
      %p227 = scmp.eq.s32.totalorder %s19, 0
      %p228 = por %p226, %p227
      %p229 = scmp.ne.s32.totalorder %s215, %s216
      %p230 = scmp.eq.s32.totalorder %s20, 1
      %p231 = por %p229, %p230
      %p233 = scmp.ne.s32.totalorder %s216, %s232
      %p234 = scmp.eq.s32.totalorder %s20, 0
      %p235 = por %p233, %p234
      %s237 = sadd.s32 %s236, 1
      %p240 = scmp.eq.s32.totalorder %s14, 1
      %p241 = scmp.ne.s32.totalorder %s236, %s238
      %p242 = scmp.eq.s32.totalorder %s14, 0
      %p243 = por %p241, %p242
      %p244 = scmp.ne.s32.totalorder %s236, %s238
      %p245 = scmp.eq.s32.totalorder %s19, 1
      %p246 = por %p244, %p245
      %p247 = scmp.ne.s32.totalorder %s238, %s239
      %p248 = scmp.eq.s32.totalorder %s19, 0
      %p249 = por %p247, %p248
      %p250 = scmp.ne.s32.totalorder %s238, %s239
      %p251 = scmp.eq.s32.totalorder %s20, 1
      %p252 = por %p250, %p251
      %p254 = scmp.ne.s32.totalorder %s239, %s253
      %p255 = scmp.eq.s32.totalorder %s20, 0
      %p256 = por %p254, %p255
      %p257 = scmp.le.s32.totalorder 1, %s14
      %p258 = scmp.lt.s32.totalorder %s14, 3
      %p259 = pnand %p257, %p258
      %p260 = pneg %p259
      // Predicated region
      $region9: #{pan_loss.1} parent=5 // pred_check
        _
      $region10: #{pan_loss.1} parent=5 // pred_check_branch
        %262 = sbr.rel (%p259) target = $region12
      $region11: #{pan_loss.1} parent=5 // pred_region
        %s263 = ssub.s32 %s14, 1
        // Predicated region
        $region13: #{pan_loss.1} parent=11 // pred_check
          %p264 = pneg %p172
        $region14: #{pan_loss.1} parent=11 // pred_check_branch
          %266 = sbr.rel (%p264) target = $region16
        $region15: #{pan_loss.1} parent=11 // pred_region
          %p267 = scmp.lt.s32.totalorder %s24, 0
          %s268 = scalar_select %p267, %s24, 0
          %s269 = smul.addr %s268, 8
          %s270 = scalar_lea.vmem %s4, %s269
        $region16: #{pan_loss.1} parent=11 // pred_fallthru
          _
        // Predicated region
        $region17: #{pan_loss.1} parent=11 // pred_check
          %p271 = pneg %p228
        $region18: #{pan_loss.1} parent=11 // pred_check_branch
          %273 = sbr.rel (%p271) target = $region20
        $region19: #{pan_loss.1} parent=11 // pred_region
          %p274 = scmp.lt.s32.totalorder %s24, 0
          %s275 = scalar_select %p274, %s24, 0
          %s276 = smul.addr %s275, 8
          %s277 = scalar_lea.vmem %s6, %s276
        $region20: #{pan_loss.1} parent=11 // pred_fallthru
          _
      $region12: #{pan_loss.1} parent=5 // pred_fallthru
        _
      %p278 = scmp.lt.s32.totalorder %s14, 2
      // Predicated region
      $region21: #{pan_loss.1} parent=5 // pred_check
        %p279 = pneg %p278
      $region22: #{pan_loss.1} parent=5 // pred_check_branch
        %281 = sbr.rel (%p279) target = $region24
      $region23: #{pan_loss.1} parent=5 // pred_region
        // Predicated region
        $region25: #{pan_loss.1} parent=23 // pred_check
          %p282 = pneg %p50
        $region26: #{pan_loss.1} parent=23 // pred_check_branch
          %284 = sbr.rel (%p282) target = $region28
        $region27: #{pan_loss.1} parent=23 // pred_region
          %s285 = ssub.s32 1, %s21
          %s286 = smul.u32 %s22, %s285
          %p287 = scmp.lt.s32.totalorder %s286, 0
          %s288 = scalar_select %p287, %s286, 0
          %s289 = smul.addr %s288, 8
          %s290 = scalar_lea.vmem %s0, %s289
          %s291 = ssub.s32 1, %s21
          %s292 = smul.u32 %s22, %s291
        $region28: #{pan_loss.1} parent=23 // pred_fallthru
          _
        // Predicated region
        $region29: #{pan_loss.1} parent=23 // pred_check
          %p293 = pneg %p80
        $region30: #{pan_loss.1} parent=23 // pred_check_branch
          %295 = sbr.rel (%p293) target = $region32
        $region31: #{pan_loss.1} parent=23 // pred_region
          %s296 = ssub.s32 1, %s21
          %s297 = smul.u32 %s22, %s296
          %p298 = scmp.lt.s32.totalorder %s297, 0
          %s299 = scalar_select %p298, %s297, 0
          %s300 = smul.addr %s299, 8
          %s301 = scalar_lea.vmem %s1, %s300
          %s302 = ssub.s32 1, %s21
          %s303 = smul.u32 %s22, %s302
        $region32: #{pan_loss.1} parent=23 // pred_fallthru
          _
        // Predicated region
        $region33: #{pan_loss.1} parent=23 // pred_check
          %p304 = pneg %p110
        $region34: #{pan_loss.1} parent=23 // pred_check_branch
          %306 = sbr.rel (%p304) target = $region36
        $region35: #{pan_loss.1} parent=23 // pred_region
          %s307 = ssub.s32 1, %s21
          %s308 = smul.u32 %s22, %s307
          %p309 = scmp.lt.s32.totalorder %s308, 0
          %s310 = scalar_select %p309, %s308, 0
          %s311 = smul.addr %s310, 8
          %s312 = scalar_lea.vmem %s2, %s311
          %s313 = ssub.s32 1, %s21
          %s314 = smul.u32 %s22, %s313
        $region36: #{pan_loss.1} parent=23 // pred_fallthru
          _
        // Predicated region
        $region37: #{pan_loss.1} parent=23 // pred_check
          %p315 = pneg %p140
        $region38: #{pan_loss.1} parent=23 // pred_check_branch
          %317 = sbr.rel (%p315) target = $region40
        $region39: #{pan_loss.1} parent=23 // pred_region
          %s318 = ssub.s32 1, %s21
          %s319 = smul.u32 %s22, %s318
          %p320 = scmp.lt.s32.totalorder %s319, 0
          %s321 = scalar_select %p320, %s319, 0
          %s322 = smul.addr %s321, 8
          %s323 = scalar_lea.vmem %s3, %s322
          %s324 = ssub.s32 1, %s21
          %s325 = smul.u32 %s22, %s324
        $region40: #{pan_loss.1} parent=23 // pred_fallthru
          _
        // Predicated region
        $region41: #{pan_loss.1} parent=23 // pred_check
          %p326 = pneg %p196
        $region42: #{pan_loss.1} parent=23 // pred_check_branch
          %328 = sbr.rel (%p326) target = $region44
        $region43: #{pan_loss.1} parent=23 // pred_region
          %s329 = ssub.s32 1, %s21
          %s330 = smul.u32 %s22, %s329
          %p331 = scmp.lt.s32.totalorder %s330, 0
          %s332 = scalar_select %p331, %s330, 0
          %s333 = smul.addr %s332, 8
          %s334 = scalar_lea.vmem %s5, %s333
          %s335 = ssub.s32 1, %s21
          %s336 = smul.u32 %s22, %s335
        $region44: #{pan_loss.1} parent=23 // pred_fallthru
          _
      $region24: #{pan_loss.1} parent=5 // pred_fallthru
        _
      %p337 = scmp.le.s32.totalorder 1, %s14
      %p338 = scmp.lt.s32.totalorder %s14, 3
      %p339 = pnand %p337, %p338
      %p340 = pneg %p339
      // Predicated region
      $region45: #{pan_loss.1} parent=5 // pred_check
        _
      $region46: #{pan_loss.1} parent=5 // pred_check_branch
        %342 = sbr.rel (%p339) target = $region48
      $region47: #{pan_loss.1} parent=5 // pred_region
        %s343 = ssub.s32 %s14, 1
        %s344 = ssub.s32 1, %s23
        %s345 = smul.u32 %s24, %s344
        %p346 = scmp.lt.s32.totalorder %s345, 0
        %s347 = scalar_select %p346, %s345, 0
        %s348 = smul.addr %s347, 8
        %s349 = scalar_lea.vmem %s0, %s348
        %p350 = pneg %p56
        %p351 = pneg %p53
        %s352 = ssub.s32 1, %s23
        %s353 = smul.u32 %s24, %s352
        %p354 = scmp.lt.s32.totalorder %s353, 0
        %s355 = scalar_select %p354, %s353, 0
        %s356 = smul.addr %s355, 8
        %s357 = scalar_lea.vmem %s1, %s356
        %p358 = pneg %p86
        %p359 = pneg %p83
        %s360 = ssub.s32 1, %s23
        %s361 = smul.u32 %s24, %s360
        %p362 = scmp.lt.s32.totalorder %s361, 0
        %s363 = scalar_select %p362, %s361, 0
        %s364 = smul.addr %s363, 8
        %s365 = scalar_lea.vmem %s2, %s364
        %p366 = pneg %p116
        %p367 = pneg %p113
        %s368 = ssub.s32 1, %s23
        %s369 = smul.u32 %s24, %s368
        %p370 = scmp.lt.s32.totalorder %s369, 0
        %s371 = scalar_select %p370, %s369, 0
        %s372 = smul.addr %s371, 8
        %s373 = scalar_lea.vmem %s3, %s372
        %p374 = pneg %p146
        %p375 = pneg %p143
        %p376 = scmp.lt.s32.totalorder %s24, 0
        %s377 = scalar_select %p376, %s24, 0
        %s378 = smul.addr %s377, 8
        %s379 = scalar_lea.vmem %s4, %s378
        %p380 = pneg %p172
        %p381 = pneg %p169
        %s382 = ssub.s32 1, %s23
        %s383 = smul.u32 %s24, %s382
        %p384 = scmp.lt.s32.totalorder %s383, 0
        %s385 = scalar_select %p384, %s383, 0
        %s386 = smul.addr %s385, 8
        %s387 = scalar_lea.vmem %s5, %s386
        %p388 = pneg %p202
        %p389 = pneg %p199
        %p390 = scmp.lt.s32.totalorder %s24, 0
        %s391 = scalar_select %p390, %s24, 0
        %s392 = smul.addr %s391, 8
        %s393 = scalar_lea.vmem %s6, %s392
        %p394 = pneg %p228
        %p395 = pneg %p225
        %p396 = pneg %p249
        %p397 = pneg %p246
        %s398 = ssub.s32 1, %s23
        %s399 = smul.u32 %s24, %s398
        %p400 = scmp.lt.s32.totalorder %s399, 0
        %s401 = scalar_select %p400, %s399, 0
        %s402 = smul.addr %s401, 8
        %s403 = scalar_lea.vmem %s0, %s402
        %s404 = ssub.s32 1, %s23
        %s405 = smul.u32 %s24, %s404
        %s406 = ssub.s32 1, %s23
        %s407 = smul.u32 %s24, %s406
        %p408 = scmp.lt.s32.totalorder %s407, 0
        %s409 = scalar_select %p408, %s407, 0
        %s410 = smul.addr %s409, 8
        %s411 = scalar_lea.vmem %s1, %s410
        %s412 = ssub.s32 1, %s23
        %s413 = smul.u32 %s24, %s412
        %s414 = ssub.s32 1, %s23
        %s415 = smul.u32 %s24, %s414
        %p416 = scmp.lt.s32.totalorder %s415, 0
        %s417 = scalar_select %p416, %s415, 0
        %s418 = smul.addr %s417, 8
        %s419 = scalar_lea.vmem %s2, %s418
        %s420 = ssub.s32 1, %s23
        %s421 = smul.u32 %s24, %s420
        %s422 = ssub.s32 1, %s23
        %s423 = smul.u32 %s24, %s422
        %p424 = scmp.lt.s32.totalorder %s423, 0
        %s425 = scalar_select %p424, %s423, 0
        %s426 = smul.addr %s425, 8
        %s427 = scalar_lea.vmem %s3, %s426
        %s428 = ssub.s32 1, %s23
        %s429 = smul.u32 %s24, %s428
        %p430 = scmp.lt.s32.totalorder %s24, 0
        %s431 = scalar_select %p430, %s24, 0
        %s432 = smul.addr %s431, 8
        %s433 = scalar_lea.vmem %s4, %s432
        %s434 = ssub.s32 1, %s23
        %s435 = smul.u32 %s24, %s434
        %p436 = scmp.lt.s32.totalorder %s435, 0
        %s437 = scalar_select %p436, %s435, 0
        %s438 = smul.addr %s437, 8
        %s439 = scalar_lea.vmem %s5, %s438
        %s440 = ssub.s32 1, %s23
        %s441 = smul.u32 %s24, %s440
        %p442 = scmp.lt.s32.totalorder %s24, 0
        %s443 = scalar_select %p442, %s24, 0
        %s444 = smul.addr %s443, 8
        %s445 = scalar_lea.vmem %s6, %s444
        %p446 = scmp.eq.s32.totalorder %s23, 0
        %p447 = scmp.eq.s32.totalorder %s24, 0
        %p448 = pnand %p446, %p447
        %p449 = pneg %p448
        // Predicated region
        $region49: #{pan_loss.1} parent=47 // pred_check
          _
        $region50: #{pan_loss.1} parent=47 // pred_check_branch
          %451 = sbr.rel (%p448) target = $region52
        $region51: #{pan_loss.1} parent=47 // pred_region
          %s452 = scalar_lea.smem [#allocation3], 0
          %453 = sst [smem:[%s452]] 0.0
          %s454 = scalar_lea.smem [#allocation3], 1
          %455 = sst [smem:[%s454]] 0.0
          %s456 = scalar_lea.smem [#allocation3], 2
          %457 = sst [smem:[%s456]] 0.0
          %s458 = scalar_lea.smem [#allocation3], 3
          %459 = sst [smem:[%s458]] 0.0
          %s460 = scalar_lea.smem [#allocation3], 4
          %461 = sst [smem:[%s460]] 0.0
          %s462 = scalar_lea.smem [#allocation3], 5
          %463 = sst [smem:[%s462]] 0.0
          %s464 = scalar_lea.smem [#allocation3], 6
          %465 = sst [smem:[%s464]] 0.0
          %s466 = scalar_lea.smem [#allocation3], 7
          %467 = sst [smem:[%s466]] 0.0
          %s468 = scalar_lea.smem [#allocation2], 0
          %469 = sst [smem:[%s468]] 0.0
          %s470 = scalar_lea.smem [#allocation2], 1
          %471 = sst [smem:[%s470]] 0.0
          %s472 = scalar_lea.smem [#allocation2], 2
          %473 = sst [smem:[%s472]] 0.0
          %s474 = scalar_lea.smem [#allocation2], 3
          %475 = sst [smem:[%s474]] 0.0
          %s476 = scalar_lea.smem [#allocation2], 4
          %477 = sst [smem:[%s476]] 0.0
          %s478 = scalar_lea.smem [#allocation2], 5
          %479 = sst [smem:[%s478]] 0.0
          %s480 = scalar_lea.smem [#allocation2], 6
          %481 = sst [smem:[%s480]] 0.0
          %s482 = scalar_lea.smem [#allocation2], 7
          %483 = sst [smem:[%s482]] 0.0
          %s484 = scalar_lea.smem [#allocation2], 8
          %485 = sst [smem:[%s484]] 0.0
          %s486 = scalar_lea.smem [#allocation2], 9
          %487 = sst [smem:[%s486]] 0.0
          %s488 = scalar_lea.smem [#allocation2], 10
          %489 = sst [smem:[%s488]] 0.0
          %s490 = scalar_lea.smem [#allocation2], 11
          %491 = sst [smem:[%s490]] 0.0
          %s492 = scalar_lea.smem [#allocation2], 12
          %493 = sst [smem:[%s492]] 0.0
          %s494 = scalar_lea.smem [#allocation2], 13
          %495 = sst [smem:[%s494]] 0.0
          %s496 = scalar_lea.smem [#allocation2], 14
          %497 = sst [smem:[%s496]] 0.0
          %s498 = scalar_lea.smem [#allocation2], 15
          %499 = sst [smem:[%s498]] 0.0
          %s500 = scalar_lea.smem [#allocation2], 128
          %501 = sst [smem:[%s500]] 0.0
          %s502 = scalar_lea.smem [#allocation2], 129
          %503 = sst [smem:[%s502]] 0.0
          %s504 = scalar_lea.smem [#allocation2], 130
          %505 = sst [smem:[%s504]] 0.0
          %s506 = scalar_lea.smem [#allocation2], 131
          %507 = sst [smem:[%s506]] 0.0
          %s508 = scalar_lea.smem [#allocation2], 132
          %509 = sst [smem:[%s508]] 0.0
          %s510 = scalar_lea.smem [#allocation2], 133
          %511 = sst [smem:[%s510]] 0.0
          %s512 = scalar_lea.smem [#allocation2], 134
          %513 = sst [smem:[%s512]] 0.0
          %s514 = scalar_lea.smem [#allocation2], 135
          %515 = sst [smem:[%s514]] 0.0
          %s516 = scalar_lea.smem [#allocation2], 136
          %517 = sst [smem:[%s516]] 0.0
          %s518 = scalar_lea.smem [#allocation2], 137
          %519 = sst [smem:[%s518]] 0.0
          %s520 = scalar_lea.smem [#allocation2], 138
          %521 = sst [smem:[%s520]] 0.0
          %s522 = scalar_lea.smem [#allocation2], 139
          %523 = sst [smem:[%s522]] 0.0
          %s524 = scalar_lea.smem [#allocation2], 140
          %525 = sst [smem:[%s524]] 0.0
          %s526 = scalar_lea.smem [#allocation2], 141
          %527 = sst [smem:[%s526]] 0.0
          %s528 = scalar_lea.smem [#allocation2], 142
          %529 = sst [smem:[%s528]] 0.0
          %s530 = scalar_lea.smem [#allocation2], 143
          %531 = sst [smem:[%s530]] 0.0
          %s532 = scalar_lea.smem [#allocation2], 256
          %533 = sst [smem:[%s532]] 0.0
          %s534 = scalar_lea.smem [#allocation2], 257
          %535 = sst [smem:[%s534]] 0.0
          %s536 = scalar_lea.smem [#allocation2], 258
          %537 = sst [smem:[%s536]] 0.0
          %s538 = scalar_lea.smem [#allocation2], 259
          %539 = sst [smem:[%s538]] 0.0
          %s540 = scalar_lea.smem [#allocation2], 260
          %541 = sst [smem:[%s540]] 0.0
          %s542 = scalar_lea.smem [#allocation2], 261
          %543 = sst [smem:[%s542]] 0.0
          %s544 = scalar_lea.smem [#allocation2], 262
          %545 = sst [smem:[%s544]] 0.0
          %s546 = scalar_lea.smem [#allocation2], 263
          %547 = sst [smem:[%s546]] 0.0
          %s548 = scalar_lea.smem [#allocation2], 264
          %549 = sst [smem:[%s548]] 0.0
          %s550 = scalar_lea.smem [#allocation2], 265
          %551 = sst [smem:[%s550]] 0.0
          %s552 = scalar_lea.smem [#allocation2], 266
          %553 = sst [smem:[%s552]] 0.0
          %s554 = scalar_lea.smem [#allocation2], 267
          %555 = sst [smem:[%s554]] 0.0
          %s556 = scalar_lea.smem [#allocation2], 268
          %557 = sst [smem:[%s556]] 0.0
          %s558 = scalar_lea.smem [#allocation2], 269
          %559 = sst [smem:[%s558]] 0.0
          %s560 = scalar_lea.smem [#allocation2], 270
          %561 = sst [smem:[%s560]] 0.0
          %s562 = scalar_lea.smem [#allocation2], 271
          %563 = sst [smem:[%s562]] 0.0
          %s564 = scalar_lea.smem [#allocation2], 384
          %565 = sst [smem:[%s564]] 0.0
          %s566 = scalar_lea.smem [#allocation2], 385
          %567 = sst [smem:[%s566]] 0.0
          %s568 = scalar_lea.smem [#allocation2], 386
          %569 = sst [smem:[%s568]] 0.0
          %s570 = scalar_lea.smem [#allocation2], 387
          %571 = sst [smem:[%s570]] 0.0
          %s572 = scalar_lea.smem [#allocation2], 388
          %573 = sst [smem:[%s572]] 0.0
          %s574 = scalar_lea.smem [#allocation2], 389
          %575 = sst [smem:[%s574]] 0.0
          %s576 = scalar_lea.smem [#allocation2], 390
          %577 = sst [smem:[%s576]] 0.0
          %s578 = scalar_lea.smem [#allocation2], 391
          %579 = sst [smem:[%s578]] 0.0
          %s580 = scalar_lea.smem [#allocation2], 392
          %581 = sst [smem:[%s580]] 0.0
          %s582 = scalar_lea.smem [#allocation2], 393
          %583 = sst [smem:[%s582]] 0.0
          %s584 = scalar_lea.smem [#allocation2], 394
          %585 = sst [smem:[%s584]] 0.0
          %s586 = scalar_lea.smem [#allocation2], 395
          %587 = sst [smem:[%s586]] 0.0
          %s588 = scalar_lea.smem [#allocation2], 396
          %589 = sst [smem:[%s588]] 0.0
          %s590 = scalar_lea.smem [#allocation2], 397
          %591 = sst [smem:[%s590]] 0.0
          %s592 = scalar_lea.smem [#allocation2], 398
          %593 = sst [smem:[%s592]] 0.0
          %s594 = scalar_lea.smem [#allocation2], 399
          %595 = sst [smem:[%s594]] 0.0
          %s596 = scalar_lea.smem [#allocation2], 512
          %597 = sst [smem:[%s596]] 0.0
          %s598 = scalar_lea.smem [#allocation2], 513
          %599 = sst [smem:[%s598]] 0.0
          %s600 = scalar_lea.smem [#allocation2], 514
          %601 = sst [smem:[%s600]] 0.0
          %s602 = scalar_lea.smem [#allocation2], 515
          %603 = sst [smem:[%s602]] 0.0
          %s604 = scalar_lea.smem [#allocation2], 516
          %605 = sst [smem:[%s604]] 0.0
          %s606 = scalar_lea.smem [#allocation2], 517
          %607 = sst [smem:[%s606]] 0.0
          %s608 = scalar_lea.smem [#allocation2], 518
          %609 = sst [smem:[%s608]] 0.0
          %s610 = scalar_lea.smem [#allocation2], 519
          %611 = sst [smem:[%s610]] 0.0
          %s612 = scalar_lea.smem [#allocation2], 520
          %613 = sst [smem:[%s612]] 0.0
          %s614 = scalar_lea.smem [#allocation2], 521
          %615 = sst [smem:[%s614]] 0.0
          %s616 = scalar_lea.smem [#allocation2], 522
          %617 = sst [smem:[%s616]] 0.0
          %s618 = scalar_lea.smem [#allocation2], 523
          %619 = sst [smem:[%s618]] 0.0
          %s620 = scalar_lea.smem [#allocation2], 524
          %621 = sst [smem:[%s620]] 0.0
          %s622 = scalar_lea.smem [#allocation2], 525
          %623 = sst [smem:[%s622]] 0.0
          %s624 = scalar_lea.smem [#allocation2], 526
          %625 = sst [smem:[%s624]] 0.0
          %s626 = scalar_lea.smem [#allocation2], 527
          %627 = sst [smem:[%s626]] 0.0
          %s628 = scalar_lea.smem [#allocation2], 640
          %629 = sst [smem:[%s628]] 0.0
          %s630 = scalar_lea.smem [#allocation2], 641
          %631 = sst [smem:[%s630]] 0.0
          %s632 = scalar_lea.smem [#allocation2], 642
          %633 = sst [smem:[%s632]] 0.0
          %s634 = scalar_lea.smem [#allocation2], 643
          %635 = sst [smem:[%s634]] 0.0
          %s636 = scalar_lea.smem [#allocation2], 644
          %637 = sst [smem:[%s636]] 0.0
          %s638 = scalar_lea.smem [#allocation2], 645
          %639 = sst [smem:[%s638]] 0.0
          %s640 = scalar_lea.smem [#allocation2], 646
          %641 = sst [smem:[%s640]] 0.0
          %s642 = scalar_lea.smem [#allocation2], 647
          %643 = sst [smem:[%s642]] 0.0
          %s644 = scalar_lea.smem [#allocation2], 648
          %645 = sst [smem:[%s644]] 0.0
          %s646 = scalar_lea.smem [#allocation2], 649
          %647 = sst [smem:[%s646]] 0.0
          %s648 = scalar_lea.smem [#allocation2], 650
          %649 = sst [smem:[%s648]] 0.0
          %s650 = scalar_lea.smem [#allocation2], 651
          %651 = sst [smem:[%s650]] 0.0
          %s652 = scalar_lea.smem [#allocation2], 652
          %653 = sst [smem:[%s652]] 0.0
          %s654 = scalar_lea.smem [#allocation2], 653
          %655 = sst [smem:[%s654]] 0.0
          %s656 = scalar_lea.smem [#allocation2], 654
          %657 = sst [smem:[%s656]] 0.0
          %s658 = scalar_lea.smem [#allocation2], 655
          %659 = sst [smem:[%s658]] 0.0
          %s660 = scalar_lea.smem [#allocation2], 768
          %661 = sst [smem:[%s660]] 0.0
          %s662 = scalar_lea.smem [#allocation2], 769
          %663 = sst [smem:[%s662]] 0.0
          %s664 = scalar_lea.smem [#allocation2], 770
          %665 = sst [smem:[%s664]] 0.0
          %s666 = scalar_lea.smem [#allocation2], 771
          %667 = sst [smem:[%s666]] 0.0
          %s668 = scalar_lea.smem [#allocation2], 772
          %669 = sst [smem:[%s668]] 0.0
          %s670 = scalar_lea.smem [#allocation2], 773
          %671 = sst [smem:[%s670]] 0.0
          %s672 = scalar_lea.smem [#allocation2], 774
          %673 = sst [smem:[%s672]] 0.0
          %s674 = scalar_lea.smem [#allocation2], 775
          %675 = sst [smem:[%s674]] 0.0
          %s676 = scalar_lea.smem [#allocation2], 776
          %677 = sst [smem:[%s676]] 0.0
          %s678 = scalar_lea.smem [#allocation2], 777
          %679 = sst [smem:[%s678]] 0.0
          %s680 = scalar_lea.smem [#allocation2], 778
          %681 = sst [smem:[%s680]] 0.0
          %s682 = scalar_lea.smem [#allocation2], 779
          %683 = sst [smem:[%s682]] 0.0
          %s684 = scalar_lea.smem [#allocation2], 780
          %685 = sst [smem:[%s684]] 0.0
          %s686 = scalar_lea.smem [#allocation2], 781
          %687 = sst [smem:[%s686]] 0.0
          %s688 = scalar_lea.smem [#allocation2], 782
          %689 = sst [smem:[%s688]] 0.0
          %s690 = scalar_lea.smem [#allocation2], 783
          %691 = sst [smem:[%s690]] 0.0
          %s692 = scalar_lea.smem [#allocation2], 896
          %693 = sst [smem:[%s692]] 0.0
          %s694 = scalar_lea.smem [#allocation2], 897
          %695 = sst [smem:[%s694]] 0.0
          %s696 = scalar_lea.smem [#allocation2], 898
          %697 = sst [smem:[%s696]] 0.0
          %s698 = scalar_lea.smem [#allocation2], 899
          %699 = sst [smem:[%s698]] 0.0
          %s700 = scalar_lea.smem [#allocation2], 900
          %701 = sst [smem:[%s700]] 0.0
          %s702 = scalar_lea.smem [#allocation2], 901
          %703 = sst [smem:[%s702]] 0.0
          %s704 = scalar_lea.smem [#allocation2], 902
          %705 = sst [smem:[%s704]] 0.0
          %s706 = scalar_lea.smem [#allocation2], 903
          %707 = sst [smem:[%s706]] 0.0
          %s708 = scalar_lea.smem [#allocation2], 904
          %709 = sst [smem:[%s708]] 0.0
          %s710 = scalar_lea.smem [#allocation2], 905
          %711 = sst [smem:[%s710]] 0.0
          %s712 = scalar_lea.smem [#allocation2], 906
          %713 = sst [smem:[%s712]] 0.0
          %s714 = scalar_lea.smem [#allocation2], 907
          %715 = sst [smem:[%s714]] 0.0
          %s716 = scalar_lea.smem [#allocation2], 908
          %717 = sst [smem:[%s716]] 0.0
          %s718 = scalar_lea.smem [#allocation2], 909
          %719 = sst [smem:[%s718]] 0.0
          %s720 = scalar_lea.smem [#allocation2], 910
          %721 = sst [smem:[%s720]] 0.0
          %s722 = scalar_lea.smem [#allocation2], 911
          %723 = sst [smem:[%s722]] 0.0
        $region52: #{pan_loss.1} parent=47 // pred_fallthru
          _
        // Predicated region
        $region53: #{pan_loss.1} parent=47 // pred_check
          %p724 = pneg %p446
        $region54: #{pan_loss.1} parent=47 // pred_check_branch
          %726 = sbr.rel (%p724) target = $region56
        $region55: #{pan_loss.1} parent=47 // pred_region
          %v727 = vld [vmem:[%s403] sm:$0xff]
          %v728 = vld [vmem:[%s411] sm:$0xff]
          %v729 = vld [vmem:[%s419] sm:$0xff]
          %v730 = vld [vmem:[%s427] sm:$0xff]
          %v731 = vld [vmem:[%s433] sm:$0xff]
          %v732 = vld [vmem:[%s439] sm:$0xff]
          %s733 = sld [smem:[#allocation3]]
          %v734 = vmul.f32 %v727, %v728
          %735 = vadd.xlane.f32.xlu0 %v734
          %v736 = vpop.xlane.xlu0 %735
          %v737 = vrot.slane %v736, 4
          %v738 = vadd.f32 %v736, %v737
          %v739 = vrot.slane %v738, 2
          %v740 = vadd.f32 %v738, %v739
          %v741 = vrot.slane %v740, 1
          %v742 = vadd.f32 %v740, %v741
          %s743 = vtos %v742
          %s744 = sadd.f32 %s733, %s743
          %s745 = scalar_lea.smem [#allocation3], 0
          %746 = sst [smem:[%s745]] %s744
          %s747 = sld [smem:[#allocation3 + $0x1]]
          %v748 = vmul.f32 %v727, %v727
          %749 = vadd.xlane.f32.xlu0 %v748
          %v750 = vpop.xlane.xlu0 %749
          %v751 = vrot.slane %v750, 4
          %v752 = vadd.f32 %v750, %v751
          %v753 = vrot.slane %v752, 2
          %v754 = vadd.f32 %v752, %v753
          %v755 = vrot.slane %v754, 1
          %v756 = vadd.f32 %v754, %v755
          %s757 = vtos %v756
          %v758 = vmul.f32 %v728, %v728
          %759 = vadd.xlane.f32.xlu0 %v758
          %v760 = vpop.xlane.xlu0 %759
          %v761 = vrot.slane %v760, 4
          %v762 = vadd.f32 %v760, %v761
          %v763 = vrot.slane %v762, 2
          %v764 = vadd.f32 %v762, %v763
          %v765 = vrot.slane %v764, 1
          %v766 = vadd.f32 %v764, %v765
          %s767 = vtos %v766
          %s768 = sadd.f32 %s757, %s767
          %s769 = sadd.f32 %s747, %s768
          %s770 = scalar_lea.smem [#allocation3], 1
          %771 = sst [smem:[%s770]] %s769
          %s772 = sld [smem:[#allocation3 + $0x2]]
          %v773 = vmul.f32 %v729, %v730
          %774 = vadd.xlane.f32.xlu0 %v773
          %v775 = vpop.xlane.xlu0 %774
          %v776 = vrot.slane %v775, 4
          %v777 = vadd.f32 %v775, %v776
          %v778 = vrot.slane %v777, 2
          %v779 = vadd.f32 %v777, %v778
          %v780 = vrot.slane %v779, 1
          %v781 = vadd.f32 %v779, %v780
          %s782 = vtos %v781
          %s783 = sadd.f32 %s772, %s782
          %s784 = scalar_lea.smem [#allocation3], 2
          %785 = sst [smem:[%s784]] %s783
          %s786 = sld [smem:[#allocation3 + $0x3]]
          %v787 = vmul.f32 %v729, %v729
          %788 = vadd.xlane.f32.xlu0 %v787
          %v789 = vpop.xlane.xlu0 %788
          %v790 = vrot.slane %v789, 4
          %v791 = vadd.f32 %v789, %v790
          %v792 = vrot.slane %v791, 2
          %v793 = vadd.f32 %v791, %v792
          %v794 = vrot.slane %v793, 1
          %v795 = vadd.f32 %v793, %v794
          %s796 = vtos %v795
          %v797 = vmul.f32 %v730, %v730
          %798 = vadd.xlane.f32.xlu0 %v797
          %v799 = vpop.xlane.xlu0 %798
          %v800 = vrot.slane %v799, 4
          %v801 = vadd.f32 %v799, %v800
          %v802 = vrot.slane %v801, 2
          %v803 = vadd.f32 %v801, %v802
          %v804 = vrot.slane %v803, 1
          %v805 = vadd.f32 %v803, %v804
          %s806 = vtos %v805
          %s807 = sadd.f32 %s796, %s806
          %s808 = sadd.f32 %s786, %s807
          %s809 = scalar_lea.smem [#allocation3], 3
          %810 = sst [smem:[%s809]] %s808
          %s811 = sld [smem:[#allocation3 + $0x7]]
          %812 = vmax.xlane.f32.xlu0 %v731
          %v813 = vpop.xlane.xlu0 %812
          %v814 = vrot.slane %v813, 4
          %v815 = vmax.f32 %v813, %v814
          %v816 = vrot.slane %v815, 2
          %v817 = vmax.f32 %v815, %v816
          %v818 = vrot.slane %v817, 1
          %v819 = vmax.f32 %v817, %v818
          %s820 = vtos %v819
          %s821 = smax.f32 %s811, %s820
          %s822 = scalar_lea.smem [#allocation3], 7
          %823 = sst [smem:[%s822]] %s821
          %v824 = vld [vmem:[%s445] sm:$0xff]
          %v825 = vmul.f32 %v824, %v731
          %s826 = scalar_lea.vmem %s445, 8
          %v827 = vld [vmem:[%s826] sm:$0xff]
          %v828 = vmul.f32 %v827, %v731
          %s829 = scalar_lea.vmem %s445, 16
          %v830 = vld [vmem:[%s829] sm:$0xff]
          %v831 = vmul.f32 %v830, %v731
          %s832 = scalar_lea.vmem %s445, 24
          %v833 = vld [vmem:[%s832] sm:$0xff]
          %v834 = vmul.f32 %v833, %v731
          loop: start=0, step=1, limit=16
          $region57: #{pan_loss.1} parent=55 // loop_pre_header
            _
          $region58: #{pan_loss.1} parent=55 // loop_header
            %s836 = sphi 0, %s840
            %p837 = scmp.ge.s32.totalorder %s836, 16
          $region59: #{pan_loss.1} parent=55 // loop_header_branch
            %839 = sbr.rel (%p837) target = $region63
          $region60: #{pan_loss.1} parent=55 // loop_body
            %s841 = sadd.s32 %s836, 1
            %s842 = scvt.s32.f32 %s841
            %v843 = vstv %s842
            %vm844 = vcmp.eq.f32.partialorder %v732, %v843
            %v845 = vsel %vm844, 1, 0
            %v846 = vcvt.s32.f32 %v845
            %s847 = sld [smem:[#allocation2 + %s836]]
            %v848 = vmul.f32 %v825, %v846
            %849 = vadd.xlane.f32.xlu0 %v848
            %v850 = vpop.xlane.xlu0 %849
            %v851 = vrot.slane %v850, 4
            %v852 = vadd.f32 %v850, %v851
            %v853 = vrot.slane %v852, 2
            %v854 = vadd.f32 %v852, %v853
            %v855 = vrot.slane %v854, 1
            %v856 = vadd.f32 %v854, %v855
            %s857 = vtos %v856
            %s858 = sadd.f32 %s847, %s857
            %s859 = scalar_lea.smem [#allocation2], %s836
            %860 = sst [smem:[%s859]] %s858
            %s861 = sshra.s32 %s836, 7
            %s862 = sand.u32 %s836, 127
            %s863 = sadd.s32 %s861, 1
            %s864 = smul.u32 %s863, 128
            %s865 = sshra.s32 %s836, 7
            %s866 = sand.u32 %s836, 127
            %s867 = sadd.s32 %s864, %s866
            %s868 = sld [smem:[#allocation2 + %s867]]
            %v869 = vmul.f32 %v828, %v846
            %870 = vadd.xlane.f32.xlu0 %v869
            %v871 = vpop.xlane.xlu0 %870
            %v872 = vrot.slane %v871, 4
            %v873 = vadd.f32 %v871, %v872
            %v874 = vrot.slane %v873, 2
            %v875 = vadd.f32 %v873, %v874
            %v876 = vrot.slane %v875, 1
            %v877 = vadd.f32 %v875, %v876
            %s878 = vtos %v877
            %s879 = sadd.f32 %s868, %s878
            %s880 = scalar_lea.smem [#allocation2], %s867
            %881 = sst [smem:[%s880]] %s879
            %s882 = sadd.s32 %s861, 2
            %s883 = smul.u32 %s882, 128
            %s884 = sadd.s32 %s883, %s866
            %s885 = sld [smem:[#allocation2 + %s884]]
            %v886 = vmul.f32 %v831, %v846
            %887 = vadd.xlane.f32.xlu0 %v886
            %v888 = vpop.xlane.xlu0 %887
            %v889 = vrot.slane %v888, 4
            %v890 = vadd.f32 %v888, %v889
            %v891 = vrot.slane %v890, 2
            %v892 = vadd.f32 %v890, %v891
            %v893 = vrot.slane %v892, 1
            %v894 = vadd.f32 %v892, %v893
            %s895 = vtos %v894
            %s896 = sadd.f32 %s885, %s895
            %s897 = scalar_lea.smem [#allocation2], %s884
            %898 = sst [smem:[%s897]] %s896
            %s899 = sadd.s32 %s861, 3
            %s900 = smul.u32 %s899, 128
            %s901 = sadd.s32 %s900, %s866
            %s902 = sld [smem:[#allocation2 + %s901]]
            %v903 = vmul.f32 %v834, %v846
            %904 = vadd.xlane.f32.xlu0 %v903
            %v905 = vpop.xlane.xlu0 %904
            %v906 = vrot.slane %v905, 4
            %v907 = vadd.f32 %v905, %v906
            %v908 = vrot.slane %v907, 2
            %v909 = vadd.f32 %v907, %v908
            %v910 = vrot.slane %v909, 1
            %v911 = vadd.f32 %v909, %v910
            %s912 = vtos %v911
            %s913 = sadd.f32 %s902, %s912
            %s914 = scalar_lea.smem [#allocation2], %s901
            %915 = sst [smem:[%s914]] %s913
            %s916 = sadd.s32 %s861, 4
            %s917 = smul.u32 %s916, 128
            %s918 = sadd.s32 %s917, %s866
            %s919 = sld [smem:[#allocation2 + %s918]]
            %920 = vadd.xlane.f32.xlu0 %v846
            %v921 = vpop.xlane.xlu0 %920
            %v922 = vrot.slane %v921, 4
            %v923 = vadd.f32 %v921, %v922
            %v924 = vrot.slane %v923, 2
            %v925 = vadd.f32 %v923, %v924
            %v926 = vrot.slane %v925, 1
            %v927 = vadd.f32 %v925, %v926
            %s928 = vtos %v927
            %s929 = sadd.f32 %s919, %s928
            %s930 = scalar_lea.smem [#allocation2], %s918
            %931 = sst [smem:[%s930]] %s929
            %s932 = sadd.s32 %s861, 5
            %s933 = smul.u32 %s932, 128
            %s934 = sadd.s32 %s933, %s866
            %s935 = sld [smem:[#allocation2 + %s934]]
            %vm936 = vcmp.eq.f32.partialorder %v731, %v843
            %v937 = vsel %vm936, 1, 0
            %v938 = vcvt.s32.f32 %v937
            %939 = vadd.xlane.f32.xlu0 %v938
            %v940 = vpop.xlane.xlu0 %939
            %v941 = vrot.slane %v940, 4
            %v942 = vadd.f32 %v940, %v941
            %v943 = vrot.slane %v942, 2
            %v944 = vadd.f32 %v942, %v943
            %v945 = vrot.slane %v944, 1
            %v946 = vadd.f32 %v944, %v945
            %s947 = vtos %v946
            %s948 = sadd.f32 %s935, %s947
            %s949 = scalar_lea.smem [#allocation2], %s934
            %950 = sst [smem:[%s949]] %s948
          $region61: #{pan_loss.1} parent=55 // loop_footer
            %s840 = sadd.s32 1, %s836
          $region62: #{pan_loss.1} parent=55 // loop_footer_branch
            %835 = sbr.rel target = $region58
          $region63: #{pan_loss.1} parent=55 // loop_exit
            _
        $region56: #{pan_loss.1} parent=47 // pred_fallthru
          _
        %p951 = scmp.eq.s32.totalorder %s23, 1
        %p952 = pnand %p951, %p447
        %p953 = pneg %p952
        // Predicated region
        $region64: #{pan_loss.1} parent=47 // pred_check
          _
        $region65: #{pan_loss.1} parent=47 // pred_check_branch
          %955 = sbr.rel (%p952) target = $region67
        $region66: #{pan_loss.1} parent=47 // pred_region
          %s956 = sld [smem:[#allocation3 + $0x7]]
          %v957 = vlaneseq
          %v958 = vand.u32 %v957, 127
          %v959 = vcvt.s32.f32 %v958
          %v960 = vadd.f32 %v959, 1.0
          %v961 = vstv %s956
          %vm962 = vcmp.le.f32.partialorder %v960, %v961
          %vm963 = vcmp.lt.s32.totalorder %v958, 16
          %vm964 = vmand %vm962, %vm963
          %v965 = vsel %vm964, 1, 0
          %v966 = vcvt.s32.f32 %v965
          %p967 = scmp.le.f32.partialorder 1.0, %s956
          %s968 = scalar_select %p967, 1, 0
          %s969 = scvt.s32.f32 %s968
          %s970 = sld [smem:[#allocation2 + $0x200]]
          %s971 = sld [smem:[#allocation2 + $0x280]]
          %p972 = scmp.lt.f32.partialorder %s970, 0.5
          %s973 = scalar_select %p972, 1, 0
          %s974 = scvt.s32.f32 %s973
          %s975 = sadd.f32 %s970, %s974
          %p976 = scmp.lt.f32.partialorder %s971, 0.5
          %s977 = scalar_select %p976, 1, 0
          %s978 = scvt.s32.f32 %s977
          %s979 = sadd.f32 %s971, %s978
          %v980 = vstv %s975
          %v981 = vrcp.pop %v980
          %v982 = vmul.f32 %v980, %v981
          %v983 = vsub.f32 1.0, %v982
          %v984 = vmul.f32 %v981, %v983
          %v985 = vadd.f32 %v981, %v984
          %vm986 = vweird.f32 %v980
          %vm987 = vweird.f32 %v981
          %vm988 = vmor %vm986, %vm987
          %v989 = vsel %vm988, %v981, %v985
          %v990 = vand.u32 2147483647, %v980
          %vm991 = vcmp.eq.f32.partialorder %v990, 8.507059e+37
          %v992 = vand.u32 %v980, 2147483648
          %v993 = vor.u32 1.1754944e-38, %v992
          %v994 = vsel %vm991, %v993, %v989
          %v995 = vmul.f32 1.0, %v994
          %v996 = vadd.f32 %v995, 0.0
          %s997 = vtos %v996
          %v998 = vstv %s979
          %v999 = vrcp.pop %v998
          %v1000 = vmul.f32 %v998, %v999
          %v1001 = vsub.f32 1.0, %v1000
          %v1002 = vmul.f32 %v999, %v1001
          %v1003 = vadd.f32 %v999, %v1002
          %vm1004 = vweird.f32 %v998
          %vm1005 = vweird.f32 %v999
          %vm1006 = vmor %vm1004, %vm1005
          %v1007 = vsel %vm1006, %v999, %v1003
          %v1008 = vand.u32 2147483647, %v998
          %vm1009 = vcmp.eq.f32.partialorder %v1008, 8.507059e+37
          %v1010 = vand.u32 %v998, 2147483648
          %v1011 = vor.u32 1.1754944e-38, %v1010
          %v1012 = vsel %vm1009, %v1011, %v1007
          %v1013 = vmul.f32 1.0, %v1012
          %v1014 = vadd.f32 %v1013, 0.0
          %s1015 = vtos %v1014
          %s1016 = smul.f32 %s969, %s1015
          %s1017 = sld [smem:[#allocation2]]
          %s1018 = smul.f32 %s1017, %s997
          %s1019 = sld [smem:[#allocation2 + $0x80]]
          %s1020 = smul.f32 %s1019, %s997
          %s1021 = sld [smem:[#allocation2 + $0x100]]
          %s1022 = smul.f32 %s1021, %s997
          %s1023 = sld [smem:[#allocation2 + $0x180]]
          %s1024 = smul.f32 %s1023, %s997
          %s1025 = scalar_lea.smem [#allocation2], 0
          %1026 = sst [smem:[%s1025]] %s1018
          %s1027 = scalar_lea.smem [#allocation2], 128
          %1028 = sst [smem:[%s1027]] %s1020
          %s1029 = scalar_lea.smem [#allocation2], 256
          %1030 = sst [smem:[%s1029]] %s1022
          %s1031 = scalar_lea.smem [#allocation2], 384
          %1032 = sst [smem:[%s1031]] %s1024
          %s1033 = scalar_lea.smem [#allocation2], 768
          %1034 = sst [smem:[%s1033]] %s1016
          %s1035 = smul.f32 %s1018, %s1018
          %s1036 = smul.f32 %s1020, %s1020
          %s1037 = sadd.f32 %s1035, %s1036
          %s1038 = smul.f32 %s1022, %s1022
          %s1039 = sadd.f32 %s1037, %s1038
          %s1040 = smul.f32 %s1024, %s1024
          %s1041 = sadd.f32 %s1039, %s1040
          %v1042 = vstv %s1041
          %v1043 = vrsqrt.pop %v1042
          %v1044 = vmul.f32 %v1043, %v1042
          %v1045 = vmul.f32 %v1044, %v1043
          %v1046 = vmul.f32 0.5, %v1045
          %v1047 = vsub.f32 1.5, %v1046
          %v1048 = vmul.f32 %v1043, %v1047
          %v1049 = vmul.f32 %v1042, %v1048
          %vm1050 = vcmp.eq.f32.partialorder %v1042, inf
          %v1051 = vsel %vm1050, %v1042, %v1049
          %vm1052 = vcmp.eq.f32.partialorder %v1042, 0.0
          %v1053 = vand.u32 %v1042, 2147483648
          %v1054 = vsel %vm1052, %v1053, %v1051
          %s1055 = vtos %v1054
          %s1056 = ssub.f32 %s1055, 0.5
          %s1057 = smax.f32 %s1056, 0.0
          %s1058 = ssub.f32 256.0, %s971
          %s1059 = smul.f32 %s1057, %s1057
          %v1060 = vstv %s1059
          %v1061 = vadd.f32 %v1060, 1.0
          %v1062 = vlog2.pop %v1061
          %v1063 = vmul.f32 %v1062, 0.6931472
          %v1064 = vadd.f32 %v1063, 0.0
          %s1065 = vtos %v1064
          %s1066 = smul.f32 %s1058, %s1065
          %s1067 = smul.f32 %s1066, %s1016
          %s1068 = sadd.f32 %s1067, 0.0
          %vm1069 = vcmp.eq.s32.totalorder %v958, 0
          %v1070 = vstv %s1018
          %v1071 = vsel %vm1069, %v1070, 0.0
          %v1072 = vstv %s1020
          %v1073 = vsel %vm1069, %v1072, 0.0
          %v1074 = vstv %s1022
          %v1075 = vsel %vm1069, %v1074, 0.0
          %v1076 = vstv %s1024
          %v1077 = vsel %vm1069, %v1076, 0.0
          %p1078 = scmp.le.f32.partialorder 2.0, %s956
          %s1079 = scalar_select %p1078, 1, 0
          %s1080 = scvt.s32.f32 %s1079
          %s1081 = sld [smem:[#allocation2 + $0x201]]
          %s1082 = sld [smem:[#allocation2 + $0x281]]
          %p1083 = scmp.lt.f32.partialorder %s1081, 0.5
          %s1084 = scalar_select %p1083, 1, 0
          %s1085 = scvt.s32.f32 %s1084
          %s1086 = sadd.f32 %s1081, %s1085
          %p1087 = scmp.lt.f32.partialorder %s1082, 0.5
          %s1088 = scalar_select %p1087, 1, 0
          %s1089 = scvt.s32.f32 %s1088
          %s1090 = sadd.f32 %s1082, %s1089
          %v1091 = vstv %s1086
          %v1092 = vrcp.pop %v1091
          %v1093 = vmul.f32 %v1091, %v1092
          %v1094 = vsub.f32 1.0, %v1093
          %v1095 = vmul.f32 %v1092, %v1094
          %v1096 = vadd.f32 %v1092, %v1095
          %vm1097 = vweird.f32 %v1091
          %vm1098 = vweird.f32 %v1092
          %vm1099 = vmor %vm1097, %vm1098
          %v1100 = vsel %vm1099, %v1092, %v1096
          %v1101 = vand.u32 2147483647, %v1091
          %vm1102 = vcmp.eq.f32.partialorder %v1101, 8.507059e+37
          %v1103 = vand.u32 %v1091, 2147483648
          %v1104 = vor.u32 1.1754944e-38, %v1103
          %v1105 = vsel %vm1102, %v1104, %v1100
          %v1106 = vmul.f32 1.0, %v1105
          %v1107 = vadd.f32 %v1106, 0.0
          %s1108 = vtos %v1107
          %v1109 = vstv %s1090
          %v1110 = vrcp.pop %v1109
          %v1111 = vmul.f32 %v1109, %v1110
          %v1112 = vsub.f32 1.0, %v1111
          %v1113 = vmul.f32 %v1110, %v1112
          %v1114 = vadd.f32 %v1110, %v1113
          %vm1115 = vweird.f32 %v1109
          %vm1116 = vweird.f32 %v1110
          %vm1117 = vmor %vm1115, %vm1116
          %v1118 = vsel %vm1117, %v1110, %v1114
          %v1119 = vand.u32 2147483647, %v1109
          %vm1120 = vcmp.eq.f32.partialorder %v1119, 8.507059e+37
          %v1121 = vand.u32 %v1109, 2147483648
          %v1122 = vor.u32 1.1754944e-38, %v1121
          %v1123 = vsel %vm1120, %v1122, %v1118
          %v1124 = vmul.f32 1.0, %v1123
          %v1125 = vadd.f32 %v1124, 0.0
          %s1126 = vtos %v1125
          %s1127 = smul.f32 %s1080, %s1126
          %s1128 = sld [smem:[#allocation2 + $0x1]]
          %s1129 = smul.f32 %s1128, %s1108
          %s1130 = sld [smem:[#allocation2 + $0x81]]
          %s1131 = smul.f32 %s1130, %s1108
          %s1132 = sld [smem:[#allocation2 + $0x101]]
          %s1133 = smul.f32 %s1132, %s1108
          %s1134 = sld [smem:[#allocation2 + $0x181]]
          %s1135 = smul.f32 %s1134, %s1108
          %s1136 = scalar_lea.smem [#allocation2], 1
          %1137 = sst [smem:[%s1136]] %s1129
          %s1138 = scalar_lea.smem [#allocation2], 129
          %1139 = sst [smem:[%s1138]] %s1131
          %s1140 = scalar_lea.smem [#allocation2], 257
          %1141 = sst [smem:[%s1140]] %s1133
          %s1142 = scalar_lea.smem [#allocation2], 385
          %1143 = sst [smem:[%s1142]] %s1135
          %s1144 = scalar_lea.smem [#allocation2], 769
          %1145 = sst [smem:[%s1144]] %s1127
          %s1146 = smul.f32 %s1129, %s1129
          %s1147 = smul.f32 %s1131, %s1131
          %s1148 = sadd.f32 %s1146, %s1147
          %s1149 = smul.f32 %s1133, %s1133
          %s1150 = sadd.f32 %s1148, %s1149
          %s1151 = smul.f32 %s1135, %s1135
          %s1152 = sadd.f32 %s1150, %s1151
          %v1153 = vstv %s1152
          %v1154 = vrsqrt.pop %v1153
          %v1155 = vmul.f32 %v1154, %v1153
          %v1156 = vmul.f32 %v1155, %v1154
          %v1157 = vmul.f32 0.5, %v1156
          %v1158 = vsub.f32 1.5, %v1157
          %v1159 = vmul.f32 %v1154, %v1158
          %v1160 = vmul.f32 %v1153, %v1159
          %vm1161 = vcmp.eq.f32.partialorder %v1153, inf
          %v1162 = vsel %vm1161, %v1153, %v1160
          %vm1163 = vcmp.eq.f32.partialorder %v1153, 0.0
          %v1164 = vand.u32 %v1153, 2147483648
          %v1165 = vsel %vm1163, %v1164, %v1162
          %s1166 = vtos %v1165
          %s1167 = ssub.f32 %s1166, 0.5
          %s1168 = smax.f32 %s1167, 0.0
          %s1169 = ssub.f32 256.0, %s1082
          %s1170 = smul.f32 %s1168, %s1168
          %v1171 = vstv %s1170
          %v1172 = vadd.f32 %v1171, 1.0
          %v1173 = vlog2.pop %v1172
          %v1174 = vmul.f32 %v1173, 0.6931472
          %v1175 = vadd.f32 %v1174, 0.0
          %s1176 = vtos %v1175
          %s1177 = smul.f32 %s1169, %s1176
          %s1178 = smul.f32 %s1177, %s1127
          %s1179 = sadd.f32 %s1068, %s1178
          %vm1180 = vcmp.eq.s32.totalorder %v958, 1
          %v1181 = vstv %s1129
          %v1182 = vsel %vm1180, %v1181, %v1071
          %v1183 = vstv %s1131
          %v1184 = vsel %vm1180, %v1183, %v1073
          %v1185 = vstv %s1133
          %v1186 = vsel %vm1180, %v1185, %v1075
          %v1187 = vstv %s1135
          %v1188 = vsel %vm1180, %v1187, %v1077
          %p1189 = scmp.le.f32.partialorder 3.0, %s956
          %s1190 = scalar_select %p1189, 1, 0
          %s1191 = scvt.s32.f32 %s1190
          %s1192 = sld [smem:[#allocation2 + $0x202]]
          %s1193 = sld [smem:[#allocation2 + $0x282]]
          %p1194 = scmp.lt.f32.partialorder %s1192, 0.5
          %s1195 = scalar_select %p1194, 1, 0
          %s1196 = scvt.s32.f32 %s1195
          %s1197 = sadd.f32 %s1192, %s1196
          %p1198 = scmp.lt.f32.partialorder %s1193, 0.5
          %s1199 = scalar_select %p1198, 1, 0
          %s1200 = scvt.s32.f32 %s1199
          %s1201 = sadd.f32 %s1193, %s1200
          %v1202 = vstv %s1197
          %v1203 = vrcp.pop %v1202
          %v1204 = vmul.f32 %v1202, %v1203
          %v1205 = vsub.f32 1.0, %v1204
          %v1206 = vmul.f32 %v1203, %v1205
          %v1207 = vadd.f32 %v1203, %v1206
          %vm1208 = vweird.f32 %v1202
          %vm1209 = vweird.f32 %v1203
          %vm1210 = vmor %vm1208, %vm1209
          %v1211 = vsel %vm1210, %v1203, %v1207
          %v1212 = vand.u32 2147483647, %v1202
          %vm1213 = vcmp.eq.f32.partialorder %v1212, 8.507059e+37
          %v1214 = vand.u32 %v1202, 2147483648
          %v1215 = vor.u32 1.1754944e-38, %v1214
          %v1216 = vsel %vm1213, %v1215, %v1211
          %v1217 = vmul.f32 1.0, %v1216
          %v1218 = vadd.f32 %v1217, 0.0
          %s1219 = vtos %v1218
          %v1220 = vstv %s1201
          %v1221 = vrcp.pop %v1220
          %v1222 = vmul.f32 %v1220, %v1221
          %v1223 = vsub.f32 1.0, %v1222
          %v1224 = vmul.f32 %v1221, %v1223
          %v1225 = vadd.f32 %v1221, %v1224
          %vm1226 = vweird.f32 %v1220
          %vm1227 = vweird.f32 %v1221
          %vm1228 = vmor %vm1226, %vm1227
          %v1229 = vsel %vm1228, %v1221, %v1225
          %v1230 = vand.u32 2147483647, %v1220
          %vm1231 = vcmp.eq.f32.partialorder %v1230, 8.507059e+37
          %v1232 = vand.u32 %v1220, 2147483648
          %v1233 = vor.u32 1.1754944e-38, %v1232
          %v1234 = vsel %vm1231, %v1233, %v1229
          %v1235 = vmul.f32 1.0, %v1234
          %v1236 = vadd.f32 %v1235, 0.0
          %s1237 = vtos %v1236
          %s1238 = smul.f32 %s1191, %s1237
          %s1239 = sld [smem:[#allocation2 + $0x2]]
          %s1240 = smul.f32 %s1239, %s1219
          %s1241 = sld [smem:[#allocation2 + $0x82]]
          %s1242 = smul.f32 %s1241, %s1219
          %s1243 = sld [smem:[#allocation2 + $0x102]]
          %s1244 = smul.f32 %s1243, %s1219
          %s1245 = sld [smem:[#allocation2 + $0x182]]
          %s1246 = smul.f32 %s1245, %s1219
          %s1247 = scalar_lea.smem [#allocation2], 2
          %1248 = sst [smem:[%s1247]] %s1240
          %s1249 = scalar_lea.smem [#allocation2], 130
          %1250 = sst [smem:[%s1249]] %s1242
          %s1251 = scalar_lea.smem [#allocation2], 258
          %1252 = sst [smem:[%s1251]] %s1244
          %s1253 = scalar_lea.smem [#allocation2], 386
          %1254 = sst [smem:[%s1253]] %s1246
          %s1255 = scalar_lea.smem [#allocation2], 770
          %1256 = sst [smem:[%s1255]] %s1238
          %s1257 = smul.f32 %s1240, %s1240
          %s1258 = smul.f32 %s1242, %s1242
          %s1259 = sadd.f32 %s1257, %s1258
          %s1260 = smul.f32 %s1244, %s1244
          %s1261 = sadd.f32 %s1259, %s1260
          %s1262 = smul.f32 %s1246, %s1246
          %s1263 = sadd.f32 %s1261, %s1262
          %v1264 = vstv %s1263
          %v1265 = vrsqrt.pop %v1264
          %v1266 = vmul.f32 %v1265, %v1264
          %v1267 = vmul.f32 %v1266, %v1265
          %v1268 = vmul.f32 0.5, %v1267
          %v1269 = vsub.f32 1.5, %v1268
          %v1270 = vmul.f32 %v1265, %v1269
          %v1271 = vmul.f32 %v1264, %v1270
          %vm1272 = vcmp.eq.f32.partialorder %v1264, inf
          %v1273 = vsel %vm1272, %v1264, %v1271
          %vm1274 = vcmp.eq.f32.partialorder %v1264, 0.0
          %v1275 = vand.u32 %v1264, 2147483648
          %v1276 = vsel %vm1274, %v1275, %v1273
          %s1277 = vtos %v1276
          %s1278 = ssub.f32 %s1277, 0.5
          %s1279 = smax.f32 %s1278, 0.0
          %s1280 = ssub.f32 256.0, %s1193
          %s1281 = smul.f32 %s1279, %s1279
          %v1282 = vstv %s1281
          %v1283 = vadd.f32 %v1282, 1.0
          %v1284 = vlog2.pop %v1283
          %v1285 = vmul.f32 %v1284, 0.6931472
          %v1286 = vadd.f32 %v1285, 0.0
          %s1287 = vtos %v1286
          %s1288 = smul.f32 %s1280, %s1287
          %s1289 = smul.f32 %s1288, %s1238
          %s1290 = sadd.f32 %s1179, %s1289
          %vm1291 = vcmp.eq.s32.totalorder %v958, 2
          %v1292 = vstv %s1240
          %v1293 = vsel %vm1291, %v1292, %v1182
          %v1294 = vstv %s1242
          %v1295 = vsel %vm1291, %v1294, %v1184
          %v1296 = vstv %s1244
          %v1297 = vsel %vm1291, %v1296, %v1186
          %v1298 = vstv %s1246
          %v1299 = vsel %vm1291, %v1298, %v1188
          %p1300 = scmp.le.f32.partialorder 4.0, %s956
          %s1301 = scalar_select %p1300, 1, 0
          %s1302 = scvt.s32.f32 %s1301
          %s1303 = sld [smem:[#allocation2 + $0x203]]
          %s1304 = sld [smem:[#allocation2 + $0x283]]
          %p1305 = scmp.lt.f32.partialorder %s1303, 0.5
          %s1306 = scalar_select %p1305, 1, 0
          %s1307 = scvt.s32.f32 %s1306
          %s1308 = sadd.f32 %s1303, %s1307
          %p1309 = scmp.lt.f32.partialorder %s1304, 0.5
          %s1310 = scalar_select %p1309, 1, 0
          %s1311 = scvt.s32.f32 %s1310
          %s1312 = sadd.f32 %s1304, %s1311
          %v1313 = vstv %s1308
          %v1314 = vrcp.pop %v1313
          %v1315 = vmul.f32 %v1313, %v1314
          %v1316 = vsub.f32 1.0, %v1315
          %v1317 = vmul.f32 %v1314, %v1316
          %v1318 = vadd.f32 %v1314, %v1317
          %vm1319 = vweird.f32 %v1313
          %vm1320 = vweird.f32 %v1314
          %vm1321 = vmor %vm1319, %vm1320
          %v1322 = vsel %vm1321, %v1314, %v1318
          %v1323 = vand.u32 2147483647, %v1313
          %vm1324 = vcmp.eq.f32.partialorder %v1323, 8.507059e+37
          %v1325 = vand.u32 %v1313, 2147483648
          %v1326 = vor.u32 1.1754944e-38, %v1325
          %v1327 = vsel %vm1324, %v1326, %v1322
          %v1328 = vmul.f32 1.0, %v1327
          %v1329 = vadd.f32 %v1328, 0.0
          %s1330 = vtos %v1329
          %v1331 = vstv %s1312
          %v1332 = vrcp.pop %v1331
          %v1333 = vmul.f32 %v1331, %v1332
          %v1334 = vsub.f32 1.0, %v1333
          %v1335 = vmul.f32 %v1332, %v1334
          %v1336 = vadd.f32 %v1332, %v1335
          %vm1337 = vweird.f32 %v1331
          %vm1338 = vweird.f32 %v1332
          %vm1339 = vmor %vm1337, %vm1338
          %v1340 = vsel %vm1339, %v1332, %v1336
          %v1341 = vand.u32 2147483647, %v1331
          %vm1342 = vcmp.eq.f32.partialorder %v1341, 8.507059e+37
          %v1343 = vand.u32 %v1331, 2147483648
          %v1344 = vor.u32 1.1754944e-38, %v1343
          %v1345 = vsel %vm1342, %v1344, %v1340
          %v1346 = vmul.f32 1.0, %v1345
          %v1347 = vadd.f32 %v1346, 0.0
          %s1348 = vtos %v1347
          %s1349 = smul.f32 %s1302, %s1348
          %s1350 = sld [smem:[#allocation2 + $0x3]]
          %s1351 = smul.f32 %s1350, %s1330
          %s1352 = sld [smem:[#allocation2 + $0x83]]
          %s1353 = smul.f32 %s1352, %s1330
          %s1354 = sld [smem:[#allocation2 + $0x103]]
          %s1355 = smul.f32 %s1354, %s1330
          %s1356 = sld [smem:[#allocation2 + $0x183]]
          %s1357 = smul.f32 %s1356, %s1330
          %s1358 = scalar_lea.smem [#allocation2], 3
          %1359 = sst [smem:[%s1358]] %s1351
          %s1360 = scalar_lea.smem [#allocation2], 131
          %1361 = sst [smem:[%s1360]] %s1353
          %s1362 = scalar_lea.smem [#allocation2], 259
          %1363 = sst [smem:[%s1362]] %s1355
          %s1364 = scalar_lea.smem [#allocation2], 387
          %1365 = sst [smem:[%s1364]] %s1357
          %s1366 = scalar_lea.smem [#allocation2], 771
          %1367 = sst [smem:[%s1366]] %s1349
          %s1368 = smul.f32 %s1351, %s1351
          %s1369 = smul.f32 %s1353, %s1353
          %s1370 = sadd.f32 %s1368, %s1369
          %s1371 = smul.f32 %s1355, %s1355
          %s1372 = sadd.f32 %s1370, %s1371
          %s1373 = smul.f32 %s1357, %s1357
          %s1374 = sadd.f32 %s1372, %s1373
          %v1375 = vstv %s1374
          %v1376 = vrsqrt.pop %v1375
          %v1377 = vmul.f32 %v1376, %v1375
          %v1378 = vmul.f32 %v1377, %v1376
          %v1379 = vmul.f32 0.5, %v1378
          %v1380 = vsub.f32 1.5, %v1379
          %v1381 = vmul.f32 %v1376, %v1380
          %v1382 = vmul.f32 %v1375, %v1381
          %vm1383 = vcmp.eq.f32.partialorder %v1375, inf
          %v1384 = vsel %vm1383, %v1375, %v1382
          %vm1385 = vcmp.eq.f32.partialorder %v1375, 0.0
          %v1386 = vand.u32 %v1375, 2147483648
          %v1387 = vsel %vm1385, %v1386, %v1384
          %s1388 = vtos %v1387
          %s1389 = ssub.f32 %s1388, 0.5
          %s1390 = smax.f32 %s1389, 0.0
          %s1391 = ssub.f32 256.0, %s1304
          %s1392 = smul.f32 %s1390, %s1390
          %v1393 = vstv %s1392
          %v1394 = vadd.f32 %v1393, 1.0
          %v1395 = vlog2.pop %v1394
          %v1396 = vmul.f32 %v1395, 0.6931472
          %v1397 = vadd.f32 %v1396, 0.0
          %s1398 = vtos %v1397
          %s1399 = smul.f32 %s1391, %s1398
          %s1400 = smul.f32 %s1399, %s1349
          %s1401 = sadd.f32 %s1290, %s1400
          %vm1402 = vcmp.eq.s32.totalorder %v958, 3
          %v1403 = vstv %s1351
          %v1404 = vsel %vm1402, %v1403, %v1293
          %v1405 = vstv %s1353
          %v1406 = vsel %vm1402, %v1405, %v1295
          %v1407 = vstv %s1355
          %v1408 = vsel %vm1402, %v1407, %v1297
          %v1409 = vstv %s1357
          %v1410 = vsel %vm1402, %v1409, %v1299
          %p1411 = scmp.le.f32.partialorder 5.0, %s956
          %s1412 = scalar_select %p1411, 1, 0
          %s1413 = scvt.s32.f32 %s1412
          %s1414 = sld [smem:[#allocation2 + $0x204]]
          %s1415 = sld [smem:[#allocation2 + $0x284]]
          %p1416 = scmp.lt.f32.partialorder %s1414, 0.5
          %s1417 = scalar_select %p1416, 1, 0
          %s1418 = scvt.s32.f32 %s1417
          %s1419 = sadd.f32 %s1414, %s1418
          %p1420 = scmp.lt.f32.partialorder %s1415, 0.5
          %s1421 = scalar_select %p1420, 1, 0
          %s1422 = scvt.s32.f32 %s1421
          %s1423 = sadd.f32 %s1415, %s1422
          %v1424 = vstv %s1419
          %v1425 = vrcp.pop %v1424
          %v1426 = vmul.f32 %v1424, %v1425
          %v1427 = vsub.f32 1.0, %v1426
          %v1428 = vmul.f32 %v1425, %v1427
          %v1429 = vadd.f32 %v1425, %v1428
          %vm1430 = vweird.f32 %v1424
          %vm1431 = vweird.f32 %v1425
          %vm1432 = vmor %vm1430, %vm1431
          %v1433 = vsel %vm1432, %v1425, %v1429
          %v1434 = vand.u32 2147483647, %v1424
          %vm1435 = vcmp.eq.f32.partialorder %v1434, 8.507059e+37
          %v1436 = vand.u32 %v1424, 2147483648
          %v1437 = vor.u32 1.1754944e-38, %v1436
          %v1438 = vsel %vm1435, %v1437, %v1433
          %v1439 = vmul.f32 1.0, %v1438
          %v1440 = vadd.f32 %v1439, 0.0
          %s1441 = vtos %v1440
          %v1442 = vstv %s1423
          %v1443 = vrcp.pop %v1442
          %v1444 = vmul.f32 %v1442, %v1443
          %v1445 = vsub.f32 1.0, %v1444
          %v1446 = vmul.f32 %v1443, %v1445
          %v1447 = vadd.f32 %v1443, %v1446
          %vm1448 = vweird.f32 %v1442
          %vm1449 = vweird.f32 %v1443
          %vm1450 = vmor %vm1448, %vm1449
          %v1451 = vsel %vm1450, %v1443, %v1447
          %v1452 = vand.u32 2147483647, %v1442
          %vm1453 = vcmp.eq.f32.partialorder %v1452, 8.507059e+37
          %v1454 = vand.u32 %v1442, 2147483648
          %v1455 = vor.u32 1.1754944e-38, %v1454
          %v1456 = vsel %vm1453, %v1455, %v1451
          %v1457 = vmul.f32 1.0, %v1456
          %v1458 = vadd.f32 %v1457, 0.0
          %s1459 = vtos %v1458
          %s1460 = smul.f32 %s1413, %s1459
          %s1461 = sld [smem:[#allocation2 + $0x4]]
          %s1462 = smul.f32 %s1461, %s1441
          %s1463 = sld [smem:[#allocation2 + $0x84]]
          %s1464 = smul.f32 %s1463, %s1441
          %s1465 = sld [smem:[#allocation2 + $0x104]]
          %s1466 = smul.f32 %s1465, %s1441
          %s1467 = sld [smem:[#allocation2 + $0x184]]
          %s1468 = smul.f32 %s1467, %s1441
          %s1469 = scalar_lea.smem [#allocation2], 4
          %1470 = sst [smem:[%s1469]] %s1462
          %s1471 = scalar_lea.smem [#allocation2], 132
          %1472 = sst [smem:[%s1471]] %s1464
          %s1473 = scalar_lea.smem [#allocation2], 260
          %1474 = sst [smem:[%s1473]] %s1466
          %s1475 = scalar_lea.smem [#allocation2], 388
          %1476 = sst [smem:[%s1475]] %s1468
          %s1477 = scalar_lea.smem [#allocation2], 772
          %1478 = sst [smem:[%s1477]] %s1460
          %s1479 = smul.f32 %s1462, %s1462
          %s1480 = smul.f32 %s1464, %s1464
          %s1481 = sadd.f32 %s1479, %s1480
          %s1482 = smul.f32 %s1466, %s1466
          %s1483 = sadd.f32 %s1481, %s1482
          %s1484 = smul.f32 %s1468, %s1468
          %s1485 = sadd.f32 %s1483, %s1484
          %v1486 = vstv %s1485
          %v1487 = vrsqrt.pop %v1486
          %v1488 = vmul.f32 %v1487, %v1486
          %v1489 = vmul.f32 %v1488, %v1487
          %v1490 = vmul.f32 0.5, %v1489
          %v1491 = vsub.f32 1.5, %v1490
          %v1492 = vmul.f32 %v1487, %v1491
          %v1493 = vmul.f32 %v1486, %v1492
          %vm1494 = vcmp.eq.f32.partialorder %v1486, inf
          %v1495 = vsel %vm1494, %v1486, %v1493
          %vm1496 = vcmp.eq.f32.partialorder %v1486, 0.0
          %v1497 = vand.u32 %v1486, 2147483648
          %v1498 = vsel %vm1496, %v1497, %v1495
          %s1499 = vtos %v1498
          %s1500 = ssub.f32 %s1499, 0.5
          %s1501 = smax.f32 %s1500, 0.0
          %s1502 = ssub.f32 256.0, %s1415
          %s1503 = smul.f32 %s1501, %s1501
          %v1504 = vstv %s1503
          %v1505 = vadd.f32 %v1504, 1.0
          %v1506 = vlog2.pop %v1505
          %v1507 = vmul.f32 %v1506, 0.6931472
          %v1508 = vadd.f32 %v1507, 0.0
          %s1509 = vtos %v1508
          %s1510 = smul.f32 %s1502, %s1509
          %s1511 = smul.f32 %s1510, %s1460
          %s1512 = sadd.f32 %s1401, %s1511
          %vm1513 = vcmp.eq.s32.totalorder %v958, 4
          %v1514 = vstv %s1462
          %v1515 = vsel %vm1513, %v1514, %v1404
          %v1516 = vstv %s1464
          %v1517 = vsel %vm1513, %v1516, %v1406
          %v1518 = vstv %s1466
          %v1519 = vsel %vm1513, %v1518, %v1408
          %v1520 = vstv %s1468
          %v1521 = vsel %vm1513, %v1520, %v1410
          %p1522 = scmp.le.f32.partialorder 6.0, %s956
          %s1523 = scalar_select %p1522, 1, 0
          %s1524 = scvt.s32.f32 %s1523
          %s1525 = sld [smem:[#allocation2 + $0x205]]
          %s1526 = sld [smem:[#allocation2 + $0x285]]
          %p1527 = scmp.lt.f32.partialorder %s1525, 0.5
          %s1528 = scalar_select %p1527, 1, 0
          %s1529 = scvt.s32.f32 %s1528
          %s1530 = sadd.f32 %s1525, %s1529
          %p1531 = scmp.lt.f32.partialorder %s1526, 0.5
          %s1532 = scalar_select %p1531, 1, 0
          %s1533 = scvt.s32.f32 %s1532
          %s1534 = sadd.f32 %s1526, %s1533
          %v1535 = vstv %s1530
          %v1536 = vrcp.pop %v1535
          %v1537 = vmul.f32 %v1535, %v1536
          %v1538 = vsub.f32 1.0, %v1537
          %v1539 = vmul.f32 %v1536, %v1538
          %v1540 = vadd.f32 %v1536, %v1539
          %vm1541 = vweird.f32 %v1535
          %vm1542 = vweird.f32 %v1536
          %vm1543 = vmor %vm1541, %vm1542
          %v1544 = vsel %vm1543, %v1536, %v1540
          %v1545 = vand.u32 2147483647, %v1535
          %vm1546 = vcmp.eq.f32.partialorder %v1545, 8.507059e+37
          %v1547 = vand.u32 %v1535, 2147483648
          %v1548 = vor.u32 1.1754944e-38, %v1547
          %v1549 = vsel %vm1546, %v1548, %v1544
          %v1550 = vmul.f32 1.0, %v1549
          %v1551 = vadd.f32 %v1550, 0.0
          %s1552 = vtos %v1551
          %v1553 = vstv %s1534
          %v1554 = vrcp.pop %v1553
          %v1555 = vmul.f32 %v1553, %v1554
          %v1556 = vsub.f32 1.0, %v1555
          %v1557 = vmul.f32 %v1554, %v1556
          %v1558 = vadd.f32 %v1554, %v1557
          %vm1559 = vweird.f32 %v1553
          %vm1560 = vweird.f32 %v1554
          %vm1561 = vmor %vm1559, %vm1560
          %v1562 = vsel %vm1561, %v1554, %v1558
          %v1563 = vand.u32 2147483647, %v1553
          %vm1564 = vcmp.eq.f32.partialorder %v1563, 8.507059e+37
          %v1565 = vand.u32 %v1553, 2147483648
          %v1566 = vor.u32 1.1754944e-38, %v1565
          %v1567 = vsel %vm1564, %v1566, %v1562
          %v1568 = vmul.f32 1.0, %v1567
          %v1569 = vadd.f32 %v1568, 0.0
          %s1570 = vtos %v1569
          %s1571 = smul.f32 %s1524, %s1570
          %s1572 = sld [smem:[#allocation2 + $0x5]]
          %s1573 = smul.f32 %s1572, %s1552
          %s1574 = sld [smem:[#allocation2 + $0x85]]
          %s1575 = smul.f32 %s1574, %s1552
          %s1576 = sld [smem:[#allocation2 + $0x105]]
          %s1577 = smul.f32 %s1576, %s1552
          %s1578 = sld [smem:[#allocation2 + $0x185]]
          %s1579 = smul.f32 %s1578, %s1552
          %s1580 = scalar_lea.smem [#allocation2], 5
          %1581 = sst [smem:[%s1580]] %s1573
          %s1582 = scalar_lea.smem [#allocation2], 133
          %1583 = sst [smem:[%s1582]] %s1575
          %s1584 = scalar_lea.smem [#allocation2], 261
          %1585 = sst [smem:[%s1584]] %s1577
          %s1586 = scalar_lea.smem [#allocation2], 389
          %1587 = sst [smem:[%s1586]] %s1579
          %s1588 = scalar_lea.smem [#allocation2], 773
          %1589 = sst [smem:[%s1588]] %s1571
          %s1590 = smul.f32 %s1573, %s1573
          %s1591 = smul.f32 %s1575, %s1575
          %s1592 = sadd.f32 %s1590, %s1591
          %s1593 = smul.f32 %s1577, %s1577
          %s1594 = sadd.f32 %s1592, %s1593
          %s1595 = smul.f32 %s1579, %s1579
          %s1596 = sadd.f32 %s1594, %s1595
          %v1597 = vstv %s1596
          %v1598 = vrsqrt.pop %v1597
          %v1599 = vmul.f32 %v1598, %v1597
          %v1600 = vmul.f32 %v1599, %v1598
          %v1601 = vmul.f32 0.5, %v1600
          %v1602 = vsub.f32 1.5, %v1601
          %v1603 = vmul.f32 %v1598, %v1602
          %v1604 = vmul.f32 %v1597, %v1603
          %vm1605 = vcmp.eq.f32.partialorder %v1597, inf
          %v1606 = vsel %vm1605, %v1597, %v1604
          %vm1607 = vcmp.eq.f32.partialorder %v1597, 0.0
          %v1608 = vand.u32 %v1597, 2147483648
          %v1609 = vsel %vm1607, %v1608, %v1606
          %s1610 = vtos %v1609
          %s1611 = ssub.f32 %s1610, 0.5
          %s1612 = smax.f32 %s1611, 0.0
          %s1613 = ssub.f32 256.0, %s1526
          %s1614 = smul.f32 %s1612, %s1612
          %v1615 = vstv %s1614
          %v1616 = vadd.f32 %v1615, 1.0
          %v1617 = vlog2.pop %v1616
          %v1618 = vmul.f32 %v1617, 0.6931472
          %v1619 = vadd.f32 %v1618, 0.0
          %s1620 = vtos %v1619
          %s1621 = smul.f32 %s1613, %s1620
          %s1622 = smul.f32 %s1621, %s1571
          %s1623 = sadd.f32 %s1512, %s1622
          %vm1624 = vcmp.eq.s32.totalorder %v958, 5
          %v1625 = vstv %s1573
          %v1626 = vsel %vm1624, %v1625, %v1515
          %v1627 = vstv %s1575
          %v1628 = vsel %vm1624, %v1627, %v1517
          %v1629 = vstv %s1577
          %v1630 = vsel %vm1624, %v1629, %v1519
          %v1631 = vstv %s1579
          %v1632 = vsel %vm1624, %v1631, %v1521
          %p1633 = scmp.le.f32.partialorder 7.0, %s956
          %s1634 = scalar_select %p1633, 1, 0
          %s1635 = scvt.s32.f32 %s1634
          %s1636 = sld [smem:[#allocation2 + $0x206]]
          %s1637 = sld [smem:[#allocation2 + $0x286]]
          %p1638 = scmp.lt.f32.partialorder %s1636, 0.5
          %s1639 = scalar_select %p1638, 1, 0
          %s1640 = scvt.s32.f32 %s1639
          %s1641 = sadd.f32 %s1636, %s1640
          %p1642 = scmp.lt.f32.partialorder %s1637, 0.5
          %s1643 = scalar_select %p1642, 1, 0
          %s1644 = scvt.s32.f32 %s1643
          %s1645 = sadd.f32 %s1637, %s1644
          %v1646 = vstv %s1641
          %v1647 = vrcp.pop %v1646
          %v1648 = vmul.f32 %v1646, %v1647
          %v1649 = vsub.f32 1.0, %v1648
          %v1650 = vmul.f32 %v1647, %v1649
          %v1651 = vadd.f32 %v1647, %v1650
          %vm1652 = vweird.f32 %v1646
          %vm1653 = vweird.f32 %v1647
          %vm1654 = vmor %vm1652, %vm1653
          %v1655 = vsel %vm1654, %v1647, %v1651
          %v1656 = vand.u32 2147483647, %v1646
          %vm1657 = vcmp.eq.f32.partialorder %v1656, 8.507059e+37
          %v1658 = vand.u32 %v1646, 2147483648
          %v1659 = vor.u32 1.1754944e-38, %v1658
          %v1660 = vsel %vm1657, %v1659, %v1655
          %v1661 = vmul.f32 1.0, %v1660
          %v1662 = vadd.f32 %v1661, 0.0
          %s1663 = vtos %v1662
          %v1664 = vstv %s1645
          %v1665 = vrcp.pop %v1664
          %v1666 = vmul.f32 %v1664, %v1665
          %v1667 = vsub.f32 1.0, %v1666
          %v1668 = vmul.f32 %v1665, %v1667
          %v1669 = vadd.f32 %v1665, %v1668
          %vm1670 = vweird.f32 %v1664
          %vm1671 = vweird.f32 %v1665
          %vm1672 = vmor %vm1670, %vm1671
          %v1673 = vsel %vm1672, %v1665, %v1669
          %v1674 = vand.u32 2147483647, %v1664
          %vm1675 = vcmp.eq.f32.partialorder %v1674, 8.507059e+37
          %v1676 = vand.u32 %v1664, 2147483648
          %v1677 = vor.u32 1.1754944e-38, %v1676
          %v1678 = vsel %vm1675, %v1677, %v1673
          %v1679 = vmul.f32 1.0, %v1678
          %v1680 = vadd.f32 %v1679, 0.0
          %s1681 = vtos %v1680
          %s1682 = smul.f32 %s1635, %s1681
          %s1683 = sld [smem:[#allocation2 + $0x6]]
          %s1684 = smul.f32 %s1683, %s1663
          %s1685 = sld [smem:[#allocation2 + $0x86]]
          %s1686 = smul.f32 %s1685, %s1663
          %s1687 = sld [smem:[#allocation2 + $0x106]]
          %s1688 = smul.f32 %s1687, %s1663
          %s1689 = sld [smem:[#allocation2 + $0x186]]
          %s1690 = smul.f32 %s1689, %s1663
          %s1691 = scalar_lea.smem [#allocation2], 6
          %1692 = sst [smem:[%s1691]] %s1684
          %s1693 = scalar_lea.smem [#allocation2], 134
          %1694 = sst [smem:[%s1693]] %s1686
          %s1695 = scalar_lea.smem [#allocation2], 262
          %1696 = sst [smem:[%s1695]] %s1688
          %s1697 = scalar_lea.smem [#allocation2], 390
          %1698 = sst [smem:[%s1697]] %s1690
          %s1699 = scalar_lea.smem [#allocation2], 774
          %1700 = sst [smem:[%s1699]] %s1682
          %s1701 = smul.f32 %s1684, %s1684
          %s1702 = smul.f32 %s1686, %s1686
          %s1703 = sadd.f32 %s1701, %s1702
          %s1704 = smul.f32 %s1688, %s1688
          %s1705 = sadd.f32 %s1703, %s1704
          %s1706 = smul.f32 %s1690, %s1690
          %s1707 = sadd.f32 %s1705, %s1706
          %v1708 = vstv %s1707
          %v1709 = vrsqrt.pop %v1708
          %v1710 = vmul.f32 %v1709, %v1708
          %v1711 = vmul.f32 %v1710, %v1709
          %v1712 = vmul.f32 0.5, %v1711
          %v1713 = vsub.f32 1.5, %v1712
          %v1714 = vmul.f32 %v1709, %v1713
          %v1715 = vmul.f32 %v1708, %v1714
          %vm1716 = vcmp.eq.f32.partialorder %v1708, inf
          %v1717 = vsel %vm1716, %v1708, %v1715
          %vm1718 = vcmp.eq.f32.partialorder %v1708, 0.0
          %v1719 = vand.u32 %v1708, 2147483648
          %v1720 = vsel %vm1718, %v1719, %v1717
          %s1721 = vtos %v1720
          %s1722 = ssub.f32 %s1721, 0.5
          %s1723 = smax.f32 %s1722, 0.0
          %s1724 = ssub.f32 256.0, %s1637
          %s1725 = smul.f32 %s1723, %s1723
          %v1726 = vstv %s1725
          %v1727 = vadd.f32 %v1726, 1.0
          %v1728 = vlog2.pop %v1727
          %v1729 = vmul.f32 %v1728, 0.6931472
          %v1730 = vadd.f32 %v1729, 0.0
          %s1731 = vtos %v1730
          %s1732 = smul.f32 %s1724, %s1731
          %s1733 = smul.f32 %s1732, %s1682
          %s1734 = sadd.f32 %s1623, %s1733
          %vm1735 = vcmp.eq.s32.totalorder %v958, 6
          %v1736 = vstv %s1684
          %v1737 = vsel %vm1735, %v1736, %v1626
          %v1738 = vstv %s1686
          %v1739 = vsel %vm1735, %v1738, %v1628
          %v1740 = vstv %s1688
          %v1741 = vsel %vm1735, %v1740, %v1630
          %v1742 = vstv %s1690
          %v1743 = vsel %vm1735, %v1742, %v1632
          %p1744 = scmp.le.f32.partialorder 8.0, %s956
          %s1745 = scalar_select %p1744, 1, 0
          %s1746 = scvt.s32.f32 %s1745
          %s1747 = sld [smem:[#allocation2 + $0x207]]
          %s1748 = sld [smem:[#allocation2 + $0x287]]
          %p1749 = scmp.lt.f32.partialorder %s1747, 0.5
          %s1750 = scalar_select %p1749, 1, 0
          %s1751 = scvt.s32.f32 %s1750
          %s1752 = sadd.f32 %s1747, %s1751
          %p1753 = scmp.lt.f32.partialorder %s1748, 0.5
          %s1754 = scalar_select %p1753, 1, 0
          %s1755 = scvt.s32.f32 %s1754
          %s1756 = sadd.f32 %s1748, %s1755
          %v1757 = vstv %s1752
          %v1758 = vrcp.pop %v1757
          %v1759 = vmul.f32 %v1757, %v1758
          %v1760 = vsub.f32 1.0, %v1759
          %v1761 = vmul.f32 %v1758, %v1760
          %v1762 = vadd.f32 %v1758, %v1761
          %vm1763 = vweird.f32 %v1757
          %vm1764 = vweird.f32 %v1758
          %vm1765 = vmor %vm1763, %vm1764
          %v1766 = vsel %vm1765, %v1758, %v1762
          %v1767 = vand.u32 2147483647, %v1757
          %vm1768 = vcmp.eq.f32.partialorder %v1767, 8.507059e+37
          %v1769 = vand.u32 %v1757, 2147483648
          %v1770 = vor.u32 1.1754944e-38, %v1769
          %v1771 = vsel %vm1768, %v1770, %v1766
          %v1772 = vmul.f32 1.0, %v1771
          %v1773 = vadd.f32 %v1772, 0.0
          %s1774 = vtos %v1773
          %v1775 = vstv %s1756
          %v1776 = vrcp.pop %v1775
          %v1777 = vmul.f32 %v1775, %v1776
          %v1778 = vsub.f32 1.0, %v1777
          %v1779 = vmul.f32 %v1776, %v1778
          %v1780 = vadd.f32 %v1776, %v1779
          %vm1781 = vweird.f32 %v1775
          %vm1782 = vweird.f32 %v1776
          %vm1783 = vmor %vm1781, %vm1782
          %v1784 = vsel %vm1783, %v1776, %v1780
          %v1785 = vand.u32 2147483647, %v1775
          %vm1786 = vcmp.eq.f32.partialorder %v1785, 8.507059e+37
          %v1787 = vand.u32 %v1775, 2147483648
          %v1788 = vor.u32 1.1754944e-38, %v1787
          %v1789 = vsel %vm1786, %v1788, %v1784
          %v1790 = vmul.f32 1.0, %v1789
          %v1791 = vadd.f32 %v1790, 0.0
          %s1792 = vtos %v1791
          %s1793 = smul.f32 %s1746, %s1792
          %s1794 = sld [smem:[#allocation2 + $0x7]]
          %s1795 = smul.f32 %s1794, %s1774
          %s1796 = sld [smem:[#allocation2 + $0x87]]
          %s1797 = smul.f32 %s1796, %s1774
          %s1798 = sld [smem:[#allocation2 + $0x107]]
          %s1799 = smul.f32 %s1798, %s1774
          %s1800 = sld [smem:[#allocation2 + $0x187]]
          %s1801 = smul.f32 %s1800, %s1774
          %s1802 = scalar_lea.smem [#allocation2], 7
          %1803 = sst [smem:[%s1802]] %s1795
          %s1804 = scalar_lea.smem [#allocation2], 135
          %1805 = sst [smem:[%s1804]] %s1797
          %s1806 = scalar_lea.smem [#allocation2], 263
          %1807 = sst [smem:[%s1806]] %s1799
          %s1808 = scalar_lea.smem [#allocation2], 391
          %1809 = sst [smem:[%s1808]] %s1801
          %s1810 = scalar_lea.smem [#allocation2], 775
          %1811 = sst [smem:[%s1810]] %s1793
          %s1812 = smul.f32 %s1795, %s1795
          %s1813 = smul.f32 %s1797, %s1797
          %s1814 = sadd.f32 %s1812, %s1813
          %s1815 = smul.f32 %s1799, %s1799
          %s1816 = sadd.f32 %s1814, %s1815
          %s1817 = smul.f32 %s1801, %s1801
          %s1818 = sadd.f32 %s1816, %s1817
          %v1819 = vstv %s1818
          %v1820 = vrsqrt.pop %v1819
          %v1821 = vmul.f32 %v1820, %v1819
          %v1822 = vmul.f32 %v1821, %v1820
          %v1823 = vmul.f32 0.5, %v1822
          %v1824 = vsub.f32 1.5, %v1823
          %v1825 = vmul.f32 %v1820, %v1824
          %v1826 = vmul.f32 %v1819, %v1825
          %vm1827 = vcmp.eq.f32.partialorder %v1819, inf
          %v1828 = vsel %vm1827, %v1819, %v1826
          %vm1829 = vcmp.eq.f32.partialorder %v1819, 0.0
          %v1830 = vand.u32 %v1819, 2147483648
          %v1831 = vsel %vm1829, %v1830, %v1828
          %s1832 = vtos %v1831
          %s1833 = ssub.f32 %s1832, 0.5
          %s1834 = smax.f32 %s1833, 0.0
          %s1835 = ssub.f32 256.0, %s1748
          %s1836 = smul.f32 %s1834, %s1834
          %v1837 = vstv %s1836
          %v1838 = vadd.f32 %v1837, 1.0
          %v1839 = vlog2.pop %v1838
          %v1840 = vmul.f32 %v1839, 0.6931472
          %v1841 = vadd.f32 %v1840, 0.0
          %s1842 = vtos %v1841
          %s1843 = smul.f32 %s1835, %s1842
          %s1844 = smul.f32 %s1843, %s1793
          %s1845 = sadd.f32 %s1734, %s1844
          %vm1846 = vcmp.eq.s32.totalorder %v958, 7
          %v1847 = vstv %s1795
          %v1848 = vsel %vm1846, %v1847, %v1737
          %v1849 = vstv %s1797
          %v1850 = vsel %vm1846, %v1849, %v1739
          %v1851 = vstv %s1799
          %v1852 = vsel %vm1846, %v1851, %v1741
          %v1853 = vstv %s1801
          %v1854 = vsel %vm1846, %v1853, %v1743
          %p1855 = scmp.le.f32.partialorder 9.0, %s956
          %s1856 = scalar_select %p1855, 1, 0
          %s1857 = scvt.s32.f32 %s1856
          %s1858 = sld [smem:[#allocation2 + $0x208]]
          %s1859 = sld [smem:[#allocation2 + $0x288]]
          %p1860 = scmp.lt.f32.partialorder %s1858, 0.5
          %s1861 = scalar_select %p1860, 1, 0
          %s1862 = scvt.s32.f32 %s1861
          %s1863 = sadd.f32 %s1858, %s1862
          %p1864 = scmp.lt.f32.partialorder %s1859, 0.5
          %s1865 = scalar_select %p1864, 1, 0
          %s1866 = scvt.s32.f32 %s1865
          %s1867 = sadd.f32 %s1859, %s1866
          %v1868 = vstv %s1863
          %v1869 = vrcp.pop %v1868
          %v1870 = vmul.f32 %v1868, %v1869
          %v1871 = vsub.f32 1.0, %v1870
          %v1872 = vmul.f32 %v1869, %v1871
          %v1873 = vadd.f32 %v1869, %v1872
          %vm1874 = vweird.f32 %v1868
          %vm1875 = vweird.f32 %v1869
          %vm1876 = vmor %vm1874, %vm1875
          %v1877 = vsel %vm1876, %v1869, %v1873
          %v1878 = vand.u32 2147483647, %v1868
          %vm1879 = vcmp.eq.f32.partialorder %v1878, 8.507059e+37
          %v1880 = vand.u32 %v1868, 2147483648
          %v1881 = vor.u32 1.1754944e-38, %v1880
          %v1882 = vsel %vm1879, %v1881, %v1877
          %v1883 = vmul.f32 1.0, %v1882
          %v1884 = vadd.f32 %v1883, 0.0
          %s1885 = vtos %v1884
          %v1886 = vstv %s1867
          %v1887 = vrcp.pop %v1886
          %v1888 = vmul.f32 %v1886, %v1887
          %v1889 = vsub.f32 1.0, %v1888
          %v1890 = vmul.f32 %v1887, %v1889
          %v1891 = vadd.f32 %v1887, %v1890
          %vm1892 = vweird.f32 %v1886
          %vm1893 = vweird.f32 %v1887
          %vm1894 = vmor %vm1892, %vm1893
          %v1895 = vsel %vm1894, %v1887, %v1891
          %v1896 = vand.u32 2147483647, %v1886
          %vm1897 = vcmp.eq.f32.partialorder %v1896, 8.507059e+37
          %v1898 = vand.u32 %v1886, 2147483648
          %v1899 = vor.u32 1.1754944e-38, %v1898
          %v1900 = vsel %vm1897, %v1899, %v1895
          %v1901 = vmul.f32 1.0, %v1900
          %v1902 = vadd.f32 %v1901, 0.0
          %s1903 = vtos %v1902
          %s1904 = smul.f32 %s1857, %s1903
          %s1905 = sld [smem:[#allocation2 + $0x8]]
          %s1906 = smul.f32 %s1905, %s1885
          %s1907 = sld [smem:[#allocation2 + $0x88]]
          %s1908 = smul.f32 %s1907, %s1885
          %s1909 = sld [smem:[#allocation2 + $0x108]]
          %s1910 = smul.f32 %s1909, %s1885
          %s1911 = sld [smem:[#allocation2 + $0x188]]
          %s1912 = smul.f32 %s1911, %s1885
          %s1913 = scalar_lea.smem [#allocation2], 8
          %1914 = sst [smem:[%s1913]] %s1906
          %s1915 = scalar_lea.smem [#allocation2], 136
          %1916 = sst [smem:[%s1915]] %s1908
          %s1917 = scalar_lea.smem [#allocation2], 264
          %1918 = sst [smem:[%s1917]] %s1910
          %s1919 = scalar_lea.smem [#allocation2], 392
          %1920 = sst [smem:[%s1919]] %s1912
          %s1921 = scalar_lea.smem [#allocation2], 776
          %1922 = sst [smem:[%s1921]] %s1904
          %s1923 = smul.f32 %s1906, %s1906
          %s1924 = smul.f32 %s1908, %s1908
          %s1925 = sadd.f32 %s1923, %s1924
          %s1926 = smul.f32 %s1910, %s1910
          %s1927 = sadd.f32 %s1925, %s1926
          %s1928 = smul.f32 %s1912, %s1912
          %s1929 = sadd.f32 %s1927, %s1928
          %v1930 = vstv %s1929
          %v1931 = vrsqrt.pop %v1930
          %v1932 = vmul.f32 %v1931, %v1930
          %v1933 = vmul.f32 %v1932, %v1931
          %v1934 = vmul.f32 0.5, %v1933
          %v1935 = vsub.f32 1.5, %v1934
          %v1936 = vmul.f32 %v1931, %v1935
          %v1937 = vmul.f32 %v1930, %v1936
          %vm1938 = vcmp.eq.f32.partialorder %v1930, inf
          %v1939 = vsel %vm1938, %v1930, %v1937
          %vm1940 = vcmp.eq.f32.partialorder %v1930, 0.0
          %v1941 = vand.u32 %v1930, 2147483648
          %v1942 = vsel %vm1940, %v1941, %v1939
          %s1943 = vtos %v1942
          %s1944 = ssub.f32 %s1943, 0.5
          %s1945 = smax.f32 %s1944, 0.0
          %s1946 = ssub.f32 256.0, %s1859
          %s1947 = smul.f32 %s1945, %s1945
          %v1948 = vstv %s1947
          %v1949 = vadd.f32 %v1948, 1.0
          %v1950 = vlog2.pop %v1949
          %v1951 = vmul.f32 %v1950, 0.6931472
          %v1952 = vadd.f32 %v1951, 0.0
          %s1953 = vtos %v1952
          %s1954 = smul.f32 %s1946, %s1953
          %s1955 = smul.f32 %s1954, %s1904
          %s1956 = sadd.f32 %s1845, %s1955
          %vm1957 = vcmp.eq.s32.totalorder %v958, 8
          %v1958 = vstv %s1906
          %v1959 = vsel %vm1957, %v1958, %v1848
          %v1960 = vstv %s1908
          %v1961 = vsel %vm1957, %v1960, %v1850
          %v1962 = vstv %s1910
          %v1963 = vsel %vm1957, %v1962, %v1852
          %v1964 = vstv %s1912
          %v1965 = vsel %vm1957, %v1964, %v1854
          %p1966 = scmp.le.f32.partialorder 10.0, %s956
          %s1967 = scalar_select %p1966, 1, 0
          %s1968 = scvt.s32.f32 %s1967
          %s1969 = sld [smem:[#allocation2 + $0x209]]
          %s1970 = sld [smem:[#allocation2 + $0x289]]
          %p1971 = scmp.lt.f32.partialorder %s1969, 0.5
          %s1972 = scalar_select %p1971, 1, 0
          %s1973 = scvt.s32.f32 %s1972
          %s1974 = sadd.f32 %s1969, %s1973
          %p1975 = scmp.lt.f32.partialorder %s1970, 0.5
          %s1976 = scalar_select %p1975, 1, 0
          %s1977 = scvt.s32.f32 %s1976
          %s1978 = sadd.f32 %s1970, %s1977
          %v1979 = vstv %s1974
          %v1980 = vrcp.pop %v1979
          %v1981 = vmul.f32 %v1979, %v1980
          %v1982 = vsub.f32 1.0, %v1981
          %v1983 = vmul.f32 %v1980, %v1982
          %v1984 = vadd.f32 %v1980, %v1983
          %vm1985 = vweird.f32 %v1979
          %vm1986 = vweird.f32 %v1980
          %vm1987 = vmor %vm1985, %vm1986
          %v1988 = vsel %vm1987, %v1980, %v1984
          %v1989 = vand.u32 2147483647, %v1979
          %vm1990 = vcmp.eq.f32.partialorder %v1989, 8.507059e+37
          %v1991 = vand.u32 %v1979, 2147483648
          %v1992 = vor.u32 1.1754944e-38, %v1991
          %v1993 = vsel %vm1990, %v1992, %v1988
          %v1994 = vmul.f32 1.0, %v1993
          %v1995 = vadd.f32 %v1994, 0.0
          %s1996 = vtos %v1995
          %v1997 = vstv %s1978
          %v1998 = vrcp.pop %v1997
          %v1999 = vmul.f32 %v1997, %v1998
          %v2000 = vsub.f32 1.0, %v1999
          %v2001 = vmul.f32 %v1998, %v2000
          %v2002 = vadd.f32 %v1998, %v2001
          %vm2003 = vweird.f32 %v1997
          %vm2004 = vweird.f32 %v1998
          %vm2005 = vmor %vm2003, %vm2004
          %v2006 = vsel %vm2005, %v1998, %v2002
          %v2007 = vand.u32 2147483647, %v1997
          %vm2008 = vcmp.eq.f32.partialorder %v2007, 8.507059e+37
          %v2009 = vand.u32 %v1997, 2147483648
          %v2010 = vor.u32 1.1754944e-38, %v2009
          %v2011 = vsel %vm2008, %v2010, %v2006
          %v2012 = vmul.f32 1.0, %v2011
          %v2013 = vadd.f32 %v2012, 0.0
          %s2014 = vtos %v2013
          %s2015 = smul.f32 %s1968, %s2014
          %s2016 = sld [smem:[#allocation2 + $0x9]]
          %s2017 = smul.f32 %s2016, %s1996
          %s2018 = sld [smem:[#allocation2 + $0x89]]
          %s2019 = smul.f32 %s2018, %s1996
          %s2020 = sld [smem:[#allocation2 + $0x109]]
          %s2021 = smul.f32 %s2020, %s1996
          %s2022 = sld [smem:[#allocation2 + $0x189]]
          %s2023 = smul.f32 %s2022, %s1996
          %s2024 = scalar_lea.smem [#allocation2], 9
          %2025 = sst [smem:[%s2024]] %s2017
          %s2026 = scalar_lea.smem [#allocation2], 137
          %2027 = sst [smem:[%s2026]] %s2019
          %s2028 = scalar_lea.smem [#allocation2], 265
          %2029 = sst [smem:[%s2028]] %s2021
          %s2030 = scalar_lea.smem [#allocation2], 393
          %2031 = sst [smem:[%s2030]] %s2023
          %s2032 = scalar_lea.smem [#allocation2], 777
          %2033 = sst [smem:[%s2032]] %s2015
          %s2034 = smul.f32 %s2017, %s2017
          %s2035 = smul.f32 %s2019, %s2019
          %s2036 = sadd.f32 %s2034, %s2035
          %s2037 = smul.f32 %s2021, %s2021
          %s2038 = sadd.f32 %s2036, %s2037
          %s2039 = smul.f32 %s2023, %s2023
          %s2040 = sadd.f32 %s2038, %s2039
          %v2041 = vstv %s2040
          %v2042 = vrsqrt.pop %v2041
          %v2043 = vmul.f32 %v2042, %v2041
          %v2044 = vmul.f32 %v2043, %v2042
          %v2045 = vmul.f32 0.5, %v2044
          %v2046 = vsub.f32 1.5, %v2045
          %v2047 = vmul.f32 %v2042, %v2046
          %v2048 = vmul.f32 %v2041, %v2047
          %vm2049 = vcmp.eq.f32.partialorder %v2041, inf
          %v2050 = vsel %vm2049, %v2041, %v2048
          %vm2051 = vcmp.eq.f32.partialorder %v2041, 0.0
          %v2052 = vand.u32 %v2041, 2147483648
          %v2053 = vsel %vm2051, %v2052, %v2050
          %s2054 = vtos %v2053
          %s2055 = ssub.f32 %s2054, 0.5
          %s2056 = smax.f32 %s2055, 0.0
          %s2057 = ssub.f32 256.0, %s1970
          %s2058 = smul.f32 %s2056, %s2056
          %v2059 = vstv %s2058
          %v2060 = vadd.f32 %v2059, 1.0
          %v2061 = vlog2.pop %v2060
          %v2062 = vmul.f32 %v2061, 0.6931472
          %v2063 = vadd.f32 %v2062, 0.0
          %s2064 = vtos %v2063
          %s2065 = smul.f32 %s2057, %s2064
          %s2066 = smul.f32 %s2065, %s2015
          %s2067 = sadd.f32 %s1956, %s2066
          %vm2068 = vcmp.eq.s32.totalorder %v958, 9
          %v2069 = vstv %s2017
          %v2070 = vsel %vm2068, %v2069, %v1959
          %v2071 = vstv %s2019
          %v2072 = vsel %vm2068, %v2071, %v1961
          %v2073 = vstv %s2021
          %v2074 = vsel %vm2068, %v2073, %v1963
          %v2075 = vstv %s2023
          %v2076 = vsel %vm2068, %v2075, %v1965
          %p2077 = scmp.le.f32.partialorder 11.0, %s956
          %s2078 = scalar_select %p2077, 1, 0
          %s2079 = scvt.s32.f32 %s2078
          %s2080 = sld [smem:[#allocation2 + $0x20a]]
          %s2081 = sld [smem:[#allocation2 + $0x28a]]
          %p2082 = scmp.lt.f32.partialorder %s2080, 0.5
          %s2083 = scalar_select %p2082, 1, 0
          %s2084 = scvt.s32.f32 %s2083
          %s2085 = sadd.f32 %s2080, %s2084
          %p2086 = scmp.lt.f32.partialorder %s2081, 0.5
          %s2087 = scalar_select %p2086, 1, 0
          %s2088 = scvt.s32.f32 %s2087
          %s2089 = sadd.f32 %s2081, %s2088
          %v2090 = vstv %s2085
          %v2091 = vrcp.pop %v2090
          %v2092 = vmul.f32 %v2090, %v2091
          %v2093 = vsub.f32 1.0, %v2092
          %v2094 = vmul.f32 %v2091, %v2093
          %v2095 = vadd.f32 %v2091, %v2094
          %vm2096 = vweird.f32 %v2090
          %vm2097 = vweird.f32 %v2091
          %vm2098 = vmor %vm2096, %vm2097
          %v2099 = vsel %vm2098, %v2091, %v2095
          %v2100 = vand.u32 2147483647, %v2090
          %vm2101 = vcmp.eq.f32.partialorder %v2100, 8.507059e+37
          %v2102 = vand.u32 %v2090, 2147483648
          %v2103 = vor.u32 1.1754944e-38, %v2102
          %v2104 = vsel %vm2101, %v2103, %v2099
          %v2105 = vmul.f32 1.0, %v2104
          %v2106 = vadd.f32 %v2105, 0.0
          %s2107 = vtos %v2106
          %v2108 = vstv %s2089
          %v2109 = vrcp.pop %v2108
          %v2110 = vmul.f32 %v2108, %v2109
          %v2111 = vsub.f32 1.0, %v2110
          %v2112 = vmul.f32 %v2109, %v2111
          %v2113 = vadd.f32 %v2109, %v2112
          %vm2114 = vweird.f32 %v2108
          %vm2115 = vweird.f32 %v2109
          %vm2116 = vmor %vm2114, %vm2115
          %v2117 = vsel %vm2116, %v2109, %v2113
          %v2118 = vand.u32 2147483647, %v2108
          %vm2119 = vcmp.eq.f32.partialorder %v2118, 8.507059e+37
          %v2120 = vand.u32 %v2108, 2147483648
          %v2121 = vor.u32 1.1754944e-38, %v2120
          %v2122 = vsel %vm2119, %v2121, %v2117
          %v2123 = vmul.f32 1.0, %v2122
          %v2124 = vadd.f32 %v2123, 0.0
          %s2125 = vtos %v2124
          %s2126 = smul.f32 %s2079, %s2125
          %s2127 = sld [smem:[#allocation2 + $0xa]]
          %s2128 = smul.f32 %s2127, %s2107
          %s2129 = sld [smem:[#allocation2 + $0x8a]]
          %s2130 = smul.f32 %s2129, %s2107
          %s2131 = sld [smem:[#allocation2 + $0x10a]]
          %s2132 = smul.f32 %s2131, %s2107
          %s2133 = sld [smem:[#allocation2 + $0x18a]]
          %s2134 = smul.f32 %s2133, %s2107
          %s2135 = scalar_lea.smem [#allocation2], 10
          %2136 = sst [smem:[%s2135]] %s2128
          %s2137 = scalar_lea.smem [#allocation2], 138
          %2138 = sst [smem:[%s2137]] %s2130
          %s2139 = scalar_lea.smem [#allocation2], 266
          %2140 = sst [smem:[%s2139]] %s2132
          %s2141 = scalar_lea.smem [#allocation2], 394
          %2142 = sst [smem:[%s2141]] %s2134
          %s2143 = scalar_lea.smem [#allocation2], 778
          %2144 = sst [smem:[%s2143]] %s2126
          %s2145 = smul.f32 %s2128, %s2128
          %s2146 = smul.f32 %s2130, %s2130
          %s2147 = sadd.f32 %s2145, %s2146
          %s2148 = smul.f32 %s2132, %s2132
          %s2149 = sadd.f32 %s2147, %s2148
          %s2150 = smul.f32 %s2134, %s2134
          %s2151 = sadd.f32 %s2149, %s2150
          %v2152 = vstv %s2151
          %v2153 = vrsqrt.pop %v2152
          %v2154 = vmul.f32 %v2153, %v2152
          %v2155 = vmul.f32 %v2154, %v2153
          %v2156 = vmul.f32 0.5, %v2155
          %v2157 = vsub.f32 1.5, %v2156
          %v2158 = vmul.f32 %v2153, %v2157
          %v2159 = vmul.f32 %v2152, %v2158
          %vm2160 = vcmp.eq.f32.partialorder %v2152, inf
          %v2161 = vsel %vm2160, %v2152, %v2159
          %vm2162 = vcmp.eq.f32.partialorder %v2152, 0.0
          %v2163 = vand.u32 %v2152, 2147483648
          %v2164 = vsel %vm2162, %v2163, %v2161
          %s2165 = vtos %v2164
          %s2166 = ssub.f32 %s2165, 0.5
          %s2167 = smax.f32 %s2166, 0.0
          %s2168 = ssub.f32 256.0, %s2081
          %s2169 = smul.f32 %s2167, %s2167
          %v2170 = vstv %s2169
          %v2171 = vadd.f32 %v2170, 1.0
          %v2172 = vlog2.pop %v2171
          %v2173 = vmul.f32 %v2172, 0.6931472
          %v2174 = vadd.f32 %v2173, 0.0
          %s2175 = vtos %v2174
          %s2176 = smul.f32 %s2168, %s2175
          %s2177 = smul.f32 %s2176, %s2126
          %s2178 = sadd.f32 %s2067, %s2177
          %vm2179 = vcmp.eq.s32.totalorder %v958, 10
          %v2180 = vstv %s2128
          %v2181 = vsel %vm2179, %v2180, %v2070
          %v2182 = vstv %s2130
          %v2183 = vsel %vm2179, %v2182, %v2072
          %v2184 = vstv %s2132
          %v2185 = vsel %vm2179, %v2184, %v2074
          %v2186 = vstv %s2134
          %v2187 = vsel %vm2179, %v2186, %v2076
          %p2188 = scmp.le.f32.partialorder 12.0, %s956
          %s2189 = scalar_select %p2188, 1, 0
          %s2190 = scvt.s32.f32 %s2189
          %s2191 = sld [smem:[#allocation2 + $0x20b]]
          %s2192 = sld [smem:[#allocation2 + $0x28b]]
          %p2193 = scmp.lt.f32.partialorder %s2191, 0.5
          %s2194 = scalar_select %p2193, 1, 0
          %s2195 = scvt.s32.f32 %s2194
          %s2196 = sadd.f32 %s2191, %s2195
          %p2197 = scmp.lt.f32.partialorder %s2192, 0.5
          %s2198 = scalar_select %p2197, 1, 0
          %s2199 = scvt.s32.f32 %s2198
          %s2200 = sadd.f32 %s2192, %s2199
          %v2201 = vstv %s2196
          %v2202 = vrcp.pop %v2201
          %v2203 = vmul.f32 %v2201, %v2202
          %v2204 = vsub.f32 1.0, %v2203
          %v2205 = vmul.f32 %v2202, %v2204
          %v2206 = vadd.f32 %v2202, %v2205
          %vm2207 = vweird.f32 %v2201
          %vm2208 = vweird.f32 %v2202
          %vm2209 = vmor %vm2207, %vm2208
          %v2210 = vsel %vm2209, %v2202, %v2206
          %v2211 = vand.u32 2147483647, %v2201
          %vm2212 = vcmp.eq.f32.partialorder %v2211, 8.507059e+37
          %v2213 = vand.u32 %v2201, 2147483648
          %v2214 = vor.u32 1.1754944e-38, %v2213
          %v2215 = vsel %vm2212, %v2214, %v2210
          %v2216 = vmul.f32 1.0, %v2215
          %v2217 = vadd.f32 %v2216, 0.0
          %s2218 = vtos %v2217
          %v2219 = vstv %s2200
          %v2220 = vrcp.pop %v2219
          %v2221 = vmul.f32 %v2219, %v2220
          %v2222 = vsub.f32 1.0, %v2221
          %v2223 = vmul.f32 %v2220, %v2222
          %v2224 = vadd.f32 %v2220, %v2223
          %vm2225 = vweird.f32 %v2219
          %vm2226 = vweird.f32 %v2220
          %vm2227 = vmor %vm2225, %vm2226
          %v2228 = vsel %vm2227, %v2220, %v2224
          %v2229 = vand.u32 2147483647, %v2219
          %vm2230 = vcmp.eq.f32.partialorder %v2229, 8.507059e+37
          %v2231 = vand.u32 %v2219, 2147483648
          %v2232 = vor.u32 1.1754944e-38, %v2231
          %v2233 = vsel %vm2230, %v2232, %v2228
          %v2234 = vmul.f32 1.0, %v2233
          %v2235 = vadd.f32 %v2234, 0.0
          %s2236 = vtos %v2235
          %s2237 = smul.f32 %s2190, %s2236
          %s2238 = sld [smem:[#allocation2 + $0xb]]
          %s2239 = smul.f32 %s2238, %s2218
          %s2240 = sld [smem:[#allocation2 + $0x8b]]
          %s2241 = smul.f32 %s2240, %s2218
          %s2242 = sld [smem:[#allocation2 + $0x10b]]
          %s2243 = smul.f32 %s2242, %s2218
          %s2244 = sld [smem:[#allocation2 + $0x18b]]
          %s2245 = smul.f32 %s2244, %s2218
          %s2246 = scalar_lea.smem [#allocation2], 11
          %2247 = sst [smem:[%s2246]] %s2239
          %s2248 = scalar_lea.smem [#allocation2], 139
          %2249 = sst [smem:[%s2248]] %s2241
          %s2250 = scalar_lea.smem [#allocation2], 267
          %2251 = sst [smem:[%s2250]] %s2243
          %s2252 = scalar_lea.smem [#allocation2], 395
          %2253 = sst [smem:[%s2252]] %s2245
          %s2254 = scalar_lea.smem [#allocation2], 779
          %2255 = sst [smem:[%s2254]] %s2237
          %s2256 = smul.f32 %s2239, %s2239
          %s2257 = smul.f32 %s2241, %s2241
          %s2258 = sadd.f32 %s2256, %s2257
          %s2259 = smul.f32 %s2243, %s2243
          %s2260 = sadd.f32 %s2258, %s2259
          %s2261 = smul.f32 %s2245, %s2245
          %s2262 = sadd.f32 %s2260, %s2261
          %v2263 = vstv %s2262
          %v2264 = vrsqrt.pop %v2263
          %v2265 = vmul.f32 %v2264, %v2263
          %v2266 = vmul.f32 %v2265, %v2264
          %v2267 = vmul.f32 0.5, %v2266
          %v2268 = vsub.f32 1.5, %v2267
          %v2269 = vmul.f32 %v2264, %v2268
          %v2270 = vmul.f32 %v2263, %v2269
          %vm2271 = vcmp.eq.f32.partialorder %v2263, inf
          %v2272 = vsel %vm2271, %v2263, %v2270
          %vm2273 = vcmp.eq.f32.partialorder %v2263, 0.0
          %v2274 = vand.u32 %v2263, 2147483648
          %v2275 = vsel %vm2273, %v2274, %v2272
          %s2276 = vtos %v2275
          %s2277 = ssub.f32 %s2276, 0.5
          %s2278 = smax.f32 %s2277, 0.0
          %s2279 = ssub.f32 256.0, %s2192
          %s2280 = smul.f32 %s2278, %s2278
          %v2281 = vstv %s2280
          %v2282 = vadd.f32 %v2281, 1.0
          %v2283 = vlog2.pop %v2282
          %v2284 = vmul.f32 %v2283, 0.6931472
          %v2285 = vadd.f32 %v2284, 0.0
          %s2286 = vtos %v2285
          %s2287 = smul.f32 %s2279, %s2286
          %s2288 = smul.f32 %s2287, %s2237
          %s2289 = sadd.f32 %s2178, %s2288
          %vm2290 = vcmp.eq.s32.totalorder %v958, 11
          %v2291 = vstv %s2239
          %v2292 = vsel %vm2290, %v2291, %v2181
          %v2293 = vstv %s2241
          %v2294 = vsel %vm2290, %v2293, %v2183
          %v2295 = vstv %s2243
          %v2296 = vsel %vm2290, %v2295, %v2185
          %v2297 = vstv %s2245
          %v2298 = vsel %vm2290, %v2297, %v2187
          %p2299 = scmp.le.f32.partialorder 13.0, %s956
          %s2300 = scalar_select %p2299, 1, 0
          %s2301 = scvt.s32.f32 %s2300
          %s2302 = sld [smem:[#allocation2 + $0x20c]]
          %s2303 = sld [smem:[#allocation2 + $0x28c]]
          %p2304 = scmp.lt.f32.partialorder %s2302, 0.5
          %s2305 = scalar_select %p2304, 1, 0
          %s2306 = scvt.s32.f32 %s2305
          %s2307 = sadd.f32 %s2302, %s2306
          %p2308 = scmp.lt.f32.partialorder %s2303, 0.5
          %s2309 = scalar_select %p2308, 1, 0
          %s2310 = scvt.s32.f32 %s2309
          %s2311 = sadd.f32 %s2303, %s2310
          %v2312 = vstv %s2307
          %v2313 = vrcp.pop %v2312
          %v2314 = vmul.f32 %v2312, %v2313
          %v2315 = vsub.f32 1.0, %v2314
          %v2316 = vmul.f32 %v2313, %v2315
          %v2317 = vadd.f32 %v2313, %v2316
          %vm2318 = vweird.f32 %v2312
          %vm2319 = vweird.f32 %v2313
          %vm2320 = vmor %vm2318, %vm2319
          %v2321 = vsel %vm2320, %v2313, %v2317
          %v2322 = vand.u32 2147483647, %v2312
          %vm2323 = vcmp.eq.f32.partialorder %v2322, 8.507059e+37
          %v2324 = vand.u32 %v2312, 2147483648
          %v2325 = vor.u32 1.1754944e-38, %v2324
          %v2326 = vsel %vm2323, %v2325, %v2321
          %v2327 = vmul.f32 1.0, %v2326
          %v2328 = vadd.f32 %v2327, 0.0
          %s2329 = vtos %v2328
          %v2330 = vstv %s2311
          %v2331 = vrcp.pop %v2330
          %v2332 = vmul.f32 %v2330, %v2331
          %v2333 = vsub.f32 1.0, %v2332
          %v2334 = vmul.f32 %v2331, %v2333
          %v2335 = vadd.f32 %v2331, %v2334
          %vm2336 = vweird.f32 %v2330
          %vm2337 = vweird.f32 %v2331
          %vm2338 = vmor %vm2336, %vm2337
          %v2339 = vsel %vm2338, %v2331, %v2335
          %v2340 = vand.u32 2147483647, %v2330
          %vm2341 = vcmp.eq.f32.partialorder %v2340, 8.507059e+37
          %v2342 = vand.u32 %v2330, 2147483648
          %v2343 = vor.u32 1.1754944e-38, %v2342
          %v2344 = vsel %vm2341, %v2343, %v2339
          %v2345 = vmul.f32 1.0, %v2344
          %v2346 = vadd.f32 %v2345, 0.0
          %s2347 = vtos %v2346
          %s2348 = smul.f32 %s2301, %s2347
          %s2349 = sld [smem:[#allocation2 + $0xc]]
          %s2350 = smul.f32 %s2349, %s2329
          %s2351 = sld [smem:[#allocation2 + $0x8c]]
          %s2352 = smul.f32 %s2351, %s2329
          %s2353 = sld [smem:[#allocation2 + $0x10c]]
          %s2354 = smul.f32 %s2353, %s2329
          %s2355 = sld [smem:[#allocation2 + $0x18c]]
          %s2356 = smul.f32 %s2355, %s2329
          %s2357 = scalar_lea.smem [#allocation2], 12
          %2358 = sst [smem:[%s2357]] %s2350
          %s2359 = scalar_lea.smem [#allocation2], 140
          %2360 = sst [smem:[%s2359]] %s2352
          %s2361 = scalar_lea.smem [#allocation2], 268
          %2362 = sst [smem:[%s2361]] %s2354
          %s2363 = scalar_lea.smem [#allocation2], 396
          %2364 = sst [smem:[%s2363]] %s2356
          %s2365 = scalar_lea.smem [#allocation2], 780
          %2366 = sst [smem:[%s2365]] %s2348
          %s2367 = smul.f32 %s2350, %s2350
          %s2368 = smul.f32 %s2352, %s2352
          %s2369 = sadd.f32 %s2367, %s2368
          %s2370 = smul.f32 %s2354, %s2354
          %s2371 = sadd.f32 %s2369, %s2370
          %s2372 = smul.f32 %s2356, %s2356
          %s2373 = sadd.f32 %s2371, %s2372
          %v2374 = vstv %s2373
          %v2375 = vrsqrt.pop %v2374
          %v2376 = vmul.f32 %v2375, %v2374
          %v2377 = vmul.f32 %v2376, %v2375
          %v2378 = vmul.f32 0.5, %v2377
          %v2379 = vsub.f32 1.5, %v2378
          %v2380 = vmul.f32 %v2375, %v2379
          %v2381 = vmul.f32 %v2374, %v2380
          %vm2382 = vcmp.eq.f32.partialorder %v2374, inf
          %v2383 = vsel %vm2382, %v2374, %v2381
          %vm2384 = vcmp.eq.f32.partialorder %v2374, 0.0
          %v2385 = vand.u32 %v2374, 2147483648
          %v2386 = vsel %vm2384, %v2385, %v2383
          %s2387 = vtos %v2386
          %s2388 = ssub.f32 %s2387, 0.5
          %s2389 = smax.f32 %s2388, 0.0
          %s2390 = ssub.f32 256.0, %s2303
          %s2391 = smul.f32 %s2389, %s2389
          %v2392 = vstv %s2391
          %v2393 = vadd.f32 %v2392, 1.0
          %v2394 = vlog2.pop %v2393
          %v2395 = vmul.f32 %v2394, 0.6931472
          %v2396 = vadd.f32 %v2395, 0.0
          %s2397 = vtos %v2396
          %s2398 = smul.f32 %s2390, %s2397
          %s2399 = smul.f32 %s2398, %s2348
          %s2400 = sadd.f32 %s2289, %s2399
          %vm2401 = vcmp.eq.s32.totalorder %v958, 12
          %v2402 = vstv %s2350
          %v2403 = vsel %vm2401, %v2402, %v2292
          %v2404 = vstv %s2352
          %v2405 = vsel %vm2401, %v2404, %v2294
          %v2406 = vstv %s2354
          %v2407 = vsel %vm2401, %v2406, %v2296
          %v2408 = vstv %s2356
          %v2409 = vsel %vm2401, %v2408, %v2298
          %p2410 = scmp.le.f32.partialorder 14.0, %s956
          %s2411 = scalar_select %p2410, 1, 0
          %s2412 = scvt.s32.f32 %s2411
          %s2413 = sld [smem:[#allocation2 + $0x20d]]
          %s2414 = sld [smem:[#allocation2 + $0x28d]]
          %p2415 = scmp.lt.f32.partialorder %s2413, 0.5
          %s2416 = scalar_select %p2415, 1, 0
          %s2417 = scvt.s32.f32 %s2416
          %s2418 = sadd.f32 %s2413, %s2417
          %p2419 = scmp.lt.f32.partialorder %s2414, 0.5
          %s2420 = scalar_select %p2419, 1, 0
          %s2421 = scvt.s32.f32 %s2420
          %s2422 = sadd.f32 %s2414, %s2421
          %v2423 = vstv %s2418
          %v2424 = vrcp.pop %v2423
          %v2425 = vmul.f32 %v2423, %v2424
          %v2426 = vsub.f32 1.0, %v2425
          %v2427 = vmul.f32 %v2424, %v2426
          %v2428 = vadd.f32 %v2424, %v2427
          %vm2429 = vweird.f32 %v2423
          %vm2430 = vweird.f32 %v2424
          %vm2431 = vmor %vm2429, %vm2430
          %v2432 = vsel %vm2431, %v2424, %v2428
          %v2433 = vand.u32 2147483647, %v2423
          %vm2434 = vcmp.eq.f32.partialorder %v2433, 8.507059e+37
          %v2435 = vand.u32 %v2423, 2147483648
          %v2436 = vor.u32 1.1754944e-38, %v2435
          %v2437 = vsel %vm2434, %v2436, %v2432
          %v2438 = vmul.f32 1.0, %v2437
          %v2439 = vadd.f32 %v2438, 0.0
          %s2440 = vtos %v2439
          %v2441 = vstv %s2422
          %v2442 = vrcp.pop %v2441
          %v2443 = vmul.f32 %v2441, %v2442
          %v2444 = vsub.f32 1.0, %v2443
          %v2445 = vmul.f32 %v2442, %v2444
          %v2446 = vadd.f32 %v2442, %v2445
          %vm2447 = vweird.f32 %v2441
          %vm2448 = vweird.f32 %v2442
          %vm2449 = vmor %vm2447, %vm2448
          %v2450 = vsel %vm2449, %v2442, %v2446
          %v2451 = vand.u32 2147483647, %v2441
          %vm2452 = vcmp.eq.f32.partialorder %v2451, 8.507059e+37
          %v2453 = vand.u32 %v2441, 2147483648
          %v2454 = vor.u32 1.1754944e-38, %v2453
          %v2455 = vsel %vm2452, %v2454, %v2450
          %v2456 = vmul.f32 1.0, %v2455
          %v2457 = vadd.f32 %v2456, 0.0
          %s2458 = vtos %v2457
          %s2459 = smul.f32 %s2412, %s2458
          %s2460 = sld [smem:[#allocation2 + $0xd]]
          %s2461 = smul.f32 %s2460, %s2440
          %s2462 = sld [smem:[#allocation2 + $0x8d]]
          %s2463 = smul.f32 %s2462, %s2440
          %s2464 = sld [smem:[#allocation2 + $0x10d]]
          %s2465 = smul.f32 %s2464, %s2440
          %s2466 = sld [smem:[#allocation2 + $0x18d]]
          %s2467 = smul.f32 %s2466, %s2440
          %s2468 = scalar_lea.smem [#allocation2], 13
          %2469 = sst [smem:[%s2468]] %s2461
          %s2470 = scalar_lea.smem [#allocation2], 141
          %2471 = sst [smem:[%s2470]] %s2463
          %s2472 = scalar_lea.smem [#allocation2], 269
          %2473 = sst [smem:[%s2472]] %s2465
          %s2474 = scalar_lea.smem [#allocation2], 397
          %2475 = sst [smem:[%s2474]] %s2467
          %s2476 = scalar_lea.smem [#allocation2], 781
          %2477 = sst [smem:[%s2476]] %s2459
          %s2478 = smul.f32 %s2461, %s2461
          %s2479 = smul.f32 %s2463, %s2463
          %s2480 = sadd.f32 %s2478, %s2479
          %s2481 = smul.f32 %s2465, %s2465
          %s2482 = sadd.f32 %s2480, %s2481
          %s2483 = smul.f32 %s2467, %s2467
          %s2484 = sadd.f32 %s2482, %s2483
          %v2485 = vstv %s2484
          %v2486 = vrsqrt.pop %v2485
          %v2487 = vmul.f32 %v2486, %v2485
          %v2488 = vmul.f32 %v2487, %v2486
          %v2489 = vmul.f32 0.5, %v2488
          %v2490 = vsub.f32 1.5, %v2489
          %v2491 = vmul.f32 %v2486, %v2490
          %v2492 = vmul.f32 %v2485, %v2491
          %vm2493 = vcmp.eq.f32.partialorder %v2485, inf
          %v2494 = vsel %vm2493, %v2485, %v2492
          %vm2495 = vcmp.eq.f32.partialorder %v2485, 0.0
          %v2496 = vand.u32 %v2485, 2147483648
          %v2497 = vsel %vm2495, %v2496, %v2494
          %s2498 = vtos %v2497
          %s2499 = ssub.f32 %s2498, 0.5
          %s2500 = smax.f32 %s2499, 0.0
          %s2501 = ssub.f32 256.0, %s2414
          %s2502 = smul.f32 %s2500, %s2500
          %v2503 = vstv %s2502
          %v2504 = vadd.f32 %v2503, 1.0
          %v2505 = vlog2.pop %v2504
          %v2506 = vmul.f32 %v2505, 0.6931472
          %v2507 = vadd.f32 %v2506, 0.0
          %s2508 = vtos %v2507
          %s2509 = smul.f32 %s2501, %s2508
          %s2510 = smul.f32 %s2509, %s2459
          %s2511 = sadd.f32 %s2400, %s2510
          %vm2512 = vcmp.eq.s32.totalorder %v958, 13
          %v2513 = vstv %s2461
          %v2514 = vsel %vm2512, %v2513, %v2403
          %v2515 = vstv %s2463
          %v2516 = vsel %vm2512, %v2515, %v2405
          %v2517 = vstv %s2465
          %v2518 = vsel %vm2512, %v2517, %v2407
          %v2519 = vstv %s2467
          %v2520 = vsel %vm2512, %v2519, %v2409
          %p2521 = scmp.le.f32.partialorder 15.0, %s956
          %s2522 = scalar_select %p2521, 1, 0
          %s2523 = scvt.s32.f32 %s2522
          %s2524 = sld [smem:[#allocation2 + $0x20e]]
          %s2525 = sld [smem:[#allocation2 + $0x28e]]
          %p2526 = scmp.lt.f32.partialorder %s2524, 0.5
          %s2527 = scalar_select %p2526, 1, 0
          %s2528 = scvt.s32.f32 %s2527
          %s2529 = sadd.f32 %s2524, %s2528
          %p2530 = scmp.lt.f32.partialorder %s2525, 0.5
          %s2531 = scalar_select %p2530, 1, 0
          %s2532 = scvt.s32.f32 %s2531
          %s2533 = sadd.f32 %s2525, %s2532
          %v2534 = vstv %s2529
          %v2535 = vrcp.pop %v2534
          %v2536 = vmul.f32 %v2534, %v2535
          %v2537 = vsub.f32 1.0, %v2536
          %v2538 = vmul.f32 %v2535, %v2537
          %v2539 = vadd.f32 %v2535, %v2538
          %vm2540 = vweird.f32 %v2534
          %vm2541 = vweird.f32 %v2535
          %vm2542 = vmor %vm2540, %vm2541
          %v2543 = vsel %vm2542, %v2535, %v2539
          %v2544 = vand.u32 2147483647, %v2534
          %vm2545 = vcmp.eq.f32.partialorder %v2544, 8.507059e+37
          %v2546 = vand.u32 %v2534, 2147483648
          %v2547 = vor.u32 1.1754944e-38, %v2546
          %v2548 = vsel %vm2545, %v2547, %v2543
          %v2549 = vmul.f32 1.0, %v2548
          %v2550 = vadd.f32 %v2549, 0.0
          %s2551 = vtos %v2550
          %v2552 = vstv %s2533
          %v2553 = vrcp.pop %v2552
          %v2554 = vmul.f32 %v2552, %v2553
          %v2555 = vsub.f32 1.0, %v2554
          %v2556 = vmul.f32 %v2553, %v2555
          %v2557 = vadd.f32 %v2553, %v2556
          %vm2558 = vweird.f32 %v2552
          %vm2559 = vweird.f32 %v2553
          %vm2560 = vmor %vm2558, %vm2559
          %v2561 = vsel %vm2560, %v2553, %v2557
          %v2562 = vand.u32 2147483647, %v2552
          %vm2563 = vcmp.eq.f32.partialorder %v2562, 8.507059e+37
          %v2564 = vand.u32 %v2552, 2147483648
          %v2565 = vor.u32 1.1754944e-38, %v2564
          %v2566 = vsel %vm2563, %v2565, %v2561
          %v2567 = vmul.f32 1.0, %v2566
          %v2568 = vadd.f32 %v2567, 0.0
          %s2569 = vtos %v2568
          %s2570 = smul.f32 %s2523, %s2569
          %s2571 = sld [smem:[#allocation2 + $0xe]]
          %s2572 = smul.f32 %s2571, %s2551
          %s2573 = sld [smem:[#allocation2 + $0x8e]]
          %s2574 = smul.f32 %s2573, %s2551
          %s2575 = sld [smem:[#allocation2 + $0x10e]]
          %s2576 = smul.f32 %s2575, %s2551
          %s2577 = sld [smem:[#allocation2 + $0x18e]]
          %s2578 = smul.f32 %s2577, %s2551
          %s2579 = scalar_lea.smem [#allocation2], 14
          %2580 = sst [smem:[%s2579]] %s2572
          %s2581 = scalar_lea.smem [#allocation2], 142
          %2582 = sst [smem:[%s2581]] %s2574
          %s2583 = scalar_lea.smem [#allocation2], 270
          %2584 = sst [smem:[%s2583]] %s2576
          %s2585 = scalar_lea.smem [#allocation2], 398
          %2586 = sst [smem:[%s2585]] %s2578
          %s2587 = scalar_lea.smem [#allocation2], 782
          %2588 = sst [smem:[%s2587]] %s2570
          %s2589 = smul.f32 %s2572, %s2572
          %s2590 = smul.f32 %s2574, %s2574
          %s2591 = sadd.f32 %s2589, %s2590
          %s2592 = smul.f32 %s2576, %s2576
          %s2593 = sadd.f32 %s2591, %s2592
          %s2594 = smul.f32 %s2578, %s2578
          %s2595 = sadd.f32 %s2593, %s2594
          %v2596 = vstv %s2595
          %v2597 = vrsqrt.pop %v2596
          %v2598 = vmul.f32 %v2597, %v2596
          %v2599 = vmul.f32 %v2598, %v2597
          %v2600 = vmul.f32 0.5, %v2599
          %v2601 = vsub.f32 1.5, %v2600
          %v2602 = vmul.f32 %v2597, %v2601
          %v2603 = vmul.f32 %v2596, %v2602
          %vm2604 = vcmp.eq.f32.partialorder %v2596, inf
          %v2605 = vsel %vm2604, %v2596, %v2603
          %vm2606 = vcmp.eq.f32.partialorder %v2596, 0.0
          %v2607 = vand.u32 %v2596, 2147483648
          %v2608 = vsel %vm2606, %v2607, %v2605
          %s2609 = vtos %v2608
          %s2610 = ssub.f32 %s2609, 0.5
          %s2611 = smax.f32 %s2610, 0.0
          %s2612 = ssub.f32 256.0, %s2525
          %s2613 = smul.f32 %s2611, %s2611
          %v2614 = vstv %s2613
          %v2615 = vadd.f32 %v2614, 1.0
          %v2616 = vlog2.pop %v2615
          %v2617 = vmul.f32 %v2616, 0.6931472
          %v2618 = vadd.f32 %v2617, 0.0
          %s2619 = vtos %v2618
          %s2620 = smul.f32 %s2612, %s2619
          %s2621 = smul.f32 %s2620, %s2570
          %s2622 = sadd.f32 %s2511, %s2621
          %vm2623 = vcmp.eq.s32.totalorder %v958, 14
          %v2624 = vstv %s2572
          %v2625 = vsel %vm2623, %v2624, %v2514
          %v2626 = vstv %s2574
          %v2627 = vsel %vm2623, %v2626, %v2516
          %v2628 = vstv %s2576
          %v2629 = vsel %vm2623, %v2628, %v2518
          %v2630 = vstv %s2578
          %v2631 = vsel %vm2623, %v2630, %v2520
          %p2632 = scmp.le.f32.partialorder 16.0, %s956
          %s2633 = scalar_select %p2632, 1, 0
          %s2634 = scvt.s32.f32 %s2633
          %s2635 = sld [smem:[#allocation2 + $0x20f]]
          %s2636 = sld [smem:[#allocation2 + $0x28f]]
          %p2637 = scmp.lt.f32.partialorder %s2635, 0.5
          %s2638 = scalar_select %p2637, 1, 0
          %s2639 = scvt.s32.f32 %s2638
          %s2640 = sadd.f32 %s2635, %s2639
          %p2641 = scmp.lt.f32.partialorder %s2636, 0.5
          %s2642 = scalar_select %p2641, 1, 0
          %s2643 = scvt.s32.f32 %s2642
          %s2644 = sadd.f32 %s2636, %s2643
          %v2645 = vstv %s2640
          %v2646 = vrcp.pop %v2645
          %v2647 = vmul.f32 %v2645, %v2646
          %v2648 = vsub.f32 1.0, %v2647
          %v2649 = vmul.f32 %v2646, %v2648
          %v2650 = vadd.f32 %v2646, %v2649
          %vm2651 = vweird.f32 %v2645
          %vm2652 = vweird.f32 %v2646
          %vm2653 = vmor %vm2651, %vm2652
          %v2654 = vsel %vm2653, %v2646, %v2650
          %v2655 = vand.u32 2147483647, %v2645
          %vm2656 = vcmp.eq.f32.partialorder %v2655, 8.507059e+37
          %v2657 = vand.u32 %v2645, 2147483648
          %v2658 = vor.u32 1.1754944e-38, %v2657
          %v2659 = vsel %vm2656, %v2658, %v2654
          %v2660 = vmul.f32 1.0, %v2659
          %v2661 = vadd.f32 %v2660, 0.0
          %s2662 = vtos %v2661
          %v2663 = vstv %s2644
          %v2664 = vrcp.pop %v2663
          %v2665 = vmul.f32 %v2663, %v2664
          %v2666 = vsub.f32 1.0, %v2665
          %v2667 = vmul.f32 %v2664, %v2666
          %v2668 = vadd.f32 %v2664, %v2667
          %vm2669 = vweird.f32 %v2663
          %vm2670 = vweird.f32 %v2664
          %vm2671 = vmor %vm2669, %vm2670
          %v2672 = vsel %vm2671, %v2664, %v2668
          %v2673 = vand.u32 2147483647, %v2663
          %vm2674 = vcmp.eq.f32.partialorder %v2673, 8.507059e+37
          %v2675 = vand.u32 %v2663, 2147483648
          %v2676 = vor.u32 1.1754944e-38, %v2675
          %v2677 = vsel %vm2674, %v2676, %v2672
          %v2678 = vmul.f32 1.0, %v2677
          %v2679 = vadd.f32 %v2678, 0.0
          %s2680 = vtos %v2679
          %s2681 = smul.f32 %s2634, %s2680
          %s2682 = sld [smem:[#allocation2 + $0xf]]
          %s2683 = smul.f32 %s2682, %s2662
          %s2684 = sld [smem:[#allocation2 + $0x8f]]
          %s2685 = smul.f32 %s2684, %s2662
          %s2686 = sld [smem:[#allocation2 + $0x10f]]
          %s2687 = smul.f32 %s2686, %s2662
          %s2688 = sld [smem:[#allocation2 + $0x18f]]
          %s2689 = smul.f32 %s2688, %s2662
          %s2690 = scalar_lea.smem [#allocation2], 15
          %2691 = sst [smem:[%s2690]] %s2683
          %s2692 = scalar_lea.smem [#allocation2], 143
          %2693 = sst [smem:[%s2692]] %s2685
          %s2694 = scalar_lea.smem [#allocation2], 271
          %2695 = sst [smem:[%s2694]] %s2687
          %s2696 = scalar_lea.smem [#allocation2], 399
          %2697 = sst [smem:[%s2696]] %s2689
          %s2698 = scalar_lea.smem [#allocation2], 783
          %2699 = sst [smem:[%s2698]] %s2681
          %s2700 = smul.f32 %s2683, %s2683
          %s2701 = smul.f32 %s2685, %s2685
          %s2702 = sadd.f32 %s2700, %s2701
          %s2703 = smul.f32 %s2687, %s2687
          %s2704 = sadd.f32 %s2702, %s2703
          %s2705 = smul.f32 %s2689, %s2689
          %s2706 = sadd.f32 %s2704, %s2705
          %v2707 = vstv %s2706
          %v2708 = vrsqrt.pop %v2707
          %v2709 = vmul.f32 %v2708, %v2707
          %v2710 = vmul.f32 %v2709, %v2708
          %v2711 = vmul.f32 0.5, %v2710
          %v2712 = vsub.f32 1.5, %v2711
          %v2713 = vmul.f32 %v2708, %v2712
          %v2714 = vmul.f32 %v2707, %v2713
          %vm2715 = vcmp.eq.f32.partialorder %v2707, inf
          %v2716 = vsel %vm2715, %v2707, %v2714
          %vm2717 = vcmp.eq.f32.partialorder %v2707, 0.0
          %v2718 = vand.u32 %v2707, 2147483648
          %v2719 = vsel %vm2717, %v2718, %v2716
          %s2720 = vtos %v2719
          %s2721 = ssub.f32 %s2720, 0.5
          %s2722 = smax.f32 %s2721, 0.0
          %s2723 = ssub.f32 256.0, %s2636
          %s2724 = smul.f32 %s2722, %s2722
          %v2725 = vstv %s2724
          %v2726 = vadd.f32 %v2725, 1.0
          %v2727 = vlog2.pop %v2726
          %v2728 = vmul.f32 %v2727, 0.6931472
          %v2729 = vadd.f32 %v2728, 0.0
          %s2730 = vtos %v2729
          %s2731 = smul.f32 %s2723, %s2730
          %s2732 = smul.f32 %s2731, %s2681
          %s2733 = sadd.f32 %s2622, %s2732
          %vm2734 = vcmp.eq.s32.totalorder %v958, 15
          %v2735 = vstv %s2683
          %v2736 = vsel %vm2734, %v2735, %v2625
          %v2737 = vstv %s2685
          %v2738 = vsel %vm2734, %v2737, %v2627
          %v2739 = vstv %s2687
          %v2740 = vsel %vm2734, %v2739, %v2629
          %v2741 = vstv %s2689
          %v2742 = vsel %vm2734, %v2741, %v2631
          %s2743 = scalar_lea.smem [#allocation3], 5
          %2744 = sst [smem:[%s2743]] %s2733
          %v2745 = vsub.f32 %v2736, %v1070
          %v2746 = vsub.f32 %v2738, %v1072
          %v2747 = vsub.f32 %v2740, %v1074
          %v2748 = vsub.f32 %v2742, %v1076
          %v2749 = vmul.f32 %v2745, %v2745
          %v2750 = vmul.f32 %v2746, %v2746
          %v2751 = vadd.f32 %v2749, %v2750
          %v2752 = vmul.f32 %v2747, %v2747
          %v2753 = vadd.f32 %v2751, %v2752
          %v2754 = vmul.f32 %v2748, %v2748
          %v2755 = vadd.f32 %v2753, %v2754
          %v2756 = vrsqrt.pop %v2755
          %v2757 = vmul.f32 %v2756, %v2755
          %v2758 = vmul.f32 %v2757, %v2756
          %v2759 = vmul.f32 0.5, %v2758
          %v2760 = vsub.f32 1.5, %v2759
          %v2761 = vmul.f32 %v2756, %v2760
          %v2762 = vmul.f32 %v2755, %v2761
          %vm2763 = vcmp.eq.f32.partialorder %v2755, inf
          %v2764 = vsel %vm2763, %v2755, %v2762
          %vm2765 = vcmp.eq.f32.partialorder %v2755, 0.0
          %v2766 = vand.u32 %v2755, 2147483648
          %v2767 = vsel %vm2765, %v2766, %v2764
          %v2768 = vsub.f32 3.0, %v2767
          %v2769 = vmax.f32 %v2768, 0.0
          %vm2770 = vcmp.gt.s32.totalorder %v958, 0
          %v2771 = vsel %vm2770, 1, 0
          %v2772 = vcvt.s32.f32 %v2771
          %v2773 = vmul.f32 %v2772, %v966
          %v2774 = vmul.f32 %v2773, %v2769
          %v2775 = vmul.f32 %v2774, %v2769
          %vm2776 = vcmask 1040384
          %v2777 = vsel %vm2776, %v2775, 0.0
          %2778 = vadd.xlane.f32.xlu0 %v2777
          %v2779 = vpop.xlane.xlu0 %2778
          %v2780 = vrot.slane %v2779, 4
          %v2781 = vadd.f32 %v2779, %v2780
          %v2782 = vrot.slane %v2781, 2
          %v2783 = vadd.f32 %v2781, %v2782
          %v2784 = vrot.slane %v2783, 1
          %v2785 = vadd.f32 %v2783, %v2784
          %s2786 = vtos %v2785
          %s2787 = smul.f32 %s969, %s2786
          %s2788 = sadd.f32 %s2787, 0.0
          %v2789 = vsub.f32 %v2736, %v1181
          %v2790 = vsub.f32 %v2738, %v1183
          %v2791 = vsub.f32 %v2740, %v1185
          %v2792 = vsub.f32 %v2742, %v1187
          %v2793 = vmul.f32 %v2789, %v2789
          %v2794 = vmul.f32 %v2790, %v2790
          %v2795 = vadd.f32 %v2793, %v2794
          %v2796 = vmul.f32 %v2791, %v2791
          %v2797 = vadd.f32 %v2795, %v2796
          %v2798 = vmul.f32 %v2792, %v2792
          %v2799 = vadd.f32 %v2797, %v2798
          %v2800 = vrsqrt.pop %v2799
          %v2801 = vmul.f32 %v2800, %v2799
          %v2802 = vmul.f32 %v2801, %v2800
          %v2803 = vmul.f32 0.5, %v2802
          %v2804 = vsub.f32 1.5, %v2803
          %v2805 = vmul.f32 %v2800, %v2804
          %v2806 = vmul.f32 %v2799, %v2805
          %vm2807 = vcmp.eq.f32.partialorder %v2799, inf
          %v2808 = vsel %vm2807, %v2799, %v2806
          %vm2809 = vcmp.eq.f32.partialorder %v2799, 0.0
          %v2810 = vand.u32 %v2799, 2147483648
          %v2811 = vsel %vm2809, %v2810, %v2808
          %v2812 = vsub.f32 3.0, %v2811
          %v2813 = vmax.f32 %v2812, 0.0
          %vm2814 = vcmp.gt.s32.totalorder %v958, 1
          %v2815 = vsel %vm2814, 1, 0
          %v2816 = vcvt.s32.f32 %v2815
          %v2817 = vmul.f32 %v2816, %v966
          %v2818 = vmul.f32 %v2817, %v2813
          %v2819 = vmul.f32 %v2818, %v2813
          %v2820 = vsel %vm2776, %v2819, 0.0
          %2821 = vadd.xlane.f32.xlu0 %v2820
          %v2822 = vpop.xlane.xlu0 %2821
          %v2823 = vrot.slane %v2822, 4
          %v2824 = vadd.f32 %v2822, %v2823
          %v2825 = vrot.slane %v2824, 2
          %v2826 = vadd.f32 %v2824, %v2825
          %v2827 = vrot.slane %v2826, 1
          %v2828 = vadd.f32 %v2826, %v2827
          %s2829 = vtos %v2828
          %s2830 = smul.f32 %s1080, %s2829
          %s2831 = sadd.f32 %s2788, %s2830
          %v2832 = vsub.f32 %v2736, %v1292
          %v2833 = vsub.f32 %v2738, %v1294
          %v2834 = vsub.f32 %v2740, %v1296
          %v2835 = vsub.f32 %v2742, %v1298
          %v2836 = vmul.f32 %v2832, %v2832
          %v2837 = vmul.f32 %v2833, %v2833
          %v2838 = vadd.f32 %v2836, %v2837
          %v2839 = vmul.f32 %v2834, %v2834
          %v2840 = vadd.f32 %v2838, %v2839
          %v2841 = vmul.f32 %v2835, %v2835
          %v2842 = vadd.f32 %v2840, %v2841
          %v2843 = vrsqrt.pop %v2842
          %v2844 = vmul.f32 %v2843, %v2842
          %v2845 = vmul.f32 %v2844, %v2843
          %v2846 = vmul.f32 0.5, %v2845
          %v2847 = vsub.f32 1.5, %v2846
          %v2848 = vmul.f32 %v2843, %v2847
          %v2849 = vmul.f32 %v2842, %v2848
          %vm2850 = vcmp.eq.f32.partialorder %v2842, inf
          %v2851 = vsel %vm2850, %v2842, %v2849
          %vm2852 = vcmp.eq.f32.partialorder %v2842, 0.0
          %v2853 = vand.u32 %v2842, 2147483648
          %v2854 = vsel %vm2852, %v2853, %v2851
          %v2855 = vsub.f32 3.0, %v2854
          %v2856 = vmax.f32 %v2855, 0.0
          %vm2857 = vcmp.gt.s32.totalorder %v958, 2
          %v2858 = vsel %vm2857, 1, 0
          %v2859 = vcvt.s32.f32 %v2858
          %v2860 = vmul.f32 %v2859, %v966
          %v2861 = vmul.f32 %v2860, %v2856
          %v2862 = vmul.f32 %v2861, %v2856
          %v2863 = vsel %vm2776, %v2862, 0.0
          %2864 = vadd.xlane.f32.xlu0 %v2863
          %v2865 = vpop.xlane.xlu0 %2864
          %v2866 = vrot.slane %v2865, 4
          %v2867 = vadd.f32 %v2865, %v2866
          %v2868 = vrot.slane %v2867, 2
          %v2869 = vadd.f32 %v2867, %v2868
          %v2870 = vrot.slane %v2869, 1
          %v2871 = vadd.f32 %v2869, %v2870
          %s2872 = vtos %v2871
          %s2873 = smul.f32 %s1191, %s2872
          %s2874 = sadd.f32 %s2831, %s2873
          %v2875 = vsub.f32 %v2736, %v1403
          %v2876 = vsub.f32 %v2738, %v1405
          %v2877 = vsub.f32 %v2740, %v1407
          %v2878 = vsub.f32 %v2742, %v1409
          %v2879 = vmul.f32 %v2875, %v2875
          %v2880 = vmul.f32 %v2876, %v2876
          %v2881 = vadd.f32 %v2879, %v2880
          %v2882 = vmul.f32 %v2877, %v2877
          %v2883 = vadd.f32 %v2881, %v2882
          %v2884 = vmul.f32 %v2878, %v2878
          %v2885 = vadd.f32 %v2883, %v2884
          %v2886 = vrsqrt.pop %v2885
          %v2887 = vmul.f32 %v2886, %v2885
          %v2888 = vmul.f32 %v2887, %v2886
          %v2889 = vmul.f32 0.5, %v2888
          %v2890 = vsub.f32 1.5, %v2889
          %v2891 = vmul.f32 %v2886, %v2890
          %v2892 = vmul.f32 %v2885, %v2891
          %vm2893 = vcmp.eq.f32.partialorder %v2885, inf
          %v2894 = vsel %vm2893, %v2885, %v2892
          %vm2895 = vcmp.eq.f32.partialorder %v2885, 0.0
          %v2896 = vand.u32 %v2885, 2147483648
          %v2897 = vsel %vm2895, %v2896, %v2894
          %v2898 = vsub.f32 3.0, %v2897
          %v2899 = vmax.f32 %v2898, 0.0
          %vm2900 = vcmp.gt.s32.totalorder %v958, 3
          %v2901 = vsel %vm2900, 1, 0
          %v2902 = vcvt.s32.f32 %v2901
          %v2903 = vmul.f32 %v2902, %v966
          %v2904 = vmul.f32 %v2903, %v2899
          %v2905 = vmul.f32 %v2904, %v2899
          %v2906 = vsel %vm2776, %v2905, 0.0
          %2907 = vadd.xlane.f32.xlu0 %v2906
          %v2908 = vpop.xlane.xlu0 %2907
          %v2909 = vrot.slane %v2908, 4
          %v2910 = vadd.f32 %v2908, %v2909
          %v2911 = vrot.slane %v2910, 2
          %v2912 = vadd.f32 %v2910, %v2911
          %v2913 = vrot.slane %v2912, 1
          %v2914 = vadd.f32 %v2912, %v2913
          %s2915 = vtos %v2914
          %s2916 = smul.f32 %s1302, %s2915
          %s2917 = sadd.f32 %s2874, %s2916
          %v2918 = vsub.f32 %v2736, %v1514
          %v2919 = vsub.f32 %v2738, %v1516
          %v2920 = vsub.f32 %v2740, %v1518
          %v2921 = vsub.f32 %v2742, %v1520
          %v2922 = vmul.f32 %v2918, %v2918
          %v2923 = vmul.f32 %v2919, %v2919
          %v2924 = vadd.f32 %v2922, %v2923
          %v2925 = vmul.f32 %v2920, %v2920
          %v2926 = vadd.f32 %v2924, %v2925
          %v2927 = vmul.f32 %v2921, %v2921
          %v2928 = vadd.f32 %v2926, %v2927
          %v2929 = vrsqrt.pop %v2928
          %v2930 = vmul.f32 %v2929, %v2928
          %v2931 = vmul.f32 %v2930, %v2929
          %v2932 = vmul.f32 0.5, %v2931
          %v2933 = vsub.f32 1.5, %v2932
          %v2934 = vmul.f32 %v2929, %v2933
          %v2935 = vmul.f32 %v2928, %v2934
          %vm2936 = vcmp.eq.f32.partialorder %v2928, inf
          %v2937 = vsel %vm2936, %v2928, %v2935
          %vm2938 = vcmp.eq.f32.partialorder %v2928, 0.0
          %v2939 = vand.u32 %v2928, 2147483648
          %v2940 = vsel %vm2938, %v2939, %v2937
          %v2941 = vsub.f32 3.0, %v2940
          %v2942 = vmax.f32 %v2941, 0.0
          %vm2943 = vcmp.gt.s32.totalorder %v958, 4
          %v2944 = vsel %vm2943, 1, 0
          %v2945 = vcvt.s32.f32 %v2944
          %v2946 = vmul.f32 %v2945, %v966
          %v2947 = vmul.f32 %v2946, %v2942
          %v2948 = vmul.f32 %v2947, %v2942
          %v2949 = vsel %vm2776, %v2948, 0.0
          %2950 = vadd.xlane.f32.xlu0 %v2949
          %v2951 = vpop.xlane.xlu0 %2950
          %v2952 = vrot.slane %v2951, 4
          %v2953 = vadd.f32 %v2951, %v2952
          %v2954 = vrot.slane %v2953, 2
          %v2955 = vadd.f32 %v2953, %v2954
          %v2956 = vrot.slane %v2955, 1
          %v2957 = vadd.f32 %v2955, %v2956
          %s2958 = vtos %v2957
          %s2959 = smul.f32 %s1413, %s2958
          %s2960 = sadd.f32 %s2917, %s2959
          %v2961 = vsub.f32 %v2736, %v1625
          %v2962 = vsub.f32 %v2738, %v1627
          %v2963 = vsub.f32 %v2740, %v1629
          %v2964 = vsub.f32 %v2742, %v1631
          %v2965 = vmul.f32 %v2961, %v2961
          %v2966 = vmul.f32 %v2962, %v2962
          %v2967 = vadd.f32 %v2965, %v2966
          %v2968 = vmul.f32 %v2963, %v2963
          %v2969 = vadd.f32 %v2967, %v2968
          %v2970 = vmul.f32 %v2964, %v2964
          %v2971 = vadd.f32 %v2969, %v2970
          %v2972 = vrsqrt.pop %v2971
          %v2973 = vmul.f32 %v2972, %v2971
          %v2974 = vmul.f32 %v2973, %v2972
          %v2975 = vmul.f32 0.5, %v2974
          %v2976 = vsub.f32 1.5, %v2975
          %v2977 = vmul.f32 %v2972, %v2976
          %v2978 = vmul.f32 %v2971, %v2977
          %vm2979 = vcmp.eq.f32.partialorder %v2971, inf
          %v2980 = vsel %vm2979, %v2971, %v2978
          %vm2981 = vcmp.eq.f32.partialorder %v2971, 0.0
          %v2982 = vand.u32 %v2971, 2147483648
          %v2983 = vsel %vm2981, %v2982, %v2980
          %v2984 = vsub.f32 3.0, %v2983
          %v2985 = vmax.f32 %v2984, 0.0
          %vm2986 = vcmp.gt.s32.totalorder %v958, 5
          %v2987 = vsel %vm2986, 1, 0
          %v2988 = vcvt.s32.f32 %v2987
          %v2989 = vmul.f32 %v2988, %v966
          %v2990 = vmul.f32 %v2989, %v2985
          %v2991 = vmul.f32 %v2990, %v2985
          %v2992 = vsel %vm2776, %v2991, 0.0
          %2993 = vadd.xlane.f32.xlu0 %v2992
          %v2994 = vpop.xlane.xlu0 %2993
          %v2995 = vrot.slane %v2994, 4
          %v2996 = vadd.f32 %v2994, %v2995
          %v2997 = vrot.slane %v2996, 2
          %v2998 = vadd.f32 %v2996, %v2997
          %v2999 = vrot.slane %v2998, 1
          %v3000 = vadd.f32 %v2998, %v2999
          %s3001 = vtos %v3000
          %s3002 = smul.f32 %s1524, %s3001
          %s3003 = sadd.f32 %s2960, %s3002
          %v3004 = vsub.f32 %v2736, %v1736
          %v3005 = vsub.f32 %v2738, %v1738
          %v3006 = vsub.f32 %v2740, %v1740
          %v3007 = vsub.f32 %v2742, %v1742
          %v3008 = vmul.f32 %v3004, %v3004
          %v3009 = vmul.f32 %v3005, %v3005
          %v3010 = vadd.f32 %v3008, %v3009
          %v3011 = vmul.f32 %v3006, %v3006
          %v3012 = vadd.f32 %v3010, %v3011
          %v3013 = vmul.f32 %v3007, %v3007
          %v3014 = vadd.f32 %v3012, %v3013
          %v3015 = vrsqrt.pop %v3014
          %v3016 = vmul.f32 %v3015, %v3014
          %v3017 = vmul.f32 %v3016, %v3015
          %v3018 = vmul.f32 0.5, %v3017
          %v3019 = vsub.f32 1.5, %v3018
          %v3020 = vmul.f32 %v3015, %v3019
          %v3021 = vmul.f32 %v3014, %v3020
          %vm3022 = vcmp.eq.f32.partialorder %v3014, inf
          %v3023 = vsel %vm3022, %v3014, %v3021
          %vm3024 = vcmp.eq.f32.partialorder %v3014, 0.0
          %v3025 = vand.u32 %v3014, 2147483648
          %v3026 = vsel %vm3024, %v3025, %v3023
          %v3027 = vsub.f32 3.0, %v3026
          %v3028 = vmax.f32 %v3027, 0.0
          %vm3029 = vcmp.gt.s32.totalorder %v958, 6
          %v3030 = vsel %vm3029, 1, 0
          %v3031 = vcvt.s32.f32 %v3030
          %v3032 = vmul.f32 %v3031, %v966
          %v3033 = vmul.f32 %v3032, %v3028
          %v3034 = vmul.f32 %v3033, %v3028
          %v3035 = vsel %vm2776, %v3034, 0.0
          %3036 = vadd.xlane.f32.xlu0 %v3035
          %v3037 = vpop.xlane.xlu0 %3036
          %v3038 = vrot.slane %v3037, 4
          %v3039 = vadd.f32 %v3037, %v3038
          %v3040 = vrot.slane %v3039, 2
          %v3041 = vadd.f32 %v3039, %v3040
          %v3042 = vrot.slane %v3041, 1
          %v3043 = vadd.f32 %v3041, %v3042
          %s3044 = vtos %v3043
          %s3045 = smul.f32 %s1635, %s3044
          %s3046 = sadd.f32 %s3003, %s3045
          %v3047 = vsub.f32 %v2736, %v1847
          %v3048 = vsub.f32 %v2738, %v1849
          %v3049 = vsub.f32 %v2740, %v1851
          %v3050 = vsub.f32 %v2742, %v1853
          %v3051 = vmul.f32 %v3047, %v3047
          %v3052 = vmul.f32 %v3048, %v3048
          %v3053 = vadd.f32 %v3051, %v3052
          %v3054 = vmul.f32 %v3049, %v3049
          %v3055 = vadd.f32 %v3053, %v3054
          %v3056 = vmul.f32 %v3050, %v3050
          %v3057 = vadd.f32 %v3055, %v3056
          %v3058 = vrsqrt.pop %v3057
          %v3059 = vmul.f32 %v3058, %v3057
          %v3060 = vmul.f32 %v3059, %v3058
          %v3061 = vmul.f32 0.5, %v3060
          %v3062 = vsub.f32 1.5, %v3061
          %v3063 = vmul.f32 %v3058, %v3062
          %v3064 = vmul.f32 %v3057, %v3063
          %vm3065 = vcmp.eq.f32.partialorder %v3057, inf
          %v3066 = vsel %vm3065, %v3057, %v3064
          %vm3067 = vcmp.eq.f32.partialorder %v3057, 0.0
          %v3068 = vand.u32 %v3057, 2147483648
          %v3069 = vsel %vm3067, %v3068, %v3066
          %v3070 = vsub.f32 3.0, %v3069
          %v3071 = vmax.f32 %v3070, 0.0
          %vm3072 = vcmp.gt.s32.totalorder %v958, 7
          %v3073 = vsel %vm3072, 1, 0
          %v3074 = vcvt.s32.f32 %v3073
          %v3075 = vmul.f32 %v3074, %v966
          %v3076 = vmul.f32 %v3075, %v3071
          %v3077 = vmul.f32 %v3076, %v3071
          %v3078 = vsel %vm2776, %v3077, 0.0
          %3079 = vadd.xlane.f32.xlu0 %v3078
          %v3080 = vpop.xlane.xlu0 %3079
          %v3081 = vrot.slane %v3080, 4
          %v3082 = vadd.f32 %v3080, %v3081
          %v3083 = vrot.slane %v3082, 2
          %v3084 = vadd.f32 %v3082, %v3083
          %v3085 = vrot.slane %v3084, 1
          %v3086 = vadd.f32 %v3084, %v3085
          %s3087 = vtos %v3086
          %s3088 = smul.f32 %s1746, %s3087
          %s3089 = sadd.f32 %s3046, %s3088
          %v3090 = vsub.f32 %v2736, %v1958
          %v3091 = vsub.f32 %v2738, %v1960
          %v3092 = vsub.f32 %v2740, %v1962
          %v3093 = vsub.f32 %v2742, %v1964
          %v3094 = vmul.f32 %v3090, %v3090
          %v3095 = vmul.f32 %v3091, %v3091
          %v3096 = vadd.f32 %v3094, %v3095
          %v3097 = vmul.f32 %v3092, %v3092
          %v3098 = vadd.f32 %v3096, %v3097
          %v3099 = vmul.f32 %v3093, %v3093
          %v3100 = vadd.f32 %v3098, %v3099
          %v3101 = vrsqrt.pop %v3100
          %v3102 = vmul.f32 %v3101, %v3100
          %v3103 = vmul.f32 %v3102, %v3101
          %v3104 = vmul.f32 0.5, %v3103
          %v3105 = vsub.f32 1.5, %v3104
          %v3106 = vmul.f32 %v3101, %v3105
          %v3107 = vmul.f32 %v3100, %v3106
          %vm3108 = vcmp.eq.f32.partialorder %v3100, inf
          %v3109 = vsel %vm3108, %v3100, %v3107
          %vm3110 = vcmp.eq.f32.partialorder %v3100, 0.0
          %v3111 = vand.u32 %v3100, 2147483648
          %v3112 = vsel %vm3110, %v3111, %v3109
          %v3113 = vsub.f32 3.0, %v3112
          %v3114 = vmax.f32 %v3113, 0.0
          %vm3115 = vcmp.gt.s32.totalorder %v958, 8
          %v3116 = vsel %vm3115, 1, 0
          %v3117 = vcvt.s32.f32 %v3116
          %v3118 = vmul.f32 %v3117, %v966
          %v3119 = vmul.f32 %v3118, %v3114
          %v3120 = vmul.f32 %v3119, %v3114
          %v3121 = vsel %vm2776, %v3120, 0.0
          %3122 = vadd.xlane.f32.xlu0 %v3121
          %v3123 = vpop.xlane.xlu0 %3122
          %v3124 = vrot.slane %v3123, 4
          %v3125 = vadd.f32 %v3123, %v3124
          %v3126 = vrot.slane %v3125, 2
          %v3127 = vadd.f32 %v3125, %v3126
          %v3128 = vrot.slane %v3127, 1
          %v3129 = vadd.f32 %v3127, %v3128
          %s3130 = vtos %v3129
          %s3131 = smul.f32 %s1857, %s3130
          %s3132 = sadd.f32 %s3089, %s3131
          %v3133 = vsub.f32 %v2736, %v2069
          %v3134 = vsub.f32 %v2738, %v2071
          %v3135 = vsub.f32 %v2740, %v2073
          %v3136 = vsub.f32 %v2742, %v2075
          %v3137 = vmul.f32 %v3133, %v3133
          %v3138 = vmul.f32 %v3134, %v3134
          %v3139 = vadd.f32 %v3137, %v3138
          %v3140 = vmul.f32 %v3135, %v3135
          %v3141 = vadd.f32 %v3139, %v3140
          %v3142 = vmul.f32 %v3136, %v3136
          %v3143 = vadd.f32 %v3141, %v3142
          %v3144 = vrsqrt.pop %v3143
          %v3145 = vmul.f32 %v3144, %v3143
          %v3146 = vmul.f32 %v3145, %v3144
          %v3147 = vmul.f32 0.5, %v3146
          %v3148 = vsub.f32 1.5, %v3147
          %v3149 = vmul.f32 %v3144, %v3148
          %v3150 = vmul.f32 %v3143, %v3149
          %vm3151 = vcmp.eq.f32.partialorder %v3143, inf
          %v3152 = vsel %vm3151, %v3143, %v3150
          %vm3153 = vcmp.eq.f32.partialorder %v3143, 0.0
          %v3154 = vand.u32 %v3143, 2147483648
          %v3155 = vsel %vm3153, %v3154, %v3152
          %v3156 = vsub.f32 3.0, %v3155
          %v3157 = vmax.f32 %v3156, 0.0
          %vm3158 = vcmp.gt.s32.totalorder %v958, 9
          %v3159 = vsel %vm3158, 1, 0
          %v3160 = vcvt.s32.f32 %v3159
          %v3161 = vmul.f32 %v3160, %v966
          %v3162 = vmul.f32 %v3161, %v3157
          %v3163 = vmul.f32 %v3162, %v3157
          %v3164 = vsel %vm2776, %v3163, 0.0
          %3165 = vadd.xlane.f32.xlu0 %v3164
          %v3166 = vpop.xlane.xlu0 %3165
          %v3167 = vrot.slane %v3166, 4
          %v3168 = vadd.f32 %v3166, %v3167
          %v3169 = vrot.slane %v3168, 2
          %v3170 = vadd.f32 %v3168, %v3169
          %v3171 = vrot.slane %v3170, 1
          %v3172 = vadd.f32 %v3170, %v3171
          %s3173 = vtos %v3172
          %s3174 = smul.f32 %s1968, %s3173
          %s3175 = sadd.f32 %s3132, %s3174
          %v3176 = vsub.f32 %v2736, %v2180
          %v3177 = vsub.f32 %v2738, %v2182
          %v3178 = vsub.f32 %v2740, %v2184
          %v3179 = vsub.f32 %v2742, %v2186
          %v3180 = vmul.f32 %v3176, %v3176
          %v3181 = vmul.f32 %v3177, %v3177
          %v3182 = vadd.f32 %v3180, %v3181
          %v3183 = vmul.f32 %v3178, %v3178
          %v3184 = vadd.f32 %v3182, %v3183
          %v3185 = vmul.f32 %v3179, %v3179
          %v3186 = vadd.f32 %v3184, %v3185
          %v3187 = vrsqrt.pop %v3186
          %v3188 = vmul.f32 %v3187, %v3186
          %v3189 = vmul.f32 %v3188, %v3187
          %v3190 = vmul.f32 0.5, %v3189
          %v3191 = vsub.f32 1.5, %v3190
          %v3192 = vmul.f32 %v3187, %v3191
          %v3193 = vmul.f32 %v3186, %v3192
          %vm3194 = vcmp.eq.f32.partialorder %v3186, inf
          %v3195 = vsel %vm3194, %v3186, %v3193
          %vm3196 = vcmp.eq.f32.partialorder %v3186, 0.0
          %v3197 = vand.u32 %v3186, 2147483648
          %v3198 = vsel %vm3196, %v3197, %v3195
          %v3199 = vsub.f32 3.0, %v3198
          %v3200 = vmax.f32 %v3199, 0.0
          %vm3201 = vcmp.gt.s32.totalorder %v958, 10
          %v3202 = vsel %vm3201, 1, 0
          %v3203 = vcvt.s32.f32 %v3202
          %v3204 = vmul.f32 %v3203, %v966
          %v3205 = vmul.f32 %v3204, %v3200
          %v3206 = vmul.f32 %v3205, %v3200
          %v3207 = vsel %vm2776, %v3206, 0.0
          %3208 = vadd.xlane.f32.xlu0 %v3207
          %v3209 = vpop.xlane.xlu0 %3208
          %v3210 = vrot.slane %v3209, 4
          %v3211 = vadd.f32 %v3209, %v3210
          %v3212 = vrot.slane %v3211, 2
          %v3213 = vadd.f32 %v3211, %v3212
          %v3214 = vrot.slane %v3213, 1
          %v3215 = vadd.f32 %v3213, %v3214
          %s3216 = vtos %v3215
          %s3217 = smul.f32 %s2079, %s3216
          %s3218 = sadd.f32 %s3175, %s3217
          %v3219 = vsub.f32 %v2736, %v2291
          %v3220 = vsub.f32 %v2738, %v2293
          %v3221 = vsub.f32 %v2740, %v2295
          %v3222 = vsub.f32 %v2742, %v2297
          %v3223 = vmul.f32 %v3219, %v3219
          %v3224 = vmul.f32 %v3220, %v3220
          %v3225 = vadd.f32 %v3223, %v3224
          %v3226 = vmul.f32 %v3221, %v3221
          %v3227 = vadd.f32 %v3225, %v3226
          %v3228 = vmul.f32 %v3222, %v3222
          %v3229 = vadd.f32 %v3227, %v3228
          %v3230 = vrsqrt.pop %v3229
          %v3231 = vmul.f32 %v3230, %v3229
          %v3232 = vmul.f32 %v3231, %v3230
          %v3233 = vmul.f32 0.5, %v3232
          %v3234 = vsub.f32 1.5, %v3233
          %v3235 = vmul.f32 %v3230, %v3234
          %v3236 = vmul.f32 %v3229, %v3235
          %vm3237 = vcmp.eq.f32.partialorder %v3229, inf
          %v3238 = vsel %vm3237, %v3229, %v3236
          %vm3239 = vcmp.eq.f32.partialorder %v3229, 0.0
          %v3240 = vand.u32 %v3229, 2147483648
          %v3241 = vsel %vm3239, %v3240, %v3238
          %v3242 = vsub.f32 3.0, %v3241
          %v3243 = vmax.f32 %v3242, 0.0
          %vm3244 = vcmp.gt.s32.totalorder %v958, 11
          %v3245 = vsel %vm3244, 1, 0
          %v3246 = vcvt.s32.f32 %v3245
          %v3247 = vmul.f32 %v3246, %v966
          %v3248 = vmul.f32 %v3247, %v3243
          %v3249 = vmul.f32 %v3248, %v3243
          %v3250 = vsel %vm2776, %v3249, 0.0
          %3251 = vadd.xlane.f32.xlu0 %v3250
          %v3252 = vpop.xlane.xlu0 %3251
          %v3253 = vrot.slane %v3252, 4
          %v3254 = vadd.f32 %v3252, %v3253
          %v3255 = vrot.slane %v3254, 2
          %v3256 = vadd.f32 %v3254, %v3255
          %v3257 = vrot.slane %v3256, 1
          %v3258 = vadd.f32 %v3256, %v3257
          %s3259 = vtos %v3258
          %s3260 = smul.f32 %s2190, %s3259
          %s3261 = sadd.f32 %s3218, %s3260
          %v3262 = vsub.f32 %v2736, %v2402
          %v3263 = vsub.f32 %v2738, %v2404
          %v3264 = vsub.f32 %v2740, %v2406
          %v3265 = vsub.f32 %v2742, %v2408
          %v3266 = vmul.f32 %v3262, %v3262
          %v3267 = vmul.f32 %v3263, %v3263
          %v3268 = vadd.f32 %v3266, %v3267
          %v3269 = vmul.f32 %v3264, %v3264
          %v3270 = vadd.f32 %v3268, %v3269
          %v3271 = vmul.f32 %v3265, %v3265
          %v3272 = vadd.f32 %v3270, %v3271
          %v3273 = vrsqrt.pop %v3272
          %v3274 = vmul.f32 %v3273, %v3272
          %v3275 = vmul.f32 %v3274, %v3273
          %v3276 = vmul.f32 0.5, %v3275
          %v3277 = vsub.f32 1.5, %v3276
          %v3278 = vmul.f32 %v3273, %v3277
          %v3279 = vmul.f32 %v3272, %v3278
          %vm3280 = vcmp.eq.f32.partialorder %v3272, inf
          %v3281 = vsel %vm3280, %v3272, %v3279
          %vm3282 = vcmp.eq.f32.partialorder %v3272, 0.0
          %v3283 = vand.u32 %v3272, 2147483648
          %v3284 = vsel %vm3282, %v3283, %v3281
          %v3285 = vsub.f32 3.0, %v3284
          %v3286 = vmax.f32 %v3285, 0.0
          %vm3287 = vcmp.gt.s32.totalorder %v958, 12
          %v3288 = vsel %vm3287, 1, 0
          %v3289 = vcvt.s32.f32 %v3288
          %v3290 = vmul.f32 %v3289, %v966
          %v3291 = vmul.f32 %v3290, %v3286
          %v3292 = vmul.f32 %v3291, %v3286
          %v3293 = vsel %vm2776, %v3292, 0.0
          %3294 = vadd.xlane.f32.xlu0 %v3293
          %v3295 = vpop.xlane.xlu0 %3294
          %v3296 = vrot.slane %v3295, 4
          %v3297 = vadd.f32 %v3295, %v3296
          %v3298 = vrot.slane %v3297, 2
          %v3299 = vadd.f32 %v3297, %v3298
          %v3300 = vrot.slane %v3299, 1
          %v3301 = vadd.f32 %v3299, %v3300
          %s3302 = vtos %v3301
          %s3303 = smul.f32 %s2301, %s3302
          %s3304 = sadd.f32 %s3261, %s3303
          %v3305 = vsub.f32 %v2736, %v2513
          %v3306 = vsub.f32 %v2738, %v2515
          %v3307 = vsub.f32 %v2740, %v2517
          %v3308 = vsub.f32 %v2742, %v2519
          %v3309 = vmul.f32 %v3305, %v3305
          %v3310 = vmul.f32 %v3306, %v3306
          %v3311 = vadd.f32 %v3309, %v3310
          %v3312 = vmul.f32 %v3307, %v3307
          %v3313 = vadd.f32 %v3311, %v3312
          %v3314 = vmul.f32 %v3308, %v3308
          %v3315 = vadd.f32 %v3313, %v3314
          %v3316 = vrsqrt.pop %v3315
          %v3317 = vmul.f32 %v3316, %v3315
          %v3318 = vmul.f32 %v3317, %v3316
          %v3319 = vmul.f32 0.5, %v3318
          %v3320 = vsub.f32 1.5, %v3319
          %v3321 = vmul.f32 %v3316, %v3320
          %v3322 = vmul.f32 %v3315, %v3321
          %vm3323 = vcmp.eq.f32.partialorder %v3315, inf
          %v3324 = vsel %vm3323, %v3315, %v3322
          %vm3325 = vcmp.eq.f32.partialorder %v3315, 0.0
          %v3326 = vand.u32 %v3315, 2147483648
          %v3327 = vsel %vm3325, %v3326, %v3324
          %v3328 = vsub.f32 3.0, %v3327
          %v3329 = vmax.f32 %v3328, 0.0
          %vm3330 = vcmp.gt.s32.totalorder %v958, 13
          %v3331 = vsel %vm3330, 1, 0
          %v3332 = vcvt.s32.f32 %v3331
          %v3333 = vmul.f32 %v3332, %v966
          %v3334 = vmul.f32 %v3333, %v3329
          %v3335 = vmul.f32 %v3334, %v3329
          %v3336 = vsel %vm2776, %v3335, 0.0
          %3337 = vadd.xlane.f32.xlu0 %v3336
          %v3338 = vpop.xlane.xlu0 %3337
          %v3339 = vrot.slane %v3338, 4
          %v3340 = vadd.f32 %v3338, %v3339
          %v3341 = vrot.slane %v3340, 2
          %v3342 = vadd.f32 %v3340, %v3341
          %v3343 = vrot.slane %v3342, 1
          %v3344 = vadd.f32 %v3342, %v3343
          %s3345 = vtos %v3344
          %s3346 = smul.f32 %s2412, %s3345
          %s3347 = sadd.f32 %s3304, %s3346
          %v3348 = vsub.f32 %v2736, %v2624
          %v3349 = vsub.f32 %v2738, %v2626
          %v3350 = vsub.f32 %v2740, %v2628
          %v3351 = vsub.f32 %v2742, %v2630
          %v3352 = vmul.f32 %v3348, %v3348
          %v3353 = vmul.f32 %v3349, %v3349
          %v3354 = vadd.f32 %v3352, %v3353
          %v3355 = vmul.f32 %v3350, %v3350
          %v3356 = vadd.f32 %v3354, %v3355
          %v3357 = vmul.f32 %v3351, %v3351
          %v3358 = vadd.f32 %v3356, %v3357
          %v3359 = vrsqrt.pop %v3358
          %v3360 = vmul.f32 %v3359, %v3358
          %v3361 = vmul.f32 %v3360, %v3359
          %v3362 = vmul.f32 0.5, %v3361
          %v3363 = vsub.f32 1.5, %v3362
          %v3364 = vmul.f32 %v3359, %v3363
          %v3365 = vmul.f32 %v3358, %v3364
          %vm3366 = vcmp.eq.f32.partialorder %v3358, inf
          %v3367 = vsel %vm3366, %v3358, %v3365
          %vm3368 = vcmp.eq.f32.partialorder %v3358, 0.0
          %v3369 = vand.u32 %v3358, 2147483648
          %v3370 = vsel %vm3368, %v3369, %v3367
          %v3371 = vsub.f32 3.0, %v3370
          %v3372 = vmax.f32 %v3371, 0.0
          %vm3373 = vcmp.gt.s32.totalorder %v958, 14
          %v3374 = vsel %vm3373, 1, 0
          %v3375 = vcvt.s32.f32 %v3374
          %v3376 = vmul.f32 %v3375, %v966
          %v3377 = vmul.f32 %v3376, %v3372
          %v3378 = vmul.f32 %v3377, %v3372
          %v3379 = vsel %vm2776, %v3378, 0.0
          %3380 = vadd.xlane.f32.xlu0 %v3379
          %v3381 = vpop.xlane.xlu0 %3380
          %v3382 = vrot.slane %v3381, 4
          %v3383 = vadd.f32 %v3381, %v3382
          %v3384 = vrot.slane %v3383, 2
          %v3385 = vadd.f32 %v3383, %v3384
          %v3386 = vrot.slane %v3385, 1
          %v3387 = vadd.f32 %v3385, %v3386
          %s3388 = vtos %v3387
          %s3389 = smul.f32 %s2523, %s3388
          %s3390 = sadd.f32 %s3347, %s3389
          %v3391 = vsub.f32 %v2736, %v2735
          %v3392 = vsub.f32 %v2738, %v2737
          %v3393 = vsub.f32 %v2740, %v2739
          %v3394 = vsub.f32 %v2742, %v2741
          %v3395 = vmul.f32 %v3391, %v3391
          %v3396 = vmul.f32 %v3392, %v3392
          %v3397 = vadd.f32 %v3395, %v3396
          %v3398 = vmul.f32 %v3393, %v3393
          %v3399 = vadd.f32 %v3397, %v3398
          %v3400 = vmul.f32 %v3394, %v3394
          %v3401 = vadd.f32 %v3399, %v3400
          %v3402 = vrsqrt.pop %v3401
          %v3403 = vmul.f32 %v3402, %v3401
          %v3404 = vmul.f32 %v3403, %v3402
          %v3405 = vmul.f32 0.5, %v3404
          %v3406 = vsub.f32 1.5, %v3405
          %v3407 = vmul.f32 %v3402, %v3406
          %v3408 = vmul.f32 %v3401, %v3407
          %vm3409 = vcmp.eq.f32.partialorder %v3401, inf
          %v3410 = vsel %vm3409, %v3401, %v3408
          %vm3411 = vcmp.eq.f32.partialorder %v3401, 0.0
          %v3412 = vand.u32 %v3401, 2147483648
          %v3413 = vsel %vm3411, %v3412, %v3410
          %v3414 = vsub.f32 3.0, %v3413
          %v3415 = vmax.f32 %v3414, 0.0
          %vm3416 = vcmp.gt.s32.totalorder %v958, 15
          %v3417 = vsel %vm3416, 1, 0
          %v3418 = vcvt.s32.f32 %v3417
          %v3419 = vmul.f32 %v3418, %v966
          %v3420 = vmul.f32 %v3419, %v3415
          %v3421 = vmul.f32 %v3420, %v3415
          %v3422 = vsel %vm2776, %v3421, 0.0
          %3423 = vadd.xlane.f32.xlu0 %v3422
          %v3424 = vpop.xlane.xlu0 %3423
          %v3425 = vrot.slane %v3424, 4
          %v3426 = vadd.f32 %v3424, %v3425
          %v3427 = vrot.slane %v3426, 2
          %v3428 = vadd.f32 %v3426, %v3427
          %v3429 = vrot.slane %v3428, 1
          %v3430 = vadd.f32 %v3428, %v3429
          %s3431 = vtos %v3430
          %s3432 = smul.f32 %s2634, %s3431
          %s3433 = sadd.f32 %s3390, %s3432
          %s3434 = scalar_lea.smem [#allocation3], 6
          %3435 = sst [smem:[%s3434]] %s3433
        $region67: #{pan_loss.1} parent=47 // pred_fallthru
          _
        // Predicated region
        $region68: #{pan_loss.1} parent=47 // pred_check
          %p3436 = pneg %p951
        $region69: #{pan_loss.1} parent=47 // pred_check_branch
          %3438 = sbr.rel (%p3436) target = $region71
        $region70: #{pan_loss.1} parent=47 // pred_region
          %v3439 = vld [vmem:[%s433] sm:$0xff]
          %v3440 = vld [vmem:[%s445] sm:$0xff]
          %v3441 = vmul.f32 %v3440, %v3439
          %s3442 = scalar_lea.vmem %s445, 8
          %v3443 = vld [vmem:[%s3442] sm:$0xff]
          %v3444 = vmul.f32 %v3443, %v3439
          %s3445 = scalar_lea.vmem %s445, 16
          %v3446 = vld [vmem:[%s3445] sm:$0xff]
          %v3447 = vmul.f32 %v3446, %v3439
          %s3448 = scalar_lea.vmem %s445, 24
          %v3449 = vld [vmem:[%s3448] sm:$0xff]
          %v3450 = vmul.f32 %v3449, %v3439
          %vm3451 = vcmp.eq.f32.partialorder %v3439, 1.0
          %s3452 = sld [smem:[#allocation2]]
          %v3453 = vstv %s3452
          %v3454 = vsel %vm3451, %v3453, 0.0
          %s3455 = sld [smem:[#allocation2 + $0x80]]
          %v3456 = vstv %s3455
          %v3457 = vsel %vm3451, %v3456, 0.0
          %s3458 = sld [smem:[#allocation2 + $0x100]]
          %v3459 = vstv %s3458
          %v3460 = vsel %vm3451, %v3459, 0.0
          %s3461 = sld [smem:[#allocation2 + $0x180]]
          %v3462 = vstv %s3461
          %v3463 = vsel %vm3451, %v3462, 0.0
          %s3464 = sld [smem:[#allocation2 + $0x300]]
          %v3465 = vstv %s3464
          %v3466 = vsel %vm3451, %v3465, 0.0
          %vm3467 = vcmp.eq.f32.partialorder %v3439, 2.0
          %s3468 = sld [smem:[#allocation2 + $0x1]]
          %v3469 = vstv %s3468
          %v3470 = vsel %vm3467, %v3469, %v3454
          %s3471 = sld [smem:[#allocation2 + $0x81]]
          %v3472 = vstv %s3471
          %v3473 = vsel %vm3467, %v3472, %v3457
          %s3474 = sld [smem:[#allocation2 + $0x101]]
          %v3475 = vstv %s3474
          %v3476 = vsel %vm3467, %v3475, %v3460
          %s3477 = sld [smem:[#allocation2 + $0x181]]
          %v3478 = vstv %s3477
          %v3479 = vsel %vm3467, %v3478, %v3463
          %s3480 = sld [smem:[#allocation2 + $0x301]]
          %v3481 = vstv %s3480
          %v3482 = vsel %vm3467, %v3481, %v3466
          %vm3483 = vcmp.eq.f32.partialorder %v3439, 3.0
          %s3484 = sld [smem:[#allocation2 + $0x2]]
          %v3485 = vstv %s3484
          %v3486 = vsel %vm3483, %v3485, %v3470
          %s3487 = sld [smem:[#allocation2 + $0x82]]
          %v3488 = vstv %s3487
          %v3489 = vsel %vm3483, %v3488, %v3473
          %s3490 = sld [smem:[#allocation2 + $0x102]]
          %v3491 = vstv %s3490
          %v3492 = vsel %vm3483, %v3491, %v3476
          %s3493 = sld [smem:[#allocation2 + $0x182]]
          %v3494 = vstv %s3493
          %v3495 = vsel %vm3483, %v3494, %v3479
          %s3496 = sld [smem:[#allocation2 + $0x302]]
          %v3497 = vstv %s3496
          %v3498 = vsel %vm3483, %v3497, %v3482
          %vm3499 = vcmp.eq.f32.partialorder %v3439, 4.0
          %s3500 = sld [smem:[#allocation2 + $0x3]]
          %v3501 = vstv %s3500
          %v3502 = vsel %vm3499, %v3501, %v3486
          %s3503 = sld [smem:[#allocation2 + $0x83]]
          %v3504 = vstv %s3503
          %v3505 = vsel %vm3499, %v3504, %v3489
          %s3506 = sld [smem:[#allocation2 + $0x103]]
          %v3507 = vstv %s3506
          %v3508 = vsel %vm3499, %v3507, %v3492
          %s3509 = sld [smem:[#allocation2 + $0x183]]
          %v3510 = vstv %s3509
          %v3511 = vsel %vm3499, %v3510, %v3495
          %s3512 = sld [smem:[#allocation2 + $0x303]]
          %v3513 = vstv %s3512
          %v3514 = vsel %vm3499, %v3513, %v3498
          %vm3515 = vcmp.eq.f32.partialorder %v3439, 5.0
          %s3516 = sld [smem:[#allocation2 + $0x4]]
          %v3517 = vstv %s3516
          %v3518 = vsel %vm3515, %v3517, %v3502
          %s3519 = sld [smem:[#allocation2 + $0x84]]
          %v3520 = vstv %s3519
          %v3521 = vsel %vm3515, %v3520, %v3505
          %s3522 = sld [smem:[#allocation2 + $0x104]]
          %v3523 = vstv %s3522
          %v3524 = vsel %vm3515, %v3523, %v3508
          %s3525 = sld [smem:[#allocation2 + $0x184]]
          %v3526 = vstv %s3525
          %v3527 = vsel %vm3515, %v3526, %v3511
          %s3528 = sld [smem:[#allocation2 + $0x304]]
          %v3529 = vstv %s3528
          %v3530 = vsel %vm3515, %v3529, %v3514
          %vm3531 = vcmp.eq.f32.partialorder %v3439, 6.0
          %s3532 = sld [smem:[#allocation2 + $0x5]]
          %v3533 = vstv %s3532
          %v3534 = vsel %vm3531, %v3533, %v3518
          %s3535 = sld [smem:[#allocation2 + $0x85]]
          %v3536 = vstv %s3535
          %v3537 = vsel %vm3531, %v3536, %v3521
          %s3538 = sld [smem:[#allocation2 + $0x105]]
          %v3539 = vstv %s3538
          %v3540 = vsel %vm3531, %v3539, %v3524
          %s3541 = sld [smem:[#allocation2 + $0x185]]
          %v3542 = vstv %s3541
          %v3543 = vsel %vm3531, %v3542, %v3527
          %s3544 = sld [smem:[#allocation2 + $0x305]]
          %v3545 = vstv %s3544
          %v3546 = vsel %vm3531, %v3545, %v3530
          %vm3547 = vcmp.eq.f32.partialorder %v3439, 7.0
          %s3548 = sld [smem:[#allocation2 + $0x6]]
          %v3549 = vstv %s3548
          %v3550 = vsel %vm3547, %v3549, %v3534
          %s3551 = sld [smem:[#allocation2 + $0x86]]
          %v3552 = vstv %s3551
          %v3553 = vsel %vm3547, %v3552, %v3537
          %s3554 = sld [smem:[#allocation2 + $0x106]]
          %v3555 = vstv %s3554
          %v3556 = vsel %vm3547, %v3555, %v3540
          %s3557 = sld [smem:[#allocation2 + $0x186]]
          %v3558 = vstv %s3557
          %v3559 = vsel %vm3547, %v3558, %v3543
          %s3560 = sld [smem:[#allocation2 + $0x306]]
          %v3561 = vstv %s3560
          %v3562 = vsel %vm3547, %v3561, %v3546
          %vm3563 = vcmp.eq.f32.partialorder %v3439, 8.0
          %s3564 = sld [smem:[#allocation2 + $0x7]]
          %v3565 = vstv %s3564
          %v3566 = vsel %vm3563, %v3565, %v3550
          %s3567 = sld [smem:[#allocation2 + $0x87]]
          %v3568 = vstv %s3567
          %v3569 = vsel %vm3563, %v3568, %v3553
          %s3570 = sld [smem:[#allocation2 + $0x107]]
          %v3571 = vstv %s3570
          %v3572 = vsel %vm3563, %v3571, %v3556
          %s3573 = sld [smem:[#allocation2 + $0x187]]
          %v3574 = vstv %s3573
          %v3575 = vsel %vm3563, %v3574, %v3559
          %s3576 = sld [smem:[#allocation2 + $0x307]]
          %v3577 = vstv %s3576
          %v3578 = vsel %vm3563, %v3577, %v3562
          %vm3579 = vcmp.eq.f32.partialorder %v3439, 9.0
          %s3580 = sld [smem:[#allocation2 + $0x8]]
          %v3581 = vstv %s3580
          %v3582 = vsel %vm3579, %v3581, %v3566
          %s3583 = sld [smem:[#allocation2 + $0x88]]
          %v3584 = vstv %s3583
          %v3585 = vsel %vm3579, %v3584, %v3569
          %s3586 = sld [smem:[#allocation2 + $0x108]]
          %v3587 = vstv %s3586
          %v3588 = vsel %vm3579, %v3587, %v3572
          %s3589 = sld [smem:[#allocation2 + $0x188]]
          %v3590 = vstv %s3589
          %v3591 = vsel %vm3579, %v3590, %v3575
          %s3592 = sld [smem:[#allocation2 + $0x308]]
          %v3593 = vstv %s3592
          %v3594 = vsel %vm3579, %v3593, %v3578
          %vm3595 = vcmp.eq.f32.partialorder %v3439, 10.0
          %s3596 = sld [smem:[#allocation2 + $0x9]]
          %v3597 = vstv %s3596
          %v3598 = vsel %vm3595, %v3597, %v3582
          %s3599 = sld [smem:[#allocation2 + $0x89]]
          %v3600 = vstv %s3599
          %v3601 = vsel %vm3595, %v3600, %v3585
          %s3602 = sld [smem:[#allocation2 + $0x109]]
          %v3603 = vstv %s3602
          %v3604 = vsel %vm3595, %v3603, %v3588
          %s3605 = sld [smem:[#allocation2 + $0x189]]
          %v3606 = vstv %s3605
          %v3607 = vsel %vm3595, %v3606, %v3591
          %s3608 = sld [smem:[#allocation2 + $0x309]]
          %v3609 = vstv %s3608
          %v3610 = vsel %vm3595, %v3609, %v3594
          %vm3611 = vcmp.eq.f32.partialorder %v3439, 11.0
          %s3612 = sld [smem:[#allocation2 + $0xa]]
          %v3613 = vstv %s3612
          %v3614 = vsel %vm3611, %v3613, %v3598
          %s3615 = sld [smem:[#allocation2 + $0x8a]]
          %v3616 = vstv %s3615
          %v3617 = vsel %vm3611, %v3616, %v3601
          %s3618 = sld [smem:[#allocation2 + $0x10a]]
          %v3619 = vstv %s3618
          %v3620 = vsel %vm3611, %v3619, %v3604
          %s3621 = sld [smem:[#allocation2 + $0x18a]]
          %v3622 = vstv %s3621
          %v3623 = vsel %vm3611, %v3622, %v3607
          %s3624 = sld [smem:[#allocation2 + $0x30a]]
          %v3625 = vstv %s3624
          %v3626 = vsel %vm3611, %v3625, %v3610
          %vm3627 = vcmp.eq.f32.partialorder %v3439, 12.0
          %s3628 = sld [smem:[#allocation2 + $0xb]]
          %v3629 = vstv %s3628
          %v3630 = vsel %vm3627, %v3629, %v3614
          %s3631 = sld [smem:[#allocation2 + $0x8b]]
          %v3632 = vstv %s3631
          %v3633 = vsel %vm3627, %v3632, %v3617
          %s3634 = sld [smem:[#allocation2 + $0x10b]]
          %v3635 = vstv %s3634
          %v3636 = vsel %vm3627, %v3635, %v3620
          %s3637 = sld [smem:[#allocation2 + $0x18b]]
          %v3638 = vstv %s3637
          %v3639 = vsel %vm3627, %v3638, %v3623
          %s3640 = sld [smem:[#allocation2 + $0x30b]]
          %v3641 = vstv %s3640
          %v3642 = vsel %vm3627, %v3641, %v3626
          %vm3643 = vcmp.eq.f32.partialorder %v3439, 13.0
          %s3644 = sld [smem:[#allocation2 + $0xc]]
          %v3645 = vstv %s3644
          %v3646 = vsel %vm3643, %v3645, %v3630
          %s3647 = sld [smem:[#allocation2 + $0x8c]]
          %v3648 = vstv %s3647
          %v3649 = vsel %vm3643, %v3648, %v3633
          %s3650 = sld [smem:[#allocation2 + $0x10c]]
          %v3651 = vstv %s3650
          %v3652 = vsel %vm3643, %v3651, %v3636
          %s3653 = sld [smem:[#allocation2 + $0x18c]]
          %v3654 = vstv %s3653
          %v3655 = vsel %vm3643, %v3654, %v3639
          %s3656 = sld [smem:[#allocation2 + $0x30c]]
          %v3657 = vstv %s3656
          %v3658 = vsel %vm3643, %v3657, %v3642
          %vm3659 = vcmp.eq.f32.partialorder %v3439, 14.0
          %s3660 = sld [smem:[#allocation2 + $0xd]]
          %v3661 = vstv %s3660
          %v3662 = vsel %vm3659, %v3661, %v3646
          %s3663 = sld [smem:[#allocation2 + $0x8d]]
          %v3664 = vstv %s3663
          %v3665 = vsel %vm3659, %v3664, %v3649
          %s3666 = sld [smem:[#allocation2 + $0x10d]]
          %v3667 = vstv %s3666
          %v3668 = vsel %vm3659, %v3667, %v3652
          %s3669 = sld [smem:[#allocation2 + $0x18d]]
          %v3670 = vstv %s3669
          %v3671 = vsel %vm3659, %v3670, %v3655
          %s3672 = sld [smem:[#allocation2 + $0x30d]]
          %v3673 = vstv %s3672
          %v3674 = vsel %vm3659, %v3673, %v3658
          %vm3675 = vcmp.eq.f32.partialorder %v3439, 15.0
          %s3676 = sld [smem:[#allocation2 + $0xe]]
          %v3677 = vstv %s3676
          %v3678 = vsel %vm3675, %v3677, %v3662
          %s3679 = sld [smem:[#allocation2 + $0x8e]]
          %v3680 = vstv %s3679
          %v3681 = vsel %vm3675, %v3680, %v3665
          %s3682 = sld [smem:[#allocation2 + $0x10e]]
          %v3683 = vstv %s3682
          %v3684 = vsel %vm3675, %v3683, %v3668
          %s3685 = sld [smem:[#allocation2 + $0x18e]]
          %v3686 = vstv %s3685
          %v3687 = vsel %vm3675, %v3686, %v3671
          %s3688 = sld [smem:[#allocation2 + $0x30e]]
          %v3689 = vstv %s3688
          %v3690 = vsel %vm3675, %v3689, %v3674
          %vm3691 = vcmp.eq.f32.partialorder %v3439, 16.0
          %s3692 = sld [smem:[#allocation2 + $0xf]]
          %v3693 = vstv %s3692
          %v3694 = vsel %vm3691, %v3693, %v3678
          %s3695 = sld [smem:[#allocation2 + $0x8f]]
          %v3696 = vstv %s3695
          %v3697 = vsel %vm3691, %v3696, %v3681
          %s3698 = sld [smem:[#allocation2 + $0x10f]]
          %v3699 = vstv %s3698
          %v3700 = vsel %vm3691, %v3699, %v3684
          %s3701 = sld [smem:[#allocation2 + $0x18f]]
          %v3702 = vstv %s3701
          %v3703 = vsel %vm3691, %v3702, %v3687
          %s3704 = sld [smem:[#allocation2 + $0x30f]]
          %v3705 = vstv %s3704
          %v3706 = vsel %vm3691, %v3705, %v3690
          %v3707 = vsub.f32 %v3441, %v3694
          %v3708 = vsub.f32 %v3444, %v3697
          %v3709 = vsub.f32 %v3447, %v3700
          %v3710 = vsub.f32 %v3450, %v3703
          %v3711 = vmul.f32 %v3707, %v3707
          %v3712 = vmul.f32 %v3708, %v3708
          %v3713 = vadd.f32 %v3711, %v3712
          %v3714 = vmul.f32 %v3709, %v3709
          %v3715 = vadd.f32 %v3713, %v3714
          %v3716 = vmul.f32 %v3710, %v3710
          %v3717 = vadd.f32 %v3715, %v3716
          %v3718 = vrsqrt.pop %v3717
          %v3719 = vmul.f32 %v3718, %v3717
          %v3720 = vmul.f32 %v3719, %v3718
          %v3721 = vmul.f32 0.5, %v3720
          %v3722 = vsub.f32 1.5, %v3721
          %v3723 = vmul.f32 %v3718, %v3722
          %v3724 = vmul.f32 %v3717, %v3723
          %vm3725 = vcmp.eq.f32.partialorder %v3717, inf
          %v3726 = vsel %vm3725, %v3717, %v3724
          %vm3727 = vcmp.eq.f32.partialorder %v3717, 0.0
          %v3728 = vand.u32 %v3717, 2147483648
          %v3729 = vsel %vm3727, %v3728, %v3726
          %v3730 = vsub.f32 %v3729, 0.5
          %v3731 = vmax.f32 %v3730, 0.0
          %s3732 = sld [smem:[#allocation3 + $0x4]]
          %v3733 = vmul.f32 %v3731, %v3731
          %v3734 = vadd.f32 %v3733, 1.0
          %v3735 = vlog2.pop %v3734
          %v3736 = vmul.f32 %v3735, 0.6931472
          %v3737 = vmul.f32 %v3706, %v3736
          %3738 = vadd.xlane.f32.xlu0 %v3737
          %v3739 = vpop.xlane.xlu0 %3738
          %v3740 = vrot.slane %v3739, 4
          %v3741 = vadd.f32 %v3739, %v3740
          %v3742 = vrot.slane %v3741, 2
          %v3743 = vadd.f32 %v3741, %v3742
          %v3744 = vrot.slane %v3743, 1
          %v3745 = vadd.f32 %v3743, %v3744
          %s3746 = vtos %v3745
          %s3747 = sadd.f32 %s3732, %s3746
          %s3748 = scalar_lea.smem [#allocation3], 4
          %3749 = sst [smem:[%s3748]] %s3747
        $region71: #{pan_loss.1} parent=47 // pred_fallthru
          _
        // Predicated region
        $region72: #{pan_loss.1} parent=47 // pred_check
          _
        $region73: #{pan_loss.1} parent=47 // pred_check_branch
          %3751 = sbr.rel (%p952) target = $region75
        $region74: #{pan_loss.1} parent=47 // pred_region
          %s3752 = sld [smem:[#allocation3]]
          %s3753 = sld [smem:[#allocation3 + $0x1]]
          %v3754 = vstv %s3752
          %v3755 = vstv %s3753
          %v3756 = vrcp.pop %v3755
          %v3757 = vmul.f32 %v3755, %v3756
          %v3758 = vsub.f32 1.0, %v3757
          %v3759 = vmul.f32 %v3756, %v3758
          %v3760 = vadd.f32 %v3756, %v3759
          %vm3761 = vweird.f32 %v3755
          %vm3762 = vweird.f32 %v3756
          %vm3763 = vmor %vm3761, %vm3762
          %v3764 = vsel %vm3763, %v3756, %v3760
          %v3765 = vand.u32 2147483647, %v3755
          %vm3766 = vcmp.eq.f32.partialorder %v3765, 8.507059e+37
          %v3767 = vand.u32 %v3755, 2147483648
          %v3768 = vor.u32 1.1754944e-38, %v3767
          %v3769 = vsel %vm3766, %v3768, %v3764
          %v3770 = vmul.f32 %v3754, %v3769
          %v3771 = vadd.f32 %v3770, 0.0
          %s3772 = vtos %v3771
          %s3773 = smul.f32 %s3772, 2.0
          %s3774 = ssub.f32 1.0, %s3773
          %s3775 = sld [smem:[#allocation3 + $0x2]]
          %s3776 = sld [smem:[#allocation3 + $0x3]]
          %v3777 = vstv %s3775
          %v3778 = vstv %s3776
          %v3779 = vrcp.pop %v3778
          %v3780 = vmul.f32 %v3778, %v3779
          %v3781 = vsub.f32 1.0, %v3780
          %v3782 = vmul.f32 %v3779, %v3781
          %v3783 = vadd.f32 %v3779, %v3782
          %vm3784 = vweird.f32 %v3778
          %vm3785 = vweird.f32 %v3779
          %vm3786 = vmor %vm3784, %vm3785
          %v3787 = vsel %vm3786, %v3779, %v3783
          %v3788 = vand.u32 2147483647, %v3778
          %vm3789 = vcmp.eq.f32.partialorder %v3788, 8.507059e+37
          %v3790 = vand.u32 %v3778, 2147483648
          %v3791 = vor.u32 1.1754944e-38, %v3790
          %v3792 = vsel %vm3789, %v3791, %v3787
          %v3793 = vmul.f32 %v3777, %v3792
          %v3794 = vadd.f32 %v3793, 0.0
          %s3795 = vtos %v3794
          %s3796 = smul.f32 %s3795, 2.0
          %s3797 = ssub.f32 1.0, %s3796
          %s3798 = sld [smem:[#allocation3 + $0x4]]
          %s3799 = sld [smem:[#allocation3 + $0x5]]
          %s3800 = sadd.f32 %s3798, %s3799
          %s3801 = sld [smem:[#allocation3 + $0x7]]
          %s3802 = sadd.f32 %s3801, 1e-08
          %v3803 = vstv %s3800
          %v3804 = vstv %s3802
          %v3805 = vrcp.pop %v3804
          %v3806 = vmul.f32 %v3804, %v3805
          %v3807 = vsub.f32 1.0, %v3806
          %v3808 = vmul.f32 %v3805, %v3807
          %v3809 = vadd.f32 %v3805, %v3808
          %vm3810 = vweird.f32 %v3804
          %vm3811 = vweird.f32 %v3805
          %vm3812 = vmor %vm3810, %vm3811
          %v3813 = vsel %vm3812, %v3805, %v3809
          %v3814 = vand.u32 2147483647, %v3804
          %vm3815 = vcmp.eq.f32.partialorder %v3814, 8.507059e+37
          %v3816 = vand.u32 %v3804, 2147483648
          %v3817 = vor.u32 1.1754944e-38, %v3816
          %v3818 = vsel %vm3815, %v3817, %v3813
          %v3819 = vmul.f32 %v3803, %v3818
          %v3820 = vadd.f32 %v3819, 0.0
          %s3821 = vtos %v3820
          %s3822 = sld [smem:[#allocation3 + $0x6]]
          %s3823 = smul.f32 %s3797, 0.5
          %s3824 = sadd.f32 %s3774, %s3823
          %s3825 = sadd.f32 %s3821, %s3822
          %s3826 = smul.f32 %s3825, 0.25
          %s3827 = sadd.f32 %s3824, %s3826
          %s3828 = scalar_lea.smem [#allocation4], 0
          %3829 = sst [smem:[%s3828]] %s3827
          %s3830 = scalar_lea.smem [#allocation4], 1
          %3831 = sst [smem:[%s3830]] %s3774
          %s3832 = scalar_lea.smem [#allocation4], 2
          %3833 = sst [smem:[%s3832]] %s3797
          %s3834 = scalar_lea.smem [#allocation4], 3
          %3835 = sst [smem:[%s3834]] %s3821
          %s3836 = scalar_lea.smem [#allocation4], 4
          %3837 = sst [smem:[%s3836]] %s3822
          %s3838 = scalar_lea.smem [#allocation4], 5
          %3839 = sst [smem:[%s3838]] 0.0
          %s3840 = scalar_lea.smem [#allocation4], 6
          %3841 = sst [smem:[%s3840]] 0.0
          %s3842 = scalar_lea.smem [#allocation4], 7
          %3843 = sst [smem:[%s3842]] 0.0
        $region75: #{pan_loss.1} parent=47 // pred_fallthru
          _
        // Predicated region
        $region76: #{pan_loss.1} parent=47 // pred_check
          %p3844 = pneg %p246
        $region77: #{pan_loss.1} parent=47 // pred_check_branch
          %3846 = sbr.rel (%p3844) target = $region79
        $region78: #{pan_loss.1} parent=47 // pred_region
          %3848 = vsyncadd [#allocation5], 0
          %s3850 = sshll.u32 %s7, 4
          %s3851 = int_to_ptr.vmem [resolvable:$true] %s3850
          %3853 = dma.smem_to_vmem [#allocation4], 16, %s3851, [#allocation5]
        $region79: #{pan_loss.1} parent=47 // pred_fallthru
          _
        // Predicated region
        $region80: #{pan_loss.1} parent=47 // pred_check
          %p3854 = pneg %p246
        $region81: #{pan_loss.1} parent=47 // pred_check_branch
          %3856 = sbr.rel (%p3854) target = $region83
        $region82: #{pan_loss.1} parent=47 // pred_region
          %3858 = dma.done [#allocation5], 16
        $region83: #{pan_loss.1} parent=47 // pred_fallthru
          _
        %3859 = sfence
      $region48: #{pan_loss.1} parent=5 // pred_fallthru
        _
      %p3860 = scmp.le.s32.totalorder 2, %s14
      // Predicated region
      $region84: #{pan_loss.1} parent=5 // pred_check
        %p3861 = pneg %p3860
      $region85: #{pan_loss.1} parent=5 // pred_check_branch
        %3863 = sbr.rel (%p3861) target = $region87
      $region86: #{pan_loss.1} parent=5 // pred_region
        %s3864 = ssub.s32 %s14, 2
      $region87: #{pan_loss.1} parent=5 // pred_fallthru
        _
    $region6: #{pan_loss.1} parent=1 // loop_footer
      %s18 = sadd.s32 1, %s14
    $region7: #{pan_loss.1} parent=1 // loop_footer_branch
      %13 = sbr.rel target = $region3
    $region8: #{pan_loss.1} parent=1 // loop_exit
      _
    %3865 = vsyncpa [#allocation5], 1
    %s3866 = scalar_lea.sflag [#allocation5], 1
    %3867 = vsyncpa %s3866, 1

</llo_original>
